<compile_context>
chip_gen: v5e
topology: v5e:2x2
jax: 0.10.0
libtpu: 0.0.40
codegen_flags: <defaults>
</compile_context>

<pallas_src>
import math
import functools

import jax
import jax.numpy as jnp
from jax.experimental import pallas as pl


# ----------------------------------------------------------------------------
# Kernel: full TranAD_Adversarial forward (both phases, all batch elements).
# ----------------------------------------------------------------------------
def tranad_kernel(src_ref, tgt_ref, pe_ref, w_ref, b_ref, out_ref, *,
                  feats, nhead, batch, w_layout, b_layout):
    D = 2 * feats
    hd = D // nhead
    scale = 1.0 / math.sqrt(hd)

    src2 = src_ref[...]            # (W, B*F)
    tgt2 = tgt_ref[...]            # (T, B*F)
    pe = pe_ref[...]               # (W, D)
    wslab = w_ref[...]             # packed weight slab, (in, out) layout
    bslab = b_ref[...]             # packed bias / layernorm vector slab

    def W(name):                   # static slice -> (in, out) weight
        off, r, c = w_layout[name]
        return wslab[off:off + r, :c]

    def V(name):                   # static slice -> (1, n) vector
        row, n = b_layout[name]
        return bslab[row:row + 1, :n]

    def matmul(x, w):
        return jnp.dot(x, w, preferred_element_type=jnp.float32)

    def linear(x, wname, bname):
        return matmul(x, W(wname)) + V(bname)

    def layer_norm(x, wname, bname, eps=1e-5):
        mu = jnp.mean(x, axis=-1, keepdims=True)
        xc = x - mu
        var = jnp.mean(xc * xc, axis=-1, keepdims=True)
        return xc * jax.lax.rsqrt(var + eps) * V(wname) + V(bname)

    def softmax(s):
        m = jnp.max(s, axis=-1, keepdims=True)
        e = jnp.exp(s - m)
        return e * pl.reciprocal(jnp.sum(e, axis=-1, keepdims=True), approx=True)

    def mha(q_in, kv_in, prefix, self_attn):
        in_w = W(prefix + '_in')               # (D, 3D)
        in_b = V(prefix + '_in_b')             # (1, 3D)
        out_w = W(prefix + '_out')             # (D, D)
        out_b = V(prefix + '_out_b')           # (1, D)
        if self_attn:
            qkv = matmul(q_in, in_w) + in_b    # fused Q/K/V projection
            q, k, v = qkv[:, :D], qkv[:, D:2 * D], qkv[:, 2 * D:]
        else:
            q = matmul(q_in, in_w[:, :D]) + in_b[:, :D]
            kv = matmul(kv_in, in_w[:, D:]) + in_b[:, D:]     # fused K/V projection
            k, v = kv[:, :D], kv[:, D:]
        acc = jnp.zeros((q_in.shape[0], D), jnp.float32)
        for h in range(nhead):                 # static unroll (nhead = feats, tiny)
            sl = slice(h * hd, (h + 1) * hd)
            qh, kh, vh = q[:, sl], k[:, sl], v[:, sl]
            s = jax.lax.dot_general(qh, kh, (((1,), (1,)), ((), ())),
                                    preferred_element_type=jnp.float32) * scale
            p = softmax(s)
            # fold head output straight into the output projection (no concat)
            acc = acc + matmul(matmul(p, vh), out_w[sl, :])
        return acc + out_b

    def encode_decode(src, c, tgt):
        # src/c: (W, F), tgt: (T, F)
        s = jnp.concatenate([src, c], axis=-1) * math.sqrt(feats) + pe     # (W, D)
        # transformer encoder layer (post-norm, relu FFN; dropout = identity)
        s = layer_norm(s + mha(s, s, 'enc', True), 'enc_ln1_w', 'enc_ln1_b')
        ff = linear(jnp.maximum(linear(s, 'enc_ff1', 'enc_ff1_b'), 0.0),
                    'enc_ff2', 'enc_ff2_b')
        mem = layer_norm(s + ff, 'enc_ln2_w', 'enc_ln2_b')                 # (W, D)
        # transformer decoder layer
        t = jnp.concatenate([tgt, tgt], axis=-1)                           # tgt.repeat(1,1,2)
        t = layer_norm(t + mha(t, t, 'dec_sa', True), 'dec_ln1_w', 'dec_ln1_b')
        t = layer_norm(t + mha(t, mem, 'dec_ca', False), 'dec_ln2_w', 'dec_ln2_b')
        ff = linear(jnp.maximum(linear(t, 'dec_ff1', 'dec_ff1_b'), 0.0),
                    'dec_ff2', 'dec_ff2_b')
        t = layer_norm(t + ff, 'dec_ln3_w', 'dec_ln3_b')                   # (T, D)
        # fcn: Linear(2F -> F) + Sigmoid  (divide goes to the EUP)
        z = linear(t, 'fcn', 'fcn_b')
        return pl.reciprocal(1.0 + jnp.exp(-z), approx=True)               # (T, F)

    outs = []
    for b in range(batch):                       # static unroll over batch
        src_b = src2[:, b * feats:(b + 1) * feats]         # (W, F)
        tgt_b = tgt2[:, b * feats:(b + 1) * feats]         # (T, F)
        x1 = encode_decode(src_b, jnp.zeros_like(src_b), tgt_b)   # phase 1, c = 0
        cb = (x1 - src_b) ** 2                                    # adversarial c
        x2 = encode_decode(src_b, cb, tgt_b)                      # phase 2
        outs.append(x2)
    out_ref[...] = jnp.concatenate(outs, axis=-1)            # (T, B*F)


# ----------------------------------------------------------------------------
# Wrapper: one pallas_call, no grid; batch folded into the lane axis.
# ----------------------------------------------------------------------------
def make_tranad_forward(feats, n_window, tgt_len, batch, w_layout, b_layout):
    kernel = functools.partial(
        tranad_kernel, feats=feats, nhead=feats, batch=batch,
        w_layout=w_layout, b_layout=b_layout)

    call = pl.pallas_call(
        kernel,
        out_shape=jax.ShapeDtypeStruct((tgt_len, batch * feats), jnp.float32),
    )

    @jax.jit
    def forward(src_sbf, tgt_tbf, pe, w_slab, b_slab):
        # (seq, batch, feats) -> (seq, batch*feats): row-major reshape, no copy.
        src2 = src_sbf.reshape(n_window, batch * feats)
        tgt2 = tgt_tbf.reshape(tgt_len, batch * feats)
        out2 = call(src2, tgt2, pe, w_slab, b_slab)
        return out2.reshape(tgt_len, batch, feats)   # (T, B, F), PyTorch layout

    return forward


# ----------------------------------------------------------------------------
# Parameter construction & packing (shapes from TranAD_Adversarial.__init__,
# all weights stored in (in, out) layout).
# ----------------------------------------------------------------------------
def init_params(key, feats, dff=16):
    D = 2 * feats
    keys = iter(jax.random.split(key, 16))

    def Wm(shape):
        return 0.2 * jax.random.normal(next(keys), shape, dtype=jnp.float32)

    def zeros(n):
        return jnp.zeros((n,), jnp.float32)

    def ones(n):
        return jnp.ones((n,), jnp.float32)

    weights = {
        'enc_in': Wm((D, 3 * D)), 'enc_out': Wm((D, D)),
        'enc_ff1': Wm((D, dff)), 'enc_ff2': Wm((dff, D)),
        'dec_sa_in': Wm((D, 3 * D)), 'dec_sa_out': Wm((D, D)),
        'dec_ca_in': Wm((D, 3 * D)), 'dec_ca_out': Wm((D, D)),
        'dec_ff1': Wm((D, dff)), 'dec_ff2': Wm((dff, D)),
        'fcn': Wm((D, feats)),
    }
    vectors = {
        'enc_in_b': zeros(3 * D), 'enc_out_b': zeros(D),
        'enc_ln1_w': ones(D), 'enc_ln1_b': zeros(D),
        'enc_ff1_b': zeros(dff), 'enc_ff2_b': zeros(D),
        'enc_ln2_w': ones(D), 'enc_ln2_b': zeros(D),
        'dec_sa_in_b': zeros(3 * D), 'dec_sa_out_b': zeros(D),
        'dec_ln1_w': ones(D), 'dec_ln1_b': zeros(D),
        'dec_ca_in_b': zeros(3 * D), 'dec_ca_out_b': zeros(D),
        'dec_ln2_w': ones(D), 'dec_ln2_b': zeros(D),
        'dec_ff1_b': zeros(dff), 'dec_ff2_b': zeros(D),
        'dec_ln3_w': ones(D), 'dec_ln3_b': zeros(D),
        'fcn_b': zeros(feats),
    }
    return weights, vectors


def pack_params(weights, vectors):
    """Pack all params into two flat f32 slabs + static slice layouts."""
    wcols = max(w.shape[1] for w in weights.values())
    w_layout, w_rows, off = {}, [], 0
    for name, w in weights.items():
        r, c = w.shape
        w_layout[name] = (off, r, c)
        w_rows.append(jnp.pad(w, ((0, 0), (0, wcols - c))))
        off += r
    w_slab = jnp.concatenate(w_rows, axis=0)          # (total_rows, wcols)

    bcols = max(v.shape[0] for v in vectors.values())
    b_layout, b_rows = {}, []
    for i, (name, v) in enumerate(vectors.items()):
        b_layout[name] = (i, v.shape[0])
        b_rows.append(jnp.pad(v, (0, bcols - v.shape[0])))
    b_slab = jnp.stack(b_rows, axis=0)                # (n_vectors, bcols)
    return w_slab, b_slab, w_layout, b_layout


def make_positional_encoding(max_len, d_model):
    # Matches the spec's PositionalEncoding exactly: pe = sin(pos*div) +
    # cos(pos*div) over ALL feature indices, div = exp(arange(d)*(-ln(1e4)/d)).
    position = jnp.arange(max_len, dtype=jnp.float32)[:, None]
    div_term = jnp.exp(jnp.arange(d_model, dtype=jnp.float32) *
                       (-math.log(10000.0) / d_model))
    return jnp.sin(position * div_term) + jnp.cos(position * div_term)   # (W, D)


if __name__ == "__main__":
    feats = 4          # n_feats
    n_window = 10      # n_window (src seq length)
    T = 1              # tgt seq length (TranAD feeds the last window element)
    B = 2              # batch

    key = jax.random.PRNGKey(0)
    k_src, k_tgt, k_par = jax.random.split(key, 3)

    src = jax.random.uniform(k_src, (n_window, B, feats), dtype=jnp.float32)
    tgt = jax.random.uniform(k_tgt, (T, B, feats), dtype=jnp.float32)

    weights, vectors = init_params(k_par, feats)
    w_slab, b_slab, w_layout, b_layout = pack_params(weights, vectors)
    pe = make_positional_encoding(n_window, 2 * feats)

    forward = make_tranad_forward(feats, n_window, T, B, w_layout, b_layout)
    out = jax.block_until_ready(forward(src, tgt, pe, w_slab, b_slab))

    assert out.shape == (T, B, feats), out.shape
    assert bool(jnp.all(jnp.isfinite(out)))
    print("KERNEL_OK")
</pallas_src>

<mosaic_0001>
module attributes {stable_mosaic.version = 11 : i64} {
  func.func @tranad_kernel(%arg0: memref<10x8xf32, #tpu.memory_space<vmem>>, %arg1: memref<1x8xf32, #tpu.memory_space<vmem>>, %arg2: memref<10x8xf32, #tpu.memory_space<vmem>>, %arg3: memref<104x24xf32, #tpu.memory_space<vmem>>, %arg4: memref<21x24xf32, #tpu.memory_space<vmem>>, %arg5: memref<1x8xf32, #tpu.memory_space<vmem>>) attributes {dimension_semantics = [], scalar_prefetch = 0 : i64, scratch_operands = 0 : i64, tpu.core_type = #tpu.core_type<tc>} {
    %c0 = arith.constant 0 : index
    %c0_0 = arith.constant 0 : index
    %0 = vector.load %arg0[%c0, %c0_0] : memref<10x8xf32, #tpu.memory_space<vmem>>, vector<10x8xf32>
    %c0_1 = arith.constant 0 : index
    %c0_2 = arith.constant 0 : index
    %1 = vector.load %arg1[%c0_1, %c0_2] : memref<1x8xf32, #tpu.memory_space<vmem>>, vector<1x8xf32>
    %c0_3 = arith.constant 0 : index
    %c0_4 = arith.constant 0 : index
    %2 = vector.load %arg2[%c0_3, %c0_4] : memref<10x8xf32, #tpu.memory_space<vmem>>, vector<10x8xf32>
    %c0_5 = arith.constant 0 : index
    %c0_6 = arith.constant 0 : index
    %3 = vector.load %arg3[%c0_5, %c0_6] : memref<104x24xf32, #tpu.memory_space<vmem>>, vector<104x24xf32>
    %c0_7 = arith.constant 0 : index
    %c0_8 = arith.constant 0 : index
    %4 = vector.load %arg4[%c0_7, %c0_8] : memref<21x24xf32, #tpu.memory_space<vmem>>, vector<21x24xf32>
    %5 = vector.extract_strided_slice %0 {offsets = [0, 0], sizes = [10, 4], strides = [1, 1]} : vector<10x8xf32> to vector<10x4xf32>
    %6 = vector.extract_strided_slice %1 {offsets = [0, 0], sizes = [1, 4], strides = [1, 1]} : vector<1x8xf32> to vector<1x4xf32>
    %cst = arith.constant 0.000000e+00 : f32
    %7 = vector.broadcast %cst : f32 to vector<10x4xf32>
    %8 = tpu.concatenate %5, %7 in 1 : vector<10x4xf32>, vector<10x4xf32> -> vector<10x8xf32>
    %cst_9 = arith.constant 2.000000e+00 : f32
    %9 = vector.broadcast %cst_9 : f32 to vector<10x8xf32>
    %10 = arith.mulf %8, %9 : vector<10x8xf32>
    %11 = arith.addf %10, %2 : vector<10x8xf32>
    %12 = vector.extract_strided_slice %3 {offsets = [0, 0], sizes = [8, 24], strides = [1, 1]} : vector<104x24xf32> to vector<8x24xf32>
    %13 = vector.extract_strided_slice %4 {offsets = [0, 0], sizes = [1, 24], strides = [1, 1]} : vector<21x24xf32> to vector<1x24xf32>
    %14 = vector.extract_strided_slice %3 {offsets = [8, 0], sizes = [8, 8], strides = [1, 1]} : vector<104x24xf32> to vector<8x8xf32>
    %15 = vector.extract_strided_slice %4 {offsets = [1, 0], sizes = [1, 8], strides = [1, 1]} : vector<21x24xf32> to vector<1x8xf32>
    %cst_10 = arith.constant dense<0.000000e+00> : vector<10x24xf32>
    %16 = tpu.matmul %11, %12, %cst_10 {dimension_numbers = #tpu.dot_dimension_numbers<[1], [0], [0], [1], [0, 0, 1, 1], [], []>} : vector<10x8xf32>, vector<8x24xf32>, vector<10x24xf32> -> vector<10x24xf32>
    %17 = vector.broadcast %13 : vector<1x24xf32> to vector<10x24xf32>
    %18 = arith.addf %16, %17 : vector<10x24xf32>
    %19 = vector.extract_strided_slice %18 {offsets = [0, 0], sizes = [10, 8], strides = [1, 1]} : vector<10x24xf32> to vector<10x8xf32>
    %20 = vector.extract_strided_slice %18 {offsets = [0, 8], sizes = [10, 8], strides = [1, 1]} : vector<10x24xf32> to vector<10x8xf32>
    %21 = vector.extract_strided_slice %18 {offsets = [0, 16], sizes = [10, 8], strides = [1, 1]} : vector<10x24xf32> to vector<10x8xf32>
    %cst_11 = arith.constant 0.000000e+00 : f32
    %22 = vector.broadcast %cst_11 : f32 to vector<10x8xf32>
    %23 = vector.extract_strided_slice %19 {offsets = [0, 0], sizes = [10, 2], strides = [1, 1]} : vector<10x8xf32> to vector<10x2xf32>
    %24 = vector.extract_strided_slice %20 {offsets = [0, 0], sizes = [10, 2], strides = [1, 1]} : vector<10x8xf32> to vector<10x2xf32>
    %25 = vector.extract_strided_slice %21 {offsets = [0, 0], sizes = [10, 2], strides = [1, 1]} : vector<10x8xf32> to vector<10x2xf32>
    %cst_12 = arith.constant dense<0.000000e+00> : vector<10x10xf32>
    %26 = tpu.matmul %23, %24, %cst_12 {dimension_numbers = #tpu.dot_dimension_numbers<[1], [1], [0], [0], [0, 0, 1, 0], [], []>} : vector<10x2xf32>, vector<10x2xf32>, vector<10x10xf32> -> vector<10x10xf32>
    %cst_13 = arith.constant 0.707106769 : f32
    %27 = vector.broadcast %cst_13 : f32 to vector<10x10xf32>
    %28 = arith.mulf %26, %27 : vector<10x10xf32>
    %cst_14 = arith.constant dense<0xFF800000> : vector<10xf32>
    %29 = vector.multi_reduction <maximumf>, %28, %cst_14 [1] : vector<10x10xf32> to vector<10xf32>
    %30 = vector.shape_cast %29 : vector<10xf32> to vector<10x1xf32>
    %31 = vector.broadcast %30 : vector<10x1xf32> to vector<10x10xf32>
    %32 = arith.subf %28, %31 : vector<10x10xf32>
    %33 = math.exp %32 : vector<10x10xf32>
    %cst_15 = arith.constant dense<0.000000e+00> : vector<10xf32>
    %34 = vector.multi_reduction <add>, %33, %cst_15 [1] : vector<10x10xf32> to vector<10xf32>
    %35 = vector.shape_cast %34 : vector<10xf32> to vector<10x1xf32>
    %36 = tpu.reciprocal %35 {approx = true} : vector<10x1xf32> -> vector<10x1xf32>
    %37 = vector.broadcast %36 : vector<10x1xf32> to vector<10x10xf32>
    %38 = arith.mulf %33, %37 : vector<10x10xf32>
    %cst_16 = arith.constant dense<0.000000e+00> : vector<10x2xf32>
    %39 = tpu.matmul %38, %25, %cst_16 {dimension_numbers = #tpu.dot_dimension_numbers<[1], [0], [0], [1], [0, 0, 1, 1], [], []>} : vector<10x10xf32>, vector<10x2xf32>, vector<10x2xf32> -> vector<10x2xf32>
    %40 = vector.extract_strided_slice %14 {offsets = [0, 0], sizes = [2, 8], strides = [1, 1]} : vector<8x8xf32> to vector<2x8xf32>
    %cst_17 = arith.constant dense<0.000000e+00> : vector<10x8xf32>
    %41 = tpu.matmul %39, %40, %cst_17 {dimension_numbers = #tpu.dot_dimension_numbers<[1], [0], [0], [1], [0, 0, 1, 1], [], []>} : vector<10x2xf32>, vector<2x8xf32>, vector<10x8xf32> -> vector<10x8xf32>
    %42 = arith.addf %22, %41 : vector<10x8xf32>
    %43 = vector.extract_strided_slice %19 {offsets = [0, 2], sizes = [10, 2], strides = [1, 1]} : vector<10x8xf32> to vector<10x2xf32>
    %44 = vector.extract_strided_slice %20 {offsets = [0, 2], sizes = [10, 2], strides = [1, 1]} : vector<10x8xf32> to vector<10x2xf32>
    %45 = vector.extract_strided_slice %21 {offsets = [0, 2], sizes = [10, 2], strides = [1, 1]} : vector<10x8xf32> to vector<10x2xf32>
    %cst_18 = arith.constant dense<0.000000e+00> : vector<10x10xf32>
    %46 = tpu.matmul %43, %44, %cst_18 {dimension_numbers = #tpu.dot_dimension_numbers<[1], [1], [0], [0], [0, 0, 1, 0], [], []>} : vector<10x2xf32>, vector<10x2xf32>, vector<10x10xf32> -> vector<10x10xf32>
    %cst_19 = arith.constant 0.707106769 : f32
    %47 = vector.broadcast %cst_19 : f32 to vector<10x10xf32>
    %48 = arith.mulf %46, %47 : vector<10x10xf32>
    %cst_20 = arith.constant dense<0xFF800000> : vector<10xf32>
    %49 = vector.multi_reduction <maximumf>, %48, %cst_20 [1] : vector<10x10xf32> to vector<10xf32>
    %50 = vector.shape_cast %49 : vector<10xf32> to vector<10x1xf32>
    %51 = vector.broadcast %50 : vector<10x1xf32> to vector<10x10xf32>
    %52 = arith.subf %48, %51 : vector<10x10xf32>
    %53 = math.exp %52 : vector<10x10xf32>
    %cst_21 = arith.constant dense<0.000000e+00> : vector<10xf32>
    %54 = vector.multi_reduction <add>, %53, %cst_21 [1] : vector<10x10xf32> to vector<10xf32>
    %55 = vector.shape_cast %54 : vector<10xf32> to vector<10x1xf32>
    %56 = tpu.reciprocal %55 {approx = true} : vector<10x1xf32> -> vector<10x1xf32>
    %57 = vector.broadcast %56 : vector<10x1xf32> to vector<10x10xf32>
    %58 = arith.mulf %53, %57 : vector<10x10xf32>
    %cst_22 = arith.constant dense<0.000000e+00> : vector<10x2xf32>
    %59 = tpu.matmul %58, %45, %cst_22 {dimension_numbers = #tpu.dot_dimension_numbers<[1], [0], [0], [1], [0, 0, 1, 1], [], []>} : vector<10x10xf32>, vector<10x2xf32>, vector<10x2xf32> -> vector<10x2xf32>
    %60 = vector.extract_strided_slice %14 {offsets = [2, 0], sizes = [2, 8], strides = [1, 1]} : vector<8x8xf32> to vector<2x8xf32>
    %cst_23 = arith.constant dense<0.000000e+00> : vector<10x8xf32>
    %61 = tpu.matmul %59, %60, %cst_23 {dimension_numbers = #tpu.dot_dimension_numbers<[1], [0], [0], [1], [0, 0, 1, 1], [], []>} : vector<10x2xf32>, vector<2x8xf32>, vector<10x8xf32> -> vector<10x8xf32>
    %62 = arith.addf %42, %61 : vector<10x8xf32>
    %63 = vector.extract_strided_slice %19 {offsets = [0, 4], sizes = [10, 2], strides = [1, 1]} : vector<10x8xf32> to vector<10x2xf32>
    %64 = vector.extract_strided_slice %20 {offsets = [0, 4], sizes = [10, 2], strides = [1, 1]} : vector<10x8xf32> to vector<10x2xf32>
    %65 = vector.extract_strided_slice %21 {offsets = [0, 4], sizes = [10, 2], strides = [1, 1]} : vector<10x8xf32> to vector<10x2xf32>
    %cst_24 = arith.constant dense<0.000000e+00> : vector<10x10xf32>
    %66 = tpu.matmul %63, %64, %cst_24 {dimension_numbers = #tpu.dot_dimension_numbers<[1], [1], [0], [0], [0, 0, 1, 0], [], []>} : vector<10x2xf32>, vector<10x2xf32>, vector<10x10xf32> -> vector<10x10xf32>
    %cst_25 = arith.constant 0.707106769 : f32
    %67 = vector.broadcast %cst_25 : f32 to vector<10x10xf32>
    %68 = arith.mulf %66, %67 : vector<10x10xf32>
    %cst_26 = arith.constant dense<0xFF800000> : vector<10xf32>
    %69 = vector.multi_reduction <maximumf>, %68, %cst_26 [1] : vector<10x10xf32> to vector<10xf32>
    %70 = vector.shape_cast %69 : vector<10xf32> to vector<10x1xf32>
    %71 = vector.broadcast %70 : vector<10x1xf32> to vector<10x10xf32>
    %72 = arith.subf %68, %71 : vector<10x10xf32>
    %73 = math.exp %72 : vector<10x10xf32>
    %cst_27 = arith.constant dense<0.000000e+00> : vector<10xf32>
    %74 = vector.multi_reduction <add>, %73, %cst_27 [1] : vector<10x10xf32> to vector<10xf32>
    %75 = vector.shape_cast %74 : vector<10xf32> to vector<10x1xf32>
    %76 = tpu.reciprocal %75 {approx = true} : vector<10x1xf32> -> vector<10x1xf32>
    %77 = vector.broadcast %76 : vector<10x1xf32> to vector<10x10xf32>
    %78 = arith.mulf %73, %77 : vector<10x10xf32>
    %cst_28 = arith.constant dense<0.000000e+00> : vector<10x2xf32>
    %79 = tpu.matmul %78, %65, %cst_28 {dimension_numbers = #tpu.dot_dimension_numbers<[1], [0], [0], [1], [0, 0, 1, 1], [], []>} : vector<10x10xf32>, vector<10x2xf32>, vector<10x2xf32> -> vector<10x2xf32>
    %80 = vector.extract_strided_slice %14 {offsets = [4, 0], sizes = [2, 8], strides = [1, 1]} : vector<8x8xf32> to vector<2x8xf32>
    %cst_29 = arith.constant dense<0.000000e+00> : vector<10x8xf32>
    %81 = tpu.matmul %79, %80, %cst_29 {dimension_numbers = #tpu.dot_dimension_numbers<[1], [0], [0], [1], [0, 0, 1, 1], [], []>} : vector<10x2xf32>, vector<2x8xf32>, vector<10x8xf32> -> vector<10x8xf32>
    %82 = arith.addf %62, %81 : vector<10x8xf32>
    %83 = vector.extract_strided_slice %19 {offsets = [0, 6], sizes = [10, 2], strides = [1, 1]} : vector<10x8xf32> to vector<10x2xf32>
    %84 = vector.extract_strided_slice %20 {offsets = [0, 6], sizes = [10, 2], strides = [1, 1]} : vector<10x8xf32> to vector<10x2xf32>
    %85 = vector.extract_strided_slice %21 {offsets = [0, 6], sizes = [10, 2], strides = [1, 1]} : vector<10x8xf32> to vector<10x2xf32>
    %cst_30 = arith.constant dense<0.000000e+00> : vector<10x10xf32>
    %86 = tpu.matmul %83, %84, %cst_30 {dimension_numbers = #tpu.dot_dimension_numbers<[1], [1], [0], [0], [0, 0, 1, 0], [], []>} : vector<10x2xf32>, vector<10x2xf32>, vector<10x10xf32> -> vector<10x10xf32>
    %cst_31 = arith.constant 0.707106769 : f32
    %87 = vector.broadcast %cst_31 : f32 to vector<10x10xf32>
    %88 = arith.mulf %86, %87 : vector<10x10xf32>
    %cst_32 = arith.constant dense<0xFF800000> : vector<10xf32>
    %89 = vector.multi_reduction <maximumf>, %88, %cst_32 [1] : vector<10x10xf32> to vector<10xf32>
    %90 = vector.shape_cast %89 : vector<10xf32> to vector<10x1xf32>
    %91 = vector.broadcast %90 : vector<10x1xf32> to vector<10x10xf32>
    %92 = arith.subf %88, %91 : vector<10x10xf32>
    %93 = math.exp %92 : vector<10x10xf32>
    %cst_33 = arith.constant dense<0.000000e+00> : vector<10xf32>
    %94 = vector.multi_reduction <add>, %93, %cst_33 [1] : vector<10x10xf32> to vector<10xf32>
    %95 = vector.shape_cast %94 : vector<10xf32> to vector<10x1xf32>
    %96 = tpu.reciprocal %95 {approx = true} : vector<10x1xf32> -> vector<10x1xf32>
    %97 = vector.broadcast %96 : vector<10x1xf32> to vector<10x10xf32>
    %98 = arith.mulf %93, %97 : vector<10x10xf32>
    %cst_34 = arith.constant dense<0.000000e+00> : vector<10x2xf32>
    %99 = tpu.matmul %98, %85, %cst_34 {dimension_numbers = #tpu.dot_dimension_numbers<[1], [0], [0], [1], [0, 0, 1, 1], [], []>} : vector<10x10xf32>, vector<10x2xf32>, vector<10x2xf32> -> vector<10x2xf32>
    %100 = vector.extract_strided_slice %14 {offsets = [6, 0], sizes = [2, 8], strides = [1, 1]} : vector<8x8xf32> to vector<2x8xf32>
    %cst_35 = arith.constant dense<0.000000e+00> : vector<10x8xf32>
    %101 = tpu.matmul %99, %100, %cst_35 {dimension_numbers = #tpu.dot_dimension_numbers<[1], [0], [0], [1], [0, 0, 1, 1], [], []>} : vector<10x2xf32>, vector<2x8xf32>, vector<10x8xf32> -> vector<10x8xf32>
    %102 = arith.addf %82, %101 : vector<10x8xf32>
    %103 = vector.broadcast %15 : vector<1x8xf32> to vector<10x8xf32>
    %104 = arith.addf %102, %103 : vector<10x8xf32>
    %105 = arith.addf %11, %104 : vector<10x8xf32>
    %cst_36 = arith.constant dense<0.000000e+00> : vector<10xf32>
    %106 = vector.multi_reduction <add>, %105, %cst_36 [1] : vector<10x8xf32> to vector<10xf32>
    %107 = vector.shape_cast %106 : vector<10xf32> to vector<10x1xf32>
    %cst_37 = arith.constant 8.000000e+00 : f32
    %108 = vector.broadcast %cst_37 : f32 to vector<10x1xf32>
    %109 = arith.divf %107, %108 : vector<10x1xf32>
    %110 = vector.broadcast %109 : vector<10x1xf32> to vector<10x8xf32>
    %111 = arith.subf %105, %110 : vector<10x8xf32>
    %112 = arith.mulf %111, %111 : vector<10x8xf32>
    %cst_38 = arith.constant dense<0.000000e+00> : vector<10xf32>
    %113 = vector.multi_reduction <add>, %112, %cst_38 [1] : vector<10x8xf32> to vector<10xf32>
    %114 = vector.shape_cast %113 : vector<10xf32> to vector<10x1xf32>
    %cst_39 = arith.constant 8.000000e+00 : f32
    %115 = vector.broadcast %cst_39 : f32 to vector<10x1xf32>
    %116 = arith.divf %114, %115 : vector<10x1xf32>
    %cst_40 = arith.constant 9.99999974E-6 : f32
    %117 = vector.broadcast %cst_40 : f32 to vector<10x1xf32>
    %118 = arith.addf %116, %117 : vector<10x1xf32>
    %119 = math.rsqrt %118 : vector<10x1xf32>
    %120 = vector.broadcast %119 : vector<10x1xf32> to vector<10x8xf32>
    %121 = arith.mulf %111, %120 : vector<10x8xf32>
    %122 = vector.extract_strided_slice %4 {offsets = [2, 0], sizes = [1, 8], strides = [1, 1]} : vector<21x24xf32> to vector<1x8xf32>
    %123 = vector.broadcast %122 : vector<1x8xf32> to vector<10x8xf32>
    %124 = arith.mulf %121, %123 : vector<10x8xf32>
    %125 = vector.extract_strided_slice %4 {offsets = [3, 0], sizes = [1, 8], strides = [1, 1]} : vector<21x24xf32> to vector<1x8xf32>
    %126 = vector.broadcast %125 : vector<1x8xf32> to vector<10x8xf32>
    %127 = arith.addf %124, %126 : vector<10x8xf32>
    %128 = vector.extract_strided_slice %3 {offsets = [16, 0], sizes = [8, 16], strides = [1, 1]} : vector<104x24xf32> to vector<8x16xf32>
    %cst_41 = arith.constant dense<0.000000e+00> : vector<10x16xf32>
    %129 = tpu.matmul %127, %128, %cst_41 {dimension_numbers = #tpu.dot_dimension_numbers<[1], [0], [0], [1], [0, 0, 1, 1], [], []>} : vector<10x8xf32>, vector<8x16xf32>, vector<10x16xf32> -> vector<10x16xf32>
    %130 = vector.extract_strided_slice %4 {offsets = [4, 0], sizes = [1, 16], strides = [1, 1]} : vector<21x24xf32> to vector<1x16xf32>
    %131 = vector.broadcast %130 : vector<1x16xf32> to vector<10x16xf32>
    %132 = arith.addf %129, %131 : vector<10x16xf32>
    %cst_42 = arith.constant 0.000000e+00 : f32
    %133 = vector.broadcast %cst_42 : f32 to vector<10x16xf32>
    %134 = arith.maximumf %132, %133 : vector<10x16xf32>
    %135 = vector.extract_strided_slice %3 {offsets = [24, 0], sizes = [16, 8], strides = [1, 1]} : vector<104x24xf32> to vector<16x8xf32>
    %cst_43 = arith.constant dense<0.000000e+00> : vector<10x8xf32>
    %136 = tpu.matmul %134, %135, %cst_43 {dimension_numbers = #tpu.dot_dimension_numbers<[1], [0], [0], [1], [0, 0, 1, 1], [], []>} : vector<10x16xf32>, vector<16x8xf32>, vector<10x8xf32> -> vector<10x8xf32>
    %137 = vector.extract_strided_slice %4 {offsets = [5, 0], sizes = [1, 8], strides = [1, 1]} : vector<21x24xf32> to vector<1x8xf32>
    %138 = vector.broadcast %137 : vector<1x8xf32> to vector<10x8xf32>
    %139 = arith.addf %136, %138 : vector<10x8xf32>
    %140 = arith.addf %127, %139 : vector<10x8xf32>
    %cst_44 = arith.constant dense<0.000000e+00> : vector<10xf32>
    %141 = vector.multi_reduction <add>, %140, %cst_44 [1] : vector<10x8xf32> to vector<10xf32>
    %142 = vector.shape_cast %141 : vector<10xf32> to vector<10x1xf32>
    %cst_45 = arith.constant 8.000000e+00 : f32
    %143 = vector.broadcast %cst_45 : f32 to vector<10x1xf32>
    %144 = arith.divf %142, %143 : vector<10x1xf32>
    %145 = vector.broadcast %144 : vector<10x1xf32> to vector<10x8xf32>
    %146 = arith.subf %140, %145 : vector<10x8xf32>
    %147 = arith.mulf %146, %146 : vector<10x8xf32>
    %cst_46 = arith.constant dense<0.000000e+00> : vector<10xf32>
    %148 = vector.multi_reduction <add>, %147, %cst_46 [1] : vector<10x8xf32> to vector<10xf32>
    %149 = vector.shape_cast %148 : vector<10xf32> to vector<10x1xf32>
    %cst_47 = arith.constant 8.000000e+00 : f32
    %150 = vector.broadcast %cst_47 : f32 to vector<10x1xf32>
    %151 = arith.divf %149, %150 : vector<10x1xf32>
    %cst_48 = arith.constant 9.99999974E-6 : f32
    %152 = vector.broadcast %cst_48 : f32 to vector<10x1xf32>
    %153 = arith.addf %151, %152 : vector<10x1xf32>
    %154 = math.rsqrt %153 : vector<10x1xf32>
    %155 = vector.broadcast %154 : vector<10x1xf32> to vector<10x8xf32>
    %156 = arith.mulf %146, %155 : vector<10x8xf32>
    %157 = vector.extract_strided_slice %4 {offsets = [6, 0], sizes = [1, 8], strides = [1, 1]} : vector<21x24xf32> to vector<1x8xf32>
    %158 = vector.broadcast %157 : vector<1x8xf32> to vector<10x8xf32>
    %159 = arith.mulf %156, %158 : vector<10x8xf32>
    %160 = vector.extract_strided_slice %4 {offsets = [7, 0], sizes = [1, 8], strides = [1, 1]} : vector<21x24xf32> to vector<1x8xf32>
    %161 = vector.broadcast %160 : vector<1x8xf32> to vector<10x8xf32>
    %162 = arith.addf %159, %161 : vector<10x8xf32>
    %163 = tpu.concatenate %6, %6 in 1 : vector<1x4xf32>, vector<1x4xf32> -> vector<1x8xf32>
    %164 = vector.extract_strided_slice %3 {offsets = [40, 0], sizes = [8, 24], strides = [1, 1]} : vector<104x24xf32> to vector<8x24xf32>
    %165 = vector.extract_strided_slice %4 {offsets = [8, 0], sizes = [1, 24], strides = [1, 1]} : vector<21x24xf32> to vector<1x24xf32>
    %166 = vector.extract_strided_slice %3 {offsets = [48, 0], sizes = [8, 8], strides = [1, 1]} : vector<104x24xf32> to vector<8x8xf32>
    %167 = vector.extract_strided_slice %4 {offsets = [9, 0], sizes = [1, 8], strides = [1, 1]} : vector<21x24xf32> to vector<1x8xf32>
    %cst_49 = arith.constant dense<0.000000e+00> : vector<1x24xf32>
    %168 = tpu.matmul %163, %164, %cst_49 {dimension_numbers = #tpu.dot_dimension_numbers<[1], [0], [0], [1], [0, 0, 1, 1], [], []>} : vector<1x8xf32>, vector<8x24xf32>, vector<1x24xf32> -> vector<1x24xf32>
    %169 = arith.addf %168, %165 : vector<1x24xf32>
    %170 = vector.extract_strided_slice %169 {offsets = [0, 0], sizes = [1, 8], strides = [1, 1]} : vector<1x24xf32> to vector<1x8xf32>
    %171 = vector.extract_strided_slice %169 {offsets = [0, 8], sizes = [1, 8], strides = [1, 1]} : vector<1x24xf32> to vector<1x8xf32>
    %172 = vector.extract_strided_slice %169 {offsets = [0, 16], sizes = [1, 8], strides = [1, 1]} : vector<1x24xf32> to vector<1x8xf32>
    %cst_50 = arith.constant 0.000000e+00 : f32
    %173 = vector.broadcast %cst_50 : f32 to vector<1x8xf32>
    %174 = vector.extract_strided_slice %170 {offsets = [0, 0], sizes = [1, 2], strides = [1, 1]} : vector<1x8xf32> to vector<1x2xf32>
    %175 = vector.extract_strided_slice %171 {offsets = [0, 0], sizes = [1, 2], strides = [1, 1]} : vector<1x8xf32> to vector<1x2xf32>
    %176 = vector.extract_strided_slice %172 {offsets = [0, 0], sizes = [1, 2], strides = [1, 1]} : vector<1x8xf32> to vector<1x2xf32>
    %cst_51 = arith.constant dense<0.000000e+00> : vector<1x1xf32>
    %177 = tpu.matmul %174, %175, %cst_51 {dimension_numbers = #tpu.dot_dimension_numbers<[1], [1], [0], [0], [0, 0, 1, 0], [], []>} : vector<1x2xf32>, vector<1x2xf32>, vector<1x1xf32> -> vector<1x1xf32>
    %cst_52 = arith.constant 0.707106769 : f32
    %178 = vector.broadcast %cst_52 : f32 to vector<1x1xf32>
    %179 = arith.mulf %177, %178 : vector<1x1xf32>
    %cst_53 = arith.constant dense<0xFF800000> : vector<1xf32>
    %180 = vector.multi_reduction <maximumf>, %179, %cst_53 [1] : vector<1x1xf32> to vector<1xf32>
    %181 = vector.shape_cast %180 : vector<1xf32> to vector<1x1xf32>
    %182 = arith.subf %179, %181 : vector<1x1xf32>
    %183 = math.exp %182 : vector<1x1xf32>
    %cst_54 = arith.constant dense<0.000000e+00> : vector<1xf32>
    %184 = vector.multi_reduction <add>, %183, %cst_54 [1] : vector<1x1xf32> to vector<1xf32>
    %185 = vector.shape_cast %184 : vector<1xf32> to vector<1x1xf32>
    %186 = tpu.reciprocal %185 {approx = true} : vector<1x1xf32> -> vector<1x1xf32>
    %187 = arith.mulf %183, %186 : vector<1x1xf32>
    %cst_55 = arith.constant dense<0.000000e+00> : vector<1x2xf32>
    %188 = tpu.matmul %187, %176, %cst_55 {dimension_numbers = #tpu.dot_dimension_numbers<[1], [0], [0], [1], [0, 0, 1, 1], [], []>} : vector<1x1xf32>, vector<1x2xf32>, vector<1x2xf32> -> vector<1x2xf32>
    %189 = vector.extract_strided_slice %166 {offsets = [0, 0], sizes = [2, 8], strides = [1, 1]} : vector<8x8xf32> to vector<2x8xf32>
    %cst_56 = arith.constant dense<0.000000e+00> : vector<1x8xf32>
    %190 = tpu.matmul %188, %189, %cst_56 {dimension_numbers = #tpu.dot_dimension_numbers<[1], [0], [0], [1], [0, 0, 1, 1], [], []>} : vector<1x2xf32>, vector<2x8xf32>, vector<1x8xf32> -> vector<1x8xf32>
    %191 = arith.addf %173, %190 : vector<1x8xf32>
    %192 = vector.extract_strided_slice %170 {offsets = [0, 2], sizes = [1, 2], strides = [1, 1]} : vector<1x8xf32> to vector<1x2xf32>
    %193 = vector.extract_strided_slice %171 {offsets = [0, 2], sizes = [1, 2], strides = [1, 1]} : vector<1x8xf32> to vector<1x2xf32>
    %194 = vector.extract_strided_slice %172 {offsets = [0, 2], sizes = [1, 2], strides = [1, 1]} : vector<1x8xf32> to vector<1x2xf32>
    %cst_57 = arith.constant dense<0.000000e+00> : vector<1x1xf32>
    %195 = tpu.matmul %192, %193, %cst_57 {dimension_numbers = #tpu.dot_dimension_numbers<[1], [1], [0], [0], [0, 0, 1, 0], [], []>} : vector<1x2xf32>, vector<1x2xf32>, vector<1x1xf32> -> vector<1x1xf32>
    %cst_58 = arith.constant 0.707106769 : f32
    %196 = vector.broadcast %cst_58 : f32 to vector<1x1xf32>
    %197 = arith.mulf %195, %196 : vector<1x1xf32>
    %cst_59 = arith.constant dense<0xFF800000> : vector<1xf32>
    %198 = vector.multi_reduction <maximumf>, %197, %cst_59 [1] : vector<1x1xf32> to vector<1xf32>
    %199 = vector.shape_cast %198 : vector<1xf32> to vector<1x1xf32>
    %200 = arith.subf %197, %199 : vector<1x1xf32>
    %201 = math.exp %200 : vector<1x1xf32>
    %cst_60 = arith.constant dense<0.000000e+00> : vector<1xf32>
    %202 = vector.multi_reduction <add>, %201, %cst_60 [1] : vector<1x1xf32> to vector<1xf32>
    %203 = vector.shape_cast %202 : vector<1xf32> to vector<1x1xf32>
    %204 = tpu.reciprocal %203 {approx = true} : vector<1x1xf32> -> vector<1x1xf32>
    %205 = arith.mulf %201, %204 : vector<1x1xf32>
    %cst_61 = arith.constant dense<0.000000e+00> : vector<1x2xf32>
    %206 = tpu.matmul %205, %194, %cst_61 {dimension_numbers = #tpu.dot_dimension_numbers<[1], [0], [0], [1], [0, 0, 1, 1], [], []>} : vector<1x1xf32>, vector<1x2xf32>, vector<1x2xf32> -> vector<1x2xf32>
    %207 = vector.extract_strided_slice %166 {offsets = [2, 0], sizes = [2, 8], strides = [1, 1]} : vector<8x8xf32> to vector<2x8xf32>
    %cst_62 = arith.constant dense<0.000000e+00> : vector<1x8xf32>
    %208 = tpu.matmul %206, %207, %cst_62 {dimension_numbers = #tpu.dot_dimension_numbers<[1], [0], [0], [1], [0, 0, 1, 1], [], []>} : vector<1x2xf32>, vector<2x8xf32>, vector<1x8xf32> -> vector<1x8xf32>
    %209 = arith.addf %191, %208 : vector<1x8xf32>
    %210 = vector.extract_strided_slice %170 {offsets = [0, 4], sizes = [1, 2], strides = [1, 1]} : vector<1x8xf32> to vector<1x2xf32>
    %211 = vector.extract_strided_slice %171 {offsets = [0, 4], sizes = [1, 2], strides = [1, 1]} : vector<1x8xf32> to vector<1x2xf32>
    %212 = vector.extract_strided_slice %172 {offsets = [0, 4], sizes = [1, 2], strides = [1, 1]} : vector<1x8xf32> to vector<1x2xf32>
    %cst_63 = arith.constant dense<0.000000e+00> : vector<1x1xf32>
    %213 = tpu.matmul %210, %211, %cst_63 {dimension_numbers = #tpu.dot_dimension_numbers<[1], [1], [0], [0], [0, 0, 1, 0], [], []>} : vector<1x2xf32>, vector<1x2xf32>, vector<1x1xf32> -> vector<1x1xf32>
    %cst_64 = arith.constant 0.707106769 : f32
    %214 = vector.broadcast %cst_64 : f32 to vector<1x1xf32>
    %215 = arith.mulf %213, %214 : vector<1x1xf32>
    %cst_65 = arith.constant dense<0xFF800000> : vector<1xf32>
    %216 = vector.multi_reduction <maximumf>, %215, %cst_65 [1] : vector<1x1xf32> to vector<1xf32>
    %217 = vector.shape_cast %216 : vector<1xf32> to vector<1x1xf32>
    %218 = arith.subf %215, %217 : vector<1x1xf32>
    %219 = math.exp %218 : vector<1x1xf32>
    %cst_66 = arith.constant dense<0.000000e+00> : vector<1xf32>
    %220 = vector.multi_reduction <add>, %219, %cst_66 [1] : vector<1x1xf32> to vector<1xf32>
    %221 = vector.shape_cast %220 : vector<1xf32> to vector<1x1xf32>
    %222 = tpu.reciprocal %221 {approx = true} : vector<1x1xf32> -> vector<1x1xf32>
    %223 = arith.mulf %219, %222 : vector<1x1xf32>
    %cst_67 = arith.constant dense<0.000000e+00> : vector<1x2xf32>
    %224 = tpu.matmul %223, %212, %cst_67 {dimension_numbers = #tpu.dot_dimension_numbers<[1], [0], [0], [1], [0, 0, 1, 1], [], []>} : vector<1x1xf32>, vector<1x2xf32>, vector<1x2xf32> -> vector<1x2xf32>
    %225 = vector.extract_strided_slice %166 {offsets = [4, 0], sizes = [2, 8], strides = [1, 1]} : vector<8x8xf32> to vector<2x8xf32>
    %cst_68 = arith.constant dense<0.000000e+00> : vector<1x8xf32>
    %226 = tpu.matmul %224, %225, %cst_68 {dimension_numbers = #tpu.dot_dimension_numbers<[1], [0], [0], [1], [0, 0, 1, 1], [], []>} : vector<1x2xf32>, vector<2x8xf32>, vector<1x8xf32> -> vector<1x8xf32>
    %227 = arith.addf %209, %226 : vector<1x8xf32>
    %228 = vector.extract_strided_slice %170 {offsets = [0, 6], sizes = [1, 2], strides = [1, 1]} : vector<1x8xf32> to vector<1x2xf32>
    %229 = vector.extract_strided_slice %171 {offsets = [0, 6], sizes = [1, 2], strides = [1, 1]} : vector<1x8xf32> to vector<1x2xf32>
    %230 = vector.extract_strided_slice %172 {offsets = [0, 6], sizes = [1, 2], strides = [1, 1]} : vector<1x8xf32> to vector<1x2xf32>
    %cst_69 = arith.constant dense<0.000000e+00> : vector<1x1xf32>
    %231 = tpu.matmul %228, %229, %cst_69 {dimension_numbers = #tpu.dot_dimension_numbers<[1], [1], [0], [0], [0, 0, 1, 0], [], []>} : vector<1x2xf32>, vector<1x2xf32>, vector<1x1xf32> -> vector<1x1xf32>
    %cst_70 = arith.constant 0.707106769 : f32
    %232 = vector.broadcast %cst_70 : f32 to vector<1x1xf32>
    %233 = arith.mulf %231, %232 : vector<1x1xf32>
    %cst_71 = arith.constant dense<0xFF800000> : vector<1xf32>
    %234 = vector.multi_reduction <maximumf>, %233, %cst_71 [1] : vector<1x1xf32> to vector<1xf32>
    %235 = vector.shape_cast %234 : vector<1xf32> to vector<1x1xf32>
    %236 = arith.subf %233, %235 : vector<1x1xf32>
    %237 = math.exp %236 : vector<1x1xf32>
    %cst_72 = arith.constant dense<0.000000e+00> : vector<1xf32>
    %238 = vector.multi_reduction <add>, %237, %cst_72 [1] : vector<1x1xf32> to vector<1xf32>
    %239 = vector.shape_cast %238 : vector<1xf32> to vector<1x1xf32>
    %240 = tpu.reciprocal %239 {approx = true} : vector<1x1xf32> -> vector<1x1xf32>
    %241 = arith.mulf %237, %240 : vector<1x1xf32>
    %cst_73 = arith.constant dense<0.000000e+00> : vector<1x2xf32>
    %242 = tpu.matmul %241, %230, %cst_73 {dimension_numbers = #tpu.dot_dimension_numbers<[1], [0], [0], [1], [0, 0, 1, 1], [], []>} : vector<1x1xf32>, vector<1x2xf32>, vector<1x2xf32> -> vector<1x2xf32>
    %243 = vector.extract_strided_slice %166 {offsets = [6, 0], sizes = [2, 8], strides = [1, 1]} : vector<8x8xf32> to vector<2x8xf32>
    %cst_74 = arith.constant dense<0.000000e+00> : vector<1x8xf32>
    %244 = tpu.matmul %242, %243, %cst_74 {dimension_numbers = #tpu.dot_dimension_numbers<[1], [0], [0], [1], [0, 0, 1, 1], [], []>} : vector<1x2xf32>, vector<2x8xf32>, vector<1x8xf32> -> vector<1x8xf32>
    %245 = arith.addf %227, %244 : vector<1x8xf32>
    %246 = arith.addf %245, %167 : vector<1x8xf32>
    %247 = arith.addf %163, %246 : vector<1x8xf32>
    %cst_75 = arith.constant dense<0.000000e+00> : vector<1xf32>
    %248 = vector.multi_reduction <add>, %247, %cst_75 [1] : vector<1x8xf32> to vector<1xf32>
    %249 = vector.shape_cast %248 : vector<1xf32> to vector<1x1xf32>
    %cst_76 = arith.constant 8.000000e+00 : f32
    %250 = vector.broadcast %cst_76 : f32 to vector<1x1xf32>
    %251 = arith.divf %249, %250 : vector<1x1xf32>
    %252 = vector.broadcast %251 : vector<1x1xf32> to vector<1x8xf32>
    %253 = arith.subf %247, %252 : vector<1x8xf32>
    %254 = arith.mulf %253, %253 : vector<1x8xf32>
    %cst_77 = arith.constant dense<0.000000e+00> : vector<1xf32>
    %255 = vector.multi_reduction <add>, %254, %cst_77 [1] : vector<1x8xf32> to vector<1xf32>
    %256 = vector.shape_cast %255 : vector<1xf32> to vector<1x1xf32>
    %cst_78 = arith.constant 8.000000e+00 : f32
    %257 = vector.broadcast %cst_78 : f32 to vector<1x1xf32>
    %258 = arith.divf %256, %257 : vector<1x1xf32>
    %cst_79 = arith.constant 9.99999974E-6 : f32
    %259 = vector.broadcast %cst_79 : f32 to vector<1x1xf32>
    %260 = arith.addf %258, %259 : vector<1x1xf32>
    %261 = math.rsqrt %260 : vector<1x1xf32>
    %262 = vector.broadcast %261 : vector<1x1xf32> to vector<1x8xf32>
    %263 = arith.mulf %253, %262 : vector<1x8xf32>
    %264 = vector.extract_strided_slice %4 {offsets = [10, 0], sizes = [1, 8], strides = [1, 1]} : vector<21x24xf32> to vector<1x8xf32>
    %265 = arith.mulf %263, %264 : vector<1x8xf32>
    %266 = vector.extract_strided_slice %4 {offsets = [11, 0], sizes = [1, 8], strides = [1, 1]} : vector<21x24xf32> to vector<1x8xf32>
    %267 = arith.addf %265, %266 : vector<1x8xf32>
    %268 = vector.extract_strided_slice %3 {offsets = [56, 0], sizes = [8, 24], strides = [1, 1]} : vector<104x24xf32> to vector<8x24xf32>
    %269 = vector.extract_strided_slice %4 {offsets = [12, 0], sizes = [1, 24], strides = [1, 1]} : vector<21x24xf32> to vector<1x24xf32>
    %270 = vector.extract_strided_slice %3 {offsets = [64, 0], sizes = [8, 8], strides = [1, 1]} : vector<104x24xf32> to vector<8x8xf32>
    %271 = vector.extract_strided_slice %4 {offsets = [13, 0], sizes = [1, 8], strides = [1, 1]} : vector<21x24xf32> to vector<1x8xf32>
    %272 = vector.extract_strided_slice %268 {offsets = [0, 0], sizes = [8, 8], strides = [1, 1]} : vector<8x24xf32> to vector<8x8xf32>
    %cst_80 = arith.constant dense<0.000000e+00> : vector<1x8xf32>
    %273 = tpu.matmul %267, %272, %cst_80 {dimension_numbers = #tpu.dot_dimension_numbers<[1], [0], [0], [1], [0, 0, 1, 1], [], []>} : vector<1x8xf32>, vector<8x8xf32>, vector<1x8xf32> -> vector<1x8xf32>
    %274 = vector.extract_strided_slice %269 {offsets = [0, 0], sizes = [1, 8], strides = [1, 1]} : vector<1x24xf32> to vector<1x8xf32>
    %275 = arith.addf %273, %274 : vector<1x8xf32>
    %276 = vector.extract_strided_slice %268 {offsets = [0, 8], sizes = [8, 16], strides = [1, 1]} : vector<8x24xf32> to vector<8x16xf32>
    %cst_81 = arith.constant dense<0.000000e+00> : vector<10x16xf32>
    %277 = tpu.matmul %162, %276, %cst_81 {dimension_numbers = #tpu.dot_dimension_numbers<[1], [0], [0], [1], [0, 0, 1, 1], [], []>} : vector<10x8xf32>, vector<8x16xf32>, vector<10x16xf32> -> vector<10x16xf32>
    %278 = vector.extract_strided_slice %269 {offsets = [0, 8], sizes = [1, 16], strides = [1, 1]} : vector<1x24xf32> to vector<1x16xf32>
    %279 = vector.broadcast %278 : vector<1x16xf32> to vector<10x16xf32>
    %280 = arith.addf %277, %279 : vector<10x16xf32>
    %281 = vector.extract_strided_slice %280 {offsets = [0, 0], sizes = [10, 8], strides = [1, 1]} : vector<10x16xf32> to vector<10x8xf32>
    %282 = vector.extract_strided_slice %280 {offsets = [0, 8], sizes = [10, 8], strides = [1, 1]} : vector<10x16xf32> to vector<10x8xf32>
    %cst_82 = arith.constant 0.000000e+00 : f32
    %283 = vector.broadcast %cst_82 : f32 to vector<1x8xf32>
    %284 = vector.extract_strided_slice %275 {offsets = [0, 0], sizes = [1, 2], strides = [1, 1]} : vector<1x8xf32> to vector<1x2xf32>
    %285 = vector.extract_strided_slice %281 {offsets = [0, 0], sizes = [10, 2], strides = [1, 1]} : vector<10x8xf32> to vector<10x2xf32>
    %286 = vector.extract_strided_slice %282 {offsets = [0, 0], sizes = [10, 2], strides = [1, 1]} : vector<10x8xf32> to vector<10x2xf32>
    %cst_83 = arith.constant dense<0.000000e+00> : vector<1x10xf32>
    %287 = tpu.matmul %284, %285, %cst_83 {dimension_numbers = #tpu.dot_dimension_numbers<[1], [1], [0], [0], [0, 0, 1, 0], [], []>} : vector<1x2xf32>, vector<10x2xf32>, vector<1x10xf32> -> vector<1x10xf32>
    %cst_84 = arith.constant 0.707106769 : f32
    %288 = vector.broadcast %cst_84 : f32 to vector<1x10xf32>
    %289 = arith.mulf %287, %288 : vector<1x10xf32>
    %cst_85 = arith.constant dense<0xFF800000> : vector<1xf32>
    %290 = vector.multi_reduction <maximumf>, %289, %cst_85 [1] : vector<1x10xf32> to vector<1xf32>
    %291 = vector.shape_cast %290 : vector<1xf32> to vector<1x1xf32>
    %292 = vector.broadcast %291 : vector<1x1xf32> to vector<1x10xf32>
    %293 = arith.subf %289, %292 : vector<1x10xf32>
    %294 = math.exp %293 : vector<1x10xf32>
    %cst_86 = arith.constant dense<0.000000e+00> : vector<1xf32>
    %295 = vector.multi_reduction <add>, %294, %cst_86 [1] : vector<1x10xf32> to vector<1xf32>
    %296 = vector.shape_cast %295 : vector<1xf32> to vector<1x1xf32>
    %297 = tpu.reciprocal %296 {approx = true} : vector<1x1xf32> -> vector<1x1xf32>
    %298 = vector.broadcast %297 : vector<1x1xf32> to vector<1x10xf32>
    %299 = arith.mulf %294, %298 : vector<1x10xf32>
    %cst_87 = arith.constant dense<0.000000e+00> : vector<1x2xf32>
    %300 = tpu.matmul %299, %286, %cst_87 {dimension_numbers = #tpu.dot_dimension_numbers<[1], [0], [0], [1], [0, 0, 1, 1], [], []>} : vector<1x10xf32>, vector<10x2xf32>, vector<1x2xf32> -> vector<1x2xf32>
    %301 = vector.extract_strided_slice %270 {offsets = [0, 0], sizes = [2, 8], strides = [1, 1]} : vector<8x8xf32> to vector<2x8xf32>
    %cst_88 = arith.constant dense<0.000000e+00> : vector<1x8xf32>
    %302 = tpu.matmul %300, %301, %cst_88 {dimension_numbers = #tpu.dot_dimension_numbers<[1], [0], [0], [1], [0, 0, 1, 1], [], []>} : vector<1x2xf32>, vector<2x8xf32>, vector<1x8xf32> -> vector<1x8xf32>
    %303 = arith.addf %283, %302 : vector<1x8xf32>
    %304 = vector.extract_strided_slice %275 {offsets = [0, 2], sizes = [1, 2], strides = [1, 1]} : vector<1x8xf32> to vector<1x2xf32>
    %305 = vector.extract_strided_slice %281 {offsets = [0, 2], sizes = [10, 2], strides = [1, 1]} : vector<10x8xf32> to vector<10x2xf32>
    %306 = vector.extract_strided_slice %282 {offsets = [0, 2], sizes = [10, 2], strides = [1, 1]} : vector<10x8xf32> to vector<10x2xf32>
    %cst_89 = arith.constant dense<0.000000e+00> : vector<1x10xf32>
    %307 = tpu.matmul %304, %305, %cst_89 {dimension_numbers = #tpu.dot_dimension_numbers<[1], [1], [0], [0], [0, 0, 1, 0], [], []>} : vector<1x2xf32>, vector<10x2xf32>, vector<1x10xf32> -> vector<1x10xf32>
    %cst_90 = arith.constant 0.707106769 : f32
    %308 = vector.broadcast %cst_90 : f32 to vector<1x10xf32>
    %309 = arith.mulf %307, %308 : vector<1x10xf32>
    %cst_91 = arith.constant dense<0xFF800000> : vector<1xf32>
    %310 = vector.multi_reduction <maximumf>, %309, %cst_91 [1] : vector<1x10xf32> to vector<1xf32>
    %311 = vector.shape_cast %310 : vector<1xf32> to vector<1x1xf32>
    %312 = vector.broadcast %311 : vector<1x1xf32> to vector<1x10xf32>
    %313 = arith.subf %309, %312 : vector<1x10xf32>
    %314 = math.exp %313 : vector<1x10xf32>
    %cst_92 = arith.constant dense<0.000000e+00> : vector<1xf32>
    %315 = vector.multi_reduction <add>, %314, %cst_92 [1] : vector<1x10xf32> to vector<1xf32>
    %316 = vector.shape_cast %315 : vector<1xf32> to vector<1x1xf32>
    %317 = tpu.reciprocal %316 {approx = true} : vector<1x1xf32> -> vector<1x1xf32>
    %318 = vector.broadcast %317 : vector<1x1xf32> to vector<1x10xf32>
    %319 = arith.mulf %314, %318 : vector<1x10xf32>
    %cst_93 = arith.constant dense<0.000000e+00> : vector<1x2xf32>
    %320 = tpu.matmul %319, %306, %cst_93 {dimension_numbers = #tpu.dot_dimension_numbers<[1], [0], [0], [1], [0, 0, 1, 1], [], []>} : vector<1x10xf32>, vector<10x2xf32>, vector<1x2xf32> -> vector<1x2xf32>
    %321 = vector.extract_strided_slice %270 {offsets = [2, 0], sizes = [2, 8], strides = [1, 1]} : vector<8x8xf32> to vector<2x8xf32>
    %cst_94 = arith.constant dense<0.000000e+00> : vector<1x8xf32>
    %322 = tpu.matmul %320, %321, %cst_94 {dimension_numbers = #tpu.dot_dimension_numbers<[1], [0], [0], [1], [0, 0, 1, 1], [], []>} : vector<1x2xf32>, vector<2x8xf32>, vector<1x8xf32> -> vector<1x8xf32>
    %323 = arith.addf %303, %322 : vector<1x8xf32>
    %324 = vector.extract_strided_slice %275 {offsets = [0, 4], sizes = [1, 2], strides = [1, 1]} : vector<1x8xf32> to vector<1x2xf32>
    %325 = vector.extract_strided_slice %281 {offsets = [0, 4], sizes = [10, 2], strides = [1, 1]} : vector<10x8xf32> to vector<10x2xf32>
    %326 = vector.extract_strided_slice %282 {offsets = [0, 4], sizes = [10, 2], strides = [1, 1]} : vector<10x8xf32> to vector<10x2xf32>
    %cst_95 = arith.constant dense<0.000000e+00> : vector<1x10xf32>
    %327 = tpu.matmul %324, %325, %cst_95 {dimension_numbers = #tpu.dot_dimension_numbers<[1], [1], [0], [0], [0, 0, 1, 0], [], []>} : vector<1x2xf32>, vector<10x2xf32>, vector<1x10xf32> -> vector<1x10xf32>
    %cst_96 = arith.constant 0.707106769 : f32
    %328 = vector.broadcast %cst_96 : f32 to vector<1x10xf32>
    %329 = arith.mulf %327, %328 : vector<1x10xf32>
    %cst_97 = arith.constant dense<0xFF800000> : vector<1xf32>
    %330 = vector.multi_reduction <maximumf>, %329, %cst_97 [1] : vector<1x10xf32> to vector<1xf32>
    %331 = vector.shape_cast %330 : vector<1xf32> to vector<1x1xf32>
    %332 = vector.broadcast %331 : vector<1x1xf32> to vector<1x10xf32>
    %333 = arith.subf %329, %332 : vector<1x10xf32>
    %334 = math.exp %333 : vector<1x10xf32>
    %cst_98 = arith.constant dense<0.000000e+00> : vector<1xf32>
    %335 = vector.multi_reduction <add>, %334, %cst_98 [1] : vector<1x10xf32> to vector<1xf32>
    %336 = vector.shape_cast %335 : vector<1xf32> to vector<1x1xf32>
    %337 = tpu.reciprocal %336 {approx = true} : vector<1x1xf32> -> vector<1x1xf32>
    %338 = vector.broadcast %337 : vector<1x1xf32> to vector<1x10xf32>
    %339 = arith.mulf %334, %338 : vector<1x10xf32>
    %cst_99 = arith.constant dense<0.000000e+00> : vector<1x2xf32>
    %340 = tpu.matmul %339, %326, %cst_99 {dimension_numbers = #tpu.dot_dimension_numbers<[1], [0], [0], [1], [0, 0, 1, 1], [], []>} : vector<1x10xf32>, vector<10x2xf32>, vector<1x2xf32> -> vector<1x2xf32>
    %341 = vector.extract_strided_slice %270 {offsets = [4, 0], sizes = [2, 8], strides = [1, 1]} : vector<8x8xf32> to vector<2x8xf32>
    %cst_100 = arith.constant dense<0.000000e+00> : vector<1x8xf32>
    %342 = tpu.matmul %340, %341, %cst_100 {dimension_numbers = #tpu.dot_dimension_numbers<[1], [0], [0], [1], [0, 0, 1, 1], [], []>} : vector<1x2xf32>, vector<2x8xf32>, vector<1x8xf32> -> vector<1x8xf32>
    %343 = arith.addf %323, %342 : vector<1x8xf32>
    %344 = vector.extract_strided_slice %275 {offsets = [0, 6], sizes = [1, 2], strides = [1, 1]} : vector<1x8xf32> to vector<1x2xf32>
    %345 = vector.extract_strided_slice %281 {offsets = [0, 6], sizes = [10, 2], strides = [1, 1]} : vector<10x8xf32> to vector<10x2xf32>
    %346 = vector.extract_strided_slice %282 {offsets = [0, 6], sizes = [10, 2], strides = [1, 1]} : vector<10x8xf32> to vector<10x2xf32>
    %cst_101 = arith.constant dense<0.000000e+00> : vector<1x10xf32>
    %347 = tpu.matmul %344, %345, %cst_101 {dimension_numbers = #tpu.dot_dimension_numbers<[1], [1], [0], [0], [0, 0, 1, 0], [], []>} : vector<1x2xf32>, vector<10x2xf32>, vector<1x10xf32> -> vector<1x10xf32>
    %cst_102 = arith.constant 0.707106769 : f32
    %348 = vector.broadcast %cst_102 : f32 to vector<1x10xf32>
    %349 = arith.mulf %347, %348 : vector<1x10xf32>
    %cst_103 = arith.constant dense<0xFF800000> : vector<1xf32>
    %350 = vector.multi_reduction <maximumf>, %349, %cst_103 [1] : vector<1x10xf32> to vector<1xf32>
    %351 = vector.shape_cast %350 : vector<1xf32> to vector<1x1xf32>
    %352 = vector.broadcast %351 : vector<1x1xf32> to vector<1x10xf32>
    %353 = arith.subf %349, %352 : vector<1x10xf32>
    %354 = math.exp %353 : vector<1x10xf32>
    %cst_104 = arith.constant dense<0.000000e+00> : vector<1xf32>
    %355 = vector.multi_reduction <add>, %354, %cst_104 [1] : vector<1x10xf32> to vector<1xf32>
    %356 = vector.shape_cast %355 : vector<1xf32> to vector<1x1xf32>
    %357 = tpu.reciprocal %356 {approx = true} : vector<1x1xf32> -> vector<1x1xf32>
    %358 = vector.broadcast %357 : vector<1x1xf32> to vector<1x10xf32>
    %359 = arith.mulf %354, %358 : vector<1x10xf32>
    %cst_105 = arith.constant dense<0.000000e+00> : vector<1x2xf32>
    %360 = tpu.matmul %359, %346, %cst_105 {dimension_numbers = #tpu.dot_dimension_numbers<[1], [0], [0], [1], [0, 0, 1, 1], [], []>} : vector<1x10xf32>, vector<10x2xf32>, vector<1x2xf32> -> vector<1x2xf32>
    %361 = vector.extract_strided_slice %270 {offsets = [6, 0], sizes = [2, 8], strides = [1, 1]} : vector<8x8xf32> to vector<2x8xf32>
    %cst_106 = arith.constant dense<0.000000e+00> : vector<1x8xf32>
    %362 = tpu.matmul %360, %361, %cst_106 {dimension_numbers = #tpu.dot_dimension_numbers<[1], [0], [0], [1], [0, 0, 1, 1], [], []>} : vector<1x2xf32>, vector<2x8xf32>, vector<1x8xf32> -> vector<1x8xf32>
    %363 = arith.addf %343, %362 : vector<1x8xf32>
    %364 = arith.addf %363, %271 : vector<1x8xf32>
    %365 = arith.addf %267, %364 : vector<1x8xf32>
    %cst_107 = arith.constant dense<0.000000e+00> : vector<1xf32>
    %366 = vector.multi_reduction <add>, %365, %cst_107 [1] : vector<1x8xf32> to vector<1xf32>
    %367 = vector.shape_cast %366 : vector<1xf32> to vector<1x1xf32>
    %cst_108 = arith.constant 8.000000e+00 : f32
    %368 = vector.broadcast %cst_108 : f32 to vector<1x1xf32>
    %369 = arith.divf %367, %368 : vector<1x1xf32>
    %370 = vector.broadcast %369 : vector<1x1xf32> to vector<1x8xf32>
    %371 = arith.subf %365, %370 : vector<1x8xf32>
    %372 = arith.mulf %371, %371 : vector<1x8xf32>
    %cst_109 = arith.constant dense<0.000000e+00> : vector<1xf32>
    %373 = vector.multi_reduction <add>, %372, %cst_109 [1] : vector<1x8xf32> to vector<1xf32>
    %374 = vector.shape_cast %373 : vector<1xf32> to vector<1x1xf32>
    %cst_110 = arith.constant 8.000000e+00 : f32
    %375 = vector.broadcast %cst_110 : f32 to vector<1x1xf32>
    %376 = arith.divf %374, %375 : vector<1x1xf32>
    %cst_111 = arith.constant 9.99999974E-6 : f32
    %377 = vector.broadcast %cst_111 : f32 to vector<1x1xf32>
    %378 = arith.addf %376, %377 : vector<1x1xf32>
    %379 = math.rsqrt %378 : vector<1x1xf32>
    %380 = vector.broadcast %379 : vector<1x1xf32> to vector<1x8xf32>
    %381 = arith.mulf %371, %380 : vector<1x8xf32>
    %382 = vector.extract_strided_slice %4 {offsets = [14, 0], sizes = [1, 8], strides = [1, 1]} : vector<21x24xf32> to vector<1x8xf32>
    %383 = arith.mulf %381, %382 : vector<1x8xf32>
    %384 = vector.extract_strided_slice %4 {offsets = [15, 0], sizes = [1, 8], strides = [1, 1]} : vector<21x24xf32> to vector<1x8xf32>
    %385 = arith.addf %383, %384 : vector<1x8xf32>
    %386 = vector.extract_strided_slice %3 {offsets = [72, 0], sizes = [8, 16], strides = [1, 1]} : vector<104x24xf32> to vector<8x16xf32>
    %cst_112 = arith.constant dense<0.000000e+00> : vector<1x16xf32>
    %387 = tpu.matmul %385, %386, %cst_112 {dimension_numbers = #tpu.dot_dimension_numbers<[1], [0], [0], [1], [0, 0, 1, 1], [], []>} : vector<1x8xf32>, vector<8x16xf32>, vector<1x16xf32> -> vector<1x16xf32>
    %388 = vector.extract_strided_slice %4 {offsets = [16, 0], sizes = [1, 16], strides = [1, 1]} : vector<21x24xf32> to vector<1x16xf32>
    %389 = arith.addf %387, %388 : vector<1x16xf32>
    %cst_113 = arith.constant 0.000000e+00 : f32
    %390 = vector.broadcast %cst_113 : f32 to vector<1x16xf32>
    %391 = arith.maximumf %389, %390 : vector<1x16xf32>
    %392 = vector.extract_strided_slice %3 {offsets = [80, 0], sizes = [16, 8], strides = [1, 1]} : vector<104x24xf32> to vector<16x8xf32>
    %cst_114 = arith.constant dense<0.000000e+00> : vector<1x8xf32>
    %393 = tpu.matmul %391, %392, %cst_114 {dimension_numbers = #tpu.dot_dimension_numbers<[1], [0], [0], [1], [0, 0, 1, 1], [], []>} : vector<1x16xf32>, vector<16x8xf32>, vector<1x8xf32> -> vector<1x8xf32>
    %394 = vector.extract_strided_slice %4 {offsets = [17, 0], sizes = [1, 8], strides = [1, 1]} : vector<21x24xf32> to vector<1x8xf32>
    %395 = arith.addf %393, %394 : vector<1x8xf32>
    %396 = arith.addf %385, %395 : vector<1x8xf32>
    %cst_115 = arith.constant dense<0.000000e+00> : vector<1xf32>
    %397 = vector.multi_reduction <add>, %396, %cst_115 [1] : vector<1x8xf32> to vector<1xf32>
    %398 = vector.shape_cast %397 : vector<1xf32> to vector<1x1xf32>
    %cst_116 = arith.constant 8.000000e+00 : f32
    %399 = vector.broadcast %cst_116 : f32 to vector<1x1xf32>
    %400 = arith.divf %398, %399 : vector<1x1xf32>
    %401 = vector.broadcast %400 : vector<1x1xf32> to vector<1x8xf32>
    %402 = arith.subf %396, %401 : vector<1x8xf32>
    %403 = arith.mulf %402, %402 : vector<1x8xf32>
    %cst_117 = arith.constant dense<0.000000e+00> : vector<1xf32>
    %404 = vector.multi_reduction <add>, %403, %cst_117 [1] : vector<1x8xf32> to vector<1xf32>
    %405 = vector.shape_cast %404 : vector<1xf32> to vector<1x1xf32>
    %cst_118 = arith.constant 8.000000e+00 : f32
    %406 = vector.broadcast %cst_118 : f32 to vector<1x1xf32>
    %407 = arith.divf %405, %406 : vector<1x1xf32>
    %cst_119 = arith.constant 9.99999974E-6 : f32
    %408 = vector.broadcast %cst_119 : f32 to vector<1x1xf32>
    %409 = arith.addf %407, %408 : vector<1x1xf32>
    %410 = math.rsqrt %409 : vector<1x1xf32>
    %411 = vector.broadcast %410 : vector<1x1xf32> to vector<1x8xf32>
    %412 = arith.mulf %402, %411 : vector<1x8xf32>
    %413 = vector.extract_strided_slice %4 {offsets = [18, 0], sizes = [1, 8], strides = [1, 1]} : vector<21x24xf32> to vector<1x8xf32>
    %414 = arith.mulf %412, %413 : vector<1x8xf32>
    %415 = vector.extract_strided_slice %4 {offsets = [19, 0], sizes = [1, 8], strides = [1, 1]} : vector<21x24xf32> to vector<1x8xf32>
    %416 = arith.addf %414, %415 : vector<1x8xf32>
    %417 = vector.extract_strided_slice %3 {offsets = [96, 0], sizes = [8, 4], strides = [1, 1]} : vector<104x24xf32> to vector<8x4xf32>
    %cst_120 = arith.constant dense<0.000000e+00> : vector<1x4xf32>
    %418 = tpu.matmul %416, %417, %cst_120 {dimension_numbers = #tpu.dot_dimension_numbers<[1], [0], [0], [1], [0, 0, 1, 1], [], []>} : vector<1x8xf32>, vector<8x4xf32>, vector<1x4xf32> -> vector<1x4xf32>
    %419 = vector.extract_strided_slice %4 {offsets = [20, 0], sizes = [1, 4], strides = [1, 1]} : vector<21x24xf32> to vector<1x4xf32>
    %420 = arith.addf %418, %419 : vector<1x4xf32>
    %cst_121 = arith.constant 0.000000e+00 : f32
    %421 = vector.broadcast %cst_121 : f32 to vector<1x4xf32>
    %422 = arith.subf %421, %420 : vector<1x4xf32>
    %423 = math.exp %422 : vector<1x4xf32>
    %cst_122 = arith.constant 1.000000e+00 : f32
    %424 = vector.broadcast %cst_122 : f32 to vector<1x4xf32>
    %425 = arith.addf %424, %423 : vector<1x4xf32>
    %426 = tpu.reciprocal %425 {approx = true} : vector<1x4xf32> -> vector<1x4xf32>
    %427 = vector.broadcast %426 : vector<1x4xf32> to vector<10x4xf32>
    %428 = arith.subf %427, %5 : vector<10x4xf32>
    %429 = arith.mulf %428, %428 : vector<10x4xf32>
    %430 = tpu.concatenate %5, %429 in 1 : vector<10x4xf32>, vector<10x4xf32> -> vector<10x8xf32>
    %cst_123 = arith.constant 2.000000e+00 : f32
    %431 = vector.broadcast %cst_123 : f32 to vector<10x8xf32>
    %432 = arith.mulf %430, %431 : vector<10x8xf32>
    %433 = arith.addf %432, %2 : vector<10x8xf32>
    %434 = vector.extract_strided_slice %3 {offsets = [0, 0], sizes = [8, 24], strides = [1, 1]} : vector<104x24xf32> to vector<8x24xf32>
    %435 = vector.extract_strided_slice %4 {offsets = [0, 0], sizes = [1, 24], strides = [1, 1]} : vector<21x24xf32> to vector<1x24xf32>
    %436 = vector.extract_strided_slice %3 {offsets = [8, 0], sizes = [8, 8], strides = [1, 1]} : vector<104x24xf32> to vector<8x8xf32>
    %437 = vector.extract_strided_slice %4 {offsets = [1, 0], sizes = [1, 8], strides = [1, 1]} : vector<21x24xf32> to vector<1x8xf32>
    %cst_124 = arith.constant dense<0.000000e+00> : vector<10x24xf32>
    %438 = tpu.matmul %433, %434, %cst_124 {dimension_numbers = #tpu.dot_dimension_numbers<[1], [0], [0], [1], [0, 0, 1, 1], [], []>} : vector<10x8xf32>, vector<8x24xf32>, vector<10x24xf32> -> vector<10x24xf32>
    %439 = vector.broadcast %435 : vector<1x24xf32> to vector<10x24xf32>
    %440 = arith.addf %438, %439 : vector<10x24xf32>
    %441 = vector.extract_strided_slice %440 {offsets = [0, 0], sizes = [10, 8], strides = [1, 1]} : vector<10x24xf32> to vector<10x8xf32>
    %442 = vector.extract_strided_slice %440 {offsets = [0, 8], sizes = [10, 8], strides = [1, 1]} : vector<10x24xf32> to vector<10x8xf32>
    %443 = vector.extract_strided_slice %440 {offsets = [0, 16], sizes = [10, 8], strides = [1, 1]} : vector<10x24xf32> to vector<10x8xf32>
    %cst_125 = arith.constant 0.000000e+00 : f32
    %444 = vector.broadcast %cst_125 : f32 to vector<10x8xf32>
    %445 = vector.extract_strided_slice %441 {offsets = [0, 0], sizes = [10, 2], strides = [1, 1]} : vector<10x8xf32> to vector<10x2xf32>
    %446 = vector.extract_strided_slice %442 {offsets = [0, 0], sizes = [10, 2], strides = [1, 1]} : vector<10x8xf32> to vector<10x2xf32>
    %447 = vector.extract_strided_slice %443 {offsets = [0, 0], sizes = [10, 2], strides = [1, 1]} : vector<10x8xf32> to vector<10x2xf32>
    %cst_126 = arith.constant dense<0.000000e+00> : vector<10x10xf32>
    %448 = tpu.matmul %445, %446, %cst_126 {dimension_numbers = #tpu.dot_dimension_numbers<[1], [1], [0], [0], [0, 0, 1, 0], [], []>} : vector<10x2xf32>, vector<10x2xf32>, vector<10x10xf32> -> vector<10x10xf32>
    %cst_127 = arith.constant 0.707106769 : f32
    %449 = vector.broadcast %cst_127 : f32 to vector<10x10xf32>
    %450 = arith.mulf %448, %449 : vector<10x10xf32>
    %cst_128 = arith.constant dense<0xFF800000> : vector<10xf32>
    %451 = vector.multi_reduction <maximumf>, %450, %cst_128 [1] : vector<10x10xf32> to vector<10xf32>
    %452 = vector.shape_cast %451 : vector<10xf32> to vector<10x1xf32>
    %453 = vector.broadcast %452 : vector<10x1xf32> to vector<10x10xf32>
    %454 = arith.subf %450, %453 : vector<10x10xf32>
    %455 = math.exp %454 : vector<10x10xf32>
    %cst_129 = arith.constant dense<0.000000e+00> : vector<10xf32>
    %456 = vector.multi_reduction <add>, %455, %cst_129 [1] : vector<10x10xf32> to vector<10xf32>
    %457 = vector.shape_cast %456 : vector<10xf32> to vector<10x1xf32>
    %458 = tpu.reciprocal %457 {approx = true} : vector<10x1xf32> -> vector<10x1xf32>
    %459 = vector.broadcast %458 : vector<10x1xf32> to vector<10x10xf32>
    %460 = arith.mulf %455, %459 : vector<10x10xf32>
    %cst_130 = arith.constant dense<0.000000e+00> : vector<10x2xf32>
    %461 = tpu.matmul %460, %447, %cst_130 {dimension_numbers = #tpu.dot_dimension_numbers<[1], [0], [0], [1], [0, 0, 1, 1], [], []>} : vector<10x10xf32>, vector<10x2xf32>, vector<10x2xf32> -> vector<10x2xf32>
    %462 = vector.extract_strided_slice %436 {offsets = [0, 0], sizes = [2, 8], strides = [1, 1]} : vector<8x8xf32> to vector<2x8xf32>
    %cst_131 = arith.constant dense<0.000000e+00> : vector<10x8xf32>
    %463 = tpu.matmul %461, %462, %cst_131 {dimension_numbers = #tpu.dot_dimension_numbers<[1], [0], [0], [1], [0, 0, 1, 1], [], []>} : vector<10x2xf32>, vector<2x8xf32>, vector<10x8xf32> -> vector<10x8xf32>
    %464 = arith.addf %444, %463 : vector<10x8xf32>
    %465 = vector.extract_strided_slice %441 {offsets = [0, 2], sizes = [10, 2], strides = [1, 1]} : vector<10x8xf32> to vector<10x2xf32>
    %466 = vector.extract_strided_slice %442 {offsets = [0, 2], sizes = [10, 2], strides = [1, 1]} : vector<10x8xf32> to vector<10x2xf32>
    %467 = vector.extract_strided_slice %443 {offsets = [0, 2], sizes = [10, 2], strides = [1, 1]} : vector<10x8xf32> to vector<10x2xf32>
    %cst_132 = arith.constant dense<0.000000e+00> : vector<10x10xf32>
    %468 = tpu.matmul %465, %466, %cst_132 {dimension_numbers = #tpu.dot_dimension_numbers<[1], [1], [0], [0], [0, 0, 1, 0], [], []>} : vector<10x2xf32>, vector<10x2xf32>, vector<10x10xf32> -> vector<10x10xf32>
    %cst_133 = arith.constant 0.707106769 : f32
    %469 = vector.broadcast %cst_133 : f32 to vector<10x10xf32>
    %470 = arith.mulf %468, %469 : vector<10x10xf32>
    %cst_134 = arith.constant dense<0xFF800000> : vector<10xf32>
    %471 = vector.multi_reduction <maximumf>, %470, %cst_134 [1] : vector<10x10xf32> to vector<10xf32>
    %472 = vector.shape_cast %471 : vector<10xf32> to vector<10x1xf32>
    %473 = vector.broadcast %472 : vector<10x1xf32> to vector<10x10xf32>
    %474 = arith.subf %470, %473 : vector<10x10xf32>
    %475 = math.exp %474 : vector<10x10xf32>
    %cst_135 = arith.constant dense<0.000000e+00> : vector<10xf32>
    %476 = vector.multi_reduction <add>, %475, %cst_135 [1] : vector<10x10xf32> to vector<10xf32>
    %477 = vector.shape_cast %476 : vector<10xf32> to vector<10x1xf32>
    %478 = tpu.reciprocal %477 {approx = true} : vector<10x1xf32> -> vector<10x1xf32>
    %479 = vector.broadcast %478 : vector<10x1xf32> to vector<10x10xf32>
    %480 = arith.mulf %475, %479 : vector<10x10xf32>
    %cst_136 = arith.constant dense<0.000000e+00> : vector<10x2xf32>
    %481 = tpu.matmul %480, %467, %cst_136 {dimension_numbers = #tpu.dot_dimension_numbers<[1], [0], [0], [1], [0, 0, 1, 1], [], []>} : vector<10x10xf32>, vector<10x2xf32>, vector<10x2xf32> -> vector<10x2xf32>
    %482 = vector.extract_strided_slice %436 {offsets = [2, 0], sizes = [2, 8], strides = [1, 1]} : vector<8x8xf32> to vector<2x8xf32>
    %cst_137 = arith.constant dense<0.000000e+00> : vector<10x8xf32>
    %483 = tpu.matmul %481, %482, %cst_137 {dimension_numbers = #tpu.dot_dimension_numbers<[1], [0], [0], [1], [0, 0, 1, 1], [], []>} : vector<10x2xf32>, vector<2x8xf32>, vector<10x8xf32> -> vector<10x8xf32>
    %484 = arith.addf %464, %483 : vector<10x8xf32>
    %485 = vector.extract_strided_slice %441 {offsets = [0, 4], sizes = [10, 2], strides = [1, 1]} : vector<10x8xf32> to vector<10x2xf32>
    %486 = vector.extract_strided_slice %442 {offsets = [0, 4], sizes = [10, 2], strides = [1, 1]} : vector<10x8xf32> to vector<10x2xf32>
    %487 = vector.extract_strided_slice %443 {offsets = [0, 4], sizes = [10, 2], strides = [1, 1]} : vector<10x8xf32> to vector<10x2xf32>
    %cst_138 = arith.constant dense<0.000000e+00> : vector<10x10xf32>
    %488 = tpu.matmul %485, %486, %cst_138 {dimension_numbers = #tpu.dot_dimension_numbers<[1], [1], [0], [0], [0, 0, 1, 0], [], []>} : vector<10x2xf32>, vector<10x2xf32>, vector<10x10xf32> -> vector<10x10xf32>
    %cst_139 = arith.constant 0.707106769 : f32
    %489 = vector.broadcast %cst_139 : f32 to vector<10x10xf32>
    %490 = arith.mulf %488, %489 : vector<10x10xf32>
    %cst_140 = arith.constant dense<0xFF800000> : vector<10xf32>
    %491 = vector.multi_reduction <maximumf>, %490, %cst_140 [1] : vector<10x10xf32> to vector<10xf32>
    %492 = vector.shape_cast %491 : vector<10xf32> to vector<10x1xf32>
    %493 = vector.broadcast %492 : vector<10x1xf32> to vector<10x10xf32>
    %494 = arith.subf %490, %493 : vector<10x10xf32>
    %495 = math.exp %494 : vector<10x10xf32>
    %cst_141 = arith.constant dense<0.000000e+00> : vector<10xf32>
    %496 = vector.multi_reduction <add>, %495, %cst_141 [1] : vector<10x10xf32> to vector<10xf32>
    %497 = vector.shape_cast %496 : vector<10xf32> to vector<10x1xf32>
    %498 = tpu.reciprocal %497 {approx = true} : vector<10x1xf32> -> vector<10x1xf32>
    %499 = vector.broadcast %498 : vector<10x1xf32> to vector<10x10xf32>
    %500 = arith.mulf %495, %499 : vector<10x10xf32>
    %cst_142 = arith.constant dense<0.000000e+00> : vector<10x2xf32>
    %501 = tpu.matmul %500, %487, %cst_142 {dimension_numbers = #tpu.dot_dimension_numbers<[1], [0], [0], [1], [0, 0, 1, 1], [], []>} : vector<10x10xf32>, vector<10x2xf32>, vector<10x2xf32> -> vector<10x2xf32>
    %502 = vector.extract_strided_slice %436 {offsets = [4, 0], sizes = [2, 8], strides = [1, 1]} : vector<8x8xf32> to vector<2x8xf32>
    %cst_143 = arith.constant dense<0.000000e+00> : vector<10x8xf32>
    %503 = tpu.matmul %501, %502, %cst_143 {dimension_numbers = #tpu.dot_dimension_numbers<[1], [0], [0], [1], [0, 0, 1, 1], [], []>} : vector<10x2xf32>, vector<2x8xf32>, vector<10x8xf32> -> vector<10x8xf32>
    %504 = arith.addf %484, %503 : vector<10x8xf32>
    %505 = vector.extract_strided_slice %441 {offsets = [0, 6], sizes = [10, 2], strides = [1, 1]} : vector<10x8xf32> to vector<10x2xf32>
    %506 = vector.extract_strided_slice %442 {offsets = [0, 6], sizes = [10, 2], strides = [1, 1]} : vector<10x8xf32> to vector<10x2xf32>
    %507 = vector.extract_strided_slice %443 {offsets = [0, 6], sizes = [10, 2], strides = [1, 1]} : vector<10x8xf32> to vector<10x2xf32>
    %cst_144 = arith.constant dense<0.000000e+00> : vector<10x10xf32>
    %508 = tpu.matmul %505, %506, %cst_144 {dimension_numbers = #tpu.dot_dimension_numbers<[1], [1], [0], [0], [0, 0, 1, 0], [], []>} : vector<10x2xf32>, vector<10x2xf32>, vector<10x10xf32> -> vector<10x10xf32>
    %cst_145 = arith.constant 0.707106769 : f32
    %509 = vector.broadcast %cst_145 : f32 to vector<10x10xf32>
    %510 = arith.mulf %508, %509 : vector<10x10xf32>
    %cst_146 = arith.constant dense<0xFF800000> : vector<10xf32>
    %511 = vector.multi_reduction <maximumf>, %510, %cst_146 [1] : vector<10x10xf32> to vector<10xf32>
    %512 = vector.shape_cast %511 : vector<10xf32> to vector<10x1xf32>
    %513 = vector.broadcast %512 : vector<10x1xf32> to vector<10x10xf32>
    %514 = arith.subf %510, %513 : vector<10x10xf32>
    %515 = math.exp %514 : vector<10x10xf32>
    %cst_147 = arith.constant dense<0.000000e+00> : vector<10xf32>
    %516 = vector.multi_reduction <add>, %515, %cst_147 [1] : vector<10x10xf32> to vector<10xf32>
    %517 = vector.shape_cast %516 : vector<10xf32> to vector<10x1xf32>
    %518 = tpu.reciprocal %517 {approx = true} : vector<10x1xf32> -> vector<10x1xf32>
    %519 = vector.broadcast %518 : vector<10x1xf32> to vector<10x10xf32>
    %520 = arith.mulf %515, %519 : vector<10x10xf32>
    %cst_148 = arith.constant dense<0.000000e+00> : vector<10x2xf32>
    %521 = tpu.matmul %520, %507, %cst_148 {dimension_numbers = #tpu.dot_dimension_numbers<[1], [0], [0], [1], [0, 0, 1, 1], [], []>} : vector<10x10xf32>, vector<10x2xf32>, vector<10x2xf32> -> vector<10x2xf32>
    %522 = vector.extract_strided_slice %436 {offsets = [6, 0], sizes = [2, 8], strides = [1, 1]} : vector<8x8xf32> to vector<2x8xf32>
    %cst_149 = arith.constant dense<0.000000e+00> : vector<10x8xf32>
    %523 = tpu.matmul %521, %522, %cst_149 {dimension_numbers = #tpu.dot_dimension_numbers<[1], [0], [0], [1], [0, 0, 1, 1], [], []>} : vector<10x2xf32>, vector<2x8xf32>, vector<10x8xf32> -> vector<10x8xf32>
    %524 = arith.addf %504, %523 : vector<10x8xf32>
    %525 = vector.broadcast %437 : vector<1x8xf32> to vector<10x8xf32>
    %526 = arith.addf %524, %525 : vector<10x8xf32>
    %527 = arith.addf %433, %526 : vector<10x8xf32>
    %cst_150 = arith.constant dense<0.000000e+00> : vector<10xf32>
    %528 = vector.multi_reduction <add>, %527, %cst_150 [1] : vector<10x8xf32> to vector<10xf32>
    %529 = vector.shape_cast %528 : vector<10xf32> to vector<10x1xf32>
    %cst_151 = arith.constant 8.000000e+00 : f32
    %530 = vector.broadcast %cst_151 : f32 to vector<10x1xf32>
    %531 = arith.divf %529, %530 : vector<10x1xf32>
    %532 = vector.broadcast %531 : vector<10x1xf32> to vector<10x8xf32>
    %533 = arith.subf %527, %532 : vector<10x8xf32>
    %534 = arith.mulf %533, %533 : vector<10x8xf32>
    %cst_152 = arith.constant dense<0.000000e+00> : vector<10xf32>
    %535 = vector.multi_reduction <add>, %534, %cst_152 [1] : vector<10x8xf32> to vector<10xf32>
    %536 = vector.shape_cast %535 : vector<10xf32> to vector<10x1xf32>
    %cst_153 = arith.constant 8.000000e+00 : f32
    %537 = vector.broadcast %cst_153 : f32 to vector<10x1xf32>
    %538 = arith.divf %536, %537 : vector<10x1xf32>
    %cst_154 = arith.constant 9.99999974E-6 : f32
    %539 = vector.broadcast %cst_154 : f32 to vector<10x1xf32>
    %540 = arith.addf %538, %539 : vector<10x1xf32>
    %541 = math.rsqrt %540 : vector<10x1xf32>
    %542 = vector.broadcast %541 : vector<10x1xf32> to vector<10x8xf32>
    %543 = arith.mulf %533, %542 : vector<10x8xf32>
    %544 = vector.extract_strided_slice %4 {offsets = [2, 0], sizes = [1, 8], strides = [1, 1]} : vector<21x24xf32> to vector<1x8xf32>
    %545 = vector.broadcast %544 : vector<1x8xf32> to vector<10x8xf32>
    %546 = arith.mulf %543, %545 : vector<10x8xf32>
    %547 = vector.extract_strided_slice %4 {offsets = [3, 0], sizes = [1, 8], strides = [1, 1]} : vector<21x24xf32> to vector<1x8xf32>
    %548 = vector.broadcast %547 : vector<1x8xf32> to vector<10x8xf32>
    %549 = arith.addf %546, %548 : vector<10x8xf32>
    %550 = vector.extract_strided_slice %3 {offsets = [16, 0], sizes = [8, 16], strides = [1, 1]} : vector<104x24xf32> to vector<8x16xf32>
    %cst_155 = arith.constant dense<0.000000e+00> : vector<10x16xf32>
    %551 = tpu.matmul %549, %550, %cst_155 {dimension_numbers = #tpu.dot_dimension_numbers<[1], [0], [0], [1], [0, 0, 1, 1], [], []>} : vector<10x8xf32>, vector<8x16xf32>, vector<10x16xf32> -> vector<10x16xf32>
    %552 = vector.extract_strided_slice %4 {offsets = [4, 0], sizes = [1, 16], strides = [1, 1]} : vector<21x24xf32> to vector<1x16xf32>
    %553 = vector.broadcast %552 : vector<1x16xf32> to vector<10x16xf32>
    %554 = arith.addf %551, %553 : vector<10x16xf32>
    %cst_156 = arith.constant 0.000000e+00 : f32
    %555 = vector.broadcast %cst_156 : f32 to vector<10x16xf32>
    %556 = arith.maximumf %554, %555 : vector<10x16xf32>
    %557 = vector.extract_strided_slice %3 {offsets = [24, 0], sizes = [16, 8], strides = [1, 1]} : vector<104x24xf32> to vector<16x8xf32>
    %cst_157 = arith.constant dense<0.000000e+00> : vector<10x8xf32>
    %558 = tpu.matmul %556, %557, %cst_157 {dimension_numbers = #tpu.dot_dimension_numbers<[1], [0], [0], [1], [0, 0, 1, 1], [], []>} : vector<10x16xf32>, vector<16x8xf32>, vector<10x8xf32> -> vector<10x8xf32>
    %559 = vector.extract_strided_slice %4 {offsets = [5, 0], sizes = [1, 8], strides = [1, 1]} : vector<21x24xf32> to vector<1x8xf32>
    %560 = vector.broadcast %559 : vector<1x8xf32> to vector<10x8xf32>
    %561 = arith.addf %558, %560 : vector<10x8xf32>
    %562 = arith.addf %549, %561 : vector<10x8xf32>
    %cst_158 = arith.constant dense<0.000000e+00> : vector<10xf32>
    %563 = vector.multi_reduction <add>, %562, %cst_158 [1] : vector<10x8xf32> to vector<10xf32>
    %564 = vector.shape_cast %563 : vector<10xf32> to vector<10x1xf32>
    %cst_159 = arith.constant 8.000000e+00 : f32
    %565 = vector.broadcast %cst_159 : f32 to vector<10x1xf32>
    %566 = arith.divf %564, %565 : vector<10x1xf32>
    %567 = vector.broadcast %566 : vector<10x1xf32> to vector<10x8xf32>
    %568 = arith.subf %562, %567 : vector<10x8xf32>
    %569 = arith.mulf %568, %568 : vector<10x8xf32>
    %cst_160 = arith.constant dense<0.000000e+00> : vector<10xf32>
    %570 = vector.multi_reduction <add>, %569, %cst_160 [1] : vector<10x8xf32> to vector<10xf32>
    %571 = vector.shape_cast %570 : vector<10xf32> to vector<10x1xf32>
    %cst_161 = arith.constant 8.000000e+00 : f32
    %572 = vector.broadcast %cst_161 : f32 to vector<10x1xf32>
    %573 = arith.divf %571, %572 : vector<10x1xf32>
    %cst_162 = arith.constant 9.99999974E-6 : f32
    %574 = vector.broadcast %cst_162 : f32 to vector<10x1xf32>
    %575 = arith.addf %573, %574 : vector<10x1xf32>
    %576 = math.rsqrt %575 : vector<10x1xf32>
    %577 = vector.broadcast %576 : vector<10x1xf32> to vector<10x8xf32>
    %578 = arith.mulf %568, %577 : vector<10x8xf32>
    %579 = vector.extract_strided_slice %4 {offsets = [6, 0], sizes = [1, 8], strides = [1, 1]} : vector<21x24xf32> to vector<1x8xf32>
    %580 = vector.broadcast %579 : vector<1x8xf32> to vector<10x8xf32>
    %581 = arith.mulf %578, %580 : vector<10x8xf32>
    %582 = vector.extract_strided_slice %4 {offsets = [7, 0], sizes = [1, 8], strides = [1, 1]} : vector<21x24xf32> to vector<1x8xf32>
    %583 = vector.broadcast %582 : vector<1x8xf32> to vector<10x8xf32>
    %584 = arith.addf %581, %583 : vector<10x8xf32>
    %585 = tpu.concatenate %6, %6 in 1 : vector<1x4xf32>, vector<1x4xf32> -> vector<1x8xf32>
    %586 = vector.extract_strided_slice %3 {offsets = [40, 0], sizes = [8, 24], strides = [1, 1]} : vector<104x24xf32> to vector<8x24xf32>
    %587 = vector.extract_strided_slice %4 {offsets = [8, 0], sizes = [1, 24], strides = [1, 1]} : vector<21x24xf32> to vector<1x24xf32>
    %588 = vector.extract_strided_slice %3 {offsets = [48, 0], sizes = [8, 8], strides = [1, 1]} : vector<104x24xf32> to vector<8x8xf32>
    %589 = vector.extract_strided_slice %4 {offsets = [9, 0], sizes = [1, 8], strides = [1, 1]} : vector<21x24xf32> to vector<1x8xf32>
    %cst_163 = arith.constant dense<0.000000e+00> : vector<1x24xf32>
    %590 = tpu.matmul %585, %586, %cst_163 {dimension_numbers = #tpu.dot_dimension_numbers<[1], [0], [0], [1], [0, 0, 1, 1], [], []>} : vector<1x8xf32>, vector<8x24xf32>, vector<1x24xf32> -> vector<1x24xf32>
    %591 = arith.addf %590, %587 : vector<1x24xf32>
    %592 = vector.extract_strided_slice %591 {offsets = [0, 0], sizes = [1, 8], strides = [1, 1]} : vector<1x24xf32> to vector<1x8xf32>
    %593 = vector.extract_strided_slice %591 {offsets = [0, 8], sizes = [1, 8], strides = [1, 1]} : vector<1x24xf32> to vector<1x8xf32>
    %594 = vector.extract_strided_slice %591 {offsets = [0, 16], sizes = [1, 8], strides = [1, 1]} : vector<1x24xf32> to vector<1x8xf32>
    %cst_164 = arith.constant 0.000000e+00 : f32
    %595 = vector.broadcast %cst_164 : f32 to vector<1x8xf32>
    %596 = vector.extract_strided_slice %592 {offsets = [0, 0], sizes = [1, 2], strides = [1, 1]} : vector<1x8xf32> to vector<1x2xf32>
    %597 = vector.extract_strided_slice %593 {offsets = [0, 0], sizes = [1, 2], strides = [1, 1]} : vector<1x8xf32> to vector<1x2xf32>
    %598 = vector.extract_strided_slice %594 {offsets = [0, 0], sizes = [1, 2], strides = [1, 1]} : vector<1x8xf32> to vector<1x2xf32>
    %cst_165 = arith.constant dense<0.000000e+00> : vector<1x1xf32>
    %599 = tpu.matmul %596, %597, %cst_165 {dimension_numbers = #tpu.dot_dimension_numbers<[1], [1], [0], [0], [0, 0, 1, 0], [], []>} : vector<1x2xf32>, vector<1x2xf32>, vector<1x1xf32> -> vector<1x1xf32>
    %cst_166 = arith.constant 0.707106769 : f32
    %600 = vector.broadcast %cst_166 : f32 to vector<1x1xf32>
    %601 = arith.mulf %599, %600 : vector<1x1xf32>
    %cst_167 = arith.constant dense<0xFF800000> : vector<1xf32>
    %602 = vector.multi_reduction <maximumf>, %601, %cst_167 [1] : vector<1x1xf32> to vector<1xf32>
    %603 = vector.shape_cast %602 : vector<1xf32> to vector<1x1xf32>
    %604 = arith.subf %601, %603 : vector<1x1xf32>
    %605 = math.exp %604 : vector<1x1xf32>
    %cst_168 = arith.constant dense<0.000000e+00> : vector<1xf32>
    %606 = vector.multi_reduction <add>, %605, %cst_168 [1] : vector<1x1xf32> to vector<1xf32>
    %607 = vector.shape_cast %606 : vector<1xf32> to vector<1x1xf32>
    %608 = tpu.reciprocal %607 {approx = true} : vector<1x1xf32> -> vector<1x1xf32>
    %609 = arith.mulf %605, %608 : vector<1x1xf32>
    %cst_169 = arith.constant dense<0.000000e+00> : vector<1x2xf32>
    %610 = tpu.matmul %609, %598, %cst_169 {dimension_numbers = #tpu.dot_dimension_numbers<[1], [0], [0], [1], [0, 0, 1, 1], [], []>} : vector<1x1xf32>, vector<1x2xf32>, vector<1x2xf32> -> vector<1x2xf32>
    %611 = vector.extract_strided_slice %588 {offsets = [0, 0], sizes = [2, 8], strides = [1, 1]} : vector<8x8xf32> to vector<2x8xf32>
    %cst_170 = arith.constant dense<0.000000e+00> : vector<1x8xf32>
    %612 = tpu.matmul %610, %611, %cst_170 {dimension_numbers = #tpu.dot_dimension_numbers<[1], [0], [0], [1], [0, 0, 1, 1], [], []>} : vector<1x2xf32>, vector<2x8xf32>, vector<1x8xf32> -> vector<1x8xf32>
    %613 = arith.addf %595, %612 : vector<1x8xf32>
    %614 = vector.extract_strided_slice %592 {offsets = [0, 2], sizes = [1, 2], strides = [1, 1]} : vector<1x8xf32> to vector<1x2xf32>
    %615 = vector.extract_strided_slice %593 {offsets = [0, 2], sizes = [1, 2], strides = [1, 1]} : vector<1x8xf32> to vector<1x2xf32>
    %616 = vector.extract_strided_slice %594 {offsets = [0, 2], sizes = [1, 2], strides = [1, 1]} : vector<1x8xf32> to vector<1x2xf32>
    %cst_171 = arith.constant dense<0.000000e+00> : vector<1x1xf32>
    %617 = tpu.matmul %614, %615, %cst_171 {dimension_numbers = #tpu.dot_dimension_numbers<[1], [1], [0], [0], [0, 0, 1, 0], [], []>} : vector<1x2xf32>, vector<1x2xf32>, vector<1x1xf32> -> vector<1x1xf32>
    %cst_172 = arith.constant 0.707106769 : f32
    %618 = vector.broadcast %cst_172 : f32 to vector<1x1xf32>
    %619 = arith.mulf %617, %618 : vector<1x1xf32>
    %cst_173 = arith.constant dense<0xFF800000> : vector<1xf32>
    %620 = vector.multi_reduction <maximumf>, %619, %cst_173 [1] : vector<1x1xf32> to vector<1xf32>
    %621 = vector.shape_cast %620 : vector<1xf32> to vector<1x1xf32>
    %622 = arith.subf %619, %621 : vector<1x1xf32>
    %623 = math.exp %622 : vector<1x1xf32>
    %cst_174 = arith.constant dense<0.000000e+00> : vector<1xf32>
    %624 = vector.multi_reduction <add>, %623, %cst_174 [1] : vector<1x1xf32> to vector<1xf32>
    %625 = vector.shape_cast %624 : vector<1xf32> to vector<1x1xf32>
    %626 = tpu.reciprocal %625 {approx = true} : vector<1x1xf32> -> vector<1x1xf32>
    %627 = arith.mulf %623, %626 : vector<1x1xf32>
    %cst_175 = arith.constant dense<0.000000e+00> : vector<1x2xf32>
    %628 = tpu.matmul %627, %616, %cst_175 {dimension_numbers = #tpu.dot_dimension_numbers<[1], [0], [0], [1], [0, 0, 1, 1], [], []>} : vector<1x1xf32>, vector<1x2xf32>, vector<1x2xf32> -> vector<1x2xf32>
    %629 = vector.extract_strided_slice %588 {offsets = [2, 0], sizes = [2, 8], strides = [1, 1]} : vector<8x8xf32> to vector<2x8xf32>
    %cst_176 = arith.constant dense<0.000000e+00> : vector<1x8xf32>
    %630 = tpu.matmul %628, %629, %cst_176 {dimension_numbers = #tpu.dot_dimension_numbers<[1], [0], [0], [1], [0, 0, 1, 1], [], []>} : vector<1x2xf32>, vector<2x8xf32>, vector<1x8xf32> -> vector<1x8xf32>
    %631 = arith.addf %613, %630 : vector<1x8xf32>
    %632 = vector.extract_strided_slice %592 {offsets = [0, 4], sizes = [1, 2], strides = [1, 1]} : vector<1x8xf32> to vector<1x2xf32>
    %633 = vector.extract_strided_slice %593 {offsets = [0, 4], sizes = [1, 2], strides = [1, 1]} : vector<1x8xf32> to vector<1x2xf32>
    %634 = vector.extract_strided_slice %594 {offsets = [0, 4], sizes = [1, 2], strides = [1, 1]} : vector<1x8xf32> to vector<1x2xf32>
    %cst_177 = arith.constant dense<0.000000e+00> : vector<1x1xf32>
    %635 = tpu.matmul %632, %633, %cst_177 {dimension_numbers = #tpu.dot_dimension_numbers<[1], [1], [0], [0], [0, 0, 1, 0], [], []>} : vector<1x2xf32>, vector<1x2xf32>, vector<1x1xf32> -> vector<1x1xf32>
    %cst_178 = arith.constant 0.707106769 : f32
    %636 = vector.broadcast %cst_178 : f32 to vector<1x1xf32>
    %637 = arith.mulf %635, %636 : vector<1x1xf32>
    %cst_179 = arith.constant dense<0xFF800000> : vector<1xf32>
    %638 = vector.multi_reduction <maximumf>, %637, %cst_179 [1] : vector<1x1xf32> to vector<1xf32>
    %639 = vector.shape_cast %638 : vector<1xf32> to vector<1x1xf32>
    %640 = arith.subf %637, %639 : vector<1x1xf32>
    %641 = math.exp %640 : vector<1x1xf32>
    %cst_180 = arith.constant dense<0.000000e+00> : vector<1xf32>
    %642 = vector.multi_reduction <add>, %641, %cst_180 [1] : vector<1x1xf32> to vector<1xf32>
    %643 = vector.shape_cast %642 : vector<1xf32> to vector<1x1xf32>
    %644 = tpu.reciprocal %643 {approx = true} : vector<1x1xf32> -> vector<1x1xf32>
    %645 = arith.mulf %641, %644 : vector<1x1xf32>
    %cst_181 = arith.constant dense<0.000000e+00> : vector<1x2xf32>
    %646 = tpu.matmul %645, %634, %cst_181 {dimension_numbers = #tpu.dot_dimension_numbers<[1], [0], [0], [1], [0, 0, 1, 1], [], []>} : vector<1x1xf32>, vector<1x2xf32>, vector<1x2xf32> -> vector<1x2xf32>
    %647 = vector.extract_strided_slice %588 {offsets = [4, 0], sizes = [2, 8], strides = [1, 1]} : vector<8x8xf32> to vector<2x8xf32>
    %cst_182 = arith.constant dense<0.000000e+00> : vector<1x8xf32>
    %648 = tpu.matmul %646, %647, %cst_182 {dimension_numbers = #tpu.dot_dimension_numbers<[1], [0], [0], [1], [0, 0, 1, 1], [], []>} : vector<1x2xf32>, vector<2x8xf32>, vector<1x8xf32> -> vector<1x8xf32>
    %649 = arith.addf %631, %648 : vector<1x8xf32>
    %650 = vector.extract_strided_slice %592 {offsets = [0, 6], sizes = [1, 2], strides = [1, 1]} : vector<1x8xf32> to vector<1x2xf32>
    %651 = vector.extract_strided_slice %593 {offsets = [0, 6], sizes = [1, 2], strides = [1, 1]} : vector<1x8xf32> to vector<1x2xf32>
    %652 = vector.extract_strided_slice %594 {offsets = [0, 6], sizes = [1, 2], strides = [1, 1]} : vector<1x8xf32> to vector<1x2xf32>
    %cst_183 = arith.constant dense<0.000000e+00> : vector<1x1xf32>
    %653 = tpu.matmul %650, %651, %cst_183 {dimension_numbers = #tpu.dot_dimension_numbers<[1], [1], [0], [0], [0, 0, 1, 0], [], []>} : vector<1x2xf32>, vector<1x2xf32>, vector<1x1xf32> -> vector<1x1xf32>
    %cst_184 = arith.constant 0.707106769 : f32
    %654 = vector.broadcast %cst_184 : f32 to vector<1x1xf32>
    %655 = arith.mulf %653, %654 : vector<1x1xf32>
    %cst_185 = arith.constant dense<0xFF800000> : vector<1xf32>
    %656 = vector.multi_reduction <maximumf>, %655, %cst_185 [1] : vector<1x1xf32> to vector<1xf32>
    %657 = vector.shape_cast %656 : vector<1xf32> to vector<1x1xf32>
    %658 = arith.subf %655, %657 : vector<1x1xf32>
    %659 = math.exp %658 : vector<1x1xf32>
    %cst_186 = arith.constant dense<0.000000e+00> : vector<1xf32>
    %660 = vector.multi_reduction <add>, %659, %cst_186 [1] : vector<1x1xf32> to vector<1xf32>
    %661 = vector.shape_cast %660 : vector<1xf32> to vector<1x1xf32>
    %662 = tpu.reciprocal %661 {approx = true} : vector<1x1xf32> -> vector<1x1xf32>
    %663 = arith.mulf %659, %662 : vector<1x1xf32>
    %cst_187 = arith.constant dense<0.000000e+00> : vector<1x2xf32>
    %664 = tpu.matmul %663, %652, %cst_187 {dimension_numbers = #tpu.dot_dimension_numbers<[1], [0], [0], [1], [0, 0, 1, 1], [], []>} : vector<1x1xf32>, vector<1x2xf32>, vector<1x2xf32> -> vector<1x2xf32>
    %665 = vector.extract_strided_slice %588 {offsets = [6, 0], sizes = [2, 8], strides = [1, 1]} : vector<8x8xf32> to vector<2x8xf32>
    %cst_188 = arith.constant dense<0.000000e+00> : vector<1x8xf32>
    %666 = tpu.matmul %664, %665, %cst_188 {dimension_numbers = #tpu.dot_dimension_numbers<[1], [0], [0], [1], [0, 0, 1, 1], [], []>} : vector<1x2xf32>, vector<2x8xf32>, vector<1x8xf32> -> vector<1x8xf32>
    %667 = arith.addf %649, %666 : vector<1x8xf32>
    %668 = arith.addf %667, %589 : vector<1x8xf32>
    %669 = arith.addf %585, %668 : vector<1x8xf32>
    %cst_189 = arith.constant dense<0.000000e+00> : vector<1xf32>
    %670 = vector.multi_reduction <add>, %669, %cst_189 [1] : vector<1x8xf32> to vector<1xf32>
    %671 = vector.shape_cast %670 : vector<1xf32> to vector<1x1xf32>
    %cst_190 = arith.constant 8.000000e+00 : f32
    %672 = vector.broadcast %cst_190 : f32 to vector<1x1xf32>
    %673 = arith.divf %671, %672 : vector<1x1xf32>
    %674 = vector.broadcast %673 : vector<1x1xf32> to vector<1x8xf32>
    %675 = arith.subf %669, %674 : vector<1x8xf32>
    %676 = arith.mulf %675, %675 : vector<1x8xf32>
    %cst_191 = arith.constant dense<0.000000e+00> : vector<1xf32>
    %677 = vector.multi_reduction <add>, %676, %cst_191 [1] : vector<1x8xf32> to vector<1xf32>
    %678 = vector.shape_cast %677 : vector<1xf32> to vector<1x1xf32>
    %cst_192 = arith.constant 8.000000e+00 : f32
    %679 = vector.broadcast %cst_192 : f32 to vector<1x1xf32>
    %680 = arith.divf %678, %679 : vector<1x1xf32>
    %cst_193 = arith.constant 9.99999974E-6 : f32
    %681 = vector.broadcast %cst_193 : f32 to vector<1x1xf32>
    %682 = arith.addf %680, %681 : vector<1x1xf32>
    %683 = math.rsqrt %682 : vector<1x1xf32>
    %684 = vector.broadcast %683 : vector<1x1xf32> to vector<1x8xf32>
    %685 = arith.mulf %675, %684 : vector<1x8xf32>
    %686 = vector.extract_strided_slice %4 {offsets = [10, 0], sizes = [1, 8], strides = [1, 1]} : vector<21x24xf32> to vector<1x8xf32>
    %687 = arith.mulf %685, %686 : vector<1x8xf32>
    %688 = vector.extract_strided_slice %4 {offsets = [11, 0], sizes = [1, 8], strides = [1, 1]} : vector<21x24xf32> to vector<1x8xf32>
    %689 = arith.addf %687, %688 : vector<1x8xf32>
    %690 = vector.extract_strided_slice %3 {offsets = [56, 0], sizes = [8, 24], strides = [1, 1]} : vector<104x24xf32> to vector<8x24xf32>
    %691 = vector.extract_strided_slice %4 {offsets = [12, 0], sizes = [1, 24], strides = [1, 1]} : vector<21x24xf32> to vector<1x24xf32>
    %692 = vector.extract_strided_slice %3 {offsets = [64, 0], sizes = [8, 8], strides = [1, 1]} : vector<104x24xf32> to vector<8x8xf32>
    %693 = vector.extract_strided_slice %4 {offsets = [13, 0], sizes = [1, 8], strides = [1, 1]} : vector<21x24xf32> to vector<1x8xf32>
    %694 = vector.extract_strided_slice %690 {offsets = [0, 0], sizes = [8, 8], strides = [1, 1]} : vector<8x24xf32> to vector<8x8xf32>
    %cst_194 = arith.constant dense<0.000000e+00> : vector<1x8xf32>
    %695 = tpu.matmul %689, %694, %cst_194 {dimension_numbers = #tpu.dot_dimension_numbers<[1], [0], [0], [1], [0, 0, 1, 1], [], []>} : vector<1x8xf32>, vector<8x8xf32>, vector<1x8xf32> -> vector<1x8xf32>
    %696 = vector.extract_strided_slice %691 {offsets = [0, 0], sizes = [1, 8], strides = [1, 1]} : vector<1x24xf32> to vector<1x8xf32>
    %697 = arith.addf %695, %696 : vector<1x8xf32>
    %698 = vector.extract_strided_slice %690 {offsets = [0, 8], sizes = [8, 16], strides = [1, 1]} : vector<8x24xf32> to vector<8x16xf32>
    %cst_195 = arith.constant dense<0.000000e+00> : vector<10x16xf32>
    %699 = tpu.matmul %584, %698, %cst_195 {dimension_numbers = #tpu.dot_dimension_numbers<[1], [0], [0], [1], [0, 0, 1, 1], [], []>} : vector<10x8xf32>, vector<8x16xf32>, vector<10x16xf32> -> vector<10x16xf32>
    %700 = vector.extract_strided_slice %691 {offsets = [0, 8], sizes = [1, 16], strides = [1, 1]} : vector<1x24xf32> to vector<1x16xf32>
    %701 = vector.broadcast %700 : vector<1x16xf32> to vector<10x16xf32>
    %702 = arith.addf %699, %701 : vector<10x16xf32>
    %703 = vector.extract_strided_slice %702 {offsets = [0, 0], sizes = [10, 8], strides = [1, 1]} : vector<10x16xf32> to vector<10x8xf32>
    %704 = vector.extract_strided_slice %702 {offsets = [0, 8], sizes = [10, 8], strides = [1, 1]} : vector<10x16xf32> to vector<10x8xf32>
    %cst_196 = arith.constant 0.000000e+00 : f32
    %705 = vector.broadcast %cst_196 : f32 to vector<1x8xf32>
    %706 = vector.extract_strided_slice %697 {offsets = [0, 0], sizes = [1, 2], strides = [1, 1]} : vector<1x8xf32> to vector<1x2xf32>
    %707 = vector.extract_strided_slice %703 {offsets = [0, 0], sizes = [10, 2], strides = [1, 1]} : vector<10x8xf32> to vector<10x2xf32>
    %708 = vector.extract_strided_slice %704 {offsets = [0, 0], sizes = [10, 2], strides = [1, 1]} : vector<10x8xf32> to vector<10x2xf32>
    %cst_197 = arith.constant dense<0.000000e+00> : vector<1x10xf32>
    %709 = tpu.matmul %706, %707, %cst_197 {dimension_numbers = #tpu.dot_dimension_numbers<[1], [1], [0], [0], [0, 0, 1, 0], [], []>} : vector<1x2xf32>, vector<10x2xf32>, vector<1x10xf32> -> vector<1x10xf32>
    %cst_198 = arith.constant 0.707106769 : f32
    %710 = vector.broadcast %cst_198 : f32 to vector<1x10xf32>
    %711 = arith.mulf %709, %710 : vector<1x10xf32>
    %cst_199 = arith.constant dense<0xFF800000> : vector<1xf32>
    %712 = vector.multi_reduction <maximumf>, %711, %cst_199 [1] : vector<1x10xf32> to vector<1xf32>
    %713 = vector.shape_cast %712 : vector<1xf32> to vector<1x1xf32>
    %714 = vector.broadcast %713 : vector<1x1xf32> to vector<1x10xf32>
    %715 = arith.subf %711, %714 : vector<1x10xf32>
    %716 = math.exp %715 : vector<1x10xf32>
    %cst_200 = arith.constant dense<0.000000e+00> : vector<1xf32>
    %717 = vector.multi_reduction <add>, %716, %cst_200 [1] : vector<1x10xf32> to vector<1xf32>
    %718 = vector.shape_cast %717 : vector<1xf32> to vector<1x1xf32>
    %719 = tpu.reciprocal %718 {approx = true} : vector<1x1xf32> -> vector<1x1xf32>
    %720 = vector.broadcast %719 : vector<1x1xf32> to vector<1x10xf32>
    %721 = arith.mulf %716, %720 : vector<1x10xf32>
    %cst_201 = arith.constant dense<0.000000e+00> : vector<1x2xf32>
    %722 = tpu.matmul %721, %708, %cst_201 {dimension_numbers = #tpu.dot_dimension_numbers<[1], [0], [0], [1], [0, 0, 1, 1], [], []>} : vector<1x10xf32>, vector<10x2xf32>, vector<1x2xf32> -> vector<1x2xf32>
    %723 = vector.extract_strided_slice %692 {offsets = [0, 0], sizes = [2, 8], strides = [1, 1]} : vector<8x8xf32> to vector<2x8xf32>
    %cst_202 = arith.constant dense<0.000000e+00> : vector<1x8xf32>
    %724 = tpu.matmul %722, %723, %cst_202 {dimension_numbers = #tpu.dot_dimension_numbers<[1], [0], [0], [1], [0, 0, 1, 1], [], []>} : vector<1x2xf32>, vector<2x8xf32>, vector<1x8xf32> -> vector<1x8xf32>
    %725 = arith.addf %705, %724 : vector<1x8xf32>
    %726 = vector.extract_strided_slice %697 {offsets = [0, 2], sizes = [1, 2], strides = [1, 1]} : vector<1x8xf32> to vector<1x2xf32>
    %727 = vector.extract_strided_slice %703 {offsets = [0, 2], sizes = [10, 2], strides = [1, 1]} : vector<10x8xf32> to vector<10x2xf32>
    %728 = vector.extract_strided_slice %704 {offsets = [0, 2], sizes = [10, 2], strides = [1, 1]} : vector<10x8xf32> to vector<10x2xf32>
    %cst_203 = arith.constant dense<0.000000e+00> : vector<1x10xf32>
    %729 = tpu.matmul %726, %727, %cst_203 {dimension_numbers = #tpu.dot_dimension_numbers<[1], [1], [0], [0], [0, 0, 1, 0], [], []>} : vector<1x2xf32>, vector<10x2xf32>, vector<1x10xf32> -> vector<1x10xf32>
    %cst_204 = arith.constant 0.707106769 : f32
    %730 = vector.broadcast %cst_204 : f32 to vector<1x10xf32>
    %731 = arith.mulf %729, %730 : vector<1x10xf32>
    %cst_205 = arith.constant dense<0xFF800000> : vector<1xf32>
    %732 = vector.multi_reduction <maximumf>, %731, %cst_205 [1] : vector<1x10xf32> to vector<1xf32>
    %733 = vector.shape_cast %732 : vector<1xf32> to vector<1x1xf32>
    %734 = vector.broadcast %733 : vector<1x1xf32> to vector<1x10xf32>
    %735 = arith.subf %731, %734 : vector<1x10xf32>
    %736 = math.exp %735 : vector<1x10xf32>
    %cst_206 = arith.constant dense<0.000000e+00> : vector<1xf32>
    %737 = vector.multi_reduction <add>, %736, %cst_206 [1] : vector<1x10xf32> to vector<1xf32>
    %738 = vector.shape_cast %737 : vector<1xf32> to vector<1x1xf32>
    %739 = tpu.reciprocal %738 {approx = true} : vector<1x1xf32> -> vector<1x1xf32>
    %740 = vector.broadcast %739 : vector<1x1xf32> to vector<1x10xf32>
    %741 = arith.mulf %736, %740 : vector<1x10xf32>
    %cst_207 = arith.constant dense<0.000000e+00> : vector<1x2xf32>
    %742 = tpu.matmul %741, %728, %cst_207 {dimension_numbers = #tpu.dot_dimension_numbers<[1], [0], [0], [1], [0, 0, 1, 1], [], []>} : vector<1x10xf32>, vector<10x2xf32>, vector<1x2xf32> -> vector<1x2xf32>
    %743 = vector.extract_strided_slice %692 {offsets = [2, 0], sizes = [2, 8], strides = [1, 1]} : vector<8x8xf32> to vector<2x8xf32>
    %cst_208 = arith.constant dense<0.000000e+00> : vector<1x8xf32>
    %744 = tpu.matmul %742, %743, %cst_208 {dimension_numbers = #tpu.dot_dimension_numbers<[1], [0], [0], [1], [0, 0, 1, 1], [], []>} : vector<1x2xf32>, vector<2x8xf32>, vector<1x8xf32> -> vector<1x8xf32>
    %745 = arith.addf %725, %744 : vector<1x8xf32>
    %746 = vector.extract_strided_slice %697 {offsets = [0, 4], sizes = [1, 2], strides = [1, 1]} : vector<1x8xf32> to vector<1x2xf32>
    %747 = vector.extract_strided_slice %703 {offsets = [0, 4], sizes = [10, 2], strides = [1, 1]} : vector<10x8xf32> to vector<10x2xf32>
    %748 = vector.extract_strided_slice %704 {offsets = [0, 4], sizes = [10, 2], strides = [1, 1]} : vector<10x8xf32> to vector<10x2xf32>
    %cst_209 = arith.constant dense<0.000000e+00> : vector<1x10xf32>
    %749 = tpu.matmul %746, %747, %cst_209 {dimension_numbers = #tpu.dot_dimension_numbers<[1], [1], [0], [0], [0, 0, 1, 0], [], []>} : vector<1x2xf32>, vector<10x2xf32>, vector<1x10xf32> -> vector<1x10xf32>
    %cst_210 = arith.constant 0.707106769 : f32
    %750 = vector.broadcast %cst_210 : f32 to vector<1x10xf32>
    %751 = arith.mulf %749, %750 : vector<1x10xf32>
    %cst_211 = arith.constant dense<0xFF800000> : vector<1xf32>
    %752 = vector.multi_reduction <maximumf>, %751, %cst_211 [1] : vector<1x10xf32> to vector<1xf32>
    %753 = vector.shape_cast %752 : vector<1xf32> to vector<1x1xf32>
    %754 = vector.broadcast %753 : vector<1x1xf32> to vector<1x10xf32>
    %755 = arith.subf %751, %754 : vector<1x10xf32>
    %756 = math.exp %755 : vector<1x10xf32>
    %cst_212 = arith.constant dense<0.000000e+00> : vector<1xf32>
    %757 = vector.multi_reduction <add>, %756, %cst_212 [1] : vector<1x10xf32> to vector<1xf32>
    %758 = vector.shape_cast %757 : vector<1xf32> to vector<1x1xf32>
    %759 = tpu.reciprocal %758 {approx = true} : vector<1x1xf32> -> vector<1x1xf32>
    %760 = vector.broadcast %759 : vector<1x1xf32> to vector<1x10xf32>
    %761 = arith.mulf %756, %760 : vector<1x10xf32>
    %cst_213 = arith.constant dense<0.000000e+00> : vector<1x2xf32>
    %762 = tpu.matmul %761, %748, %cst_213 {dimension_numbers = #tpu.dot_dimension_numbers<[1], [0], [0], [1], [0, 0, 1, 1], [], []>} : vector<1x10xf32>, vector<10x2xf32>, vector<1x2xf32> -> vector<1x2xf32>
    %763 = vector.extract_strided_slice %692 {offsets = [4, 0], sizes = [2, 8], strides = [1, 1]} : vector<8x8xf32> to vector<2x8xf32>
    %cst_214 = arith.constant dense<0.000000e+00> : vector<1x8xf32>
    %764 = tpu.matmul %762, %763, %cst_214 {dimension_numbers = #tpu.dot_dimension_numbers<[1], [0], [0], [1], [0, 0, 1, 1], [], []>} : vector<1x2xf32>, vector<2x8xf32>, vector<1x8xf32> -> vector<1x8xf32>
    %765 = arith.addf %745, %764 : vector<1x8xf32>
    %766 = vector.extract_strided_slice %697 {offsets = [0, 6], sizes = [1, 2], strides = [1, 1]} : vector<1x8xf32> to vector<1x2xf32>
    %767 = vector.extract_strided_slice %703 {offsets = [0, 6], sizes = [10, 2], strides = [1, 1]} : vector<10x8xf32> to vector<10x2xf32>
    %768 = vector.extract_strided_slice %704 {offsets = [0, 6], sizes = [10, 2], strides = [1, 1]} : vector<10x8xf32> to vector<10x2xf32>
    %cst_215 = arith.constant dense<0.000000e+00> : vector<1x10xf32>
    %769 = tpu.matmul %766, %767, %cst_215 {dimension_numbers = #tpu.dot_dimension_numbers<[1], [1], [0], [0], [0, 0, 1, 0], [], []>} : vector<1x2xf32>, vector<10x2xf32>, vector<1x10xf32> -> vector<1x10xf32>
    %cst_216 = arith.constant 0.707106769 : f32
    %770 = vector.broadcast %cst_216 : f32 to vector<1x10xf32>
    %771 = arith.mulf %769, %770 : vector<1x10xf32>
    %cst_217 = arith.constant dense<0xFF800000> : vector<1xf32>
    %772 = vector.multi_reduction <maximumf>, %771, %cst_217 [1] : vector<1x10xf32> to vector<1xf32>
    %773 = vector.shape_cast %772 : vector<1xf32> to vector<1x1xf32>
    %774 = vector.broadcast %773 : vector<1x1xf32> to vector<1x10xf32>
    %775 = arith.subf %771, %774 : vector<1x10xf32>
    %776 = math.exp %775 : vector<1x10xf32>
    %cst_218 = arith.constant dense<0.000000e+00> : vector<1xf32>
    %777 = vector.multi_reduction <add>, %776, %cst_218 [1] : vector<1x10xf32> to vector<1xf32>
    %778 = vector.shape_cast %777 : vector<1xf32> to vector<1x1xf32>
    %779 = tpu.reciprocal %778 {approx = true} : vector<1x1xf32> -> vector<1x1xf32>
    %780 = vector.broadcast %779 : vector<1x1xf32> to vector<1x10xf32>
    %781 = arith.mulf %776, %780 : vector<1x10xf32>
    %cst_219 = arith.constant dense<0.000000e+00> : vector<1x2xf32>
    %782 = tpu.matmul %781, %768, %cst_219 {dimension_numbers = #tpu.dot_dimension_numbers<[1], [0], [0], [1], [0, 0, 1, 1], [], []>} : vector<1x10xf32>, vector<10x2xf32>, vector<1x2xf32> -> vector<1x2xf32>
    %783 = vector.extract_strided_slice %692 {offsets = [6, 0], sizes = [2, 8], strides = [1, 1]} : vector<8x8xf32> to vector<2x8xf32>
    %cst_220 = arith.constant dense<0.000000e+00> : vector<1x8xf32>
    %784 = tpu.matmul %782, %783, %cst_220 {dimension_numbers = #tpu.dot_dimension_numbers<[1], [0], [0], [1], [0, 0, 1, 1], [], []>} : vector<1x2xf32>, vector<2x8xf32>, vector<1x8xf32> -> vector<1x8xf32>
    %785 = arith.addf %765, %784 : vector<1x8xf32>
    %786 = arith.addf %785, %693 : vector<1x8xf32>
    %787 = arith.addf %689, %786 : vector<1x8xf32>
    %cst_221 = arith.constant dense<0.000000e+00> : vector<1xf32>
    %788 = vector.multi_reduction <add>, %787, %cst_221 [1] : vector<1x8xf32> to vector<1xf32>
    %789 = vector.shape_cast %788 : vector<1xf32> to vector<1x1xf32>
    %cst_222 = arith.constant 8.000000e+00 : f32
    %790 = vector.broadcast %cst_222 : f32 to vector<1x1xf32>
    %791 = arith.divf %789, %790 : vector<1x1xf32>
    %792 = vector.broadcast %791 : vector<1x1xf32> to vector<1x8xf32>
    %793 = arith.subf %787, %792 : vector<1x8xf32>
    %794 = arith.mulf %793, %793 : vector<1x8xf32>
    %cst_223 = arith.constant dense<0.000000e+00> : vector<1xf32>
    %795 = vector.multi_reduction <add>, %794, %cst_223 [1] : vector<1x8xf32> to vector<1xf32>
    %796 = vector.shape_cast %795 : vector<1xf32> to vector<1x1xf32>
    %cst_224 = arith.constant 8.000000e+00 : f32
    %797 = vector.broadcast %cst_224 : f32 to vector<1x1xf32>
    %798 = arith.divf %796, %797 : vector<1x1xf32>
    %cst_225 = arith.constant 9.99999974E-6 : f32
    %799 = vector.broadcast %cst_225 : f32 to vector<1x1xf32>
    %800 = arith.addf %798, %799 : vector<1x1xf32>
    %801 = math.rsqrt %800 : vector<1x1xf32>
    %802 = vector.broadcast %801 : vector<1x1xf32> to vector<1x8xf32>
    %803 = arith.mulf %793, %802 : vector<1x8xf32>
    %804 = vector.extract_strided_slice %4 {offsets = [14, 0], sizes = [1, 8], strides = [1, 1]} : vector<21x24xf32> to vector<1x8xf32>
    %805 = arith.mulf %803, %804 : vector<1x8xf32>
    %806 = vector.extract_strided_slice %4 {offsets = [15, 0], sizes = [1, 8], strides = [1, 1]} : vector<21x24xf32> to vector<1x8xf32>
    %807 = arith.addf %805, %806 : vector<1x8xf32>
    %808 = vector.extract_strided_slice %3 {offsets = [72, 0], sizes = [8, 16], strides = [1, 1]} : vector<104x24xf32> to vector<8x16xf32>
    %cst_226 = arith.constant dense<0.000000e+00> : vector<1x16xf32>
    %809 = tpu.matmul %807, %808, %cst_226 {dimension_numbers = #tpu.dot_dimension_numbers<[1], [0], [0], [1], [0, 0, 1, 1], [], []>} : vector<1x8xf32>, vector<8x16xf32>, vector<1x16xf32> -> vector<1x16xf32>
    %810 = vector.extract_strided_slice %4 {offsets = [16, 0], sizes = [1, 16], strides = [1, 1]} : vector<21x24xf32> to vector<1x16xf32>
    %811 = arith.addf %809, %810 : vector<1x16xf32>
    %cst_227 = arith.constant 0.000000e+00 : f32
    %812 = vector.broadcast %cst_227 : f32 to vector<1x16xf32>
    %813 = arith.maximumf %811, %812 : vector<1x16xf32>
    %814 = vector.extract_strided_slice %3 {offsets = [80, 0], sizes = [16, 8], strides = [1, 1]} : vector<104x24xf32> to vector<16x8xf32>
    %cst_228 = arith.constant dense<0.000000e+00> : vector<1x8xf32>
    %815 = tpu.matmul %813, %814, %cst_228 {dimension_numbers = #tpu.dot_dimension_numbers<[1], [0], [0], [1], [0, 0, 1, 1], [], []>} : vector<1x16xf32>, vector<16x8xf32>, vector<1x8xf32> -> vector<1x8xf32>
    %816 = vector.extract_strided_slice %4 {offsets = [17, 0], sizes = [1, 8], strides = [1, 1]} : vector<21x24xf32> to vector<1x8xf32>
    %817 = arith.addf %815, %816 : vector<1x8xf32>
    %818 = arith.addf %807, %817 : vector<1x8xf32>
    %cst_229 = arith.constant dense<0.000000e+00> : vector<1xf32>
    %819 = vector.multi_reduction <add>, %818, %cst_229 [1] : vector<1x8xf32> to vector<1xf32>
    %820 = vector.shape_cast %819 : vector<1xf32> to vector<1x1xf32>
    %cst_230 = arith.constant 8.000000e+00 : f32
    %821 = vector.broadcast %cst_230 : f32 to vector<1x1xf32>
    %822 = arith.divf %820, %821 : vector<1x1xf32>
    %823 = vector.broadcast %822 : vector<1x1xf32> to vector<1x8xf32>
    %824 = arith.subf %818, %823 : vector<1x8xf32>
    %825 = arith.mulf %824, %824 : vector<1x8xf32>
    %cst_231 = arith.constant dense<0.000000e+00> : vector<1xf32>
    %826 = vector.multi_reduction <add>, %825, %cst_231 [1] : vector<1x8xf32> to vector<1xf32>
    %827 = vector.shape_cast %826 : vector<1xf32> to vector<1x1xf32>
    %cst_232 = arith.constant 8.000000e+00 : f32
    %828 = vector.broadcast %cst_232 : f32 to vector<1x1xf32>
    %829 = arith.divf %827, %828 : vector<1x1xf32>
    %cst_233 = arith.constant 9.99999974E-6 : f32
    %830 = vector.broadcast %cst_233 : f32 to vector<1x1xf32>
    %831 = arith.addf %829, %830 : vector<1x1xf32>
    %832 = math.rsqrt %831 : vector<1x1xf32>
    %833 = vector.broadcast %832 : vector<1x1xf32> to vector<1x8xf32>
    %834 = arith.mulf %824, %833 : vector<1x8xf32>
    %835 = vector.extract_strided_slice %4 {offsets = [18, 0], sizes = [1, 8], strides = [1, 1]} : vector<21x24xf32> to vector<1x8xf32>
    %836 = arith.mulf %834, %835 : vector<1x8xf32>
    %837 = vector.extract_strided_slice %4 {offsets = [19, 0], sizes = [1, 8], strides = [1, 1]} : vector<21x24xf32> to vector<1x8xf32>
    %838 = arith.addf %836, %837 : vector<1x8xf32>
    %839 = vector.extract_strided_slice %3 {offsets = [96, 0], sizes = [8, 4], strides = [1, 1]} : vector<104x24xf32> to vector<8x4xf32>
    %cst_234 = arith.constant dense<0.000000e+00> : vector<1x4xf32>
    %840 = tpu.matmul %838, %839, %cst_234 {dimension_numbers = #tpu.dot_dimension_numbers<[1], [0], [0], [1], [0, 0, 1, 1], [], []>} : vector<1x8xf32>, vector<8x4xf32>, vector<1x4xf32> -> vector<1x4xf32>
    %841 = vector.extract_strided_slice %4 {offsets = [20, 0], sizes = [1, 4], strides = [1, 1]} : vector<21x24xf32> to vector<1x4xf32>
    %842 = arith.addf %840, %841 : vector<1x4xf32>
    %cst_235 = arith.constant 0.000000e+00 : f32
    %843 = vector.broadcast %cst_235 : f32 to vector<1x4xf32>
    %844 = arith.subf %843, %842 : vector<1x4xf32>
    %845 = math.exp %844 : vector<1x4xf32>
    %cst_236 = arith.constant 1.000000e+00 : f32
    %846 = vector.broadcast %cst_236 : f32 to vector<1x4xf32>
    %847 = arith.addf %846, %845 : vector<1x4xf32>
    %848 = tpu.reciprocal %847 {approx = true} : vector<1x4xf32> -> vector<1x4xf32>
    %849 = vector.extract_strided_slice %0 {offsets = [0, 4], sizes = [10, 4], strides = [1, 1]} : vector<10x8xf32> to vector<10x4xf32>
    %850 = vector.extract_strided_slice %1 {offsets = [0, 4], sizes = [1, 4], strides = [1, 1]} : vector<1x8xf32> to vector<1x4xf32>
    %cst_237 = arith.constant 0.000000e+00 : f32
    %851 = vector.broadcast %cst_237 : f32 to vector<10x4xf32>
    %852 = tpu.concatenate %849, %851 in 1 : vector<10x4xf32>, vector<10x4xf32> -> vector<10x8xf32>
    %cst_238 = arith.constant 2.000000e+00 : f32
    %853 = vector.broadcast %cst_238 : f32 to vector<10x8xf32>
    %854 = arith.mulf %852, %853 : vector<10x8xf32>
    %855 = arith.addf %854, %2 : vector<10x8xf32>
    %856 = vector.extract_strided_slice %3 {offsets = [0, 0], sizes = [8, 24], strides = [1, 1]} : vector<104x24xf32> to vector<8x24xf32>
    %857 = vector.extract_strided_slice %4 {offsets = [0, 0], sizes = [1, 24], strides = [1, 1]} : vector<21x24xf32> to vector<1x24xf32>
    %858 = vector.extract_strided_slice %3 {offsets = [8, 0], sizes = [8, 8], strides = [1, 1]} : vector<104x24xf32> to vector<8x8xf32>
    %859 = vector.extract_strided_slice %4 {offsets = [1, 0], sizes = [1, 8], strides = [1, 1]} : vector<21x24xf32> to vector<1x8xf32>
    %cst_239 = arith.constant dense<0.000000e+00> : vector<10x24xf32>
    %860 = tpu.matmul %855, %856, %cst_239 {dimension_numbers = #tpu.dot_dimension_numbers<[1], [0], [0], [1], [0, 0, 1, 1], [], []>} : vector<10x8xf32>, vector<8x24xf32>, vector<10x24xf32> -> vector<10x24xf32>
    %861 = vector.broadcast %857 : vector<1x24xf32> to vector<10x24xf32>
    %862 = arith.addf %860, %861 : vector<10x24xf32>
    %863 = vector.extract_strided_slice %862 {offsets = [0, 0], sizes = [10, 8], strides = [1, 1]} : vector<10x24xf32> to vector<10x8xf32>
    %864 = vector.extract_strided_slice %862 {offsets = [0, 8], sizes = [10, 8], strides = [1, 1]} : vector<10x24xf32> to vector<10x8xf32>
    %865 = vector.extract_strided_slice %862 {offsets = [0, 16], sizes = [10, 8], strides = [1, 1]} : vector<10x24xf32> to vector<10x8xf32>
    %cst_240 = arith.constant 0.000000e+00 : f32
    %866 = vector.broadcast %cst_240 : f32 to vector<10x8xf32>
    %867 = vector.extract_strided_slice %863 {offsets = [0, 0], sizes = [10, 2], strides = [1, 1]} : vector<10x8xf32> to vector<10x2xf32>
    %868 = vector.extract_strided_slice %864 {offsets = [0, 0], sizes = [10, 2], strides = [1, 1]} : vector<10x8xf32> to vector<10x2xf32>
    %869 = vector.extract_strided_slice %865 {offsets = [0, 0], sizes = [10, 2], strides = [1, 1]} : vector<10x8xf32> to vector<10x2xf32>
    %cst_241 = arith.constant dense<0.000000e+00> : vector<10x10xf32>
    %870 = tpu.matmul %867, %868, %cst_241 {dimension_numbers = #tpu.dot_dimension_numbers<[1], [1], [0], [0], [0, 0, 1, 0], [], []>} : vector<10x2xf32>, vector<10x2xf32>, vector<10x10xf32> -> vector<10x10xf32>
    %cst_242 = arith.constant 0.707106769 : f32
    %871 = vector.broadcast %cst_242 : f32 to vector<10x10xf32>
    %872 = arith.mulf %870, %871 : vector<10x10xf32>
    %cst_243 = arith.constant dense<0xFF800000> : vector<10xf32>
    %873 = vector.multi_reduction <maximumf>, %872, %cst_243 [1] : vector<10x10xf32> to vector<10xf32>
    %874 = vector.shape_cast %873 : vector<10xf32> to vector<10x1xf32>
    %875 = vector.broadcast %874 : vector<10x1xf32> to vector<10x10xf32>
    %876 = arith.subf %872, %875 : vector<10x10xf32>
    %877 = math.exp %876 : vector<10x10xf32>
    %cst_244 = arith.constant dense<0.000000e+00> : vector<10xf32>
    %878 = vector.multi_reduction <add>, %877, %cst_244 [1] : vector<10x10xf32> to vector<10xf32>
    %879 = vector.shape_cast %878 : vector<10xf32> to vector<10x1xf32>
    %880 = tpu.reciprocal %879 {approx = true} : vector<10x1xf32> -> vector<10x1xf32>
    %881 = vector.broadcast %880 : vector<10x1xf32> to vector<10x10xf32>
    %882 = arith.mulf %877, %881 : vector<10x10xf32>
    %cst_245 = arith.constant dense<0.000000e+00> : vector<10x2xf32>
    %883 = tpu.matmul %882, %869, %cst_245 {dimension_numbers = #tpu.dot_dimension_numbers<[1], [0], [0], [1], [0, 0, 1, 1], [], []>} : vector<10x10xf32>, vector<10x2xf32>, vector<10x2xf32> -> vector<10x2xf32>
    %884 = vector.extract_strided_slice %858 {offsets = [0, 0], sizes = [2, 8], strides = [1, 1]} : vector<8x8xf32> to vector<2x8xf32>
    %cst_246 = arith.constant dense<0.000000e+00> : vector<10x8xf32>
    %885 = tpu.matmul %883, %884, %cst_246 {dimension_numbers = #tpu.dot_dimension_numbers<[1], [0], [0], [1], [0, 0, 1, 1], [], []>} : vector<10x2xf32>, vector<2x8xf32>, vector<10x8xf32> -> vector<10x8xf32>
    %886 = arith.addf %866, %885 : vector<10x8xf32>
    %887 = vector.extract_strided_slice %863 {offsets = [0, 2], sizes = [10, 2], strides = [1, 1]} : vector<10x8xf32> to vector<10x2xf32>
    %888 = vector.extract_strided_slice %864 {offsets = [0, 2], sizes = [10, 2], strides = [1, 1]} : vector<10x8xf32> to vector<10x2xf32>
    %889 = vector.extract_strided_slice %865 {offsets = [0, 2], sizes = [10, 2], strides = [1, 1]} : vector<10x8xf32> to vector<10x2xf32>
    %cst_247 = arith.constant dense<0.000000e+00> : vector<10x10xf32>
    %890 = tpu.matmul %887, %888, %cst_247 {dimension_numbers = #tpu.dot_dimension_numbers<[1], [1], [0], [0], [0, 0, 1, 0], [], []>} : vector<10x2xf32>, vector<10x2xf32>, vector<10x10xf32> -> vector<10x10xf32>
    %cst_248 = arith.constant 0.707106769 : f32
    %891 = vector.broadcast %cst_248 : f32 to vector<10x10xf32>
    %892 = arith.mulf %890, %891 : vector<10x10xf32>
    %cst_249 = arith.constant dense<0xFF800000> : vector<10xf32>
    %893 = vector.multi_reduction <maximumf>, %892, %cst_249 [1] : vector<10x10xf32> to vector<10xf32>
    %894 = vector.shape_cast %893 : vector<10xf32> to vector<10x1xf32>
    %895 = vector.broadcast %894 : vector<10x1xf32> to vector<10x10xf32>
    %896 = arith.subf %892, %895 : vector<10x10xf32>
    %897 = math.exp %896 : vector<10x10xf32>
    %cst_250 = arith.constant dense<0.000000e+00> : vector<10xf32>
    %898 = vector.multi_reduction <add>, %897, %cst_250 [1] : vector<10x10xf32> to vector<10xf32>
    %899 = vector.shape_cast %898 : vector<10xf32> to vector<10x1xf32>
    %900 = tpu.reciprocal %899 {approx = true} : vector<10x1xf32> -> vector<10x1xf32>
    %901 = vector.broadcast %900 : vector<10x1xf32> to vector<10x10xf32>
    %902 = arith.mulf %897, %901 : vector<10x10xf32>
    %cst_251 = arith.constant dense<0.000000e+00> : vector<10x2xf32>
    %903 = tpu.matmul %902, %889, %cst_251 {dimension_numbers = #tpu.dot_dimension_numbers<[1], [0], [0], [1], [0, 0, 1, 1], [], []>} : vector<10x10xf32>, vector<10x2xf32>, vector<10x2xf32> -> vector<10x2xf32>
    %904 = vector.extract_strided_slice %858 {offsets = [2, 0], sizes = [2, 8], strides = [1, 1]} : vector<8x8xf32> to vector<2x8xf32>
    %cst_252 = arith.constant dense<0.000000e+00> : vector<10x8xf32>
    %905 = tpu.matmul %903, %904, %cst_252 {dimension_numbers = #tpu.dot_dimension_numbers<[1], [0], [0], [1], [0, 0, 1, 1], [], []>} : vector<10x2xf32>, vector<2x8xf32>, vector<10x8xf32> -> vector<10x8xf32>
    %906 = arith.addf %886, %905 : vector<10x8xf32>
    %907 = vector.extract_strided_slice %863 {offsets = [0, 4], sizes = [10, 2], strides = [1, 1]} : vector<10x8xf32> to vector<10x2xf32>
    %908 = vector.extract_strided_slice %864 {offsets = [0, 4], sizes = [10, 2], strides = [1, 1]} : vector<10x8xf32> to vector<10x2xf32>
    %909 = vector.extract_strided_slice %865 {offsets = [0, 4], sizes = [10, 2], strides = [1, 1]} : vector<10x8xf32> to vector<10x2xf32>
    %cst_253 = arith.constant dense<0.000000e+00> : vector<10x10xf32>
    %910 = tpu.matmul %907, %908, %cst_253 {dimension_numbers = #tpu.dot_dimension_numbers<[1], [1], [0], [0], [0, 0, 1, 0], [], []>} : vector<10x2xf32>, vector<10x2xf32>, vector<10x10xf32> -> vector<10x10xf32>
    %cst_254 = arith.constant 0.707106769 : f32
    %911 = vector.broadcast %cst_254 : f32 to vector<10x10xf32>
    %912 = arith.mulf %910, %911 : vector<10x10xf32>
    %cst_255 = arith.constant dense<0xFF800000> : vector<10xf32>
    %913 = vector.multi_reduction <maximumf>, %912, %cst_255 [1] : vector<10x10xf32> to vector<10xf32>
    %914 = vector.shape_cast %913 : vector<10xf32> to vector<10x1xf32>
    %915 = vector.broadcast %914 : vector<10x1xf32> to vector<10x10xf32>
    %916 = arith.subf %912, %915 : vector<10x10xf32>
    %917 = math.exp %916 : vector<10x10xf32>
    %cst_256 = arith.constant dense<0.000000e+00> : vector<10xf32>
    %918 = vector.multi_reduction <add>, %917, %cst_256 [1] : vector<10x10xf32> to vector<10xf32>
    %919 = vector.shape_cast %918 : vector<10xf32> to vector<10x1xf32>
    %920 = tpu.reciprocal %919 {approx = true} : vector<10x1xf32> -> vector<10x1xf32>
    %921 = vector.broadcast %920 : vector<10x1xf32> to vector<10x10xf32>
    %922 = arith.mulf %917, %921 : vector<10x10xf32>
    %cst_257 = arith.constant dense<0.000000e+00> : vector<10x2xf32>
    %923 = tpu.matmul %922, %909, %cst_257 {dimension_numbers = #tpu.dot_dimension_numbers<[1], [0], [0], [1], [0, 0, 1, 1], [], []>} : vector<10x10xf32>, vector<10x2xf32>, vector<10x2xf32> -> vector<10x2xf32>
    %924 = vector.extract_strided_slice %858 {offsets = [4, 0], sizes = [2, 8], strides = [1, 1]} : vector<8x8xf32> to vector<2x8xf32>
    %cst_258 = arith.constant dense<0.000000e+00> : vector<10x8xf32>
    %925 = tpu.matmul %923, %924, %cst_258 {dimension_numbers = #tpu.dot_dimension_numbers<[1], [0], [0], [1], [0, 0, 1, 1], [], []>} : vector<10x2xf32>, vector<2x8xf32>, vector<10x8xf32> -> vector<10x8xf32>
    %926 = arith.addf %906, %925 : vector<10x8xf32>
    %927 = vector.extract_strided_slice %863 {offsets = [0, 6], sizes = [10, 2], strides = [1, 1]} : vector<10x8xf32> to vector<10x2xf32>
    %928 = vector.extract_strided_slice %864 {offsets = [0, 6], sizes = [10, 2], strides = [1, 1]} : vector<10x8xf32> to vector<10x2xf32>
    %929 = vector.extract_strided_slice %865 {offsets = [0, 6], sizes = [10, 2], strides = [1, 1]} : vector<10x8xf32> to vector<10x2xf32>
    %cst_259 = arith.constant dense<0.000000e+00> : vector<10x10xf32>
    %930 = tpu.matmul %927, %928, %cst_259 {dimension_numbers = #tpu.dot_dimension_numbers<[1], [1], [0], [0], [0, 0, 1, 0], [], []>} : vector<10x2xf32>, vector<10x2xf32>, vector<10x10xf32> -> vector<10x10xf32>
    %cst_260 = arith.constant 0.707106769 : f32
    %931 = vector.broadcast %cst_260 : f32 to vector<10x10xf32>
    %932 = arith.mulf %930, %931 : vector<10x10xf32>
    %cst_261 = arith.constant dense<0xFF800000> : vector<10xf32>
    %933 = vector.multi_reduction <maximumf>, %932, %cst_261 [1] : vector<10x10xf32> to vector<10xf32>
    %934 = vector.shape_cast %933 : vector<10xf32> to vector<10x1xf32>
    %935 = vector.broadcast %934 : vector<10x1xf32> to vector<10x10xf32>
    %936 = arith.subf %932, %935 : vector<10x10xf32>
    %937 = math.exp %936 : vector<10x10xf32>
    %cst_262 = arith.constant dense<0.000000e+00> : vector<10xf32>
    %938 = vector.multi_reduction <add>, %937, %cst_262 [1] : vector<10x10xf32> to vector<10xf32>
    %939 = vector.shape_cast %938 : vector<10xf32> to vector<10x1xf32>
    %940 = tpu.reciprocal %939 {approx = true} : vector<10x1xf32> -> vector<10x1xf32>
    %941 = vector.broadcast %940 : vector<10x1xf32> to vector<10x10xf32>
    %942 = arith.mulf %937, %941 : vector<10x10xf32>
    %cst_263 = arith.constant dense<0.000000e+00> : vector<10x2xf32>
    %943 = tpu.matmul %942, %929, %cst_263 {dimension_numbers = #tpu.dot_dimension_numbers<[1], [0], [0], [1], [0, 0, 1, 1], [], []>} : vector<10x10xf32>, vector<10x2xf32>, vector<10x2xf32> -> vector<10x2xf32>
    %944 = vector.extract_strided_slice %858 {offsets = [6, 0], sizes = [2, 8], strides = [1, 1]} : vector<8x8xf32> to vector<2x8xf32>
    %cst_264 = arith.constant dense<0.000000e+00> : vector<10x8xf32>
    %945 = tpu.matmul %943, %944, %cst_264 {dimension_numbers = #tpu.dot_dimension_numbers<[1], [0], [0], [1], [0, 0, 1, 1], [], []>} : vector<10x2xf32>, vector<2x8xf32>, vector<10x8xf32> -> vector<10x8xf32>
    %946 = arith.addf %926, %945 : vector<10x8xf32>
    %947 = vector.broadcast %859 : vector<1x8xf32> to vector<10x8xf32>
    %948 = arith.addf %946, %947 : vector<10x8xf32>
    %949 = arith.addf %855, %948 : vector<10x8xf32>
    %cst_265 = arith.constant dense<0.000000e+00> : vector<10xf32>
    %950 = vector.multi_reduction <add>, %949, %cst_265 [1] : vector<10x8xf32> to vector<10xf32>
    %951 = vector.shape_cast %950 : vector<10xf32> to vector<10x1xf32>
    %cst_266 = arith.constant 8.000000e+00 : f32
    %952 = vector.broadcast %cst_266 : f32 to vector<10x1xf32>
    %953 = arith.divf %951, %952 : vector<10x1xf32>
    %954 = vector.broadcast %953 : vector<10x1xf32> to vector<10x8xf32>
    %955 = arith.subf %949, %954 : vector<10x8xf32>
    %956 = arith.mulf %955, %955 : vector<10x8xf32>
    %cst_267 = arith.constant dense<0.000000e+00> : vector<10xf32>
    %957 = vector.multi_reduction <add>, %956, %cst_267 [1] : vector<10x8xf32> to vector<10xf32>
    %958 = vector.shape_cast %957 : vector<10xf32> to vector<10x1xf32>
    %cst_268 = arith.constant 8.000000e+00 : f32
    %959 = vector.broadcast %cst_268 : f32 to vector<10x1xf32>
    %960 = arith.divf %958, %959 : vector<10x1xf32>
    %cst_269 = arith.constant 9.99999974E-6 : f32
    %961 = vector.broadcast %cst_269 : f32 to vector<10x1xf32>
    %962 = arith.addf %960, %961 : vector<10x1xf32>
    %963 = math.rsqrt %962 : vector<10x1xf32>
    %964 = vector.broadcast %963 : vector<10x1xf32> to vector<10x8xf32>
    %965 = arith.mulf %955, %964 : vector<10x8xf32>
    %966 = vector.extract_strided_slice %4 {offsets = [2, 0], sizes = [1, 8], strides = [1, 1]} : vector<21x24xf32> to vector<1x8xf32>
    %967 = vector.broadcast %966 : vector<1x8xf32> to vector<10x8xf32>
    %968 = arith.mulf %965, %967 : vector<10x8xf32>
    %969 = vector.extract_strided_slice %4 {offsets = [3, 0], sizes = [1, 8], strides = [1, 1]} : vector<21x24xf32> to vector<1x8xf32>
    %970 = vector.broadcast %969 : vector<1x8xf32> to vector<10x8xf32>
    %971 = arith.addf %968, %970 : vector<10x8xf32>
    %972 = vector.extract_strided_slice %3 {offsets = [16, 0], sizes = [8, 16], strides = [1, 1]} : vector<104x24xf32> to vector<8x16xf32>
    %cst_270 = arith.constant dense<0.000000e+00> : vector<10x16xf32>
    %973 = tpu.matmul %971, %972, %cst_270 {dimension_numbers = #tpu.dot_dimension_numbers<[1], [0], [0], [1], [0, 0, 1, 1], [], []>} : vector<10x8xf32>, vector<8x16xf32>, vector<10x16xf32> -> vector<10x16xf32>
    %974 = vector.extract_strided_slice %4 {offsets = [4, 0], sizes = [1, 16], strides = [1, 1]} : vector<21x24xf32> to vector<1x16xf32>
    %975 = vector.broadcast %974 : vector<1x16xf32> to vector<10x16xf32>
    %976 = arith.addf %973, %975 : vector<10x16xf32>
    %cst_271 = arith.constant 0.000000e+00 : f32
    %977 = vector.broadcast %cst_271 : f32 to vector<10x16xf32>
    %978 = arith.maximumf %976, %977 : vector<10x16xf32>
    %979 = vector.extract_strided_slice %3 {offsets = [24, 0], sizes = [16, 8], strides = [1, 1]} : vector<104x24xf32> to vector<16x8xf32>
    %cst_272 = arith.constant dense<0.000000e+00> : vector<10x8xf32>
    %980 = tpu.matmul %978, %979, %cst_272 {dimension_numbers = #tpu.dot_dimension_numbers<[1], [0], [0], [1], [0, 0, 1, 1], [], []>} : vector<10x16xf32>, vector<16x8xf32>, vector<10x8xf32> -> vector<10x8xf32>
    %981 = vector.extract_strided_slice %4 {offsets = [5, 0], sizes = [1, 8], strides = [1, 1]} : vector<21x24xf32> to vector<1x8xf32>
    %982 = vector.broadcast %981 : vector<1x8xf32> to vector<10x8xf32>
    %983 = arith.addf %980, %982 : vector<10x8xf32>
    %984 = arith.addf %971, %983 : vector<10x8xf32>
    %cst_273 = arith.constant dense<0.000000e+00> : vector<10xf32>
    %985 = vector.multi_reduction <add>, %984, %cst_273 [1] : vector<10x8xf32> to vector<10xf32>
    %986 = vector.shape_cast %985 : vector<10xf32> to vector<10x1xf32>
    %cst_274 = arith.constant 8.000000e+00 : f32
    %987 = vector.broadcast %cst_274 : f32 to vector<10x1xf32>
    %988 = arith.divf %986, %987 : vector<10x1xf32>
    %989 = vector.broadcast %988 : vector<10x1xf32> to vector<10x8xf32>
    %990 = arith.subf %984, %989 : vector<10x8xf32>
    %991 = arith.mulf %990, %990 : vector<10x8xf32>
    %cst_275 = arith.constant dense<0.000000e+00> : vector<10xf32>
    %992 = vector.multi_reduction <add>, %991, %cst_275 [1] : vector<10x8xf32> to vector<10xf32>
    %993 = vector.shape_cast %992 : vector<10xf32> to vector<10x1xf32>
    %cst_276 = arith.constant 8.000000e+00 : f32
    %994 = vector.broadcast %cst_276 : f32 to vector<10x1xf32>
    %995 = arith.divf %993, %994 : vector<10x1xf32>
    %cst_277 = arith.constant 9.99999974E-6 : f32
    %996 = vector.broadcast %cst_277 : f32 to vector<10x1xf32>
    %997 = arith.addf %995, %996 : vector<10x1xf32>
    %998 = math.rsqrt %997 : vector<10x1xf32>
    %999 = vector.broadcast %998 : vector<10x1xf32> to vector<10x8xf32>
    %1000 = arith.mulf %990, %999 : vector<10x8xf32>
    %1001 = vector.extract_strided_slice %4 {offsets = [6, 0], sizes = [1, 8], strides = [1, 1]} : vector<21x24xf32> to vector<1x8xf32>
    %1002 = vector.broadcast %1001 : vector<1x8xf32> to vector<10x8xf32>
    %1003 = arith.mulf %1000, %1002 : vector<10x8xf32>
    %1004 = vector.extract_strided_slice %4 {offsets = [7, 0], sizes = [1, 8], strides = [1, 1]} : vector<21x24xf32> to vector<1x8xf32>
    %1005 = vector.broadcast %1004 : vector<1x8xf32> to vector<10x8xf32>
    %1006 = arith.addf %1003, %1005 : vector<10x8xf32>
    %1007 = tpu.concatenate %850, %850 in 1 : vector<1x4xf32>, vector<1x4xf32> -> vector<1x8xf32>
    %1008 = vector.extract_strided_slice %3 {offsets = [40, 0], sizes = [8, 24], strides = [1, 1]} : vector<104x24xf32> to vector<8x24xf32>
    %1009 = vector.extract_strided_slice %4 {offsets = [8, 0], sizes = [1, 24], strides = [1, 1]} : vector<21x24xf32> to vector<1x24xf32>
    %1010 = vector.extract_strided_slice %3 {offsets = [48, 0], sizes = [8, 8], strides = [1, 1]} : vector<104x24xf32> to vector<8x8xf32>
    %1011 = vector.extract_strided_slice %4 {offsets = [9, 0], sizes = [1, 8], strides = [1, 1]} : vector<21x24xf32> to vector<1x8xf32>
    %cst_278 = arith.constant dense<0.000000e+00> : vector<1x24xf32>
    %1012 = tpu.matmul %1007, %1008, %cst_278 {dimension_numbers = #tpu.dot_dimension_numbers<[1], [0], [0], [1], [0, 0, 1, 1], [], []>} : vector<1x8xf32>, vector<8x24xf32>, vector<1x24xf32> -> vector<1x24xf32>
    %1013 = arith.addf %1012, %1009 : vector<1x24xf32>
    %1014 = vector.extract_strided_slice %1013 {offsets = [0, 0], sizes = [1, 8], strides = [1, 1]} : vector<1x24xf32> to vector<1x8xf32>
    %1015 = vector.extract_strided_slice %1013 {offsets = [0, 8], sizes = [1, 8], strides = [1, 1]} : vector<1x24xf32> to vector<1x8xf32>
    %1016 = vector.extract_strided_slice %1013 {offsets = [0, 16], sizes = [1, 8], strides = [1, 1]} : vector<1x24xf32> to vector<1x8xf32>
    %cst_279 = arith.constant 0.000000e+00 : f32
    %1017 = vector.broadcast %cst_279 : f32 to vector<1x8xf32>
    %1018 = vector.extract_strided_slice %1014 {offsets = [0, 0], sizes = [1, 2], strides = [1, 1]} : vector<1x8xf32> to vector<1x2xf32>
    %1019 = vector.extract_strided_slice %1015 {offsets = [0, 0], sizes = [1, 2], strides = [1, 1]} : vector<1x8xf32> to vector<1x2xf32>
    %1020 = vector.extract_strided_slice %1016 {offsets = [0, 0], sizes = [1, 2], strides = [1, 1]} : vector<1x8xf32> to vector<1x2xf32>
    %cst_280 = arith.constant dense<0.000000e+00> : vector<1x1xf32>
    %1021 = tpu.matmul %1018, %1019, %cst_280 {dimension_numbers = #tpu.dot_dimension_numbers<[1], [1], [0], [0], [0, 0, 1, 0], [], []>} : vector<1x2xf32>, vector<1x2xf32>, vector<1x1xf32> -> vector<1x1xf32>
    %cst_281 = arith.constant 0.707106769 : f32
    %1022 = vector.broadcast %cst_281 : f32 to vector<1x1xf32>
    %1023 = arith.mulf %1021, %1022 : vector<1x1xf32>
    %cst_282 = arith.constant dense<0xFF800000> : vector<1xf32>
    %1024 = vector.multi_reduction <maximumf>, %1023, %cst_282 [1] : vector<1x1xf32> to vector<1xf32>
    %1025 = vector.shape_cast %1024 : vector<1xf32> to vector<1x1xf32>
    %1026 = arith.subf %1023, %1025 : vector<1x1xf32>
    %1027 = math.exp %1026 : vector<1x1xf32>
    %cst_283 = arith.constant dense<0.000000e+00> : vector<1xf32>
    %1028 = vector.multi_reduction <add>, %1027, %cst_283 [1] : vector<1x1xf32> to vector<1xf32>
    %1029 = vector.shape_cast %1028 : vector<1xf32> to vector<1x1xf32>
    %1030 = tpu.reciprocal %1029 {approx = true} : vector<1x1xf32> -> vector<1x1xf32>
    %1031 = arith.mulf %1027, %1030 : vector<1x1xf32>
    %cst_284 = arith.constant dense<0.000000e+00> : vector<1x2xf32>
    %1032 = tpu.matmul %1031, %1020, %cst_284 {dimension_numbers = #tpu.dot_dimension_numbers<[1], [0], [0], [1], [0, 0, 1, 1], [], []>} : vector<1x1xf32>, vector<1x2xf32>, vector<1x2xf32> -> vector<1x2xf32>
    %1033 = vector.extract_strided_slice %1010 {offsets = [0, 0], sizes = [2, 8], strides = [1, 1]} : vector<8x8xf32> to vector<2x8xf32>
    %cst_285 = arith.constant dense<0.000000e+00> : vector<1x8xf32>
    %1034 = tpu.matmul %1032, %1033, %cst_285 {dimension_numbers = #tpu.dot_dimension_numbers<[1], [0], [0], [1], [0, 0, 1, 1], [], []>} : vector<1x2xf32>, vector<2x8xf32>, vector<1x8xf32> -> vector<1x8xf32>
    %1035 = arith.addf %1017, %1034 : vector<1x8xf32>
    %1036 = vector.extract_strided_slice %1014 {offsets = [0, 2], sizes = [1, 2], strides = [1, 1]} : vector<1x8xf32> to vector<1x2xf32>
    %1037 = vector.extract_strided_slice %1015 {offsets = [0, 2], sizes = [1, 2], strides = [1, 1]} : vector<1x8xf32> to vector<1x2xf32>
    %1038 = vector.extract_strided_slice %1016 {offsets = [0, 2], sizes = [1, 2], strides = [1, 1]} : vector<1x8xf32> to vector<1x2xf32>
    %cst_286 = arith.constant dense<0.000000e+00> : vector<1x1xf32>
    %1039 = tpu.matmul %1036, %1037, %cst_286 {dimension_numbers = #tpu.dot_dimension_numbers<[1], [1], [0], [0], [0, 0, 1, 0], [], []>} : vector<1x2xf32>, vector<1x2xf32>, vector<1x1xf32> -> vector<1x1xf32>
    %cst_287 = arith.constant 0.707106769 : f32
    %1040 = vector.broadcast %cst_287 : f32 to vector<1x1xf32>
    %1041 = arith.mulf %1039, %1040 : vector<1x1xf32>
    %cst_288 = arith.constant dense<0xFF800000> : vector<1xf32>
    %1042 = vector.multi_reduction <maximumf>, %1041, %cst_288 [1] : vector<1x1xf32> to vector<1xf32>
    %1043 = vector.shape_cast %1042 : vector<1xf32> to vector<1x1xf32>
    %1044 = arith.subf %1041, %1043 : vector<1x1xf32>
    %1045 = math.exp %1044 : vector<1x1xf32>
    %cst_289 = arith.constant dense<0.000000e+00> : vector<1xf32>
    %1046 = vector.multi_reduction <add>, %1045, %cst_289 [1] : vector<1x1xf32> to vector<1xf32>
    %1047 = vector.shape_cast %1046 : vector<1xf32> to vector<1x1xf32>
    %1048 = tpu.reciprocal %1047 {approx = true} : vector<1x1xf32> -> vector<1x1xf32>
    %1049 = arith.mulf %1045, %1048 : vector<1x1xf32>
    %cst_290 = arith.constant dense<0.000000e+00> : vector<1x2xf32>
    %1050 = tpu.matmul %1049, %1038, %cst_290 {dimension_numbers = #tpu.dot_dimension_numbers<[1], [0], [0], [1], [0, 0, 1, 1], [], []>} : vector<1x1xf32>, vector<1x2xf32>, vector<1x2xf32> -> vector<1x2xf32>
    %1051 = vector.extract_strided_slice %1010 {offsets = [2, 0], sizes = [2, 8], strides = [1, 1]} : vector<8x8xf32> to vector<2x8xf32>
    %cst_291 = arith.constant dense<0.000000e+00> : vector<1x8xf32>
    %1052 = tpu.matmul %1050, %1051, %cst_291 {dimension_numbers = #tpu.dot_dimension_numbers<[1], [0], [0], [1], [0, 0, 1, 1], [], []>} : vector<1x2xf32>, vector<2x8xf32>, vector<1x8xf32> -> vector<1x8xf32>
    %1053 = arith.addf %1035, %1052 : vector<1x8xf32>
    %1054 = vector.extract_strided_slice %1014 {offsets = [0, 4], sizes = [1, 2], strides = [1, 1]} : vector<1x8xf32> to vector<1x2xf32>
    %1055 = vector.extract_strided_slice %1015 {offsets = [0, 4], sizes = [1, 2], strides = [1, 1]} : vector<1x8xf32> to vector<1x2xf32>
    %1056 = vector.extract_strided_slice %1016 {offsets = [0, 4], sizes = [1, 2], strides = [1, 1]} : vector<1x8xf32> to vector<1x2xf32>
    %cst_292 = arith.constant dense<0.000000e+00> : vector<1x1xf32>
    %1057 = tpu.matmul %1054, %1055, %cst_292 {dimension_numbers = #tpu.dot_dimension_numbers<[1], [1], [0], [0], [0, 0, 1, 0], [], []>} : vector<1x2xf32>, vector<1x2xf32>, vector<1x1xf32> -> vector<1x1xf32>
    %cst_293 = arith.constant 0.707106769 : f32
    %1058 = vector.broadcast %cst_293 : f32 to vector<1x1xf32>
    %1059 = arith.mulf %1057, %1058 : vector<1x1xf32>
    %cst_294 = arith.constant dense<0xFF800000> : vector<1xf32>
    %1060 = vector.multi_reduction <maximumf>, %1059, %cst_294 [1] : vector<1x1xf32> to vector<1xf32>
    %1061 = vector.shape_cast %1060 : vector<1xf32> to vector<1x1xf32>
    %1062 = arith.subf %1059, %1061 : vector<1x1xf32>
    %1063 = math.exp %1062 : vector<1x1xf32>
    %cst_295 = arith.constant dense<0.000000e+00> : vector<1xf32>
    %1064 = vector.multi_reduction <add>, %1063, %cst_295 [1] : vector<1x1xf32> to vector<1xf32>
    %1065 = vector.shape_cast %1064 : vector<1xf32> to vector<1x1xf32>
    %1066 = tpu.reciprocal %1065 {approx = true} : vector<1x1xf32> -> vector<1x1xf32>
    %1067 = arith.mulf %1063, %1066 : vector<1x1xf32>
    %cst_296 = arith.constant dense<0.000000e+00> : vector<1x2xf32>
    %1068 = tpu.matmul %1067, %1056, %cst_296 {dimension_numbers = #tpu.dot_dimension_numbers<[1], [0], [0], [1], [0, 0, 1, 1], [], []>} : vector<1x1xf32>, vector<1x2xf32>, vector<1x2xf32> -> vector<1x2xf32>
    %1069 = vector.extract_strided_slice %1010 {offsets = [4, 0], sizes = [2, 8], strides = [1, 1]} : vector<8x8xf32> to vector<2x8xf32>
    %cst_297 = arith.constant dense<0.000000e+00> : vector<1x8xf32>
    %1070 = tpu.matmul %1068, %1069, %cst_297 {dimension_numbers = #tpu.dot_dimension_numbers<[1], [0], [0], [1], [0, 0, 1, 1], [], []>} : vector<1x2xf32>, vector<2x8xf32>, vector<1x8xf32> -> vector<1x8xf32>
    %1071 = arith.addf %1053, %1070 : vector<1x8xf32>
    %1072 = vector.extract_strided_slice %1014 {offsets = [0, 6], sizes = [1, 2], strides = [1, 1]} : vector<1x8xf32> to vector<1x2xf32>
    %1073 = vector.extract_strided_slice %1015 {offsets = [0, 6], sizes = [1, 2], strides = [1, 1]} : vector<1x8xf32> to vector<1x2xf32>
    %1074 = vector.extract_strided_slice %1016 {offsets = [0, 6], sizes = [1, 2], strides = [1, 1]} : vector<1x8xf32> to vector<1x2xf32>
    %cst_298 = arith.constant dense<0.000000e+00> : vector<1x1xf32>
    %1075 = tpu.matmul %1072, %1073, %cst_298 {dimension_numbers = #tpu.dot_dimension_numbers<[1], [1], [0], [0], [0, 0, 1, 0], [], []>} : vector<1x2xf32>, vector<1x2xf32>, vector<1x1xf32> -> vector<1x1xf32>
    %cst_299 = arith.constant 0.707106769 : f32
    %1076 = vector.broadcast %cst_299 : f32 to vector<1x1xf32>
    %1077 = arith.mulf %1075, %1076 : vector<1x1xf32>
    %cst_300 = arith.constant dense<0xFF800000> : vector<1xf32>
    %1078 = vector.multi_reduction <maximumf>, %1077, %cst_300 [1] : vector<1x1xf32> to vector<1xf32>
    %1079 = vector.shape_cast %1078 : vector<1xf32> to vector<1x1xf32>
    %1080 = arith.subf %1077, %1079 : vector<1x1xf32>
    %1081 = math.exp %1080 : vector<1x1xf32>
    %cst_301 = arith.constant dense<0.000000e+00> : vector<1xf32>
    %1082 = vector.multi_reduction <add>, %1081, %cst_301 [1] : vector<1x1xf32> to vector<1xf32>
    %1083 = vector.shape_cast %1082 : vector<1xf32> to vector<1x1xf32>
    %1084 = tpu.reciprocal %1083 {approx = true} : vector<1x1xf32> -> vector<1x1xf32>
    %1085 = arith.mulf %1081, %1084 : vector<1x1xf32>
    %cst_302 = arith.constant dense<0.000000e+00> : vector<1x2xf32>
    %1086 = tpu.matmul %1085, %1074, %cst_302 {dimension_numbers = #tpu.dot_dimension_numbers<[1], [0], [0], [1], [0, 0, 1, 1], [], []>} : vector<1x1xf32>, vector<1x2xf32>, vector<1x2xf32> -> vector<1x2xf32>
    %1087 = vector.extract_strided_slice %1010 {offsets = [6, 0], sizes = [2, 8], strides = [1, 1]} : vector<8x8xf32> to vector<2x8xf32>
    %cst_303 = arith.constant dense<0.000000e+00> : vector<1x8xf32>
    %1088 = tpu.matmul %1086, %1087, %cst_303 {dimension_numbers = #tpu.dot_dimension_numbers<[1], [0], [0], [1], [0, 0, 1, 1], [], []>} : vector<1x2xf32>, vector<2x8xf32>, vector<1x8xf32> -> vector<1x8xf32>
    %1089 = arith.addf %1071, %1088 : vector<1x8xf32>
    %1090 = arith.addf %1089, %1011 : vector<1x8xf32>
    %1091 = arith.addf %1007, %1090 : vector<1x8xf32>
    %cst_304 = arith.constant dense<0.000000e+00> : vector<1xf32>
    %1092 = vector.multi_reduction <add>, %1091, %cst_304 [1] : vector<1x8xf32> to vector<1xf32>
    %1093 = vector.shape_cast %1092 : vector<1xf32> to vector<1x1xf32>
    %cst_305 = arith.constant 8.000000e+00 : f32
    %1094 = vector.broadcast %cst_305 : f32 to vector<1x1xf32>
    %1095 = arith.divf %1093, %1094 : vector<1x1xf32>
    %1096 = vector.broadcast %1095 : vector<1x1xf32> to vector<1x8xf32>
    %1097 = arith.subf %1091, %1096 : vector<1x8xf32>
    %1098 = arith.mulf %1097, %1097 : vector<1x8xf32>
    %cst_306 = arith.constant dense<0.000000e+00> : vector<1xf32>
    %1099 = vector.multi_reduction <add>, %1098, %cst_306 [1] : vector<1x8xf32> to vector<1xf32>
    %1100 = vector.shape_cast %1099 : vector<1xf32> to vector<1x1xf32>
    %cst_307 = arith.constant 8.000000e+00 : f32
    %1101 = vector.broadcast %cst_307 : f32 to vector<1x1xf32>
    %1102 = arith.divf %1100, %1101 : vector<1x1xf32>
    %cst_308 = arith.constant 9.99999974E-6 : f32
    %1103 = vector.broadcast %cst_308 : f32 to vector<1x1xf32>
    %1104 = arith.addf %1102, %1103 : vector<1x1xf32>
    %1105 = math.rsqrt %1104 : vector<1x1xf32>
    %1106 = vector.broadcast %1105 : vector<1x1xf32> to vector<1x8xf32>
    %1107 = arith.mulf %1097, %1106 : vector<1x8xf32>
    %1108 = vector.extract_strided_slice %4 {offsets = [10, 0], sizes = [1, 8], strides = [1, 1]} : vector<21x24xf32> to vector<1x8xf32>
    %1109 = arith.mulf %1107, %1108 : vector<1x8xf32>
    %1110 = vector.extract_strided_slice %4 {offsets = [11, 0], sizes = [1, 8], strides = [1, 1]} : vector<21x24xf32> to vector<1x8xf32>
    %1111 = arith.addf %1109, %1110 : vector<1x8xf32>
    %1112 = vector.extract_strided_slice %3 {offsets = [56, 0], sizes = [8, 24], strides = [1, 1]} : vector<104x24xf32> to vector<8x24xf32>
    %1113 = vector.extract_strided_slice %4 {offsets = [12, 0], sizes = [1, 24], strides = [1, 1]} : vector<21x24xf32> to vector<1x24xf32>
    %1114 = vector.extract_strided_slice %3 {offsets = [64, 0], sizes = [8, 8], strides = [1, 1]} : vector<104x24xf32> to vector<8x8xf32>
    %1115 = vector.extract_strided_slice %4 {offsets = [13, 0], sizes = [1, 8], strides = [1, 1]} : vector<21x24xf32> to vector<1x8xf32>
    %1116 = vector.extract_strided_slice %1112 {offsets = [0, 0], sizes = [8, 8], strides = [1, 1]} : vector<8x24xf32> to vector<8x8xf32>
    %cst_309 = arith.constant dense<0.000000e+00> : vector<1x8xf32>
    %1117 = tpu.matmul %1111, %1116, %cst_309 {dimension_numbers = #tpu.dot_dimension_numbers<[1], [0], [0], [1], [0, 0, 1, 1], [], []>} : vector<1x8xf32>, vector<8x8xf32>, vector<1x8xf32> -> vector<1x8xf32>
    %1118 = vector.extract_strided_slice %1113 {offsets = [0, 0], sizes = [1, 8], strides = [1, 1]} : vector<1x24xf32> to vector<1x8xf32>
    %1119 = arith.addf %1117, %1118 : vector<1x8xf32>
    %1120 = vector.extract_strided_slice %1112 {offsets = [0, 8], sizes = [8, 16], strides = [1, 1]} : vector<8x24xf32> to vector<8x16xf32>
    %cst_310 = arith.constant dense<0.000000e+00> : vector<10x16xf32>
    %1121 = tpu.matmul %1006, %1120, %cst_310 {dimension_numbers = #tpu.dot_dimension_numbers<[1], [0], [0], [1], [0, 0, 1, 1], [], []>} : vector<10x8xf32>, vector<8x16xf32>, vector<10x16xf32> -> vector<10x16xf32>
    %1122 = vector.extract_strided_slice %1113 {offsets = [0, 8], sizes = [1, 16], strides = [1, 1]} : vector<1x24xf32> to vector<1x16xf32>
    %1123 = vector.broadcast %1122 : vector<1x16xf32> to vector<10x16xf32>
    %1124 = arith.addf %1121, %1123 : vector<10x16xf32>
    %1125 = vector.extract_strided_slice %1124 {offsets = [0, 0], sizes = [10, 8], strides = [1, 1]} : vector<10x16xf32> to vector<10x8xf32>
    %1126 = vector.extract_strided_slice %1124 {offsets = [0, 8], sizes = [10, 8], strides = [1, 1]} : vector<10x16xf32> to vector<10x8xf32>
    %cst_311 = arith.constant 0.000000e+00 : f32
    %1127 = vector.broadcast %cst_311 : f32 to vector<1x8xf32>
    %1128 = vector.extract_strided_slice %1119 {offsets = [0, 0], sizes = [1, 2], strides = [1, 1]} : vector<1x8xf32> to vector<1x2xf32>
    %1129 = vector.extract_strided_slice %1125 {offsets = [0, 0], sizes = [10, 2], strides = [1, 1]} : vector<10x8xf32> to vector<10x2xf32>
    %1130 = vector.extract_strided_slice %1126 {offsets = [0, 0], sizes = [10, 2], strides = [1, 1]} : vector<10x8xf32> to vector<10x2xf32>
    %cst_312 = arith.constant dense<0.000000e+00> : vector<1x10xf32>
    %1131 = tpu.matmul %1128, %1129, %cst_312 {dimension_numbers = #tpu.dot_dimension_numbers<[1], [1], [0], [0], [0, 0, 1, 0], [], []>} : vector<1x2xf32>, vector<10x2xf32>, vector<1x10xf32> -> vector<1x10xf32>
    %cst_313 = arith.constant 0.707106769 : f32
    %1132 = vector.broadcast %cst_313 : f32 to vector<1x10xf32>
    %1133 = arith.mulf %1131, %1132 : vector<1x10xf32>
    %cst_314 = arith.constant dense<0xFF800000> : vector<1xf32>
    %1134 = vector.multi_reduction <maximumf>, %1133, %cst_314 [1] : vector<1x10xf32> to vector<1xf32>
    %1135 = vector.shape_cast %1134 : vector<1xf32> to vector<1x1xf32>
    %1136 = vector.broadcast %1135 : vector<1x1xf32> to vector<1x10xf32>
    %1137 = arith.subf %1133, %1136 : vector<1x10xf32>
    %1138 = math.exp %1137 : vector<1x10xf32>
    %cst_315 = arith.constant dense<0.000000e+00> : vector<1xf32>
    %1139 = vector.multi_reduction <add>, %1138, %cst_315 [1] : vector<1x10xf32> to vector<1xf32>
    %1140 = vector.shape_cast %1139 : vector<1xf32> to vector<1x1xf32>
    %1141 = tpu.reciprocal %1140 {approx = true} : vector<1x1xf32> -> vector<1x1xf32>
    %1142 = vector.broadcast %1141 : vector<1x1xf32> to vector<1x10xf32>
    %1143 = arith.mulf %1138, %1142 : vector<1x10xf32>
    %cst_316 = arith.constant dense<0.000000e+00> : vector<1x2xf32>
    %1144 = tpu.matmul %1143, %1130, %cst_316 {dimension_numbers = #tpu.dot_dimension_numbers<[1], [0], [0], [1], [0, 0, 1, 1], [], []>} : vector<1x10xf32>, vector<10x2xf32>, vector<1x2xf32> -> vector<1x2xf32>
    %1145 = vector.extract_strided_slice %1114 {offsets = [0, 0], sizes = [2, 8], strides = [1, 1]} : vector<8x8xf32> to vector<2x8xf32>
    %cst_317 = arith.constant dense<0.000000e+00> : vector<1x8xf32>
    %1146 = tpu.matmul %1144, %1145, %cst_317 {dimension_numbers = #tpu.dot_dimension_numbers<[1], [0], [0], [1], [0, 0, 1, 1], [], []>} : vector<1x2xf32>, vector<2x8xf32>, vector<1x8xf32> -> vector<1x8xf32>
    %1147 = arith.addf %1127, %1146 : vector<1x8xf32>
    %1148 = vector.extract_strided_slice %1119 {offsets = [0, 2], sizes = [1, 2], strides = [1, 1]} : vector<1x8xf32> to vector<1x2xf32>
    %1149 = vector.extract_strided_slice %1125 {offsets = [0, 2], sizes = [10, 2], strides = [1, 1]} : vector<10x8xf32> to vector<10x2xf32>
    %1150 = vector.extract_strided_slice %1126 {offsets = [0, 2], sizes = [10, 2], strides = [1, 1]} : vector<10x8xf32> to vector<10x2xf32>
    %cst_318 = arith.constant dense<0.000000e+00> : vector<1x10xf32>
    %1151 = tpu.matmul %1148, %1149, %cst_318 {dimension_numbers = #tpu.dot_dimension_numbers<[1], [1], [0], [0], [0, 0, 1, 0], [], []>} : vector<1x2xf32>, vector<10x2xf32>, vector<1x10xf32> -> vector<1x10xf32>
    %cst_319 = arith.constant 0.707106769 : f32
    %1152 = vector.broadcast %cst_319 : f32 to vector<1x10xf32>
    %1153 = arith.mulf %1151, %1152 : vector<1x10xf32>
    %cst_320 = arith.constant dense<0xFF800000> : vector<1xf32>
    %1154 = vector.multi_reduction <maximumf>, %1153, %cst_320 [1] : vector<1x10xf32> to vector<1xf32>
    %1155 = vector.shape_cast %1154 : vector<1xf32> to vector<1x1xf32>
    %1156 = vector.broadcast %1155 : vector<1x1xf32> to vector<1x10xf32>
    %1157 = arith.subf %1153, %1156 : vector<1x10xf32>
    %1158 = math.exp %1157 : vector<1x10xf32>
    %cst_321 = arith.constant dense<0.000000e+00> : vector<1xf32>
    %1159 = vector.multi_reduction <add>, %1158, %cst_321 [1] : vector<1x10xf32> to vector<1xf32>
    %1160 = vector.shape_cast %1159 : vector<1xf32> to vector<1x1xf32>
    %1161 = tpu.reciprocal %1160 {approx = true} : vector<1x1xf32> -> vector<1x1xf32>
    %1162 = vector.broadcast %1161 : vector<1x1xf32> to vector<1x10xf32>
    %1163 = arith.mulf %1158, %1162 : vector<1x10xf32>
    %cst_322 = arith.constant dense<0.000000e+00> : vector<1x2xf32>
    %1164 = tpu.matmul %1163, %1150, %cst_322 {dimension_numbers = #tpu.dot_dimension_numbers<[1], [0], [0], [1], [0, 0, 1, 1], [], []>} : vector<1x10xf32>, vector<10x2xf32>, vector<1x2xf32> -> vector<1x2xf32>
    %1165 = vector.extract_strided_slice %1114 {offsets = [2, 0], sizes = [2, 8], strides = [1, 1]} : vector<8x8xf32> to vector<2x8xf32>
    %cst_323 = arith.constant dense<0.000000e+00> : vector<1x8xf32>
    %1166 = tpu.matmul %1164, %1165, %cst_323 {dimension_numbers = #tpu.dot_dimension_numbers<[1], [0], [0], [1], [0, 0, 1, 1], [], []>} : vector<1x2xf32>, vector<2x8xf32>, vector<1x8xf32> -> vector<1x8xf32>
    %1167 = arith.addf %1147, %1166 : vector<1x8xf32>
    %1168 = vector.extract_strided_slice %1119 {offsets = [0, 4], sizes = [1, 2], strides = [1, 1]} : vector<1x8xf32> to vector<1x2xf32>
    %1169 = vector.extract_strided_slice %1125 {offsets = [0, 4], sizes = [10, 2], strides = [1, 1]} : vector<10x8xf32> to vector<10x2xf32>
    %1170 = vector.extract_strided_slice %1126 {offsets = [0, 4], sizes = [10, 2], strides = [1, 1]} : vector<10x8xf32> to vector<10x2xf32>
    %cst_324 = arith.constant dense<0.000000e+00> : vector<1x10xf32>
    %1171 = tpu.matmul %1168, %1169, %cst_324 {dimension_numbers = #tpu.dot_dimension_numbers<[1], [1], [0], [0], [0, 0, 1, 0], [], []>} : vector<1x2xf32>, vector<10x2xf32>, vector<1x10xf32> -> vector<1x10xf32>
    %cst_325 = arith.constant 0.707106769 : f32
    %1172 = vector.broadcast %cst_325 : f32 to vector<1x10xf32>
    %1173 = arith.mulf %1171, %1172 : vector<1x10xf32>
    %cst_326 = arith.constant dense<0xFF800000> : vector<1xf32>
    %1174 = vector.multi_reduction <maximumf>, %1173, %cst_326 [1] : vector<1x10xf32> to vector<1xf32>
    %1175 = vector.shape_cast %1174 : vector<1xf32> to vector<1x1xf32>
    %1176 = vector.broadcast %1175 : vector<1x1xf32> to vector<1x10xf32>
    %1177 = arith.subf %1173, %1176 : vector<1x10xf32>
    %1178 = math.exp %1177 : vector<1x10xf32>
    %cst_327 = arith.constant dense<0.000000e+00> : vector<1xf32>
    %1179 = vector.multi_reduction <add>, %1178, %cst_327 [1] : vector<1x10xf32> to vector<1xf32>
    %1180 = vector.shape_cast %1179 : vector<1xf32> to vector<1x1xf32>
    %1181 = tpu.reciprocal %1180 {approx = true} : vector<1x1xf32> -> vector<1x1xf32>
    %1182 = vector.broadcast %1181 : vector<1x1xf32> to vector<1x10xf32>
    %1183 = arith.mulf %1178, %1182 : vector<1x10xf32>
    %cst_328 = arith.constant dense<0.000000e+00> : vector<1x2xf32>
    %1184 = tpu.matmul %1183, %1170, %cst_328 {dimension_numbers = #tpu.dot_dimension_numbers<[1], [0], [0], [1], [0, 0, 1, 1], [], []>} : vector<1x10xf32>, vector<10x2xf32>, vector<1x2xf32> -> vector<1x2xf32>
    %1185 = vector.extract_strided_slice %1114 {offsets = [4, 0], sizes = [2, 8], strides = [1, 1]} : vector<8x8xf32> to vector<2x8xf32>
    %cst_329 = arith.constant dense<0.000000e+00> : vector<1x8xf32>
    %1186 = tpu.matmul %1184, %1185, %cst_329 {dimension_numbers = #tpu.dot_dimension_numbers<[1], [0], [0], [1], [0, 0, 1, 1], [], []>} : vector<1x2xf32>, vector<2x8xf32>, vector<1x8xf32> -> vector<1x8xf32>
    %1187 = arith.addf %1167, %1186 : vector<1x8xf32>
    %1188 = vector.extract_strided_slice %1119 {offsets = [0, 6], sizes = [1, 2], strides = [1, 1]} : vector<1x8xf32> to vector<1x2xf32>
    %1189 = vector.extract_strided_slice %1125 {offsets = [0, 6], sizes = [10, 2], strides = [1, 1]} : vector<10x8xf32> to vector<10x2xf32>
    %1190 = vector.extract_strided_slice %1126 {offsets = [0, 6], sizes = [10, 2], strides = [1, 1]} : vector<10x8xf32> to vector<10x2xf32>
    %cst_330 = arith.constant dense<0.000000e+00> : vector<1x10xf32>
    %1191 = tpu.matmul %1188, %1189, %cst_330 {dimension_numbers = #tpu.dot_dimension_numbers<[1], [1], [0], [0], [0, 0, 1, 0], [], []>} : vector<1x2xf32>, vector<10x2xf32>, vector<1x10xf32> -> vector<1x10xf32>
    %cst_331 = arith.constant 0.707106769 : f32
    %1192 = vector.broadcast %cst_331 : f32 to vector<1x10xf32>
    %1193 = arith.mulf %1191, %1192 : vector<1x10xf32>
    %cst_332 = arith.constant dense<0xFF800000> : vector<1xf32>
    %1194 = vector.multi_reduction <maximumf>, %1193, %cst_332 [1] : vector<1x10xf32> to vector<1xf32>
    %1195 = vector.shape_cast %1194 : vector<1xf32> to vector<1x1xf32>
    %1196 = vector.broadcast %1195 : vector<1x1xf32> to vector<1x10xf32>
    %1197 = arith.subf %1193, %1196 : vector<1x10xf32>
    %1198 = math.exp %1197 : vector<1x10xf32>
    %cst_333 = arith.constant dense<0.000000e+00> : vector<1xf32>
    %1199 = vector.multi_reduction <add>, %1198, %cst_333 [1] : vector<1x10xf32> to vector<1xf32>
    %1200 = vector.shape_cast %1199 : vector<1xf32> to vector<1x1xf32>
    %1201 = tpu.reciprocal %1200 {approx = true} : vector<1x1xf32> -> vector<1x1xf32>
    %1202 = vector.broadcast %1201 : vector<1x1xf32> to vector<1x10xf32>
    %1203 = arith.mulf %1198, %1202 : vector<1x10xf32>
    %cst_334 = arith.constant dense<0.000000e+00> : vector<1x2xf32>
    %1204 = tpu.matmul %1203, %1190, %cst_334 {dimension_numbers = #tpu.dot_dimension_numbers<[1], [0], [0], [1], [0, 0, 1, 1], [], []>} : vector<1x10xf32>, vector<10x2xf32>, vector<1x2xf32> -> vector<1x2xf32>
    %1205 = vector.extract_strided_slice %1114 {offsets = [6, 0], sizes = [2, 8], strides = [1, 1]} : vector<8x8xf32> to vector<2x8xf32>
    %cst_335 = arith.constant dense<0.000000e+00> : vector<1x8xf32>
    %1206 = tpu.matmul %1204, %1205, %cst_335 {dimension_numbers = #tpu.dot_dimension_numbers<[1], [0], [0], [1], [0, 0, 1, 1], [], []>} : vector<1x2xf32>, vector<2x8xf32>, vector<1x8xf32> -> vector<1x8xf32>
    %1207 = arith.addf %1187, %1206 : vector<1x8xf32>
    %1208 = arith.addf %1207, %1115 : vector<1x8xf32>
    %1209 = arith.addf %1111, %1208 : vector<1x8xf32>
    %cst_336 = arith.constant dense<0.000000e+00> : vector<1xf32>
    %1210 = vector.multi_reduction <add>, %1209, %cst_336 [1] : vector<1x8xf32> to vector<1xf32>
    %1211 = vector.shape_cast %1210 : vector<1xf32> to vector<1x1xf32>
    %cst_337 = arith.constant 8.000000e+00 : f32
    %1212 = vector.broadcast %cst_337 : f32 to vector<1x1xf32>
    %1213 = arith.divf %1211, %1212 : vector<1x1xf32>
    %1214 = vector.broadcast %1213 : vector<1x1xf32> to vector<1x8xf32>
    %1215 = arith.subf %1209, %1214 : vector<1x8xf32>
    %1216 = arith.mulf %1215, %1215 : vector<1x8xf32>
    %cst_338 = arith.constant dense<0.000000e+00> : vector<1xf32>
    %1217 = vector.multi_reduction <add>, %1216, %cst_338 [1] : vector<1x8xf32> to vector<1xf32>
    %1218 = vector.shape_cast %1217 : vector<1xf32> to vector<1x1xf32>
    %cst_339 = arith.constant 8.000000e+00 : f32
    %1219 = vector.broadcast %cst_339 : f32 to vector<1x1xf32>
    %1220 = arith.divf %1218, %1219 : vector<1x1xf32>
    %cst_340 = arith.constant 9.99999974E-6 : f32
    %1221 = vector.broadcast %cst_340 : f32 to vector<1x1xf32>
    %1222 = arith.addf %1220, %1221 : vector<1x1xf32>
    %1223 = math.rsqrt %1222 : vector<1x1xf32>
    %1224 = vector.broadcast %1223 : vector<1x1xf32> to vector<1x8xf32>
    %1225 = arith.mulf %1215, %1224 : vector<1x8xf32>
    %1226 = vector.extract_strided_slice %4 {offsets = [14, 0], sizes = [1, 8], strides = [1, 1]} : vector<21x24xf32> to vector<1x8xf32>
    %1227 = arith.mulf %1225, %1226 : vector<1x8xf32>
    %1228 = vector.extract_strided_slice %4 {offsets = [15, 0], sizes = [1, 8], strides = [1, 1]} : vector<21x24xf32> to vector<1x8xf32>
    %1229 = arith.addf %1227, %1228 : vector<1x8xf32>
    %1230 = vector.extract_strided_slice %3 {offsets = [72, 0], sizes = [8, 16], strides = [1, 1]} : vector<104x24xf32> to vector<8x16xf32>
    %cst_341 = arith.constant dense<0.000000e+00> : vector<1x16xf32>
    %1231 = tpu.matmul %1229, %1230, %cst_341 {dimension_numbers = #tpu.dot_dimension_numbers<[1], [0], [0], [1], [0, 0, 1, 1], [], []>} : vector<1x8xf32>, vector<8x16xf32>, vector<1x16xf32> -> vector<1x16xf32>
    %1232 = vector.extract_strided_slice %4 {offsets = [16, 0], sizes = [1, 16], strides = [1, 1]} : vector<21x24xf32> to vector<1x16xf32>
    %1233 = arith.addf %1231, %1232 : vector<1x16xf32>
    %cst_342 = arith.constant 0.000000e+00 : f32
    %1234 = vector.broadcast %cst_342 : f32 to vector<1x16xf32>
    %1235 = arith.maximumf %1233, %1234 : vector<1x16xf32>
    %1236 = vector.extract_strided_slice %3 {offsets = [80, 0], sizes = [16, 8], strides = [1, 1]} : vector<104x24xf32> to vector<16x8xf32>
    %cst_343 = arith.constant dense<0.000000e+00> : vector<1x8xf32>
    %1237 = tpu.matmul %1235, %1236, %cst_343 {dimension_numbers = #tpu.dot_dimension_numbers<[1], [0], [0], [1], [0, 0, 1, 1], [], []>} : vector<1x16xf32>, vector<16x8xf32>, vector<1x8xf32> -> vector<1x8xf32>
    %1238 = vector.extract_strided_slice %4 {offsets = [17, 0], sizes = [1, 8], strides = [1, 1]} : vector<21x24xf32> to vector<1x8xf32>
    %1239 = arith.addf %1237, %1238 : vector<1x8xf32>
    %1240 = arith.addf %1229, %1239 : vector<1x8xf32>
    %cst_344 = arith.constant dense<0.000000e+00> : vector<1xf32>
    %1241 = vector.multi_reduction <add>, %1240, %cst_344 [1] : vector<1x8xf32> to vector<1xf32>
    %1242 = vector.shape_cast %1241 : vector<1xf32> to vector<1x1xf32>
    %cst_345 = arith.constant 8.000000e+00 : f32
    %1243 = vector.broadcast %cst_345 : f32 to vector<1x1xf32>
    %1244 = arith.divf %1242, %1243 : vector<1x1xf32>
    %1245 = vector.broadcast %1244 : vector<1x1xf32> to vector<1x8xf32>
    %1246 = arith.subf %1240, %1245 : vector<1x8xf32>
    %1247 = arith.mulf %1246, %1246 : vector<1x8xf32>
    %cst_346 = arith.constant dense<0.000000e+00> : vector<1xf32>
    %1248 = vector.multi_reduction <add>, %1247, %cst_346 [1] : vector<1x8xf32> to vector<1xf32>
    %1249 = vector.shape_cast %1248 : vector<1xf32> to vector<1x1xf32>
    %cst_347 = arith.constant 8.000000e+00 : f32
    %1250 = vector.broadcast %cst_347 : f32 to vector<1x1xf32>
    %1251 = arith.divf %1249, %1250 : vector<1x1xf32>
    %cst_348 = arith.constant 9.99999974E-6 : f32
    %1252 = vector.broadcast %cst_348 : f32 to vector<1x1xf32>
    %1253 = arith.addf %1251, %1252 : vector<1x1xf32>
    %1254 = math.rsqrt %1253 : vector<1x1xf32>
    %1255 = vector.broadcast %1254 : vector<1x1xf32> to vector<1x8xf32>
    %1256 = arith.mulf %1246, %1255 : vector<1x8xf32>
    %1257 = vector.extract_strided_slice %4 {offsets = [18, 0], sizes = [1, 8], strides = [1, 1]} : vector<21x24xf32> to vector<1x8xf32>
    %1258 = arith.mulf %1256, %1257 : vector<1x8xf32>
    %1259 = vector.extract_strided_slice %4 {offsets = [19, 0], sizes = [1, 8], strides = [1, 1]} : vector<21x24xf32> to vector<1x8xf32>
    %1260 = arith.addf %1258, %1259 : vector<1x8xf32>
    %1261 = vector.extract_strided_slice %3 {offsets = [96, 0], sizes = [8, 4], strides = [1, 1]} : vector<104x24xf32> to vector<8x4xf32>
    %cst_349 = arith.constant dense<0.000000e+00> : vector<1x4xf32>
    %1262 = tpu.matmul %1260, %1261, %cst_349 {dimension_numbers = #tpu.dot_dimension_numbers<[1], [0], [0], [1], [0, 0, 1, 1], [], []>} : vector<1x8xf32>, vector<8x4xf32>, vector<1x4xf32> -> vector<1x4xf32>
    %1263 = vector.extract_strided_slice %4 {offsets = [20, 0], sizes = [1, 4], strides = [1, 1]} : vector<21x24xf32> to vector<1x4xf32>
    %1264 = arith.addf %1262, %1263 : vector<1x4xf32>
    %cst_350 = arith.constant 0.000000e+00 : f32
    %1265 = vector.broadcast %cst_350 : f32 to vector<1x4xf32>
    %1266 = arith.subf %1265, %1264 : vector<1x4xf32>
    %1267 = math.exp %1266 : vector<1x4xf32>
    %cst_351 = arith.constant 1.000000e+00 : f32
    %1268 = vector.broadcast %cst_351 : f32 to vector<1x4xf32>
    %1269 = arith.addf %1268, %1267 : vector<1x4xf32>
    %1270 = tpu.reciprocal %1269 {approx = true} : vector<1x4xf32> -> vector<1x4xf32>
    %1271 = vector.broadcast %1270 : vector<1x4xf32> to vector<10x4xf32>
    %1272 = arith.subf %1271, %849 : vector<10x4xf32>
    %1273 = arith.mulf %1272, %1272 : vector<10x4xf32>
    %1274 = tpu.concatenate %849, %1273 in 1 : vector<10x4xf32>, vector<10x4xf32> -> vector<10x8xf32>
    %cst_352 = arith.constant 2.000000e+00 : f32
    %1275 = vector.broadcast %cst_352 : f32 to vector<10x8xf32>
    %1276 = arith.mulf %1274, %1275 : vector<10x8xf32>
    %1277 = arith.addf %1276, %2 : vector<10x8xf32>
    %1278 = vector.extract_strided_slice %3 {offsets = [0, 0], sizes = [8, 24], strides = [1, 1]} : vector<104x24xf32> to vector<8x24xf32>
    %1279 = vector.extract_strided_slice %4 {offsets = [0, 0], sizes = [1, 24], strides = [1, 1]} : vector<21x24xf32> to vector<1x24xf32>
    %1280 = vector.extract_strided_slice %3 {offsets = [8, 0], sizes = [8, 8], strides = [1, 1]} : vector<104x24xf32> to vector<8x8xf32>
    %1281 = vector.extract_strided_slice %4 {offsets = [1, 0], sizes = [1, 8], strides = [1, 1]} : vector<21x24xf32> to vector<1x8xf32>
    %cst_353 = arith.constant dense<0.000000e+00> : vector<10x24xf32>
    %1282 = tpu.matmul %1277, %1278, %cst_353 {dimension_numbers = #tpu.dot_dimension_numbers<[1], [0], [0], [1], [0, 0, 1, 1], [], []>} : vector<10x8xf32>, vector<8x24xf32>, vector<10x24xf32> -> vector<10x24xf32>
    %1283 = vector.broadcast %1279 : vector<1x24xf32> to vector<10x24xf32>
    %1284 = arith.addf %1282, %1283 : vector<10x24xf32>
    %1285 = vector.extract_strided_slice %1284 {offsets = [0, 0], sizes = [10, 8], strides = [1, 1]} : vector<10x24xf32> to vector<10x8xf32>
    %1286 = vector.extract_strided_slice %1284 {offsets = [0, 8], sizes = [10, 8], strides = [1, 1]} : vector<10x24xf32> to vector<10x8xf32>
    %1287 = vector.extract_strided_slice %1284 {offsets = [0, 16], sizes = [10, 8], strides = [1, 1]} : vector<10x24xf32> to vector<10x8xf32>
    %cst_354 = arith.constant 0.000000e+00 : f32
    %1288 = vector.broadcast %cst_354 : f32 to vector<10x8xf32>
    %1289 = vector.extract_strided_slice %1285 {offsets = [0, 0], sizes = [10, 2], strides = [1, 1]} : vector<10x8xf32> to vector<10x2xf32>
    %1290 = vector.extract_strided_slice %1286 {offsets = [0, 0], sizes = [10, 2], strides = [1, 1]} : vector<10x8xf32> to vector<10x2xf32>
    %1291 = vector.extract_strided_slice %1287 {offsets = [0, 0], sizes = [10, 2], strides = [1, 1]} : vector<10x8xf32> to vector<10x2xf32>
    %cst_355 = arith.constant dense<0.000000e+00> : vector<10x10xf32>
    %1292 = tpu.matmul %1289, %1290, %cst_355 {dimension_numbers = #tpu.dot_dimension_numbers<[1], [1], [0], [0], [0, 0, 1, 0], [], []>} : vector<10x2xf32>, vector<10x2xf32>, vector<10x10xf32> -> vector<10x10xf32>
    %cst_356 = arith.constant 0.707106769 : f32
    %1293 = vector.broadcast %cst_356 : f32 to vector<10x10xf32>
    %1294 = arith.mulf %1292, %1293 : vector<10x10xf32>
    %cst_357 = arith.constant dense<0xFF800000> : vector<10xf32>
    %1295 = vector.multi_reduction <maximumf>, %1294, %cst_357 [1] : vector<10x10xf32> to vector<10xf32>
    %1296 = vector.shape_cast %1295 : vector<10xf32> to vector<10x1xf32>
    %1297 = vector.broadcast %1296 : vector<10x1xf32> to vector<10x10xf32>
    %1298 = arith.subf %1294, %1297 : vector<10x10xf32>
    %1299 = math.exp %1298 : vector<10x10xf32>
    %cst_358 = arith.constant dense<0.000000e+00> : vector<10xf32>
    %1300 = vector.multi_reduction <add>, %1299, %cst_358 [1] : vector<10x10xf32> to vector<10xf32>
    %1301 = vector.shape_cast %1300 : vector<10xf32> to vector<10x1xf32>
    %1302 = tpu.reciprocal %1301 {approx = true} : vector<10x1xf32> -> vector<10x1xf32>
    %1303 = vector.broadcast %1302 : vector<10x1xf32> to vector<10x10xf32>
    %1304 = arith.mulf %1299, %1303 : vector<10x10xf32>
    %cst_359 = arith.constant dense<0.000000e+00> : vector<10x2xf32>
    %1305 = tpu.matmul %1304, %1291, %cst_359 {dimension_numbers = #tpu.dot_dimension_numbers<[1], [0], [0], [1], [0, 0, 1, 1], [], []>} : vector<10x10xf32>, vector<10x2xf32>, vector<10x2xf32> -> vector<10x2xf32>
    %1306 = vector.extract_strided_slice %1280 {offsets = [0, 0], sizes = [2, 8], strides = [1, 1]} : vector<8x8xf32> to vector<2x8xf32>
    %cst_360 = arith.constant dense<0.000000e+00> : vector<10x8xf32>
    %1307 = tpu.matmul %1305, %1306, %cst_360 {dimension_numbers = #tpu.dot_dimension_numbers<[1], [0], [0], [1], [0, 0, 1, 1], [], []>} : vector<10x2xf32>, vector<2x8xf32>, vector<10x8xf32> -> vector<10x8xf32>
    %1308 = arith.addf %1288, %1307 : vector<10x8xf32>
    %1309 = vector.extract_strided_slice %1285 {offsets = [0, 2], sizes = [10, 2], strides = [1, 1]} : vector<10x8xf32> to vector<10x2xf32>
    %1310 = vector.extract_strided_slice %1286 {offsets = [0, 2], sizes = [10, 2], strides = [1, 1]} : vector<10x8xf32> to vector<10x2xf32>
    %1311 = vector.extract_strided_slice %1287 {offsets = [0, 2], sizes = [10, 2], strides = [1, 1]} : vector<10x8xf32> to vector<10x2xf32>
    %cst_361 = arith.constant dense<0.000000e+00> : vector<10x10xf32>
    %1312 = tpu.matmul %1309, %1310, %cst_361 {dimension_numbers = #tpu.dot_dimension_numbers<[1], [1], [0], [0], [0, 0, 1, 0], [], []>} : vector<10x2xf32>, vector<10x2xf32>, vector<10x10xf32> -> vector<10x10xf32>
    %cst_362 = arith.constant 0.707106769 : f32
    %1313 = vector.broadcast %cst_362 : f32 to vector<10x10xf32>
    %1314 = arith.mulf %1312, %1313 : vector<10x10xf32>
    %cst_363 = arith.constant dense<0xFF800000> : vector<10xf32>
    %1315 = vector.multi_reduction <maximumf>, %1314, %cst_363 [1] : vector<10x10xf32> to vector<10xf32>
    %1316 = vector.shape_cast %1315 : vector<10xf32> to vector<10x1xf32>
    %1317 = vector.broadcast %1316 : vector<10x1xf32> to vector<10x10xf32>
    %1318 = arith.subf %1314, %1317 : vector<10x10xf32>
    %1319 = math.exp %1318 : vector<10x10xf32>
    %cst_364 = arith.constant dense<0.000000e+00> : vector<10xf32>
    %1320 = vector.multi_reduction <add>, %1319, %cst_364 [1] : vector<10x10xf32> to vector<10xf32>
    %1321 = vector.shape_cast %1320 : vector<10xf32> to vector<10x1xf32>
    %1322 = tpu.reciprocal %1321 {approx = true} : vector<10x1xf32> -> vector<10x1xf32>
    %1323 = vector.broadcast %1322 : vector<10x1xf32> to vector<10x10xf32>
    %1324 = arith.mulf %1319, %1323 : vector<10x10xf32>
    %cst_365 = arith.constant dense<0.000000e+00> : vector<10x2xf32>
    %1325 = tpu.matmul %1324, %1311, %cst_365 {dimension_numbers = #tpu.dot_dimension_numbers<[1], [0], [0], [1], [0, 0, 1, 1], [], []>} : vector<10x10xf32>, vector<10x2xf32>, vector<10x2xf32> -> vector<10x2xf32>
    %1326 = vector.extract_strided_slice %1280 {offsets = [2, 0], sizes = [2, 8], strides = [1, 1]} : vector<8x8xf32> to vector<2x8xf32>
    %cst_366 = arith.constant dense<0.000000e+00> : vector<10x8xf32>
    %1327 = tpu.matmul %1325, %1326, %cst_366 {dimension_numbers = #tpu.dot_dimension_numbers<[1], [0], [0], [1], [0, 0, 1, 1], [], []>} : vector<10x2xf32>, vector<2x8xf32>, vector<10x8xf32> -> vector<10x8xf32>
    %1328 = arith.addf %1308, %1327 : vector<10x8xf32>
    %1329 = vector.extract_strided_slice %1285 {offsets = [0, 4], sizes = [10, 2], strides = [1, 1]} : vector<10x8xf32> to vector<10x2xf32>
    %1330 = vector.extract_strided_slice %1286 {offsets = [0, 4], sizes = [10, 2], strides = [1, 1]} : vector<10x8xf32> to vector<10x2xf32>
    %1331 = vector.extract_strided_slice %1287 {offsets = [0, 4], sizes = [10, 2], strides = [1, 1]} : vector<10x8xf32> to vector<10x2xf32>
    %cst_367 = arith.constant dense<0.000000e+00> : vector<10x10xf32>
    %1332 = tpu.matmul %1329, %1330, %cst_367 {dimension_numbers = #tpu.dot_dimension_numbers<[1], [1], [0], [0], [0, 0, 1, 0], [], []>} : vector<10x2xf32>, vector<10x2xf32>, vector<10x10xf32> -> vector<10x10xf32>
    %cst_368 = arith.constant 0.707106769 : f32
    %1333 = vector.broadcast %cst_368 : f32 to vector<10x10xf32>
    %1334 = arith.mulf %1332, %1333 : vector<10x10xf32>
    %cst_369 = arith.constant dense<0xFF800000> : vector<10xf32>
    %1335 = vector.multi_reduction <maximumf>, %1334, %cst_369 [1] : vector<10x10xf32> to vector<10xf32>
    %1336 = vector.shape_cast %1335 : vector<10xf32> to vector<10x1xf32>
    %1337 = vector.broadcast %1336 : vector<10x1xf32> to vector<10x10xf32>
    %1338 = arith.subf %1334, %1337 : vector<10x10xf32>
    %1339 = math.exp %1338 : vector<10x10xf32>
    %cst_370 = arith.constant dense<0.000000e+00> : vector<10xf32>
    %1340 = vector.multi_reduction <add>, %1339, %cst_370 [1] : vector<10x10xf32> to vector<10xf32>
    %1341 = vector.shape_cast %1340 : vector<10xf32> to vector<10x1xf32>
    %1342 = tpu.reciprocal %1341 {approx = true} : vector<10x1xf32> -> vector<10x1xf32>
    %1343 = vector.broadcast %1342 : vector<10x1xf32> to vector<10x10xf32>
    %1344 = arith.mulf %1339, %1343 : vector<10x10xf32>
    %cst_371 = arith.constant dense<0.000000e+00> : vector<10x2xf32>
    %1345 = tpu.matmul %1344, %1331, %cst_371 {dimension_numbers = #tpu.dot_dimension_numbers<[1], [0], [0], [1], [0, 0, 1, 1], [], []>} : vector<10x10xf32>, vector<10x2xf32>, vector<10x2xf32> -> vector<10x2xf32>
    %1346 = vector.extract_strided_slice %1280 {offsets = [4, 0], sizes = [2, 8], strides = [1, 1]} : vector<8x8xf32> to vector<2x8xf32>
    %cst_372 = arith.constant dense<0.000000e+00> : vector<10x8xf32>
    %1347 = tpu.matmul %1345, %1346, %cst_372 {dimension_numbers = #tpu.dot_dimension_numbers<[1], [0], [0], [1], [0, 0, 1, 1], [], []>} : vector<10x2xf32>, vector<2x8xf32>, vector<10x8xf32> -> vector<10x8xf32>
    %1348 = arith.addf %1328, %1347 : vector<10x8xf32>
    %1349 = vector.extract_strided_slice %1285 {offsets = [0, 6], sizes = [10, 2], strides = [1, 1]} : vector<10x8xf32> to vector<10x2xf32>
    %1350 = vector.extract_strided_slice %1286 {offsets = [0, 6], sizes = [10, 2], strides = [1, 1]} : vector<10x8xf32> to vector<10x2xf32>
    %1351 = vector.extract_strided_slice %1287 {offsets = [0, 6], sizes = [10, 2], strides = [1, 1]} : vector<10x8xf32> to vector<10x2xf32>
    %cst_373 = arith.constant dense<0.000000e+00> : vector<10x10xf32>
    %1352 = tpu.matmul %1349, %1350, %cst_373 {dimension_numbers = #tpu.dot_dimension_numbers<[1], [1], [0], [0], [0, 0, 1, 0], [], []>} : vector<10x2xf32>, vector<10x2xf32>, vector<10x10xf32> -> vector<10x10xf32>
    %cst_374 = arith.constant 0.707106769 : f32
    %1353 = vector.broadcast %cst_374 : f32 to vector<10x10xf32>
    %1354 = arith.mulf %1352, %1353 : vector<10x10xf32>
    %cst_375 = arith.constant dense<0xFF800000> : vector<10xf32>
    %1355 = vector.multi_reduction <maximumf>, %1354, %cst_375 [1] : vector<10x10xf32> to vector<10xf32>
    %1356 = vector.shape_cast %1355 : vector<10xf32> to vector<10x1xf32>
    %1357 = vector.broadcast %1356 : vector<10x1xf32> to vector<10x10xf32>
    %1358 = arith.subf %1354, %1357 : vector<10x10xf32>
    %1359 = math.exp %1358 : vector<10x10xf32>
    %cst_376 = arith.constant dense<0.000000e+00> : vector<10xf32>
    %1360 = vector.multi_reduction <add>, %1359, %cst_376 [1] : vector<10x10xf32> to vector<10xf32>
    %1361 = vector.shape_cast %1360 : vector<10xf32> to vector<10x1xf32>
    %1362 = tpu.reciprocal %1361 {approx = true} : vector<10x1xf32> -> vector<10x1xf32>
    %1363 = vector.broadcast %1362 : vector<10x1xf32> to vector<10x10xf32>
    %1364 = arith.mulf %1359, %1363 : vector<10x10xf32>
    %cst_377 = arith.constant dense<0.000000e+00> : vector<10x2xf32>
    %1365 = tpu.matmul %1364, %1351, %cst_377 {dimension_numbers = #tpu.dot_dimension_numbers<[1], [0], [0], [1], [0, 0, 1, 1], [], []>} : vector<10x10xf32>, vector<10x2xf32>, vector<10x2xf32> -> vector<10x2xf32>
    %1366 = vector.extract_strided_slice %1280 {offsets = [6, 0], sizes = [2, 8], strides = [1, 1]} : vector<8x8xf32> to vector<2x8xf32>
    %cst_378 = arith.constant dense<0.000000e+00> : vector<10x8xf32>
    %1367 = tpu.matmul %1365, %1366, %cst_378 {dimension_numbers = #tpu.dot_dimension_numbers<[1], [0], [0], [1], [0, 0, 1, 1], [], []>} : vector<10x2xf32>, vector<2x8xf32>, vector<10x8xf32> -> vector<10x8xf32>
    %1368 = arith.addf %1348, %1367 : vector<10x8xf32>
    %1369 = vector.broadcast %1281 : vector<1x8xf32> to vector<10x8xf32>
    %1370 = arith.addf %1368, %1369 : vector<10x8xf32>
    %1371 = arith.addf %1277, %1370 : vector<10x8xf32>
    %cst_379 = arith.constant dense<0.000000e+00> : vector<10xf32>
    %1372 = vector.multi_reduction <add>, %1371, %cst_379 [1] : vector<10x8xf32> to vector<10xf32>
    %1373 = vector.shape_cast %1372 : vector<10xf32> to vector<10x1xf32>
    %cst_380 = arith.constant 8.000000e+00 : f32
    %1374 = vector.broadcast %cst_380 : f32 to vector<10x1xf32>
    %1375 = arith.divf %1373, %1374 : vector<10x1xf32>
    %1376 = vector.broadcast %1375 : vector<10x1xf32> to vector<10x8xf32>
    %1377 = arith.subf %1371, %1376 : vector<10x8xf32>
    %1378 = arith.mulf %1377, %1377 : vector<10x8xf32>
    %cst_381 = arith.constant dense<0.000000e+00> : vector<10xf32>
    %1379 = vector.multi_reduction <add>, %1378, %cst_381 [1] : vector<10x8xf32> to vector<10xf32>
    %1380 = vector.shape_cast %1379 : vector<10xf32> to vector<10x1xf32>
    %cst_382 = arith.constant 8.000000e+00 : f32
    %1381 = vector.broadcast %cst_382 : f32 to vector<10x1xf32>
    %1382 = arith.divf %1380, %1381 : vector<10x1xf32>
    %cst_383 = arith.constant 9.99999974E-6 : f32
    %1383 = vector.broadcast %cst_383 : f32 to vector<10x1xf32>
    %1384 = arith.addf %1382, %1383 : vector<10x1xf32>
    %1385 = math.rsqrt %1384 : vector<10x1xf32>
    %1386 = vector.broadcast %1385 : vector<10x1xf32> to vector<10x8xf32>
    %1387 = arith.mulf %1377, %1386 : vector<10x8xf32>
    %1388 = vector.extract_strided_slice %4 {offsets = [2, 0], sizes = [1, 8], strides = [1, 1]} : vector<21x24xf32> to vector<1x8xf32>
    %1389 = vector.broadcast %1388 : vector<1x8xf32> to vector<10x8xf32>
    %1390 = arith.mulf %1387, %1389 : vector<10x8xf32>
    %1391 = vector.extract_strided_slice %4 {offsets = [3, 0], sizes = [1, 8], strides = [1, 1]} : vector<21x24xf32> to vector<1x8xf32>
    %1392 = vector.broadcast %1391 : vector<1x8xf32> to vector<10x8xf32>
    %1393 = arith.addf %1390, %1392 : vector<10x8xf32>
    %1394 = vector.extract_strided_slice %3 {offsets = [16, 0], sizes = [8, 16], strides = [1, 1]} : vector<104x24xf32> to vector<8x16xf32>
    %cst_384 = arith.constant dense<0.000000e+00> : vector<10x16xf32>
    %1395 = tpu.matmul %1393, %1394, %cst_384 {dimension_numbers = #tpu.dot_dimension_numbers<[1], [0], [0], [1], [0, 0, 1, 1], [], []>} : vector<10x8xf32>, vector<8x16xf32>, vector<10x16xf32> -> vector<10x16xf32>
    %1396 = vector.extract_strided_slice %4 {offsets = [4, 0], sizes = [1, 16], strides = [1, 1]} : vector<21x24xf32> to vector<1x16xf32>
    %1397 = vector.broadcast %1396 : vector<1x16xf32> to vector<10x16xf32>
    %1398 = arith.addf %1395, %1397 : vector<10x16xf32>
    %cst_385 = arith.constant 0.000000e+00 : f32
    %1399 = vector.broadcast %cst_385 : f32 to vector<10x16xf32>
    %1400 = arith.maximumf %1398, %1399 : vector<10x16xf32>
    %1401 = vector.extract_strided_slice %3 {offsets = [24, 0], sizes = [16, 8], strides = [1, 1]} : vector<104x24xf32> to vector<16x8xf32>
    %cst_386 = arith.constant dense<0.000000e+00> : vector<10x8xf32>
    %1402 = tpu.matmul %1400, %1401, %cst_386 {dimension_numbers = #tpu.dot_dimension_numbers<[1], [0], [0], [1], [0, 0, 1, 1], [], []>} : vector<10x16xf32>, vector<16x8xf32>, vector<10x8xf32> -> vector<10x8xf32>
    %1403 = vector.extract_strided_slice %4 {offsets = [5, 0], sizes = [1, 8], strides = [1, 1]} : vector<21x24xf32> to vector<1x8xf32>
    %1404 = vector.broadcast %1403 : vector<1x8xf32> to vector<10x8xf32>
    %1405 = arith.addf %1402, %1404 : vector<10x8xf32>
    %1406 = arith.addf %1393, %1405 : vector<10x8xf32>
    %cst_387 = arith.constant dense<0.000000e+00> : vector<10xf32>
    %1407 = vector.multi_reduction <add>, %1406, %cst_387 [1] : vector<10x8xf32> to vector<10xf32>
    %1408 = vector.shape_cast %1407 : vector<10xf32> to vector<10x1xf32>
    %cst_388 = arith.constant 8.000000e+00 : f32
    %1409 = vector.broadcast %cst_388 : f32 to vector<10x1xf32>
    %1410 = arith.divf %1408, %1409 : vector<10x1xf32>
    %1411 = vector.broadcast %1410 : vector<10x1xf32> to vector<10x8xf32>
    %1412 = arith.subf %1406, %1411 : vector<10x8xf32>
    %1413 = arith.mulf %1412, %1412 : vector<10x8xf32>
    %cst_389 = arith.constant dense<0.000000e+00> : vector<10xf32>
    %1414 = vector.multi_reduction <add>, %1413, %cst_389 [1] : vector<10x8xf32> to vector<10xf32>
    %1415 = vector.shape_cast %1414 : vector<10xf32> to vector<10x1xf32>
    %cst_390 = arith.constant 8.000000e+00 : f32
    %1416 = vector.broadcast %cst_390 : f32 to vector<10x1xf32>
    %1417 = arith.divf %1415, %1416 : vector<10x1xf32>
    %cst_391 = arith.constant 9.99999974E-6 : f32
    %1418 = vector.broadcast %cst_391 : f32 to vector<10x1xf32>
    %1419 = arith.addf %1417, %1418 : vector<10x1xf32>
    %1420 = math.rsqrt %1419 : vector<10x1xf32>
    %1421 = vector.broadcast %1420 : vector<10x1xf32> to vector<10x8xf32>
    %1422 = arith.mulf %1412, %1421 : vector<10x8xf32>
    %1423 = vector.extract_strided_slice %4 {offsets = [6, 0], sizes = [1, 8], strides = [1, 1]} : vector<21x24xf32> to vector<1x8xf32>
    %1424 = vector.broadcast %1423 : vector<1x8xf32> to vector<10x8xf32>
    %1425 = arith.mulf %1422, %1424 : vector<10x8xf32>
    %1426 = vector.extract_strided_slice %4 {offsets = [7, 0], sizes = [1, 8], strides = [1, 1]} : vector<21x24xf32> to vector<1x8xf32>
    %1427 = vector.broadcast %1426 : vector<1x8xf32> to vector<10x8xf32>
    %1428 = arith.addf %1425, %1427 : vector<10x8xf32>
    %1429 = tpu.concatenate %850, %850 in 1 : vector<1x4xf32>, vector<1x4xf32> -> vector<1x8xf32>
    %1430 = vector.extract_strided_slice %3 {offsets = [40, 0], sizes = [8, 24], strides = [1, 1]} : vector<104x24xf32> to vector<8x24xf32>
    %1431 = vector.extract_strided_slice %4 {offsets = [8, 0], sizes = [1, 24], strides = [1, 1]} : vector<21x24xf32> to vector<1x24xf32>
    %1432 = vector.extract_strided_slice %3 {offsets = [48, 0], sizes = [8, 8], strides = [1, 1]} : vector<104x24xf32> to vector<8x8xf32>
    %1433 = vector.extract_strided_slice %4 {offsets = [9, 0], sizes = [1, 8], strides = [1, 1]} : vector<21x24xf32> to vector<1x8xf32>
    %cst_392 = arith.constant dense<0.000000e+00> : vector<1x24xf32>
    %1434 = tpu.matmul %1429, %1430, %cst_392 {dimension_numbers = #tpu.dot_dimension_numbers<[1], [0], [0], [1], [0, 0, 1, 1], [], []>} : vector<1x8xf32>, vector<8x24xf32>, vector<1x24xf32> -> vector<1x24xf32>
    %1435 = arith.addf %1434, %1431 : vector<1x24xf32>
    %1436 = vector.extract_strided_slice %1435 {offsets = [0, 0], sizes = [1, 8], strides = [1, 1]} : vector<1x24xf32> to vector<1x8xf32>
    %1437 = vector.extract_strided_slice %1435 {offsets = [0, 8], sizes = [1, 8], strides = [1, 1]} : vector<1x24xf32> to vector<1x8xf32>
    %1438 = vector.extract_strided_slice %1435 {offsets = [0, 16], sizes = [1, 8], strides = [1, 1]} : vector<1x24xf32> to vector<1x8xf32>
    %cst_393 = arith.constant 0.000000e+00 : f32
    %1439 = vector.broadcast %cst_393 : f32 to vector<1x8xf32>
    %1440 = vector.extract_strided_slice %1436 {offsets = [0, 0], sizes = [1, 2], strides = [1, 1]} : vector<1x8xf32> to vector<1x2xf32>
    %1441 = vector.extract_strided_slice %1437 {offsets = [0, 0], sizes = [1, 2], strides = [1, 1]} : vector<1x8xf32> to vector<1x2xf32>
    %1442 = vector.extract_strided_slice %1438 {offsets = [0, 0], sizes = [1, 2], strides = [1, 1]} : vector<1x8xf32> to vector<1x2xf32>
    %cst_394 = arith.constant dense<0.000000e+00> : vector<1x1xf32>
    %1443 = tpu.matmul %1440, %1441, %cst_394 {dimension_numbers = #tpu.dot_dimension_numbers<[1], [1], [0], [0], [0, 0, 1, 0], [], []>} : vector<1x2xf32>, vector<1x2xf32>, vector<1x1xf32> -> vector<1x1xf32>
    %cst_395 = arith.constant 0.707106769 : f32
    %1444 = vector.broadcast %cst_395 : f32 to vector<1x1xf32>
    %1445 = arith.mulf %1443, %1444 : vector<1x1xf32>
    %cst_396 = arith.constant dense<0xFF800000> : vector<1xf32>
    %1446 = vector.multi_reduction <maximumf>, %1445, %cst_396 [1] : vector<1x1xf32> to vector<1xf32>
    %1447 = vector.shape_cast %1446 : vector<1xf32> to vector<1x1xf32>
    %1448 = arith.subf %1445, %1447 : vector<1x1xf32>
    %1449 = math.exp %1448 : vector<1x1xf32>
    %cst_397 = arith.constant dense<0.000000e+00> : vector<1xf32>
    %1450 = vector.multi_reduction <add>, %1449, %cst_397 [1] : vector<1x1xf32> to vector<1xf32>
    %1451 = vector.shape_cast %1450 : vector<1xf32> to vector<1x1xf32>
    %1452 = tpu.reciprocal %1451 {approx = true} : vector<1x1xf32> -> vector<1x1xf32>
    %1453 = arith.mulf %1449, %1452 : vector<1x1xf32>
    %cst_398 = arith.constant dense<0.000000e+00> : vector<1x2xf32>
    %1454 = tpu.matmul %1453, %1442, %cst_398 {dimension_numbers = #tpu.dot_dimension_numbers<[1], [0], [0], [1], [0, 0, 1, 1], [], []>} : vector<1x1xf32>, vector<1x2xf32>, vector<1x2xf32> -> vector<1x2xf32>
    %1455 = vector.extract_strided_slice %1432 {offsets = [0, 0], sizes = [2, 8], strides = [1, 1]} : vector<8x8xf32> to vector<2x8xf32>
    %cst_399 = arith.constant dense<0.000000e+00> : vector<1x8xf32>
    %1456 = tpu.matmul %1454, %1455, %cst_399 {dimension_numbers = #tpu.dot_dimension_numbers<[1], [0], [0], [1], [0, 0, 1, 1], [], []>} : vector<1x2xf32>, vector<2x8xf32>, vector<1x8xf32> -> vector<1x8xf32>
    %1457 = arith.addf %1439, %1456 : vector<1x8xf32>
    %1458 = vector.extract_strided_slice %1436 {offsets = [0, 2], sizes = [1, 2], strides = [1, 1]} : vector<1x8xf32> to vector<1x2xf32>
    %1459 = vector.extract_strided_slice %1437 {offsets = [0, 2], sizes = [1, 2], strides = [1, 1]} : vector<1x8xf32> to vector<1x2xf32>
    %1460 = vector.extract_strided_slice %1438 {offsets = [0, 2], sizes = [1, 2], strides = [1, 1]} : vector<1x8xf32> to vector<1x2xf32>
    %cst_400 = arith.constant dense<0.000000e+00> : vector<1x1xf32>
    %1461 = tpu.matmul %1458, %1459, %cst_400 {dimension_numbers = #tpu.dot_dimension_numbers<[1], [1], [0], [0], [0, 0, 1, 0], [], []>} : vector<1x2xf32>, vector<1x2xf32>, vector<1x1xf32> -> vector<1x1xf32>
    %cst_401 = arith.constant 0.707106769 : f32
    %1462 = vector.broadcast %cst_401 : f32 to vector<1x1xf32>
    %1463 = arith.mulf %1461, %1462 : vector<1x1xf32>
    %cst_402 = arith.constant dense<0xFF800000> : vector<1xf32>
    %1464 = vector.multi_reduction <maximumf>, %1463, %cst_402 [1] : vector<1x1xf32> to vector<1xf32>
    %1465 = vector.shape_cast %1464 : vector<1xf32> to vector<1x1xf32>
    %1466 = arith.subf %1463, %1465 : vector<1x1xf32>
    %1467 = math.exp %1466 : vector<1x1xf32>
    %cst_403 = arith.constant dense<0.000000e+00> : vector<1xf32>
    %1468 = vector.multi_reduction <add>, %1467, %cst_403 [1] : vector<1x1xf32> to vector<1xf32>
    %1469 = vector.shape_cast %1468 : vector<1xf32> to vector<1x1xf32>
    %1470 = tpu.reciprocal %1469 {approx = true} : vector<1x1xf32> -> vector<1x1xf32>
    %1471 = arith.mulf %1467, %1470 : vector<1x1xf32>
    %cst_404 = arith.constant dense<0.000000e+00> : vector<1x2xf32>
    %1472 = tpu.matmul %1471, %1460, %cst_404 {dimension_numbers = #tpu.dot_dimension_numbers<[1], [0], [0], [1], [0, 0, 1, 1], [], []>} : vector<1x1xf32>, vector<1x2xf32>, vector<1x2xf32> -> vector<1x2xf32>
    %1473 = vector.extract_strided_slice %1432 {offsets = [2, 0], sizes = [2, 8], strides = [1, 1]} : vector<8x8xf32> to vector<2x8xf32>
    %cst_405 = arith.constant dense<0.000000e+00> : vector<1x8xf32>
    %1474 = tpu.matmul %1472, %1473, %cst_405 {dimension_numbers = #tpu.dot_dimension_numbers<[1], [0], [0], [1], [0, 0, 1, 1], [], []>} : vector<1x2xf32>, vector<2x8xf32>, vector<1x8xf32> -> vector<1x8xf32>
    %1475 = arith.addf %1457, %1474 : vector<1x8xf32>
    %1476 = vector.extract_strided_slice %1436 {offsets = [0, 4], sizes = [1, 2], strides = [1, 1]} : vector<1x8xf32> to vector<1x2xf32>
    %1477 = vector.extract_strided_slice %1437 {offsets = [0, 4], sizes = [1, 2], strides = [1, 1]} : vector<1x8xf32> to vector<1x2xf32>
    %1478 = vector.extract_strided_slice %1438 {offsets = [0, 4], sizes = [1, 2], strides = [1, 1]} : vector<1x8xf32> to vector<1x2xf32>
    %cst_406 = arith.constant dense<0.000000e+00> : vector<1x1xf32>
    %1479 = tpu.matmul %1476, %1477, %cst_406 {dimension_numbers = #tpu.dot_dimension_numbers<[1], [1], [0], [0], [0, 0, 1, 0], [], []>} : vector<1x2xf32>, vector<1x2xf32>, vector<1x1xf32> -> vector<1x1xf32>
    %cst_407 = arith.constant 0.707106769 : f32
    %1480 = vector.broadcast %cst_407 : f32 to vector<1x1xf32>
    %1481 = arith.mulf %1479, %1480 : vector<1x1xf32>
    %cst_408 = arith.constant dense<0xFF800000> : vector<1xf32>
    %1482 = vector.multi_reduction <maximumf>, %1481, %cst_408 [1] : vector<1x1xf32> to vector<1xf32>
    %1483 = vector.shape_cast %1482 : vector<1xf32> to vector<1x1xf32>
    %1484 = arith.subf %1481, %1483 : vector<1x1xf32>
    %1485 = math.exp %1484 : vector<1x1xf32>
    %cst_409 = arith.constant dense<0.000000e+00> : vector<1xf32>
    %1486 = vector.multi_reduction <add>, %1485, %cst_409 [1] : vector<1x1xf32> to vector<1xf32>
    %1487 = vector.shape_cast %1486 : vector<1xf32> to vector<1x1xf32>
    %1488 = tpu.reciprocal %1487 {approx = true} : vector<1x1xf32> -> vector<1x1xf32>
    %1489 = arith.mulf %1485, %1488 : vector<1x1xf32>
    %cst_410 = arith.constant dense<0.000000e+00> : vector<1x2xf32>
    %1490 = tpu.matmul %1489, %1478, %cst_410 {dimension_numbers = #tpu.dot_dimension_numbers<[1], [0], [0], [1], [0, 0, 1, 1], [], []>} : vector<1x1xf32>, vector<1x2xf32>, vector<1x2xf32> -> vector<1x2xf32>
    %1491 = vector.extract_strided_slice %1432 {offsets = [4, 0], sizes = [2, 8], strides = [1, 1]} : vector<8x8xf32> to vector<2x8xf32>
    %cst_411 = arith.constant dense<0.000000e+00> : vector<1x8xf32>
    %1492 = tpu.matmul %1490, %1491, %cst_411 {dimension_numbers = #tpu.dot_dimension_numbers<[1], [0], [0], [1], [0, 0, 1, 1], [], []>} : vector<1x2xf32>, vector<2x8xf32>, vector<1x8xf32> -> vector<1x8xf32>
    %1493 = arith.addf %1475, %1492 : vector<1x8xf32>
    %1494 = vector.extract_strided_slice %1436 {offsets = [0, 6], sizes = [1, 2], strides = [1, 1]} : vector<1x8xf32> to vector<1x2xf32>
    %1495 = vector.extract_strided_slice %1437 {offsets = [0, 6], sizes = [1, 2], strides = [1, 1]} : vector<1x8xf32> to vector<1x2xf32>
    %1496 = vector.extract_strided_slice %1438 {offsets = [0, 6], sizes = [1, 2], strides = [1, 1]} : vector<1x8xf32> to vector<1x2xf32>
    %cst_412 = arith.constant dense<0.000000e+00> : vector<1x1xf32>
    %1497 = tpu.matmul %1494, %1495, %cst_412 {dimension_numbers = #tpu.dot_dimension_numbers<[1], [1], [0], [0], [0, 0, 1, 0], [], []>} : vector<1x2xf32>, vector<1x2xf32>, vector<1x1xf32> -> vector<1x1xf32>
    %cst_413 = arith.constant 0.707106769 : f32
    %1498 = vector.broadcast %cst_413 : f32 to vector<1x1xf32>
    %1499 = arith.mulf %1497, %1498 : vector<1x1xf32>
    %cst_414 = arith.constant dense<0xFF800000> : vector<1xf32>
    %1500 = vector.multi_reduction <maximumf>, %1499, %cst_414 [1] : vector<1x1xf32> to vector<1xf32>
    %1501 = vector.shape_cast %1500 : vector<1xf32> to vector<1x1xf32>
    %1502 = arith.subf %1499, %1501 : vector<1x1xf32>
    %1503 = math.exp %1502 : vector<1x1xf32>
    %cst_415 = arith.constant dense<0.000000e+00> : vector<1xf32>
    %1504 = vector.multi_reduction <add>, %1503, %cst_415 [1] : vector<1x1xf32> to vector<1xf32>
    %1505 = vector.shape_cast %1504 : vector<1xf32> to vector<1x1xf32>
    %1506 = tpu.reciprocal %1505 {approx = true} : vector<1x1xf32> -> vector<1x1xf32>
    %1507 = arith.mulf %1503, %1506 : vector<1x1xf32>
    %cst_416 = arith.constant dense<0.000000e+00> : vector<1x2xf32>
    %1508 = tpu.matmul %1507, %1496, %cst_416 {dimension_numbers = #tpu.dot_dimension_numbers<[1], [0], [0], [1], [0, 0, 1, 1], [], []>} : vector<1x1xf32>, vector<1x2xf32>, vector<1x2xf32> -> vector<1x2xf32>
    %1509 = vector.extract_strided_slice %1432 {offsets = [6, 0], sizes = [2, 8], strides = [1, 1]} : vector<8x8xf32> to vector<2x8xf32>
    %cst_417 = arith.constant dense<0.000000e+00> : vector<1x8xf32>
    %1510 = tpu.matmul %1508, %1509, %cst_417 {dimension_numbers = #tpu.dot_dimension_numbers<[1], [0], [0], [1], [0, 0, 1, 1], [], []>} : vector<1x2xf32>, vector<2x8xf32>, vector<1x8xf32> -> vector<1x8xf32>
    %1511 = arith.addf %1493, %1510 : vector<1x8xf32>
    %1512 = arith.addf %1511, %1433 : vector<1x8xf32>
    %1513 = arith.addf %1429, %1512 : vector<1x8xf32>
    %cst_418 = arith.constant dense<0.000000e+00> : vector<1xf32>
    %1514 = vector.multi_reduction <add>, %1513, %cst_418 [1] : vector<1x8xf32> to vector<1xf32>
    %1515 = vector.shape_cast %1514 : vector<1xf32> to vector<1x1xf32>
    %cst_419 = arith.constant 8.000000e+00 : f32
    %1516 = vector.broadcast %cst_419 : f32 to vector<1x1xf32>
    %1517 = arith.divf %1515, %1516 : vector<1x1xf32>
    %1518 = vector.broadcast %1517 : vector<1x1xf32> to vector<1x8xf32>
    %1519 = arith.subf %1513, %1518 : vector<1x8xf32>
    %1520 = arith.mulf %1519, %1519 : vector<1x8xf32>
    %cst_420 = arith.constant dense<0.000000e+00> : vector<1xf32>
    %1521 = vector.multi_reduction <add>, %1520, %cst_420 [1] : vector<1x8xf32> to vector<1xf32>
    %1522 = vector.shape_cast %1521 : vector<1xf32> to vector<1x1xf32>
    %cst_421 = arith.constant 8.000000e+00 : f32
    %1523 = vector.broadcast %cst_421 : f32 to vector<1x1xf32>
    %1524 = arith.divf %1522, %1523 : vector<1x1xf32>
    %cst_422 = arith.constant 9.99999974E-6 : f32
    %1525 = vector.broadcast %cst_422 : f32 to vector<1x1xf32>
    %1526 = arith.addf %1524, %1525 : vector<1x1xf32>
    %1527 = math.rsqrt %1526 : vector<1x1xf32>
    %1528 = vector.broadcast %1527 : vector<1x1xf32> to vector<1x8xf32>
    %1529 = arith.mulf %1519, %1528 : vector<1x8xf32>
    %1530 = vector.extract_strided_slice %4 {offsets = [10, 0], sizes = [1, 8], strides = [1, 1]} : vector<21x24xf32> to vector<1x8xf32>
    %1531 = arith.mulf %1529, %1530 : vector<1x8xf32>
    %1532 = vector.extract_strided_slice %4 {offsets = [11, 0], sizes = [1, 8], strides = [1, 1]} : vector<21x24xf32> to vector<1x8xf32>
    %1533 = arith.addf %1531, %1532 : vector<1x8xf32>
    %1534 = vector.extract_strided_slice %3 {offsets = [56, 0], sizes = [8, 24], strides = [1, 1]} : vector<104x24xf32> to vector<8x24xf32>
    %1535 = vector.extract_strided_slice %4 {offsets = [12, 0], sizes = [1, 24], strides = [1, 1]} : vector<21x24xf32> to vector<1x24xf32>
    %1536 = vector.extract_strided_slice %3 {offsets = [64, 0], sizes = [8, 8], strides = [1, 1]} : vector<104x24xf32> to vector<8x8xf32>
    %1537 = vector.extract_strided_slice %4 {offsets = [13, 0], sizes = [1, 8], strides = [1, 1]} : vector<21x24xf32> to vector<1x8xf32>
    %1538 = vector.extract_strided_slice %1534 {offsets = [0, 0], sizes = [8, 8], strides = [1, 1]} : vector<8x24xf32> to vector<8x8xf32>
    %cst_423 = arith.constant dense<0.000000e+00> : vector<1x8xf32>
    %1539 = tpu.matmul %1533, %1538, %cst_423 {dimension_numbers = #tpu.dot_dimension_numbers<[1], [0], [0], [1], [0, 0, 1, 1], [], []>} : vector<1x8xf32>, vector<8x8xf32>, vector<1x8xf32> -> vector<1x8xf32>
    %1540 = vector.extract_strided_slice %1535 {offsets = [0, 0], sizes = [1, 8], strides = [1, 1]} : vector<1x24xf32> to vector<1x8xf32>
    %1541 = arith.addf %1539, %1540 : vector<1x8xf32>
    %1542 = vector.extract_strided_slice %1534 {offsets = [0, 8], sizes = [8, 16], strides = [1, 1]} : vector<8x24xf32> to vector<8x16xf32>
    %cst_424 = arith.constant dense<0.000000e+00> : vector<10x16xf32>
    %1543 = tpu.matmul %1428, %1542, %cst_424 {dimension_numbers = #tpu.dot_dimension_numbers<[1], [0], [0], [1], [0, 0, 1, 1], [], []>} : vector<10x8xf32>, vector<8x16xf32>, vector<10x16xf32> -> vector<10x16xf32>
    %1544 = vector.extract_strided_slice %1535 {offsets = [0, 8], sizes = [1, 16], strides = [1, 1]} : vector<1x24xf32> to vector<1x16xf32>
    %1545 = vector.broadcast %1544 : vector<1x16xf32> to vector<10x16xf32>
    %1546 = arith.addf %1543, %1545 : vector<10x16xf32>
    %1547 = vector.extract_strided_slice %1546 {offsets = [0, 0], sizes = [10, 8], strides = [1, 1]} : vector<10x16xf32> to vector<10x8xf32>
    %1548 = vector.extract_strided_slice %1546 {offsets = [0, 8], sizes = [10, 8], strides = [1, 1]} : vector<10x16xf32> to vector<10x8xf32>
    %cst_425 = arith.constant 0.000000e+00 : f32
    %1549 = vector.broadcast %cst_425 : f32 to vector<1x8xf32>
    %1550 = vector.extract_strided_slice %1541 {offsets = [0, 0], sizes = [1, 2], strides = [1, 1]} : vector<1x8xf32> to vector<1x2xf32>
    %1551 = vector.extract_strided_slice %1547 {offsets = [0, 0], sizes = [10, 2], strides = [1, 1]} : vector<10x8xf32> to vector<10x2xf32>
    %1552 = vector.extract_strided_slice %1548 {offsets = [0, 0], sizes = [10, 2], strides = [1, 1]} : vector<10x8xf32> to vector<10x2xf32>
    %cst_426 = arith.constant dense<0.000000e+00> : vector<1x10xf32>
    %1553 = tpu.matmul %1550, %1551, %cst_426 {dimension_numbers = #tpu.dot_dimension_numbers<[1], [1], [0], [0], [0, 0, 1, 0], [], []>} : vector<1x2xf32>, vector<10x2xf32>, vector<1x10xf32> -> vector<1x10xf32>
    %cst_427 = arith.constant 0.707106769 : f32
    %1554 = vector.broadcast %cst_427 : f32 to vector<1x10xf32>
    %1555 = arith.mulf %1553, %1554 : vector<1x10xf32>
    %cst_428 = arith.constant dense<0xFF800000> : vector<1xf32>
    %1556 = vector.multi_reduction <maximumf>, %1555, %cst_428 [1] : vector<1x10xf32> to vector<1xf32>
    %1557 = vector.shape_cast %1556 : vector<1xf32> to vector<1x1xf32>
    %1558 = vector.broadcast %1557 : vector<1x1xf32> to vector<1x10xf32>
    %1559 = arith.subf %1555, %1558 : vector<1x10xf32>
    %1560 = math.exp %1559 : vector<1x10xf32>
    %cst_429 = arith.constant dense<0.000000e+00> : vector<1xf32>
    %1561 = vector.multi_reduction <add>, %1560, %cst_429 [1] : vector<1x10xf32> to vector<1xf32>
    %1562 = vector.shape_cast %1561 : vector<1xf32> to vector<1x1xf32>
    %1563 = tpu.reciprocal %1562 {approx = true} : vector<1x1xf32> -> vector<1x1xf32>
    %1564 = vector.broadcast %1563 : vector<1x1xf32> to vector<1x10xf32>
    %1565 = arith.mulf %1560, %1564 : vector<1x10xf32>
    %cst_430 = arith.constant dense<0.000000e+00> : vector<1x2xf32>
    %1566 = tpu.matmul %1565, %1552, %cst_430 {dimension_numbers = #tpu.dot_dimension_numbers<[1], [0], [0], [1], [0, 0, 1, 1], [], []>} : vector<1x10xf32>, vector<10x2xf32>, vector<1x2xf32> -> vector<1x2xf32>
    %1567 = vector.extract_strided_slice %1536 {offsets = [0, 0], sizes = [2, 8], strides = [1, 1]} : vector<8x8xf32> to vector<2x8xf32>
    %cst_431 = arith.constant dense<0.000000e+00> : vector<1x8xf32>
    %1568 = tpu.matmul %1566, %1567, %cst_431 {dimension_numbers = #tpu.dot_dimension_numbers<[1], [0], [0], [1], [0, 0, 1, 1], [], []>} : vector<1x2xf32>, vector<2x8xf32>, vector<1x8xf32> -> vector<1x8xf32>
    %1569 = arith.addf %1549, %1568 : vector<1x8xf32>
    %1570 = vector.extract_strided_slice %1541 {offsets = [0, 2], sizes = [1, 2], strides = [1, 1]} : vector<1x8xf32> to vector<1x2xf32>
    %1571 = vector.extract_strided_slice %1547 {offsets = [0, 2], sizes = [10, 2], strides = [1, 1]} : vector<10x8xf32> to vector<10x2xf32>
    %1572 = vector.extract_strided_slice %1548 {offsets = [0, 2], sizes = [10, 2], strides = [1, 1]} : vector<10x8xf32> to vector<10x2xf32>
    %cst_432 = arith.constant dense<0.000000e+00> : vector<1x10xf32>
    %1573 = tpu.matmul %1570, %1571, %cst_432 {dimension_numbers = #tpu.dot_dimension_numbers<[1], [1], [0], [0], [0, 0, 1, 0], [], []>} : vector<1x2xf32>, vector<10x2xf32>, vector<1x10xf32> -> vector<1x10xf32>
    %cst_433 = arith.constant 0.707106769 : f32
    %1574 = vector.broadcast %cst_433 : f32 to vector<1x10xf32>
    %1575 = arith.mulf %1573, %1574 : vector<1x10xf32>
    %cst_434 = arith.constant dense<0xFF800000> : vector<1xf32>
    %1576 = vector.multi_reduction <maximumf>, %1575, %cst_434 [1] : vector<1x10xf32> to vector<1xf32>
    %1577 = vector.shape_cast %1576 : vector<1xf32> to vector<1x1xf32>
    %1578 = vector.broadcast %1577 : vector<1x1xf32> to vector<1x10xf32>
    %1579 = arith.subf %1575, %1578 : vector<1x10xf32>
    %1580 = math.exp %1579 : vector<1x10xf32>
    %cst_435 = arith.constant dense<0.000000e+00> : vector<1xf32>
    %1581 = vector.multi_reduction <add>, %1580, %cst_435 [1] : vector<1x10xf32> to vector<1xf32>
    %1582 = vector.shape_cast %1581 : vector<1xf32> to vector<1x1xf32>
    %1583 = tpu.reciprocal %1582 {approx = true} : vector<1x1xf32> -> vector<1x1xf32>
    %1584 = vector.broadcast %1583 : vector<1x1xf32> to vector<1x10xf32>
    %1585 = arith.mulf %1580, %1584 : vector<1x10xf32>
    %cst_436 = arith.constant dense<0.000000e+00> : vector<1x2xf32>
    %1586 = tpu.matmul %1585, %1572, %cst_436 {dimension_numbers = #tpu.dot_dimension_numbers<[1], [0], [0], [1], [0, 0, 1, 1], [], []>} : vector<1x10xf32>, vector<10x2xf32>, vector<1x2xf32> -> vector<1x2xf32>
    %1587 = vector.extract_strided_slice %1536 {offsets = [2, 0], sizes = [2, 8], strides = [1, 1]} : vector<8x8xf32> to vector<2x8xf32>
    %cst_437 = arith.constant dense<0.000000e+00> : vector<1x8xf32>
    %1588 = tpu.matmul %1586, %1587, %cst_437 {dimension_numbers = #tpu.dot_dimension_numbers<[1], [0], [0], [1], [0, 0, 1, 1], [], []>} : vector<1x2xf32>, vector<2x8xf32>, vector<1x8xf32> -> vector<1x8xf32>
    %1589 = arith.addf %1569, %1588 : vector<1x8xf32>
    %1590 = vector.extract_strided_slice %1541 {offsets = [0, 4], sizes = [1, 2], strides = [1, 1]} : vector<1x8xf32> to vector<1x2xf32>
    %1591 = vector.extract_strided_slice %1547 {offsets = [0, 4], sizes = [10, 2], strides = [1, 1]} : vector<10x8xf32> to vector<10x2xf32>
    %1592 = vector.extract_strided_slice %1548 {offsets = [0, 4], sizes = [10, 2], strides = [1, 1]} : vector<10x8xf32> to vector<10x2xf32>
    %cst_438 = arith.constant dense<0.000000e+00> : vector<1x10xf32>
    %1593 = tpu.matmul %1590, %1591, %cst_438 {dimension_numbers = #tpu.dot_dimension_numbers<[1], [1], [0], [0], [0, 0, 1, 0], [], []>} : vector<1x2xf32>, vector<10x2xf32>, vector<1x10xf32> -> vector<1x10xf32>
    %cst_439 = arith.constant 0.707106769 : f32
    %1594 = vector.broadcast %cst_439 : f32 to vector<1x10xf32>
    %1595 = arith.mulf %1593, %1594 : vector<1x10xf32>
    %cst_440 = arith.constant dense<0xFF800000> : vector<1xf32>
    %1596 = vector.multi_reduction <maximumf>, %1595, %cst_440 [1] : vector<1x10xf32> to vector<1xf32>
    %1597 = vector.shape_cast %1596 : vector<1xf32> to vector<1x1xf32>
    %1598 = vector.broadcast %1597 : vector<1x1xf32> to vector<1x10xf32>
    %1599 = arith.subf %1595, %1598 : vector<1x10xf32>
    %1600 = math.exp %1599 : vector<1x10xf32>
    %cst_441 = arith.constant dense<0.000000e+00> : vector<1xf32>
    %1601 = vector.multi_reduction <add>, %1600, %cst_441 [1] : vector<1x10xf32> to vector<1xf32>
    %1602 = vector.shape_cast %1601 : vector<1xf32> to vector<1x1xf32>
    %1603 = tpu.reciprocal %1602 {approx = true} : vector<1x1xf32> -> vector<1x1xf32>
    %1604 = vector.broadcast %1603 : vector<1x1xf32> to vector<1x10xf32>
    %1605 = arith.mulf %1600, %1604 : vector<1x10xf32>
    %cst_442 = arith.constant dense<0.000000e+00> : vector<1x2xf32>
    %1606 = tpu.matmul %1605, %1592, %cst_442 {dimension_numbers = #tpu.dot_dimension_numbers<[1], [0], [0], [1], [0, 0, 1, 1], [], []>} : vector<1x10xf32>, vector<10x2xf32>, vector<1x2xf32> -> vector<1x2xf32>
    %1607 = vector.extract_strided_slice %1536 {offsets = [4, 0], sizes = [2, 8], strides = [1, 1]} : vector<8x8xf32> to vector<2x8xf32>
    %cst_443 = arith.constant dense<0.000000e+00> : vector<1x8xf32>
    %1608 = tpu.matmul %1606, %1607, %cst_443 {dimension_numbers = #tpu.dot_dimension_numbers<[1], [0], [0], [1], [0, 0, 1, 1], [], []>} : vector<1x2xf32>, vector<2x8xf32>, vector<1x8xf32> -> vector<1x8xf32>
    %1609 = arith.addf %1589, %1608 : vector<1x8xf32>
    %1610 = vector.extract_strided_slice %1541 {offsets = [0, 6], sizes = [1, 2], strides = [1, 1]} : vector<1x8xf32> to vector<1x2xf32>
    %1611 = vector.extract_strided_slice %1547 {offsets = [0, 6], sizes = [10, 2], strides = [1, 1]} : vector<10x8xf32> to vector<10x2xf32>
    %1612 = vector.extract_strided_slice %1548 {offsets = [0, 6], sizes = [10, 2], strides = [1, 1]} : vector<10x8xf32> to vector<10x2xf32>
    %cst_444 = arith.constant dense<0.000000e+00> : vector<1x10xf32>
    %1613 = tpu.matmul %1610, %1611, %cst_444 {dimension_numbers = #tpu.dot_dimension_numbers<[1], [1], [0], [0], [0, 0, 1, 0], [], []>} : vector<1x2xf32>, vector<10x2xf32>, vector<1x10xf32> -> vector<1x10xf32>
    %cst_445 = arith.constant 0.707106769 : f32
    %1614 = vector.broadcast %cst_445 : f32 to vector<1x10xf32>
    %1615 = arith.mulf %1613, %1614 : vector<1x10xf32>
    %cst_446 = arith.constant dense<0xFF800000> : vector<1xf32>
    %1616 = vector.multi_reduction <maximumf>, %1615, %cst_446 [1] : vector<1x10xf32> to vector<1xf32>
    %1617 = vector.shape_cast %1616 : vector<1xf32> to vector<1x1xf32>
    %1618 = vector.broadcast %1617 : vector<1x1xf32> to vector<1x10xf32>
    %1619 = arith.subf %1615, %1618 : vector<1x10xf32>
    %1620 = math.exp %1619 : vector<1x10xf32>
    %cst_447 = arith.constant dense<0.000000e+00> : vector<1xf32>
    %1621 = vector.multi_reduction <add>, %1620, %cst_447 [1] : vector<1x10xf32> to vector<1xf32>
    %1622 = vector.shape_cast %1621 : vector<1xf32> to vector<1x1xf32>
    %1623 = tpu.reciprocal %1622 {approx = true} : vector<1x1xf32> -> vector<1x1xf32>
    %1624 = vector.broadcast %1623 : vector<1x1xf32> to vector<1x10xf32>
    %1625 = arith.mulf %1620, %1624 : vector<1x10xf32>
    %cst_448 = arith.constant dense<0.000000e+00> : vector<1x2xf32>
    %1626 = tpu.matmul %1625, %1612, %cst_448 {dimension_numbers = #tpu.dot_dimension_numbers<[1], [0], [0], [1], [0, 0, 1, 1], [], []>} : vector<1x10xf32>, vector<10x2xf32>, vector<1x2xf32> -> vector<1x2xf32>
    %1627 = vector.extract_strided_slice %1536 {offsets = [6, 0], sizes = [2, 8], strides = [1, 1]} : vector<8x8xf32> to vector<2x8xf32>
    %cst_449 = arith.constant dense<0.000000e+00> : vector<1x8xf32>
    %1628 = tpu.matmul %1626, %1627, %cst_449 {dimension_numbers = #tpu.dot_dimension_numbers<[1], [0], [0], [1], [0, 0, 1, 1], [], []>} : vector<1x2xf32>, vector<2x8xf32>, vector<1x8xf32> -> vector<1x8xf32>
    %1629 = arith.addf %1609, %1628 : vector<1x8xf32>
    %1630 = arith.addf %1629, %1537 : vector<1x8xf32>
    %1631 = arith.addf %1533, %1630 : vector<1x8xf32>
    %cst_450 = arith.constant dense<0.000000e+00> : vector<1xf32>
    %1632 = vector.multi_reduction <add>, %1631, %cst_450 [1] : vector<1x8xf32> to vector<1xf32>
    %1633 = vector.shape_cast %1632 : vector<1xf32> to vector<1x1xf32>
    %cst_451 = arith.constant 8.000000e+00 : f32
    %1634 = vector.broadcast %cst_451 : f32 to vector<1x1xf32>
    %1635 = arith.divf %1633, %1634 : vector<1x1xf32>
    %1636 = vector.broadcast %1635 : vector<1x1xf32> to vector<1x8xf32>
    %1637 = arith.subf %1631, %1636 : vector<1x8xf32>
    %1638 = arith.mulf %1637, %1637 : vector<1x8xf32>
    %cst_452 = arith.constant dense<0.000000e+00> : vector<1xf32>
    %1639 = vector.multi_reduction <add>, %1638, %cst_452 [1] : vector<1x8xf32> to vector<1xf32>
    %1640 = vector.shape_cast %1639 : vector<1xf32> to vector<1x1xf32>
    %cst_453 = arith.constant 8.000000e+00 : f32
    %1641 = vector.broadcast %cst_453 : f32 to vector<1x1xf32>
    %1642 = arith.divf %1640, %1641 : vector<1x1xf32>
    %cst_454 = arith.constant 9.99999974E-6 : f32
    %1643 = vector.broadcast %cst_454 : f32 to vector<1x1xf32>
    %1644 = arith.addf %1642, %1643 : vector<1x1xf32>
    %1645 = math.rsqrt %1644 : vector<1x1xf32>
    %1646 = vector.broadcast %1645 : vector<1x1xf32> to vector<1x8xf32>
    %1647 = arith.mulf %1637, %1646 : vector<1x8xf32>
    %1648 = vector.extract_strided_slice %4 {offsets = [14, 0], sizes = [1, 8], strides = [1, 1]} : vector<21x24xf32> to vector<1x8xf32>
    %1649 = arith.mulf %1647, %1648 : vector<1x8xf32>
    %1650 = vector.extract_strided_slice %4 {offsets = [15, 0], sizes = [1, 8], strides = [1, 1]} : vector<21x24xf32> to vector<1x8xf32>
    %1651 = arith.addf %1649, %1650 : vector<1x8xf32>
    %1652 = vector.extract_strided_slice %3 {offsets = [72, 0], sizes = [8, 16], strides = [1, 1]} : vector<104x24xf32> to vector<8x16xf32>
    %cst_455 = arith.constant dense<0.000000e+00> : vector<1x16xf32>
    %1653 = tpu.matmul %1651, %1652, %cst_455 {dimension_numbers = #tpu.dot_dimension_numbers<[1], [0], [0], [1], [0, 0, 1, 1], [], []>} : vector<1x8xf32>, vector<8x16xf32>, vector<1x16xf32> -> vector<1x16xf32>
    %1654 = vector.extract_strided_slice %4 {offsets = [16, 0], sizes = [1, 16], strides = [1, 1]} : vector<21x24xf32> to vector<1x16xf32>
    %1655 = arith.addf %1653, %1654 : vector<1x16xf32>
    %cst_456 = arith.constant 0.000000e+00 : f32
    %1656 = vector.broadcast %cst_456 : f32 to vector<1x16xf32>
    %1657 = arith.maximumf %1655, %1656 : vector<1x16xf32>
    %1658 = vector.extract_strided_slice %3 {offsets = [80, 0], sizes = [16, 8], strides = [1, 1]} : vector<104x24xf32> to vector<16x8xf32>
    %cst_457 = arith.constant dense<0.000000e+00> : vector<1x8xf32>
    %1659 = tpu.matmul %1657, %1658, %cst_457 {dimension_numbers = #tpu.dot_dimension_numbers<[1], [0], [0], [1], [0, 0, 1, 1], [], []>} : vector<1x16xf32>, vector<16x8xf32>, vector<1x8xf32> -> vector<1x8xf32>
    %1660 = vector.extract_strided_slice %4 {offsets = [17, 0], sizes = [1, 8], strides = [1, 1]} : vector<21x24xf32> to vector<1x8xf32>
    %1661 = arith.addf %1659, %1660 : vector<1x8xf32>
    %1662 = arith.addf %1651, %1661 : vector<1x8xf32>
    %cst_458 = arith.constant dense<0.000000e+00> : vector<1xf32>
    %1663 = vector.multi_reduction <add>, %1662, %cst_458 [1] : vector<1x8xf32> to vector<1xf32>
    %1664 = vector.shape_cast %1663 : vector<1xf32> to vector<1x1xf32>
    %cst_459 = arith.constant 8.000000e+00 : f32
    %1665 = vector.broadcast %cst_459 : f32 to vector<1x1xf32>
    %1666 = arith.divf %1664, %1665 : vector<1x1xf32>
    %1667 = vector.broadcast %1666 : vector<1x1xf32> to vector<1x8xf32>
    %1668 = arith.subf %1662, %1667 : vector<1x8xf32>
    %1669 = arith.mulf %1668, %1668 : vector<1x8xf32>
    %cst_460 = arith.constant dense<0.000000e+00> : vector<1xf32>
    %1670 = vector.multi_reduction <add>, %1669, %cst_460 [1] : vector<1x8xf32> to vector<1xf32>
    %1671 = vector.shape_cast %1670 : vector<1xf32> to vector<1x1xf32>
    %cst_461 = arith.constant 8.000000e+00 : f32
    %1672 = vector.broadcast %cst_461 : f32 to vector<1x1xf32>
    %1673 = arith.divf %1671, %1672 : vector<1x1xf32>
    %cst_462 = arith.constant 9.99999974E-6 : f32
    %1674 = vector.broadcast %cst_462 : f32 to vector<1x1xf32>
    %1675 = arith.addf %1673, %1674 : vector<1x1xf32>
    %1676 = math.rsqrt %1675 : vector<1x1xf32>
    %1677 = vector.broadcast %1676 : vector<1x1xf32> to vector<1x8xf32>
    %1678 = arith.mulf %1668, %1677 : vector<1x8xf32>
    %1679 = vector.extract_strided_slice %4 {offsets = [18, 0], sizes = [1, 8], strides = [1, 1]} : vector<21x24xf32> to vector<1x8xf32>
    %1680 = arith.mulf %1678, %1679 : vector<1x8xf32>
    %1681 = vector.extract_strided_slice %4 {offsets = [19, 0], sizes = [1, 8], strides = [1, 1]} : vector<21x24xf32> to vector<1x8xf32>
    %1682 = arith.addf %1680, %1681 : vector<1x8xf32>
    %1683 = vector.extract_strided_slice %3 {offsets = [96, 0], sizes = [8, 4], strides = [1, 1]} : vector<104x24xf32> to vector<8x4xf32>
    %cst_463 = arith.constant dense<0.000000e+00> : vector<1x4xf32>
    %1684 = tpu.matmul %1682, %1683, %cst_463 {dimension_numbers = #tpu.dot_dimension_numbers<[1], [0], [0], [1], [0, 0, 1, 1], [], []>} : vector<1x8xf32>, vector<8x4xf32>, vector<1x4xf32> -> vector<1x4xf32>
    %1685 = vector.extract_strided_slice %4 {offsets = [20, 0], sizes = [1, 4], strides = [1, 1]} : vector<21x24xf32> to vector<1x4xf32>
    %1686 = arith.addf %1684, %1685 : vector<1x4xf32>
    %cst_464 = arith.constant 0.000000e+00 : f32
    %1687 = vector.broadcast %cst_464 : f32 to vector<1x4xf32>
    %1688 = arith.subf %1687, %1686 : vector<1x4xf32>
    %1689 = math.exp %1688 : vector<1x4xf32>
    %cst_465 = arith.constant 1.000000e+00 : f32
    %1690 = vector.broadcast %cst_465 : f32 to vector<1x4xf32>
    %1691 = arith.addf %1690, %1689 : vector<1x4xf32>
    %1692 = tpu.reciprocal %1691 {approx = true} : vector<1x4xf32> -> vector<1x4xf32>
    %1693 = tpu.concatenate %848, %1692 in 1 : vector<1x4xf32>, vector<1x4xf32> -> vector<1x8xf32>
    %c0_466 = arith.constant 0 : index
    %c0_467 = arith.constant 0 : index
    %1694 = vector.load %arg5[%c0_466, %c0_467] : memref<1x8xf32, #tpu.memory_space<vmem>>, vector<1x8xf32>
    tpu.vector_store %arg5[%c0_466, %c0_467], %1693 {strides = array<i32>} : memref<1x8xf32, #tpu.memory_space<vmem>>, vector<1x8xf32>,
    return
  }
}

</mosaic_0001>

<llo_original>
// kernel: forward.1
$region0: #{forward.1}
  #allocation0 [shape = 'u32[]', space=smem, size = 0x4, offset = 0x4, fixed_abs, tag = 'smem constant byte address 0x4 - core index']
  #allocation1 [shape = 'u32[72,128]{1,0:T(1,128)}', space=vmem, size = 0x9000, scoped, tag = 'internal scratch']
  %s0 = inlined_call_operand.vmem [shape: f32[10,8], index: 0, kind: input, shape index: {}]
  %s1 = inlined_call_operand.vmem [shape: f32[1,8], index: 1, kind: input, shape index: {}]
  %s2 = inlined_call_operand.vmem [shape: f32[10,8], index: 2, kind: input, shape index: {}]
  %s3 = inlined_call_operand.vmem [shape: f32[104,24], index: 3, kind: input, shape index: {}]
  %s4 = inlined_call_operand.vmem [shape: f32[21,24], index: 4, kind: input, shape index: {}]
  %s5 = inlined_call_operand.vmem [shape: f32[1,8], index: 5, kind: output, shape index: {}]
  %s6 = sld [smem:[#allocation0]]
  $region30: #{forward.1} parent=0
    _
  %s8 = ssub.s32 1, %s6
  %s9 = scalar_select 0, %s8, %s6
  // Predicated region
  $region2: #{forward.1} parent=0 // pred_check
    _
  $region3: #{forward.1} parent=0 // pred_check_branch
    %11 = sbr.rel (0) target = $region5
  $region4: #{forward.1} parent=0 // pred_region
    _
  $region5: #{forward.1} parent=0 // pred_fallthru
    _
  // Predicated region
  $region6: #{forward.1} parent=0 // pred_check
    _
  $region7: #{forward.1} parent=0 // pred_check_branch
    %13 = sbr.rel (0) target = $region9
  $region8: #{forward.1} parent=0 // pred_region
    _
  $region9: #{forward.1} parent=0 // pred_fallthru
    _
  // Predicated region
  $region10: #{forward.1} parent=0 // pred_check
    _
  $region11: #{forward.1} parent=0 // pred_check_branch
    %15 = sbr.rel (0) target = $region13
  $region12: #{forward.1} parent=0 // pred_region
    _
  $region13: #{forward.1} parent=0 // pred_fallthru
    _
  // Predicated region
  $region14: #{forward.1} parent=0 // pred_check
    _
  $region15: #{forward.1} parent=0 // pred_check_branch
    %17 = sbr.rel (0) target = $region17
  $region16: #{forward.1} parent=0 // pred_region
    _
  $region17: #{forward.1} parent=0 // pred_fallthru
    _
  // Predicated region
  $region18: #{forward.1} parent=0 // pred_check
    _
  $region19: #{forward.1} parent=0 // pred_check_branch
    %19 = sbr.rel (0) target = $region21
  $region20: #{forward.1} parent=0 // pred_region
    _
  $region21: #{forward.1} parent=0 // pred_fallthru
    _
  %v20 = vld [vmem:[%s0] sm:$0xff]
  %v21 = vld [vmem:[%s0 + $0x8] sm:$0x3]
  %v22 = vld [vmem:[%s1] sm:$0x1]
  %v23 = vld [vmem:[%s2] sm:$0xff]
  %v24 = vld [vmem:[%s2 + $0x8] sm:$0x3]
  %v25 = vld [vmem:[%s3] sm:$0xff]
  %v26 = vld [vmem:[%s3 + $0x8] sm:$0xff]
  %v27 = vld [vmem:[%s3 + $0x10] sm:$0xff]
  %v28 = vld [vmem:[%s3 + $0x18] sm:$0xff]
  %v29 = vld [vmem:[%s3 + $0x20] sm:$0xff]
  %v30 = vld [vmem:[%s3 + $0x28] sm:$0xff]
  %v31 = vld [vmem:[%s3 + $0x30] sm:$0xff]
  %v32 = vld [vmem:[%s3 + $0x38] sm:$0xff]
  %v33 = vld [vmem:[%s3 + $0x40] sm:$0xff]
  %v34 = vld [vmem:[%s3 + $0x48] sm:$0xff]
  %v35 = vld [vmem:[%s3 + $0x50] sm:$0xff]
  %v36 = vld [vmem:[%s3 + $0x58] sm:$0xff]
  %v37 = vld [vmem:[%s3 + $0x60] sm:$0xff]
  %v38 = vld [vmem:[%s4] sm:$0xff]
  %v39 = vld [vmem:[%s4 + $0x8] sm:$0xff]
  %v40 = vld [vmem:[%s4 + $0x10] sm:$0x1f]
  %vm41 = vcmask 31744
  %v42 = vsel %vm41, %v20, 0.0
  %v43 = vsel %vm41, %v21, 0.0
  %v44 = vmul.f32 %v42, 2.0
  %v45 = vmul.f32 %v43, 2.0
  %v46 = vadd.f32 %v44, %v23
  %v47 = vadd.f32 %v45, %v24
  %v48 = vperm.slane %v38, 0
  %vm49 = vcmask 64512
  %v51 = vsel %vm49, %v46, 0
  %v54 = vsel %vm49, %v47, 0
  %56 = vmatpush.msra.mxu0 0.0
  %57 = vmatpush.msra.mxu0 0.0
  %58 = vmatpush.msra.mxu0 0.0
  %59 = vmatpush.msra.mxu0 0.0
  %60 = vmatpush.msra.mxu0 0.0
  %61 = vmatpush.msra.mxu0 0.0
  %62 = vmatpush.msra.mxu0 0.0
  %63 = vmatpush.msra.mxu0 0.0
  %64 = vmatpush.msra.mxu0 0.0
  %65 = vmatpush.msra.mxu0 0.0
  %66 = vmatpush.msra.mxu0 0.0
  %67 = vmatpush.msra.mxu0 0.0
  %68 = vmatpush.msra.mxu0 0.0
  %69 = vmatpush.msra.mxu0 0.0
  %70 = vmatpush.msra.mxu0 0.0
  %71 = vmatpush.msra.mxu0 %v25
  %72 = vmatmul.f32.gmra.mxu0 %v51
  %v73 = vpop.f32.mrf.mxu0
  %v74 = vadd.f32 %v48, %v73
  %75 = vmatmul.f32.gmra.mxu0 %v54
  %v76 = vpop.f32.mrf.mxu0
  %v77 = vadd.f32 %v48, %v76
  %78 = vdwg.mxu0
  %81 = vrot.lane.b32.xlu0 %v74, 120
  %v82 = vpop.permute.xlu0 %81
  %83 = vrot.lane.b32.xlu0 %v77, 120
  %v84 = vpop.permute.xlu0 %83
  %vm85 = vcmask 15360
  %v86 = vsel %vm85, %v74, 0
  %v88 = vsel %vm85, %v77, 0
  %v90 = vsel %vm85, %v82, 0
  %v92 = vsel %vm85, %v84, 0
  %94 = vmatpush.xpose.msra.mxu0 0.0
  %95 = vmatpush.xpose.msra.mxu0 0.0
  %96 = vmatpush.xpose.msra.mxu0 0.0
  %97 = vmatpush.xpose.msra.mxu0 0.0
  %98 = vmatpush.xpose.msra.mxu0 0.0
  %99 = vmatpush.xpose.msra.mxu0 0.0
  %100 = vmatpush.xpose.msra.mxu0 0.0
  %101 = vmatpush.xpose.msra.mxu0 0.0
  %102 = vmatpush.xpose.msra.mxu0 0.0
  %103 = vmatpush.xpose.msra.mxu0 0.0
  %104 = vmatpush.xpose.msra.mxu0 0.0
  %105 = vmatpush.xpose.msra.mxu0 0.0
  %106 = vmatpush.xpose.msra.mxu0 0.0
  %107 = vmatpush.xpose.msra.mxu0 0.0
  %108 = vmatpush.xpose.msra.mxu0 %v92
  %109 = vmatpush.xpose.msra.mxu0 %v90
  %110 = vmatmul.f32.gmra.mxu0 %v86
  %v111 = vpop.f32.mrf.mxu0
  %v112 = vadd.f32 0.0, %v111
  %113 = vmatmul.f32.gmra.mxu0 %v88
  %v114 = vpop.f32.mrf.mxu0
  %v115 = vadd.f32 0.0, %v114
  %116 = vdwg.mxu0
  %v117 = vmul.f32 %v112, 0.70710677
  %v118 = vmul.f32 %v115, 0.70710677
  %vm119 = vcmask 80896
  %v120 = vsel %vm119, %v117, -inf
  %121 = vmax.xlane.f32.xlu0 %v120
  %v122 = vpop.xlane.xlu0 %121
  %vm123 = vcmask 74752
  %v124 = vsel %vm123, %v118, -inf
  %125 = vmax.xlane.f32.xlu0 %v124
  %v126 = vpop.xlane.xlu0 %125
  %v127 = vsub.f32 %v117, %v122
  %v128 = vsub.f32 %v118, %v126
  %v129 = vmul.f32 %v127, 1.442695
  %v130 = vpow.pop %v129
  %v131 = vmul.f32 %v128, 1.442695
  %v132 = vpow.pop %v131
  %v133 = vsel %vm119, %v130, 0.0
  %134 = vadd.xlane.f32.xlu0 %v133
  %v135 = vpop.xlane.xlu0 %134
  %v136 = vsel %vm123, %v132, 0.0
  %137 = vadd.xlane.f32.xlu0 %v136
  %v138 = vpop.xlane.xlu0 %137
  %v139 = vrcp.pop %v135
  %v140 = vrcp.pop %v138
  %v141 = vmul.f32 %v130, %v139
  %v142 = vmul.f32 %v132, %v140
  %143 = vrot.lane.b32.xlu0 %v74, 112
  %v144 = vpop.permute.xlu0 %143
  %145 = vrot.lane.b32.xlu0 %v77, 112
  %v146 = vpop.permute.xlu0 %145
  %v149 = vsel %vm119, %v141, 0
  %v152 = vsel %vm119, %v142, 0
  %vm154 = vcmask 1041408
  %v155 = vsel %vm154, %v146, 0
  %157 = vmatpush.msra.mxu0 0.0
  %158 = vmatpush.msra.mxu0 0.0
  %159 = vmatpush.msra.mxu0 0.0
  %160 = vmatpush.msra.mxu0 0.0
  %161 = vmatpush.msra.mxu0 0.0
  %162 = vmatpush.msra.mxu0 0.0
  %163 = vmatpush.msra.mxu0 0.0
  %164 = vmatpush.msra.mxu0 0.0
  %165 = vmatpush.msra.mxu0 0.0
  %166 = vmatpush.msra.mxu0 0.0
  %167 = vmatpush.msra.mxu0 0.0
  %168 = vmatpush.msra.mxu0 0.0
  %169 = vmatpush.msra.mxu0 0.0
  %170 = vmatpush.msra.mxu0 0.0
  %171 = vmatpush.msra.mxu0 %v155
  %172 = vmatpush.msra.mxu0 %v144
  %173 = vmatmul.f32.gmra.mxu0 %v149
  %v174 = vpop.f32.mrf.mxu0
  %v175 = vadd.f32 0.0, %v174
  %176 = vmatmul.f32.gmra.mxu0 %v152
  %v177 = vpop.f32.mrf.mxu0
  %v178 = vadd.f32 0.0, %v177
  %179 = vdwg.mxu0
  %180 = vrot.lane.b32.xlu0 %v74, 126
  %v181 = vpop.permute.xlu0 %180
  %182 = vrot.lane.b32.xlu0 %v77, 126
  %v183 = vpop.permute.xlu0 %182
  %184 = vrot.lane.b32.xlu0 %v74, 118
  %v185 = vpop.permute.xlu0 %184
  %186 = vrot.lane.b32.xlu0 %v77, 118
  %v187 = vpop.permute.xlu0 %186
  %v188 = vsel %vm85, %v181, 0
  %v190 = vsel %vm85, %v183, 0
  %v192 = vsel %vm85, %v185, 0
  %v194 = vsel %vm85, %v187, 0
  %196 = vmatpush.xpose.msra.mxu0 0.0
  %197 = vmatpush.xpose.msra.mxu0 0.0
  %198 = vmatpush.xpose.msra.mxu0 0.0
  %199 = vmatpush.xpose.msra.mxu0 0.0
  %200 = vmatpush.xpose.msra.mxu0 0.0
  %201 = vmatpush.xpose.msra.mxu0 0.0
  %202 = vmatpush.xpose.msra.mxu0 0.0
  %203 = vmatpush.xpose.msra.mxu0 0.0
  %204 = vmatpush.xpose.msra.mxu0 0.0
  %205 = vmatpush.xpose.msra.mxu0 0.0
  %206 = vmatpush.xpose.msra.mxu0 0.0
  %207 = vmatpush.xpose.msra.mxu0 0.0
  %208 = vmatpush.xpose.msra.mxu0 0.0
  %209 = vmatpush.xpose.msra.mxu0 0.0
  %210 = vmatpush.xpose.msra.mxu0 %v194
  %211 = vmatpush.xpose.msra.mxu0 %v192
  %212 = vmatmul.f32.gmra.mxu0 %v188
  %v213 = vpop.f32.mrf.mxu0
  %v214 = vadd.f32 0.0, %v213
  %215 = vmatmul.f32.gmra.mxu0 %v190
  %v216 = vpop.f32.mrf.mxu0
  %v217 = vadd.f32 0.0, %v216
  %218 = vdwg.mxu0
  %v219 = vmul.f32 %v214, 0.70710677
  %v220 = vmul.f32 %v217, 0.70710677
  %v221 = vsel %vm119, %v219, -inf
  %222 = vmax.xlane.f32.xlu0 %v221
  %v223 = vpop.xlane.xlu0 %222
  %v224 = vsel %vm123, %v220, -inf
  %225 = vmax.xlane.f32.xlu0 %v224
  %v226 = vpop.xlane.xlu0 %225
  %v227 = vsub.f32 %v219, %v223
  %v228 = vsub.f32 %v220, %v226
  %v229 = vmul.f32 %v227, 1.442695
  %v230 = vpow.pop %v229
  %v231 = vmul.f32 %v228, 1.442695
  %v232 = vpow.pop %v231
  %v233 = vsel %vm119, %v230, 0.0
  %234 = vadd.xlane.f32.xlu0 %v233
  %v235 = vpop.xlane.xlu0 %234
  %v236 = vsel %vm123, %v232, 0.0
  %237 = vadd.xlane.f32.xlu0 %v236
  %v238 = vpop.xlane.xlu0 %237
  %v239 = vrcp.pop %v235
  %v240 = vrcp.pop %v238
  %v241 = vmul.f32 %v230, %v239
  %v242 = vmul.f32 %v232, %v240
  %243 = vrot.lane.b32.xlu0 %v74, 110
  %v244 = vpop.permute.xlu0 %243
  %245 = vrot.lane.b32.xlu0 %v77, 110
  %v246 = vpop.permute.xlu0 %245
  %v249 = vsel %vm119, %v241, 0
  %v252 = vsel %vm119, %v242, 0
  %v254 = vsel %vm154, %v246, 0
  %256 = vmatpush.msra.mxu0 0.0
  %257 = vmatpush.msra.mxu0 0.0
  %258 = vmatpush.msra.mxu0 0.0
  %259 = vmatpush.msra.mxu0 0.0
  %260 = vmatpush.msra.mxu0 0.0
  %261 = vmatpush.msra.mxu0 0.0
  %262 = vmatpush.msra.mxu0 0.0
  %263 = vmatpush.msra.mxu0 0.0
  %264 = vmatpush.msra.mxu0 0.0
  %265 = vmatpush.msra.mxu0 0.0
  %266 = vmatpush.msra.mxu0 0.0
  %267 = vmatpush.msra.mxu0 0.0
  %268 = vmatpush.msra.mxu0 0.0
  %269 = vmatpush.msra.mxu0 0.0
  %270 = vmatpush.msra.mxu0 %v254
  %271 = vmatpush.msra.mxu0 %v244
  %272 = vmatmul.f32.gmra.mxu0 %v249
  %v273 = vpop.f32.mrf.mxu0
  %v274 = vadd.f32 0.0, %v273
  %275 = vmatmul.f32.gmra.mxu0 %v252
  %v276 = vpop.f32.mrf.mxu0
  %v277 = vadd.f32 0.0, %v276
  %278 = vdwg.mxu0
  %v280 = vrot.slane %v26, 2
  %v282 = vsel %vm85, %v274, 0
  %v285 = vsel %vm85, %v277, 0
  %v287 = vsel %vm154, %v280, 0
  %289 = vmatpush.msra.mxu0 0.0
  %290 = vmatpush.msra.mxu0 0.0
  %291 = vmatpush.msra.mxu0 0.0
  %292 = vmatpush.msra.mxu0 0.0
  %293 = vmatpush.msra.mxu0 0.0
  %294 = vmatpush.msra.mxu0 0.0
  %295 = vmatpush.msra.mxu0 0.0
  %296 = vmatpush.msra.mxu0 0.0
  %297 = vmatpush.msra.mxu0 0.0
  %298 = vmatpush.msra.mxu0 0.0
  %299 = vmatpush.msra.mxu0 0.0
  %300 = vmatpush.msra.mxu0 0.0
  %301 = vmatpush.msra.mxu0 0.0
  %302 = vmatpush.msra.mxu0 0.0
  %303 = vmatpush.msra.mxu0 0.0
  %304 = vmatpush.msra.mxu0 %v287
  %305 = vmatmul.f32.gmra.mxu0 %v282
  %v306 = vpop.f32.mrf.mxu0
  %v307 = vadd.f32 0.0, %v306
  %308 = vmatmul.f32.gmra.mxu0 %v285
  %v309 = vpop.f32.mrf.mxu0
  %v310 = vadd.f32 0.0, %v309
  %311 = vdwg.mxu0
  %v313 = vsel %vm85, %v175, 0
  %v316 = vsel %vm85, %v178, 0
  %v318 = vsel %vm154, %v26, 0
  %320 = vmatpush.msra.mxu0 0.0
  %321 = vmatpush.msra.mxu0 0.0
  %322 = vmatpush.msra.mxu0 0.0
  %323 = vmatpush.msra.mxu0 0.0
  %324 = vmatpush.msra.mxu0 0.0
  %325 = vmatpush.msra.mxu0 0.0
  %326 = vmatpush.msra.mxu0 0.0
  %327 = vmatpush.msra.mxu0 0.0
  %328 = vmatpush.msra.mxu0 0.0
  %329 = vmatpush.msra.mxu0 0.0
  %330 = vmatpush.msra.mxu0 0.0
  %331 = vmatpush.msra.mxu0 0.0
  %332 = vmatpush.msra.mxu0 0.0
  %333 = vmatpush.msra.mxu0 0.0
  %334 = vmatpush.msra.mxu0 0.0
  %335 = vmatpush.msra.mxu0 %v318
  %336 = vmatmul.f32.gmra.mxu0 %v313
  %v337 = vpop.f32.mrf.mxu0
  %v338 = vadd.f32 %v307, %v337
  %339 = vmatmul.f32.gmra.mxu0 %v316
  %v340 = vpop.f32.mrf.mxu0
  %v341 = vadd.f32 %v310, %v340
  %342 = vdwg.mxu0
  %343 = vrot.lane.b32.xlu0 %v74, 124
  %v344 = vpop.permute.xlu0 %343
  %345 = vrot.lane.b32.xlu0 %v77, 124
  %v346 = vpop.permute.xlu0 %345
  %347 = vrot.lane.b32.xlu0 %v74, 116
  %v348 = vpop.permute.xlu0 %347
  %349 = vrot.lane.b32.xlu0 %v77, 116
  %v350 = vpop.permute.xlu0 %349
  %v351 = vsel %vm85, %v344, 0
  %v353 = vsel %vm85, %v346, 0
  %v355 = vsel %vm85, %v348, 0
  %v357 = vsel %vm85, %v350, 0
  %359 = vmatpush.xpose.msra.mxu0 0.0
  %360 = vmatpush.xpose.msra.mxu0 0.0
  %361 = vmatpush.xpose.msra.mxu0 0.0
  %362 = vmatpush.xpose.msra.mxu0 0.0
  %363 = vmatpush.xpose.msra.mxu0 0.0
  %364 = vmatpush.xpose.msra.mxu0 0.0
  %365 = vmatpush.xpose.msra.mxu0 0.0
  %366 = vmatpush.xpose.msra.mxu0 0.0
  %367 = vmatpush.xpose.msra.mxu0 0.0
  %368 = vmatpush.xpose.msra.mxu0 0.0
  %369 = vmatpush.xpose.msra.mxu0 0.0
  %370 = vmatpush.xpose.msra.mxu0 0.0
  %371 = vmatpush.xpose.msra.mxu0 0.0
  %372 = vmatpush.xpose.msra.mxu0 0.0
  %373 = vmatpush.xpose.msra.mxu0 %v357
  %374 = vmatpush.xpose.msra.mxu0 %v355
  %375 = vmatmul.f32.gmra.mxu0 %v351
  %v376 = vpop.f32.mrf.mxu0
  %v377 = vadd.f32 0.0, %v376
  %378 = vmatmul.f32.gmra.mxu0 %v353
  %v379 = vpop.f32.mrf.mxu0
  %v380 = vadd.f32 0.0, %v379
  %381 = vdwg.mxu0
  %v382 = vmul.f32 %v377, 0.70710677
  %v383 = vmul.f32 %v380, 0.70710677
  %v384 = vsel %vm119, %v382, -inf
  %385 = vmax.xlane.f32.xlu0 %v384
  %v386 = vpop.xlane.xlu0 %385
  %v387 = vsel %vm123, %v383, -inf
  %388 = vmax.xlane.f32.xlu0 %v387
  %v389 = vpop.xlane.xlu0 %388
  %v390 = vsub.f32 %v382, %v386
  %v391 = vsub.f32 %v383, %v389
  %v392 = vmul.f32 %v390, 1.442695
  %v393 = vpow.pop %v392
  %v394 = vmul.f32 %v391, 1.442695
  %v395 = vpow.pop %v394
  %v396 = vsel %vm119, %v393, 0.0
  %397 = vadd.xlane.f32.xlu0 %v396
  %v398 = vpop.xlane.xlu0 %397
  %v399 = vsel %vm123, %v395, 0.0
  %400 = vadd.xlane.f32.xlu0 %v399
  %v401 = vpop.xlane.xlu0 %400
  %v402 = vrcp.pop %v398
  %v403 = vrcp.pop %v401
  %v404 = vmul.f32 %v393, %v402
  %v405 = vmul.f32 %v395, %v403
  %406 = vrot.lane.b32.xlu0 %v74, 108
  %v407 = vpop.permute.xlu0 %406
  %408 = vrot.lane.b32.xlu0 %v77, 108
  %v409 = vpop.permute.xlu0 %408
  %v412 = vsel %vm119, %v404, 0
  %v415 = vsel %vm119, %v405, 0
  %v417 = vsel %vm154, %v409, 0
  %419 = vmatpush.msra.mxu0 0.0
  %420 = vmatpush.msra.mxu0 0.0
  %421 = vmatpush.msra.mxu0 0.0
  %422 = vmatpush.msra.mxu0 0.0
  %423 = vmatpush.msra.mxu0 0.0
  %424 = vmatpush.msra.mxu0 0.0
  %425 = vmatpush.msra.mxu0 0.0
  %426 = vmatpush.msra.mxu0 0.0
  %427 = vmatpush.msra.mxu0 0.0
  %428 = vmatpush.msra.mxu0 0.0
  %429 = vmatpush.msra.mxu0 0.0
  %430 = vmatpush.msra.mxu0 0.0
  %431 = vmatpush.msra.mxu0 0.0
  %432 = vmatpush.msra.mxu0 0.0
  %433 = vmatpush.msra.mxu0 %v417
  %434 = vmatpush.msra.mxu0 %v407
  %435 = vmatmul.f32.gmra.mxu0 %v412
  %v436 = vpop.f32.mrf.mxu0
  %v437 = vadd.f32 0.0, %v436
  %438 = vmatmul.f32.gmra.mxu0 %v415
  %v439 = vpop.f32.mrf.mxu0
  %v440 = vadd.f32 0.0, %v439
  %441 = vdwg.mxu0
  %v442 = vrot.slane %v26, 4
  %v444 = vsel %vm85, %v437, 0
  %v447 = vsel %vm85, %v440, 0
  %v449 = vsel %vm154, %v442, 0
  %451 = vmatpush.msra.mxu0 0.0
  %452 = vmatpush.msra.mxu0 0.0
  %453 = vmatpush.msra.mxu0 0.0
  %454 = vmatpush.msra.mxu0 0.0
  %455 = vmatpush.msra.mxu0 0.0
  %456 = vmatpush.msra.mxu0 0.0
  %457 = vmatpush.msra.mxu0 0.0
  %458 = vmatpush.msra.mxu0 0.0
  %459 = vmatpush.msra.mxu0 0.0
  %460 = vmatpush.msra.mxu0 0.0
  %461 = vmatpush.msra.mxu0 0.0
  %462 = vmatpush.msra.mxu0 0.0
  %463 = vmatpush.msra.mxu0 0.0
  %464 = vmatpush.msra.mxu0 0.0
  %465 = vmatpush.msra.mxu0 0.0
  %466 = vmatpush.msra.mxu0 %v449
  %467 = vmatmul.f32.gmra.mxu0 %v444
  %v468 = vpop.f32.mrf.mxu0
  %v469 = vadd.f32 0.0, %v468
  %470 = vmatmul.f32.gmra.mxu0 %v447
  %v471 = vpop.f32.mrf.mxu0
  %v472 = vadd.f32 0.0, %v471
  %473 = vdwg.mxu0
  %v474 = vadd.f32 %v338, %v469
  %v475 = vadd.f32 %v341, %v472
  %476 = vrot.lane.b32.xlu0 %v74, 122
  %v477 = vpop.permute.xlu0 %476
  %478 = vrot.lane.b32.xlu0 %v77, 122
  %v479 = vpop.permute.xlu0 %478
  %480 = vrot.lane.b32.xlu0 %v74, 114
  %v481 = vpop.permute.xlu0 %480
  %482 = vrot.lane.b32.xlu0 %v77, 114
  %v483 = vpop.permute.xlu0 %482
  %v484 = vsel %vm85, %v477, 0
  %v486 = vsel %vm85, %v479, 0
  %v488 = vsel %vm85, %v481, 0
  %v490 = vsel %vm85, %v483, 0
  %492 = vmatpush.xpose.msra.mxu0 0.0
  %493 = vmatpush.xpose.msra.mxu0 0.0
  %494 = vmatpush.xpose.msra.mxu0 0.0
  %495 = vmatpush.xpose.msra.mxu0 0.0
  %496 = vmatpush.xpose.msra.mxu0 0.0
  %497 = vmatpush.xpose.msra.mxu0 0.0
  %498 = vmatpush.xpose.msra.mxu0 0.0
  %499 = vmatpush.xpose.msra.mxu0 0.0
  %500 = vmatpush.xpose.msra.mxu0 0.0
  %501 = vmatpush.xpose.msra.mxu0 0.0
  %502 = vmatpush.xpose.msra.mxu0 0.0
  %503 = vmatpush.xpose.msra.mxu0 0.0
  %504 = vmatpush.xpose.msra.mxu0 0.0
  %505 = vmatpush.xpose.msra.mxu0 0.0
  %506 = vmatpush.xpose.msra.mxu0 %v490
  %507 = vmatpush.xpose.msra.mxu0 %v488
  %508 = vmatmul.f32.gmra.mxu0 %v484
  %v509 = vpop.f32.mrf.mxu0
  %v510 = vadd.f32 0.0, %v509
  %511 = vmatmul.f32.gmra.mxu0 %v486
  %v512 = vpop.f32.mrf.mxu0
  %v513 = vadd.f32 0.0, %v512
  %514 = vdwg.mxu0
  %v515 = vmul.f32 %v510, 0.70710677
  %v516 = vmul.f32 %v513, 0.70710677
  %v517 = vsel %vm119, %v515, -inf
  %518 = vmax.xlane.f32.xlu0 %v517
  %v519 = vpop.xlane.xlu0 %518
  %v520 = vsel %vm123, %v516, -inf
  %521 = vmax.xlane.f32.xlu0 %v520
  %v522 = vpop.xlane.xlu0 %521
  %v523 = vsub.f32 %v515, %v519
  %v524 = vsub.f32 %v516, %v522
  %v525 = vmul.f32 %v523, 1.442695
  %v526 = vpow.pop %v525
  %v527 = vmul.f32 %v524, 1.442695
  %v528 = vpow.pop %v527
  %v529 = vsel %vm119, %v526, 0.0
  %530 = vadd.xlane.f32.xlu0 %v529
  %v531 = vpop.xlane.xlu0 %530
  %v532 = vsel %vm123, %v528, 0.0
  %533 = vadd.xlane.f32.xlu0 %v532
  %v534 = vpop.xlane.xlu0 %533
  %v535 = vrcp.pop %v531
  %v536 = vrcp.pop %v534
  %v537 = vmul.f32 %v526, %v535
  %v538 = vmul.f32 %v528, %v536
  %539 = vrot.lane.b32.xlu0 %v74, 106
  %v540 = vpop.permute.xlu0 %539
  %541 = vrot.lane.b32.xlu0 %v77, 106
  %v542 = vpop.permute.xlu0 %541
  %v545 = vsel %vm119, %v537, 0
  %v548 = vsel %vm119, %v538, 0
  %v550 = vsel %vm154, %v542, 0
  %552 = vmatpush.msra.mxu0 0.0
  %553 = vmatpush.msra.mxu0 0.0
  %554 = vmatpush.msra.mxu0 0.0
  %555 = vmatpush.msra.mxu0 0.0
  %556 = vmatpush.msra.mxu0 0.0
  %557 = vmatpush.msra.mxu0 0.0
  %558 = vmatpush.msra.mxu0 0.0
  %559 = vmatpush.msra.mxu0 0.0
  %560 = vmatpush.msra.mxu0 0.0
  %561 = vmatpush.msra.mxu0 0.0
  %562 = vmatpush.msra.mxu0 0.0
  %563 = vmatpush.msra.mxu0 0.0
  %564 = vmatpush.msra.mxu0 0.0
  %565 = vmatpush.msra.mxu0 0.0
  %566 = vmatpush.msra.mxu0 %v550
  %567 = vmatpush.msra.mxu0 %v540
  %568 = vmatmul.f32.gmra.mxu0 %v545
  %v569 = vpop.f32.mrf.mxu0
  %v570 = vadd.f32 0.0, %v569
  %571 = vmatmul.f32.gmra.mxu0 %v548
  %v572 = vpop.f32.mrf.mxu0
  %v573 = vadd.f32 0.0, %v572
  %574 = vdwg.mxu0
  %v575 = vrot.slane %v26, 6
  %v577 = vsel %vm85, %v570, 0
  %v580 = vsel %vm85, %v573, 0
  %v582 = vsel %vm154, %v575, 0
  %584 = vmatpush.msra.mxu0 0.0
  %585 = vmatpush.msra.mxu0 0.0
  %586 = vmatpush.msra.mxu0 0.0
  %587 = vmatpush.msra.mxu0 0.0
  %588 = vmatpush.msra.mxu0 0.0
  %589 = vmatpush.msra.mxu0 0.0
  %590 = vmatpush.msra.mxu0 0.0
  %591 = vmatpush.msra.mxu0 0.0
  %592 = vmatpush.msra.mxu0 0.0
  %593 = vmatpush.msra.mxu0 0.0
  %594 = vmatpush.msra.mxu0 0.0
  %595 = vmatpush.msra.mxu0 0.0
  %596 = vmatpush.msra.mxu0 0.0
  %597 = vmatpush.msra.mxu0 0.0
  %598 = vmatpush.msra.mxu0 0.0
  %599 = vmatpush.msra.mxu0 %v582
  %600 = vmatmul.f32.gmra.mxu0 %v577
  %v601 = vpop.f32.mrf.mxu0
  %v602 = vadd.f32 0.0, %v601
  %603 = vmatmul.f32.gmra.mxu0 %v580
  %v604 = vpop.f32.mrf.mxu0
  %v605 = vadd.f32 0.0, %v604
  %606 = vdwg.mxu0
  %v607 = vadd.f32 %v474, %v602
  %v608 = vadd.f32 %v475, %v605
  %v609 = vperm.slane %v38, 1
  %v610 = vadd.f32 %v607, %v609
  %v611 = vadd.f32 %v608, %v609
  %v612 = vadd.f32 %v46, %v610
  %v613 = vadd.f32 %v47, %v611
  %v614 = vsel %vm49, %v612, 0.0
  %615 = vadd.xlane.f32.xlu0 %v614
  %v616 = vpop.xlane.xlu0 %615
  %vm617 = vcmask 58368
  %v618 = vsel %vm617, %v613, 0.0
  %619 = vadd.xlane.f32.xlu0 %v618
  %v620 = vpop.xlane.xlu0 %619
  %v621 = vrcp.pop 8.0
  %v622 = vmul.f32 8.0, %v621
  %v623 = vsub.f32 1.0, %v622
  %v624 = vmul.f32 %v621, %v623
  %v625 = vadd.f32 %v621, %v624
  %vm626 = vweird.f32 %v621
  %v627 = vsel %vm626, %v621, %v625
  %v628 = vmul.f32 %v616, %v627
  %v629 = vmul.f32 %v620, %v627
  %v630 = vsub.f32 %v612, %v628
  %v631 = vsub.f32 %v613, %v629
  %v632 = vmul.f32 %v630, %v630
  %v633 = vmul.f32 %v631, %v631
  %v634 = vsel %vm49, %v632, 0.0
  %635 = vadd.xlane.f32.xlu0 %v634
  %v636 = vpop.xlane.xlu0 %635
  %v637 = vsel %vm617, %v633, 0.0
  %638 = vadd.xlane.f32.xlu0 %v637
  %v639 = vpop.xlane.xlu0 %638
  %v640 = vmul.f32 %v636, %v627
  %v641 = vmul.f32 %v639, %v627
  %v642 = vadd.f32 %v640, 1e-05
  %v643 = vadd.f32 %v641, 1e-05
  %v644 = vrsqrt.pop %v642
  %v645 = vmul.f32 %v644, %v642
  %v646 = vmul.f32 %v645, %v644
  %v647 = vmul.f32 0.5, %v646
  %v648 = vsub.f32 1.5, %v647
  %v649 = vmul.f32 %v644, %v648
  %vm650 = vweird.f32 %v642
  %vm651 = vweird.f32 %v644
  %vm652 = vmor %vm650, %vm651
  %v653 = vsel %vm652, %v644, %v649
  %v654 = vrsqrt.pop %v643
  %v655 = vmul.f32 %v654, %v643
  %v656 = vmul.f32 %v655, %v654
  %v657 = vmul.f32 0.5, %v656
  %v658 = vsub.f32 1.5, %v657
  %v659 = vmul.f32 %v654, %v658
  %vm660 = vweird.f32 %v643
  %vm661 = vweird.f32 %v654
  %vm662 = vmor %vm660, %vm661
  %v663 = vsel %vm662, %v654, %v659
  %v664 = vmul.f32 %v630, %v653
  %v665 = vmul.f32 %v631, %v663
  %v666 = vperm.slane %v38, 2
  %v667 = vmul.f32 %v664, %v666
  %v668 = vmul.f32 %v665, %v666
  %v669 = vperm.slane %v38, 3
  %v670 = vadd.f32 %v667, %v669
  %v671 = vadd.f32 %v668, %v669
  %v672 = vperm.slane %v38, 4
  %v674 = vsel %vm49, %v670, 0
  %v677 = vsel %vm49, %v671, 0
  %679 = vmatpush.msra.mxu0 0.0
  %680 = vmatpush.msra.mxu0 0.0
  %681 = vmatpush.msra.mxu0 0.0
  %682 = vmatpush.msra.mxu0 0.0
  %683 = vmatpush.msra.mxu0 0.0
  %684 = vmatpush.msra.mxu0 0.0
  %685 = vmatpush.msra.mxu0 0.0
  %686 = vmatpush.msra.mxu0 0.0
  %687 = vmatpush.msra.mxu0 0.0
  %688 = vmatpush.msra.mxu0 0.0
  %689 = vmatpush.msra.mxu0 0.0
  %690 = vmatpush.msra.mxu0 0.0
  %691 = vmatpush.msra.mxu0 0.0
  %692 = vmatpush.msra.mxu0 0.0
  %693 = vmatpush.msra.mxu0 0.0
  %694 = vmatpush.msra.mxu0 %v27
  %695 = vmatmul.f32.gmra.mxu0 %v674
  %v696 = vpop.f32.mrf.mxu0
  %v697 = vadd.f32 %v672, %v696
  %698 = vmatmul.f32.gmra.mxu0 %v677
  %v699 = vpop.f32.mrf.mxu0
  %v700 = vadd.f32 %v672, %v699
  %701 = vdwg.mxu0
  %v702 = vmax.f32 %v697, 0.0
  %v703 = vmax.f32 %v700, 0.0
  %v704 = vperm.slane %v38, 5
  %vm705 = vcmask 130048
  %v707 = vsel %vm705, %v702, 0
  %v710 = vsel %vm705, %v703, 0
  %712 = vmatpush.msra.mxu0 0.0
  %713 = vmatpush.msra.mxu0 0.0
  %714 = vmatpush.msra.mxu0 0.0
  %715 = vmatpush.msra.mxu0 0.0
  %716 = vmatpush.msra.mxu0 0.0
  %717 = vmatpush.msra.mxu0 0.0
  %718 = vmatpush.msra.mxu0 0.0
  %719 = vmatpush.msra.mxu0 0.0
  %720 = vmatpush.msra.mxu0 0.0
  %721 = vmatpush.msra.mxu0 0.0
  %722 = vmatpush.msra.mxu0 0.0
  %723 = vmatpush.msra.mxu0 0.0
  %724 = vmatpush.msra.mxu0 0.0
  %725 = vmatpush.msra.mxu0 0.0
  %726 = vmatpush.msra.mxu0 %v29
  %727 = vmatpush.msra.mxu0 %v28
  %728 = vmatmul.f32.gmra.mxu0 %v707
  %v729 = vpop.f32.mrf.mxu0
  %v730 = vadd.f32 %v704, %v729
  %731 = vmatmul.f32.gmra.mxu0 %v710
  %v732 = vpop.f32.mrf.mxu0
  %v733 = vadd.f32 %v704, %v732
  %734 = vdwg.mxu0
  %v735 = vadd.f32 %v670, %v730
  %v736 = vadd.f32 %v671, %v733
  %v737 = vsel %vm49, %v735, 0.0
  %738 = vadd.xlane.f32.xlu0 %v737
  %v739 = vpop.xlane.xlu0 %738
  %v740 = vsel %vm617, %v736, 0.0
  %741 = vadd.xlane.f32.xlu0 %v740
  %v742 = vpop.xlane.xlu0 %741
  %v743 = vmul.f32 %v739, %v627
  %v744 = vmul.f32 %v742, %v627
  %v745 = vsub.f32 %v735, %v743
  %v746 = vsub.f32 %v736, %v744
  %v747 = vmul.f32 %v745, %v745
  %v748 = vmul.f32 %v746, %v746
  %v749 = vsel %vm49, %v747, 0.0
  %750 = vadd.xlane.f32.xlu0 %v749
  %v751 = vpop.xlane.xlu0 %750
  %v752 = vsel %vm617, %v748, 0.0
  %753 = vadd.xlane.f32.xlu0 %v752
  %v754 = vpop.xlane.xlu0 %753
  %v755 = vmul.f32 %v751, %v627
  %v756 = vmul.f32 %v754, %v627
  %v757 = vadd.f32 %v755, 1e-05
  %v758 = vadd.f32 %v756, 1e-05
  %v759 = vrsqrt.pop %v757
  %v760 = vmul.f32 %v759, %v757
  %v761 = vmul.f32 %v760, %v759
  %v762 = vmul.f32 0.5, %v761
  %v763 = vsub.f32 1.5, %v762
  %v764 = vmul.f32 %v759, %v763
  %vm765 = vweird.f32 %v757
  %vm766 = vweird.f32 %v759
  %vm767 = vmor %vm765, %vm766
  %v768 = vsel %vm767, %v759, %v764
  %v769 = vrsqrt.pop %v758
  %v770 = vmul.f32 %v769, %v758
  %v771 = vmul.f32 %v770, %v769
  %v772 = vmul.f32 0.5, %v771
  %v773 = vsub.f32 1.5, %v772
  %v774 = vmul.f32 %v769, %v773
  %vm775 = vweird.f32 %v758
  %vm776 = vweird.f32 %v769
  %vm777 = vmor %vm775, %vm776
  %v778 = vsel %vm777, %v769, %v774
  %v779 = vmul.f32 %v745, %v768
  %v780 = vmul.f32 %v746, %v778
  %v781 = vperm.slane %v38, 6
  %v782 = vmul.f32 %v779, %v781
  %v783 = vmul.f32 %v780, %v781
  %v784 = vperm.slane %v38, 7
  %v785 = vadd.f32 %v782, %v784
  %v786 = vadd.f32 %v783, %v784
  %v788 = vperm.slane %v22, 0
  %789 = vrot.lane.b32.xlu0 %v788, 4
  %v790 = vpop.permute.xlu0 %789
  %v792 = vsel %vm41, %v22, %v790
  %v794 = vsel %vm49, %v792, 0
  %796 = vmatpush.msra.mxu0 0.0
  %797 = vmatpush.msra.mxu0 0.0
  %798 = vmatpush.msra.mxu0 0.0
  %799 = vmatpush.msra.mxu0 0.0
  %800 = vmatpush.msra.mxu0 0.0
  %801 = vmatpush.msra.mxu0 0.0
  %802 = vmatpush.msra.mxu0 0.0
  %803 = vmatpush.msra.mxu0 0.0
  %804 = vmatpush.msra.mxu0 0.0
  %805 = vmatpush.msra.mxu0 0.0
  %806 = vmatpush.msra.mxu0 0.0
  %807 = vmatpush.msra.mxu0 0.0
  %808 = vmatpush.msra.mxu0 0.0
  %809 = vmatpush.msra.mxu0 0.0
  %810 = vmatpush.msra.mxu0 0.0
  %811 = vmatpush.msra.mxu0 %v30
  %812 = vmatmul.f32.gmra.mxu0 %v794
  %v813 = vpop.f32.mrf.mxu0
  %v814 = vadd.f32 %v39, %v813
  %815 = vdwg.mxu0
  %817 = vrot.lane.b32.xlu0 %v814, 120
  %v818 = vpop.permute.xlu0 %817
  %v820 = vmul.f32 %v814, %v818
  %vm821 = vcmask 8192
  %v822 = vsel %vm821, %v820, 0.0
  %823 = vadd.xlane.f32.xlu0 %v822
  %v824 = vpop.xlane.xlu0 %823
  %v825 = vmul.f32 %v824, 0.70710677
  %v826 = vsub.f32 %v825, %v825
  %v827 = vmul.f32 %v826, 1.442695
  %v828 = vpow.pop %v827
  %v829 = vadd.f32 %v828, 0.0
  %v830 = vrcp.pop %v829
  %v831 = vmul.f32 %v828, %v830
  %832 = vrot.lane.b32.xlu0 %v814, 112
  %v833 = vpop.permute.xlu0 %832
  %vm834 = vcmask 7168
  %v836 = vsel %vm834, %v831, 0
  %vm838 = vcmask 1040384
  %v839 = vsel %vm838, %v833, 0
  %841 = vmatpush.msra.mxu0 0.0
  %842 = vmatpush.msra.mxu0 0.0
  %843 = vmatpush.msra.mxu0 0.0
  %844 = vmatpush.msra.mxu0 0.0
  %845 = vmatpush.msra.mxu0 0.0
  %846 = vmatpush.msra.mxu0 0.0
  %847 = vmatpush.msra.mxu0 0.0
  %848 = vmatpush.msra.mxu0 0.0
  %849 = vmatpush.msra.mxu0 0.0
  %850 = vmatpush.msra.mxu0 0.0
  %851 = vmatpush.msra.mxu0 0.0
  %852 = vmatpush.msra.mxu0 0.0
  %853 = vmatpush.msra.mxu0 0.0
  %854 = vmatpush.msra.mxu0 0.0
  %855 = vmatpush.msra.mxu0 0.0
  %856 = vmatpush.msra.mxu0 %v839
  %857 = vmatmul.f32.gmra.mxu0 %v836
  %v858 = vpop.f32.mrf.mxu0
  %v859 = vadd.f32 0.0, %v858
  %860 = vdwg.mxu0
  %862 = vrot.lane.b32.xlu0 %v820, 126
  %v863 = vpop.permute.xlu0 %862
  %v865 = vsel %vm821, %v863, 0.0
  %866 = vadd.xlane.f32.xlu0 %v865
  %v867 = vpop.xlane.xlu0 %866
  %v868 = vmul.f32 %v867, 0.70710677
  %v869 = vsub.f32 %v868, %v868
  %v870 = vmul.f32 %v869, 1.442695
  %v871 = vpow.pop %v870
  %v872 = vadd.f32 %v871, 0.0
  %v873 = vrcp.pop %v872
  %v874 = vmul.f32 %v871, %v873
  %875 = vrot.lane.b32.xlu0 %v814, 110
  %v876 = vpop.permute.xlu0 %875
  %v878 = vsel %vm834, %v874, 0
  %v880 = vsel %vm838, %v876, 0
  %882 = vmatpush.msra.mxu0 0.0
  %883 = vmatpush.msra.mxu0 0.0
  %884 = vmatpush.msra.mxu0 0.0
  %885 = vmatpush.msra.mxu0 0.0
  %886 = vmatpush.msra.mxu0 0.0
  %887 = vmatpush.msra.mxu0 0.0
  %888 = vmatpush.msra.mxu0 0.0
  %889 = vmatpush.msra.mxu0 0.0
  %890 = vmatpush.msra.mxu0 0.0
  %891 = vmatpush.msra.mxu0 0.0
  %892 = vmatpush.msra.mxu0 0.0
  %893 = vmatpush.msra.mxu0 0.0
  %894 = vmatpush.msra.mxu0 0.0
  %895 = vmatpush.msra.mxu0 0.0
  %896 = vmatpush.msra.mxu0 0.0
  %897 = vmatpush.msra.mxu0 %v880
  %898 = vmatmul.f32.gmra.mxu0 %v878
  %v899 = vpop.f32.mrf.mxu0
  %v900 = vadd.f32 0.0, %v899
  %901 = vdwg.mxu0
  %v903 = vrot.slane %v31, 2
  %v905 = vsel %vm85, %v900, 0
  %v907 = vsel %vm154, %v903, 0
  %909 = vmatpush.msra.mxu0 0.0
  %910 = vmatpush.msra.mxu0 0.0
  %911 = vmatpush.msra.mxu0 0.0
  %912 = vmatpush.msra.mxu0 0.0
  %913 = vmatpush.msra.mxu0 0.0
  %914 = vmatpush.msra.mxu0 0.0
  %915 = vmatpush.msra.mxu0 0.0
  %916 = vmatpush.msra.mxu0 0.0
  %917 = vmatpush.msra.mxu0 0.0
  %918 = vmatpush.msra.mxu0 0.0
  %919 = vmatpush.msra.mxu0 0.0
  %920 = vmatpush.msra.mxu0 0.0
  %921 = vmatpush.msra.mxu0 0.0
  %922 = vmatpush.msra.mxu0 0.0
  %923 = vmatpush.msra.mxu0 0.0
  %924 = vmatpush.msra.mxu0 %v907
  %925 = vmatmul.f32.gmra.mxu0 %v905
  %v926 = vpop.f32.mrf.mxu0
  %v927 = vadd.f32 0.0, %v926
  %928 = vdwg.mxu0
  %v930 = vsel %vm85, %v859, 0
  %v932 = vsel %vm154, %v31, 0
  %934 = vmatpush.msra.mxu0 0.0
  %935 = vmatpush.msra.mxu0 0.0
  %936 = vmatpush.msra.mxu0 0.0
  %937 = vmatpush.msra.mxu0 0.0
  %938 = vmatpush.msra.mxu0 0.0
  %939 = vmatpush.msra.mxu0 0.0
  %940 = vmatpush.msra.mxu0 0.0
  %941 = vmatpush.msra.mxu0 0.0
  %942 = vmatpush.msra.mxu0 0.0
  %943 = vmatpush.msra.mxu0 0.0
  %944 = vmatpush.msra.mxu0 0.0
  %945 = vmatpush.msra.mxu0 0.0
  %946 = vmatpush.msra.mxu0 0.0
  %947 = vmatpush.msra.mxu0 0.0
  %948 = vmatpush.msra.mxu0 0.0
  %949 = vmatpush.msra.mxu0 %v932
  %950 = vmatmul.f32.gmra.mxu0 %v930
  %v951 = vpop.f32.mrf.mxu0
  %v952 = vadd.f32 %v927, %v951
  %953 = vdwg.mxu0
  %954 = vrot.lane.b32.xlu0 %v820, 124
  %v955 = vpop.permute.xlu0 %954
  %v957 = vsel %vm821, %v955, 0.0
  %958 = vadd.xlane.f32.xlu0 %v957
  %v959 = vpop.xlane.xlu0 %958
  %v960 = vmul.f32 %v959, 0.70710677
  %v961 = vsub.f32 %v960, %v960
  %v962 = vmul.f32 %v961, 1.442695
  %v963 = vpow.pop %v962
  %v964 = vadd.f32 %v963, 0.0
  %v965 = vrcp.pop %v964
  %v966 = vmul.f32 %v963, %v965
  %967 = vrot.lane.b32.xlu0 %v814, 108
  %v968 = vpop.permute.xlu0 %967
  %v970 = vsel %vm834, %v966, 0
  %v972 = vsel %vm838, %v968, 0
  %974 = vmatpush.msra.mxu0 0.0
  %975 = vmatpush.msra.mxu0 0.0
  %976 = vmatpush.msra.mxu0 0.0
  %977 = vmatpush.msra.mxu0 0.0
  %978 = vmatpush.msra.mxu0 0.0
  %979 = vmatpush.msra.mxu0 0.0
  %980 = vmatpush.msra.mxu0 0.0
  %981 = vmatpush.msra.mxu0 0.0
  %982 = vmatpush.msra.mxu0 0.0
  %983 = vmatpush.msra.mxu0 0.0
  %984 = vmatpush.msra.mxu0 0.0
  %985 = vmatpush.msra.mxu0 0.0
  %986 = vmatpush.msra.mxu0 0.0
  %987 = vmatpush.msra.mxu0 0.0
  %988 = vmatpush.msra.mxu0 0.0
  %989 = vmatpush.msra.mxu0 %v972
  %990 = vmatmul.f32.gmra.mxu0 %v970
  %v991 = vpop.f32.mrf.mxu0
  %v992 = vadd.f32 0.0, %v991
  %993 = vdwg.mxu0
  %v994 = vrot.slane %v31, 4
  %v996 = vsel %vm85, %v992, 0
  %v998 = vsel %vm154, %v994, 0
  %1000 = vmatpush.msra.mxu0 0.0
  %1001 = vmatpush.msra.mxu0 0.0
  %1002 = vmatpush.msra.mxu0 0.0
  %1003 = vmatpush.msra.mxu0 0.0
  %1004 = vmatpush.msra.mxu0 0.0
  %1005 = vmatpush.msra.mxu0 0.0
  %1006 = vmatpush.msra.mxu0 0.0
  %1007 = vmatpush.msra.mxu0 0.0
  %1008 = vmatpush.msra.mxu0 0.0
  %1009 = vmatpush.msra.mxu0 0.0
  %1010 = vmatpush.msra.mxu0 0.0
  %1011 = vmatpush.msra.mxu0 0.0
  %1012 = vmatpush.msra.mxu0 0.0
  %1013 = vmatpush.msra.mxu0 0.0
  %1014 = vmatpush.msra.mxu0 0.0
  %1015 = vmatpush.msra.mxu0 %v998
  %1016 = vmatmul.f32.gmra.mxu0 %v996
  %v1017 = vpop.f32.mrf.mxu0
  %v1018 = vadd.f32 0.0, %v1017
  %1019 = vdwg.mxu0
  %v1020 = vadd.f32 %v952, %v1018
  %1021 = vrot.lane.b32.xlu0 %v820, 122
  %v1022 = vpop.permute.xlu0 %1021
  %v1024 = vsel %vm821, %v1022, 0.0
  %1025 = vadd.xlane.f32.xlu0 %v1024
  %v1026 = vpop.xlane.xlu0 %1025
  %v1027 = vmul.f32 %v1026, 0.70710677
  %v1028 = vsub.f32 %v1027, %v1027
  %v1029 = vmul.f32 %v1028, 1.442695
  %v1030 = vpow.pop %v1029
  %v1031 = vadd.f32 %v1030, 0.0
  %v1032 = vrcp.pop %v1031
  %v1033 = vmul.f32 %v1030, %v1032
  %1034 = vrot.lane.b32.xlu0 %v814, 106
  %v1035 = vpop.permute.xlu0 %1034
  %v1037 = vsel %vm834, %v1033, 0
  %v1039 = vsel %vm838, %v1035, 0
  %1041 = vmatpush.msra.mxu0 0.0
  %1042 = vmatpush.msra.mxu0 0.0
  %1043 = vmatpush.msra.mxu0 0.0
  %1044 = vmatpush.msra.mxu0 0.0
  %1045 = vmatpush.msra.mxu0 0.0
  %1046 = vmatpush.msra.mxu0 0.0
  %1047 = vmatpush.msra.mxu0 0.0
  %1048 = vmatpush.msra.mxu0 0.0
  %1049 = vmatpush.msra.mxu0 0.0
  %1050 = vmatpush.msra.mxu0 0.0
  %1051 = vmatpush.msra.mxu0 0.0
  %1052 = vmatpush.msra.mxu0 0.0
  %1053 = vmatpush.msra.mxu0 0.0
  %1054 = vmatpush.msra.mxu0 0.0
  %1055 = vmatpush.msra.mxu0 0.0
  %1056 = vmatpush.msra.mxu0 %v1039
  %1057 = vmatmul.f32.gmra.mxu0 %v1037
  %v1058 = vpop.f32.mrf.mxu0
  %v1059 = vadd.f32 0.0, %v1058
  %1060 = vdwg.mxu0
  %v1061 = vrot.slane %v31, 6
  %v1063 = vsel %vm85, %v1059, 0
  %v1065 = vsel %vm154, %v1061, 0
  %1067 = vmatpush.msra.mxu0 0.0
  %1068 = vmatpush.msra.mxu0 0.0
  %1069 = vmatpush.msra.mxu0 0.0
  %1070 = vmatpush.msra.mxu0 0.0
  %1071 = vmatpush.msra.mxu0 0.0
  %1072 = vmatpush.msra.mxu0 0.0
  %1073 = vmatpush.msra.mxu0 0.0
  %1074 = vmatpush.msra.mxu0 0.0
  %1075 = vmatpush.msra.mxu0 0.0
  %1076 = vmatpush.msra.mxu0 0.0
  %1077 = vmatpush.msra.mxu0 0.0
  %1078 = vmatpush.msra.mxu0 0.0
  %1079 = vmatpush.msra.mxu0 0.0
  %1080 = vmatpush.msra.mxu0 0.0
  %1081 = vmatpush.msra.mxu0 0.0
  %1082 = vmatpush.msra.mxu0 %v1065
  %1083 = vmatmul.f32.gmra.mxu0 %v1063
  %v1084 = vpop.f32.mrf.mxu0
  %v1085 = vadd.f32 0.0, %v1084
  %1086 = vdwg.mxu0
  %v1087 = vadd.f32 %v1020, %v1085
  %v1089 = vrot.slane %v39, 1
  %v1091 = vadd.f32 %v1087, %v1089
  %v1092 = vadd.f32 %v792, %v1091
  %vm1093 = vcmask 57344
  %v1094 = vsel %vm1093, %v1092, 0.0
  %1095 = vadd.xlane.f32.xlu0 %v1094
  %v1096 = vpop.xlane.xlu0 %1095
  %v1097 = vmul.f32 %v1096, %v627
  %v1098 = vsub.f32 %v1092, %v1097
  %v1099 = vmul.f32 %v1098, %v1098
  %v1100 = vsel %vm1093, %v1099, 0.0
  %1101 = vadd.xlane.f32.xlu0 %v1100
  %v1102 = vpop.xlane.xlu0 %1101
  %v1103 = vmul.f32 %v1102, %v627
  %v1104 = vadd.f32 %v1103, 1e-05
  %v1105 = vrsqrt.pop %v1104
  %v1106 = vmul.f32 %v1105, %v1104
  %v1107 = vmul.f32 %v1106, %v1105
  %v1108 = vmul.f32 0.5, %v1107
  %v1109 = vsub.f32 1.5, %v1108
  %v1110 = vmul.f32 %v1105, %v1109
  %vm1111 = vweird.f32 %v1104
  %vm1112 = vweird.f32 %v1105
  %vm1113 = vmor %vm1111, %vm1112
  %v1114 = vsel %vm1113, %v1105, %v1110
  %v1115 = vmul.f32 %v1098, %v1114
  %v1116 = vrot.slane %v39, 2
  %v1118 = vmul.f32 %v1115, %v1116
  %v1119 = vrot.slane %v39, 3
  %v1121 = vadd.f32 %v1118, %v1119
  %v1122 = vrot.slane %v39, 4
  %v1125 = vsel %vm49, %v1121, 0
  %1127 = vmatpush.msra.mxu0 0.0
  %1128 = vmatpush.msra.mxu0 0.0
  %1129 = vmatpush.msra.mxu0 0.0
  %1130 = vmatpush.msra.mxu0 0.0
  %1131 = vmatpush.msra.mxu0 0.0
  %1132 = vmatpush.msra.mxu0 0.0
  %1133 = vmatpush.msra.mxu0 0.0
  %1134 = vmatpush.msra.mxu0 0.0
  %1135 = vmatpush.msra.mxu0 0.0
  %1136 = vmatpush.msra.mxu0 0.0
  %1137 = vmatpush.msra.mxu0 0.0
  %1138 = vmatpush.msra.mxu0 0.0
  %1139 = vmatpush.msra.mxu0 0.0
  %1140 = vmatpush.msra.mxu0 0.0
  %1141 = vmatpush.msra.mxu0 0.0
  %1142 = vmatpush.msra.mxu0 %v32
  %1143 = vmatmul.f32.gmra.mxu0 %v1125
  %v1144 = vpop.f32.mrf.mxu0
  %v1145 = vadd.f32 %v1122, %v1144
  %1146 = vdwg.mxu0
  %v1147 = vperm.slane %v39, 4
  %1149 = vrot.lane.b32.xlu0 %v32, 120
  %v1150 = vpop.permute.xlu0 %1149
  %1153 = vrot.lane.b32.xlu0 %v1147, 120
  %v1154 = vpop.permute.xlu0 %1153
  %v1157 = vsel %vm49, %v785, 0
  %v1160 = vsel %vm49, %v786, 0
  %1162 = vmatpush.msra.mxu0 0.0
  %1163 = vmatpush.msra.mxu0 0.0
  %1164 = vmatpush.msra.mxu0 0.0
  %1165 = vmatpush.msra.mxu0 0.0
  %1166 = vmatpush.msra.mxu0 0.0
  %1167 = vmatpush.msra.mxu0 0.0
  %1168 = vmatpush.msra.mxu0 0.0
  %1169 = vmatpush.msra.mxu0 0.0
  %1170 = vmatpush.msra.mxu0 0.0
  %1171 = vmatpush.msra.mxu0 0.0
  %1172 = vmatpush.msra.mxu0 0.0
  %1173 = vmatpush.msra.mxu0 0.0
  %1174 = vmatpush.msra.mxu0 0.0
  %1175 = vmatpush.msra.mxu0 0.0
  %1176 = vmatpush.msra.mxu0 0.0
  %1177 = vmatpush.msra.mxu0 %v1150
  %1178 = vmatmul.f32.gmra.mxu0 %v1157
  %v1179 = vpop.f32.mrf.mxu0
  %v1180 = vadd.f32 %v1154, %v1179
  %1181 = vmatmul.f32.gmra.mxu0 %v1160
  %v1182 = vpop.f32.mrf.mxu0
  %v1183 = vadd.f32 %v1154, %v1182
  %1184 = vdwg.mxu0
  %v1186 = vsel %vm85, %v1145, 0
  %v1189 = vsel %vm85, %v1180, 0
  %v1192 = vsel %vm85, %v1183, 0
  %1194 = vmatpush.xpose.msra.mxu0 0.0
  %1195 = vmatpush.xpose.msra.mxu0 0.0
  %1196 = vmatpush.xpose.msra.mxu0 0.0
  %1197 = vmatpush.xpose.msra.mxu0 0.0
  %1198 = vmatpush.xpose.msra.mxu0 0.0
  %1199 = vmatpush.xpose.msra.mxu0 0.0
  %1200 = vmatpush.xpose.msra.mxu0 0.0
  %1201 = vmatpush.xpose.msra.mxu0 0.0
  %1202 = vmatpush.xpose.msra.mxu0 0.0
  %1203 = vmatpush.xpose.msra.mxu0 0.0
  %1204 = vmatpush.xpose.msra.mxu0 0.0
  %1205 = vmatpush.xpose.msra.mxu0 0.0
  %1206 = vmatpush.xpose.msra.mxu0 0.0
  %1207 = vmatpush.xpose.msra.mxu0 0.0
  %1208 = vmatpush.xpose.msra.mxu0 %v1192
  %1209 = vmatpush.xpose.msra.mxu0 %v1189
  %1210 = vmatmul.f32.gmra.mxu0 %v1186
  %v1211 = vpop.f32.mrf.mxu0
  %v1212 = vadd.f32 0.0, %v1211
  %1213 = vdwg.mxu0
  %v1214 = vmul.f32 %v1212, 0.70710677
  %vm1215 = vcmask 73728
  %v1216 = vsel %vm1215, %v1214, -inf
  %1217 = vmax.xlane.f32.xlu0 %v1216
  %v1218 = vpop.xlane.xlu0 %1217
  %v1219 = vsub.f32 %v1214, %v1218
  %v1220 = vmul.f32 %v1219, 1.442695
  %v1221 = vpow.pop %v1220
  %v1222 = vsel %vm1215, %v1221, 0.0
  %1223 = vadd.xlane.f32.xlu0 %v1222
  %v1224 = vpop.xlane.xlu0 %1223
  %v1225 = vrcp.pop %v1224
  %v1226 = vmul.f32 %v1221, %v1225
  %1227 = vrot.lane.b32.xlu0 %v1180, 120
  %v1228 = vpop.permute.xlu0 %1227
  %1229 = vrot.lane.b32.xlu0 %v1183, 120
  %v1230 = vpop.permute.xlu0 %1229
  %v1233 = vsel %vm119, %v1226, 0
  %v1235 = vsel %vm154, %v1230, 0
  %1237 = vmatpush.msra.mxu0 0.0
  %1238 = vmatpush.msra.mxu0 0.0
  %1239 = vmatpush.msra.mxu0 0.0
  %1240 = vmatpush.msra.mxu0 0.0
  %1241 = vmatpush.msra.mxu0 0.0
  %1242 = vmatpush.msra.mxu0 0.0
  %1243 = vmatpush.msra.mxu0 0.0
  %1244 = vmatpush.msra.mxu0 0.0
  %1245 = vmatpush.msra.mxu0 0.0
  %1246 = vmatpush.msra.mxu0 0.0
  %1247 = vmatpush.msra.mxu0 0.0
  %1248 = vmatpush.msra.mxu0 0.0
  %1249 = vmatpush.msra.mxu0 0.0
  %1250 = vmatpush.msra.mxu0 0.0
  %1251 = vmatpush.msra.mxu0 %v1235
  %1252 = vmatpush.msra.mxu0 %v1228
  %1253 = vmatmul.f32.gmra.mxu0 %v1233
  %v1254 = vpop.f32.mrf.mxu0
  %v1255 = vadd.f32 0.0, %v1254
  %1256 = vdwg.mxu0
  %1257 = vrot.lane.b32.xlu0 %v1145, 126
  %v1258 = vpop.permute.xlu0 %1257
  %1259 = vrot.lane.b32.xlu0 %v1180, 126
  %v1260 = vpop.permute.xlu0 %1259
  %1261 = vrot.lane.b32.xlu0 %v1183, 126
  %v1262 = vpop.permute.xlu0 %1261
  %v1263 = vsel %vm85, %v1258, 0
  %v1265 = vsel %vm85, %v1260, 0
  %v1267 = vsel %vm85, %v1262, 0
  %1269 = vmatpush.xpose.msra.mxu0 0.0
  %1270 = vmatpush.xpose.msra.mxu0 0.0
  %1271 = vmatpush.xpose.msra.mxu0 0.0
  %1272 = vmatpush.xpose.msra.mxu0 0.0
  %1273 = vmatpush.xpose.msra.mxu0 0.0
  %1274 = vmatpush.xpose.msra.mxu0 0.0
  %1275 = vmatpush.xpose.msra.mxu0 0.0
  %1276 = vmatpush.xpose.msra.mxu0 0.0
  %1277 = vmatpush.xpose.msra.mxu0 0.0
  %1278 = vmatpush.xpose.msra.mxu0 0.0
  %1279 = vmatpush.xpose.msra.mxu0 0.0
  %1280 = vmatpush.xpose.msra.mxu0 0.0
  %1281 = vmatpush.xpose.msra.mxu0 0.0
  %1282 = vmatpush.xpose.msra.mxu0 0.0
  %1283 = vmatpush.xpose.msra.mxu0 %v1267
  %1284 = vmatpush.xpose.msra.mxu0 %v1265
  %1285 = vmatmul.f32.gmra.mxu0 %v1263
  %v1286 = vpop.f32.mrf.mxu0
  %v1287 = vadd.f32 0.0, %v1286
  %1288 = vdwg.mxu0
  %v1289 = vmul.f32 %v1287, 0.70710677
  %v1290 = vsel %vm1215, %v1289, -inf
  %1291 = vmax.xlane.f32.xlu0 %v1290
  %v1292 = vpop.xlane.xlu0 %1291
  %v1293 = vsub.f32 %v1289, %v1292
  %v1294 = vmul.f32 %v1293, 1.442695
  %v1295 = vpow.pop %v1294
  %v1296 = vsel %vm1215, %v1295, 0.0
  %1297 = vadd.xlane.f32.xlu0 %v1296
  %v1298 = vpop.xlane.xlu0 %1297
  %v1299 = vrcp.pop %v1298
  %v1300 = vmul.f32 %v1295, %v1299
  %1301 = vrot.lane.b32.xlu0 %v1180, 118
  %v1302 = vpop.permute.xlu0 %1301
  %1303 = vrot.lane.b32.xlu0 %v1183, 118
  %v1304 = vpop.permute.xlu0 %1303
  %v1307 = vsel %vm119, %v1300, 0
  %v1309 = vsel %vm154, %v1304, 0
  %1311 = vmatpush.msra.mxu0 0.0
  %1312 = vmatpush.msra.mxu0 0.0
  %1313 = vmatpush.msra.mxu0 0.0
  %1314 = vmatpush.msra.mxu0 0.0
  %1315 = vmatpush.msra.mxu0 0.0
  %1316 = vmatpush.msra.mxu0 0.0
  %1317 = vmatpush.msra.mxu0 0.0
  %1318 = vmatpush.msra.mxu0 0.0
  %1319 = vmatpush.msra.mxu0 0.0
  %1320 = vmatpush.msra.mxu0 0.0
  %1321 = vmatpush.msra.mxu0 0.0
  %1322 = vmatpush.msra.mxu0 0.0
  %1323 = vmatpush.msra.mxu0 0.0
  %1324 = vmatpush.msra.mxu0 0.0
  %1325 = vmatpush.msra.mxu0 %v1309
  %1326 = vmatpush.msra.mxu0 %v1302
  %1327 = vmatmul.f32.gmra.mxu0 %v1307
  %v1328 = vpop.f32.mrf.mxu0
  %v1329 = vadd.f32 0.0, %v1328
  %1330 = vdwg.mxu0
  %v1332 = vrot.slane %v33, 2
  %v1334 = vsel %vm85, %v1329, 0
  %v1336 = vsel %vm154, %v1332, 0
  %1338 = vmatpush.msra.mxu0 0.0
  %1339 = vmatpush.msra.mxu0 0.0
  %1340 = vmatpush.msra.mxu0 0.0
  %1341 = vmatpush.msra.mxu0 0.0
  %1342 = vmatpush.msra.mxu0 0.0
  %1343 = vmatpush.msra.mxu0 0.0
  %1344 = vmatpush.msra.mxu0 0.0
  %1345 = vmatpush.msra.mxu0 0.0
  %1346 = vmatpush.msra.mxu0 0.0
  %1347 = vmatpush.msra.mxu0 0.0
  %1348 = vmatpush.msra.mxu0 0.0
  %1349 = vmatpush.msra.mxu0 0.0
  %1350 = vmatpush.msra.mxu0 0.0
  %1351 = vmatpush.msra.mxu0 0.0
  %1352 = vmatpush.msra.mxu0 0.0
  %1353 = vmatpush.msra.mxu0 %v1336
  %1354 = vmatmul.f32.gmra.mxu0 %v1334
  %v1355 = vpop.f32.mrf.mxu0
  %v1356 = vadd.f32 0.0, %v1355
  %1357 = vdwg.mxu0
  %v1359 = vsel %vm85, %v1255, 0
  %v1361 = vsel %vm154, %v33, 0
  %1363 = vmatpush.msra.mxu0 0.0
  %1364 = vmatpush.msra.mxu0 0.0
  %1365 = vmatpush.msra.mxu0 0.0
  %1366 = vmatpush.msra.mxu0 0.0
  %1367 = vmatpush.msra.mxu0 0.0
  %1368 = vmatpush.msra.mxu0 0.0
  %1369 = vmatpush.msra.mxu0 0.0
  %1370 = vmatpush.msra.mxu0 0.0
  %1371 = vmatpush.msra.mxu0 0.0
  %1372 = vmatpush.msra.mxu0 0.0
  %1373 = vmatpush.msra.mxu0 0.0
  %1374 = vmatpush.msra.mxu0 0.0
  %1375 = vmatpush.msra.mxu0 0.0
  %1376 = vmatpush.msra.mxu0 0.0
  %1377 = vmatpush.msra.mxu0 0.0
  %1378 = vmatpush.msra.mxu0 %v1361
  %1379 = vmatmul.f32.gmra.mxu0 %v1359
  %v1380 = vpop.f32.mrf.mxu0
  %v1381 = vadd.f32 %v1356, %v1380
  %1382 = vdwg.mxu0
  %1383 = vrot.lane.b32.xlu0 %v1145, 124
  %v1384 = vpop.permute.xlu0 %1383
  %1385 = vrot.lane.b32.xlu0 %v1180, 124
  %v1386 = vpop.permute.xlu0 %1385
  %1387 = vrot.lane.b32.xlu0 %v1183, 124
  %v1388 = vpop.permute.xlu0 %1387
  %v1389 = vsel %vm85, %v1384, 0
  %v1391 = vsel %vm85, %v1386, 0
  %v1393 = vsel %vm85, %v1388, 0
  %1395 = vmatpush.xpose.msra.mxu0 0.0
  %1396 = vmatpush.xpose.msra.mxu0 0.0
  %1397 = vmatpush.xpose.msra.mxu0 0.0
  %1398 = vmatpush.xpose.msra.mxu0 0.0
  %1399 = vmatpush.xpose.msra.mxu0 0.0
  %1400 = vmatpush.xpose.msra.mxu0 0.0
  %1401 = vmatpush.xpose.msra.mxu0 0.0
  %1402 = vmatpush.xpose.msra.mxu0 0.0
  %1403 = vmatpush.xpose.msra.mxu0 0.0
  %1404 = vmatpush.xpose.msra.mxu0 0.0
  %1405 = vmatpush.xpose.msra.mxu0 0.0
  %1406 = vmatpush.xpose.msra.mxu0 0.0
  %1407 = vmatpush.xpose.msra.mxu0 0.0
  %1408 = vmatpush.xpose.msra.mxu0 0.0
  %1409 = vmatpush.xpose.msra.mxu0 %v1393
  %1410 = vmatpush.xpose.msra.mxu0 %v1391
  %1411 = vmatmul.f32.gmra.mxu0 %v1389
  %v1412 = vpop.f32.mrf.mxu0
  %v1413 = vadd.f32 0.0, %v1412
  %1414 = vdwg.mxu0
  %v1415 = vmul.f32 %v1413, 0.70710677
  %v1416 = vsel %vm1215, %v1415, -inf
  %1417 = vmax.xlane.f32.xlu0 %v1416
  %v1418 = vpop.xlane.xlu0 %1417
  %v1419 = vsub.f32 %v1415, %v1418
  %v1420 = vmul.f32 %v1419, 1.442695
  %v1421 = vpow.pop %v1420
  %v1422 = vsel %vm1215, %v1421, 0.0
  %1423 = vadd.xlane.f32.xlu0 %v1422
  %v1424 = vpop.xlane.xlu0 %1423
  %v1425 = vrcp.pop %v1424
  %v1426 = vmul.f32 %v1421, %v1425
  %1427 = vrot.lane.b32.xlu0 %v1180, 116
  %v1428 = vpop.permute.xlu0 %1427
  %1429 = vrot.lane.b32.xlu0 %v1183, 116
  %v1430 = vpop.permute.xlu0 %1429
  %v1433 = vsel %vm119, %v1426, 0
  %v1435 = vsel %vm154, %v1430, 0
  %1437 = vmatpush.msra.mxu0 0.0
  %1438 = vmatpush.msra.mxu0 0.0
  %1439 = vmatpush.msra.mxu0 0.0
  %1440 = vmatpush.msra.mxu0 0.0
  %1441 = vmatpush.msra.mxu0 0.0
  %1442 = vmatpush.msra.mxu0 0.0
  %1443 = vmatpush.msra.mxu0 0.0
  %1444 = vmatpush.msra.mxu0 0.0
  %1445 = vmatpush.msra.mxu0 0.0
  %1446 = vmatpush.msra.mxu0 0.0
  %1447 = vmatpush.msra.mxu0 0.0
  %1448 = vmatpush.msra.mxu0 0.0
  %1449 = vmatpush.msra.mxu0 0.0
  %1450 = vmatpush.msra.mxu0 0.0
  %1451 = vmatpush.msra.mxu0 %v1435
  %1452 = vmatpush.msra.mxu0 %v1428
  %1453 = vmatmul.f32.gmra.mxu0 %v1433
  %v1454 = vpop.f32.mrf.mxu0
  %v1455 = vadd.f32 0.0, %v1454
  %1456 = vdwg.mxu0
  %v1457 = vrot.slane %v33, 4
  %v1459 = vsel %vm85, %v1455, 0
  %v1461 = vsel %vm154, %v1457, 0
  %1463 = vmatpush.msra.mxu0 0.0
  %1464 = vmatpush.msra.mxu0 0.0
  %1465 = vmatpush.msra.mxu0 0.0
  %1466 = vmatpush.msra.mxu0 0.0
  %1467 = vmatpush.msra.mxu0 0.0
  %1468 = vmatpush.msra.mxu0 0.0
  %1469 = vmatpush.msra.mxu0 0.0
  %1470 = vmatpush.msra.mxu0 0.0
  %1471 = vmatpush.msra.mxu0 0.0
  %1472 = vmatpush.msra.mxu0 0.0
  %1473 = vmatpush.msra.mxu0 0.0
  %1474 = vmatpush.msra.mxu0 0.0
  %1475 = vmatpush.msra.mxu0 0.0
  %1476 = vmatpush.msra.mxu0 0.0
  %1477 = vmatpush.msra.mxu0 0.0
  %1478 = vmatpush.msra.mxu0 %v1461
  %1479 = vmatmul.f32.gmra.mxu0 %v1459
  %v1480 = vpop.f32.mrf.mxu0
  %v1481 = vadd.f32 0.0, %v1480
  %1482 = vdwg.mxu0
  %v1483 = vadd.f32 %v1381, %v1481
  %1484 = vrot.lane.b32.xlu0 %v1145, 122
  %v1485 = vpop.permute.xlu0 %1484
  %1486 = vrot.lane.b32.xlu0 %v1180, 122
  %v1487 = vpop.permute.xlu0 %1486
  %1488 = vrot.lane.b32.xlu0 %v1183, 122
  %v1489 = vpop.permute.xlu0 %1488
  %v1490 = vsel %vm85, %v1485, 0
  %v1492 = vsel %vm85, %v1487, 0
  %v1494 = vsel %vm85, %v1489, 0
  %1496 = vmatpush.xpose.msra.mxu0 0.0
  %1497 = vmatpush.xpose.msra.mxu0 0.0
  %1498 = vmatpush.xpose.msra.mxu0 0.0
  %1499 = vmatpush.xpose.msra.mxu0 0.0
  %1500 = vmatpush.xpose.msra.mxu0 0.0
  %1501 = vmatpush.xpose.msra.mxu0 0.0
  %1502 = vmatpush.xpose.msra.mxu0 0.0
  %1503 = vmatpush.xpose.msra.mxu0 0.0
  %1504 = vmatpush.xpose.msra.mxu0 0.0
  %1505 = vmatpush.xpose.msra.mxu0 0.0
  %1506 = vmatpush.xpose.msra.mxu0 0.0
  %1507 = vmatpush.xpose.msra.mxu0 0.0
  %1508 = vmatpush.xpose.msra.mxu0 0.0
  %1509 = vmatpush.xpose.msra.mxu0 0.0
  %1510 = vmatpush.xpose.msra.mxu0 %v1494
  %1511 = vmatpush.xpose.msra.mxu0 %v1492
  %1512 = vmatmul.f32.gmra.mxu0 %v1490
  %v1513 = vpop.f32.mrf.mxu0
  %v1514 = vadd.f32 0.0, %v1513
  %1515 = vdwg.mxu0
  %v1516 = vmul.f32 %v1514, 0.70710677
  %v1517 = vsel %vm1215, %v1516, -inf
  %1518 = vmax.xlane.f32.xlu0 %v1517
  %v1519 = vpop.xlane.xlu0 %1518
  %v1520 = vsub.f32 %v1516, %v1519
  %v1521 = vmul.f32 %v1520, 1.442695
  %v1522 = vpow.pop %v1521
  %v1523 = vsel %vm1215, %v1522, 0.0
  %1524 = vadd.xlane.f32.xlu0 %v1523
  %v1525 = vpop.xlane.xlu0 %1524
  %v1526 = vrcp.pop %v1525
  %v1527 = vmul.f32 %v1522, %v1526
  %1528 = vrot.lane.b32.xlu0 %v1180, 114
  %v1529 = vpop.permute.xlu0 %1528
  %1530 = vrot.lane.b32.xlu0 %v1183, 114
  %v1531 = vpop.permute.xlu0 %1530
  %v1534 = vsel %vm119, %v1527, 0
  %v1536 = vsel %vm154, %v1531, 0
  %1538 = vmatpush.msra.mxu0 0.0
  %1539 = vmatpush.msra.mxu0 0.0
  %1540 = vmatpush.msra.mxu0 0.0
  %1541 = vmatpush.msra.mxu0 0.0
  %1542 = vmatpush.msra.mxu0 0.0
  %1543 = vmatpush.msra.mxu0 0.0
  %1544 = vmatpush.msra.mxu0 0.0
  %1545 = vmatpush.msra.mxu0 0.0
  %1546 = vmatpush.msra.mxu0 0.0
  %1547 = vmatpush.msra.mxu0 0.0
  %1548 = vmatpush.msra.mxu0 0.0
  %1549 = vmatpush.msra.mxu0 0.0
  %1550 = vmatpush.msra.mxu0 0.0
  %1551 = vmatpush.msra.mxu0 0.0
  %1552 = vmatpush.msra.mxu0 %v1536
  %1553 = vmatpush.msra.mxu0 %v1529
  %1554 = vmatmul.f32.gmra.mxu0 %v1534
  %v1555 = vpop.f32.mrf.mxu0
  %v1556 = vadd.f32 0.0, %v1555
  %1557 = vdwg.mxu0
  %v1558 = vrot.slane %v33, 6
  %v1560 = vsel %vm85, %v1556, 0
  %v1562 = vsel %vm154, %v1558, 0
  %1564 = vmatpush.msra.mxu0 0.0
  %1565 = vmatpush.msra.mxu0 0.0
  %1566 = vmatpush.msra.mxu0 0.0
  %1567 = vmatpush.msra.mxu0 0.0
  %1568 = vmatpush.msra.mxu0 0.0
  %1569 = vmatpush.msra.mxu0 0.0
  %1570 = vmatpush.msra.mxu0 0.0
  %1571 = vmatpush.msra.mxu0 0.0
  %1572 = vmatpush.msra.mxu0 0.0
  %1573 = vmatpush.msra.mxu0 0.0
  %1574 = vmatpush.msra.mxu0 0.0
  %1575 = vmatpush.msra.mxu0 0.0
  %1576 = vmatpush.msra.mxu0 0.0
  %1577 = vmatpush.msra.mxu0 0.0
  %1578 = vmatpush.msra.mxu0 0.0
  %1579 = vmatpush.msra.mxu0 %v1562
  %1580 = vmatmul.f32.gmra.mxu0 %v1560
  %v1581 = vpop.f32.mrf.mxu0
  %v1582 = vadd.f32 0.0, %v1581
  %1583 = vdwg.mxu0
  %v1584 = vadd.f32 %v1483, %v1582
  %v1585 = vrot.slane %v39, 5
  %v1587 = vadd.f32 %v1584, %v1585
  %v1588 = vadd.f32 %v1121, %v1587
  %v1589 = vsel %vm1093, %v1588, 0.0
  %1590 = vadd.xlane.f32.xlu0 %v1589
  %v1591 = vpop.xlane.xlu0 %1590
  %v1592 = vmul.f32 %v1591, %v627
  %v1593 = vsub.f32 %v1588, %v1592
  %v1594 = vmul.f32 %v1593, %v1593
  %v1595 = vsel %vm1093, %v1594, 0.0
  %1596 = vadd.xlane.f32.xlu0 %v1595
  %v1597 = vpop.xlane.xlu0 %1596
  %v1598 = vmul.f32 %v1597, %v627
  %v1599 = vadd.f32 %v1598, 1e-05
  %v1600 = vrsqrt.pop %v1599
  %v1601 = vmul.f32 %v1600, %v1599
  %v1602 = vmul.f32 %v1601, %v1600
  %v1603 = vmul.f32 0.5, %v1602
  %v1604 = vsub.f32 1.5, %v1603
  %v1605 = vmul.f32 %v1600, %v1604
  %vm1606 = vweird.f32 %v1599
  %vm1607 = vweird.f32 %v1600
  %vm1608 = vmor %vm1606, %vm1607
  %v1609 = vsel %vm1608, %v1600, %v1605
  %v1610 = vmul.f32 %v1593, %v1609
  %v1611 = vrot.slane %v39, 6
  %v1613 = vmul.f32 %v1610, %v1611
  %v1614 = vrot.slane %v39, 7
  %v1616 = vadd.f32 %v1613, %v1614
  %v1618 = vsel %vm49, %v1616, 0
  %1620 = vmatpush.msra.mxu0 0.0
  %1621 = vmatpush.msra.mxu0 0.0
  %1622 = vmatpush.msra.mxu0 0.0
  %1623 = vmatpush.msra.mxu0 0.0
  %1624 = vmatpush.msra.mxu0 0.0
  %1625 = vmatpush.msra.mxu0 0.0
  %1626 = vmatpush.msra.mxu0 0.0
  %1627 = vmatpush.msra.mxu0 0.0
  %1628 = vmatpush.msra.mxu0 0.0
  %1629 = vmatpush.msra.mxu0 0.0
  %1630 = vmatpush.msra.mxu0 0.0
  %1631 = vmatpush.msra.mxu0 0.0
  %1632 = vmatpush.msra.mxu0 0.0
  %1633 = vmatpush.msra.mxu0 0.0
  %1634 = vmatpush.msra.mxu0 0.0
  %1635 = vmatpush.msra.mxu0 %v34
  %1636 = vmatmul.f32.gmra.mxu0 %v1618
  %v1637 = vpop.f32.mrf.mxu0
  %v1638 = vadd.f32 %v40, %v1637
  %1639 = vdwg.mxu0
  %v1640 = vmax.f32 %v1638, 0.0
  %v1642 = vrot.slane %v40, 1
  %v1645 = vsel %vm705, %v1640, 0
  %1647 = vmatpush.msra.mxu0 0.0
  %1648 = vmatpush.msra.mxu0 0.0
  %1649 = vmatpush.msra.mxu0 0.0
  %1650 = vmatpush.msra.mxu0 0.0
  %1651 = vmatpush.msra.mxu0 0.0
  %1652 = vmatpush.msra.mxu0 0.0
  %1653 = vmatpush.msra.mxu0 0.0
  %1654 = vmatpush.msra.mxu0 0.0
  %1655 = vmatpush.msra.mxu0 0.0
  %1656 = vmatpush.msra.mxu0 0.0
  %1657 = vmatpush.msra.mxu0 0.0
  %1658 = vmatpush.msra.mxu0 0.0
  %1659 = vmatpush.msra.mxu0 0.0
  %1660 = vmatpush.msra.mxu0 0.0
  %1661 = vmatpush.msra.mxu0 %v36
  %1662 = vmatpush.msra.mxu0 %v35
  %1663 = vmatmul.f32.gmra.mxu0 %v1645
  %v1664 = vpop.f32.mrf.mxu0
  %v1665 = vadd.f32 %v1642, %v1664
  %1666 = vdwg.mxu0
  %v1667 = vadd.f32 %v1616, %v1665
  %v1668 = vsel %vm1093, %v1667, 0.0
  %1669 = vadd.xlane.f32.xlu0 %v1668
  %v1670 = vpop.xlane.xlu0 %1669
  %v1671 = vmul.f32 %v1670, %v627
  %v1672 = vsub.f32 %v1667, %v1671
  %v1673 = vmul.f32 %v1672, %v1672
  %v1674 = vsel %vm1093, %v1673, 0.0
  %1675 = vadd.xlane.f32.xlu0 %v1674
  %v1676 = vpop.xlane.xlu0 %1675
  %v1677 = vmul.f32 %v1676, %v627
  %v1678 = vadd.f32 %v1677, 1e-05
  %v1679 = vrsqrt.pop %v1678
  %v1680 = vmul.f32 %v1679, %v1678
  %v1681 = vmul.f32 %v1680, %v1679
  %v1682 = vmul.f32 0.5, %v1681
  %v1683 = vsub.f32 1.5, %v1682
  %v1684 = vmul.f32 %v1679, %v1683
  %vm1685 = vweird.f32 %v1678
  %vm1686 = vweird.f32 %v1679
  %vm1687 = vmor %vm1685, %vm1686
  %v1688 = vsel %vm1687, %v1679, %v1684
  %v1689 = vmul.f32 %v1672, %v1688
  %v1690 = vrot.slane %v40, 2
  %v1692 = vmul.f32 %v1689, %v1690
  %v1693 = vrot.slane %v40, 3
  %v1695 = vadd.f32 %v1692, %v1693
  %v1696 = vrot.slane %v40, 4
  %v1699 = vsel %vm49, %v1695, 0
  %1701 = vmatpush.msra.mxu0 0.0
  %1702 = vmatpush.msra.mxu0 0.0
  %1703 = vmatpush.msra.mxu0 0.0
  %1704 = vmatpush.msra.mxu0 0.0
  %1705 = vmatpush.msra.mxu0 0.0
  %1706 = vmatpush.msra.mxu0 0.0
  %1707 = vmatpush.msra.mxu0 0.0
  %1708 = vmatpush.msra.mxu0 0.0
  %1709 = vmatpush.msra.mxu0 0.0
  %1710 = vmatpush.msra.mxu0 0.0
  %1711 = vmatpush.msra.mxu0 0.0
  %1712 = vmatpush.msra.mxu0 0.0
  %1713 = vmatpush.msra.mxu0 0.0
  %1714 = vmatpush.msra.mxu0 0.0
  %1715 = vmatpush.msra.mxu0 0.0
  %1716 = vmatpush.msra.mxu0 %v37
  %1717 = vmatmul.f32.gmra.mxu0 %v1699
  %v1718 = vpop.f32.mrf.mxu0
  %v1719 = vadd.f32 %v1696, %v1718
  %1720 = vdwg.mxu0
  %v1721 = vsub.f32 0.0, %v1719
  %v1722 = vmul.f32 %v1721, 1.442695
  %v1723 = vpow.pop %v1722
  %v1724 = vadd.f32 %v1723, 1.0
  %v1725 = vrcp.pop %v1724
  %v1726 = vperm.slane %v1725, 0
  %v1727 = vsub.f32 %v1726, %v20
  %v1728 = vsub.f32 %v1726, %v21
  %v1729 = vmul.f32 %v1727, %v1727
  %v1730 = vmul.f32 %v1728, %v1728
  %1733 = vrot.lane.b32.xlu0 %v1729, 4
  %v1734 = vpop.permute.xlu0 %1733
  %1735 = vrot.lane.b32.xlu0 %v1730, 4
  %v1736 = vpop.permute.xlu0 %1735
  %v1739 = vsel %vm41, %v20, %v1734
  %v1740 = vsel %vm41, %v21, %v1736
  %v1741 = vmul.f32 %v1739, 2.0
  %v1742 = vmul.f32 %v1740, 2.0
  %v1743 = vadd.f32 %v1741, %v23
  %v1744 = vadd.f32 %v1742, %v24
  %v1746 = vsel %vm49, %v1743, 0
  %v1749 = vsel %vm49, %v1744, 0
  %1751 = vmatpush.msra.mxu0 0.0
  %1752 = vmatpush.msra.mxu0 0.0
  %1753 = vmatpush.msra.mxu0 0.0
  %1754 = vmatpush.msra.mxu0 0.0
  %1755 = vmatpush.msra.mxu0 0.0
  %1756 = vmatpush.msra.mxu0 0.0
  %1757 = vmatpush.msra.mxu0 0.0
  %1758 = vmatpush.msra.mxu0 0.0
  %1759 = vmatpush.msra.mxu0 0.0
  %1760 = vmatpush.msra.mxu0 0.0
  %1761 = vmatpush.msra.mxu0 0.0
  %1762 = vmatpush.msra.mxu0 0.0
  %1763 = vmatpush.msra.mxu0 0.0
  %1764 = vmatpush.msra.mxu0 0.0
  %1765 = vmatpush.msra.mxu0 0.0
  %1766 = vmatpush.msra.mxu0 %v25
  %1767 = vmatmul.f32.gmra.mxu0 %v1746
  %v1768 = vpop.f32.mrf.mxu0
  %v1769 = vadd.f32 %v48, %v1768
  %1770 = vmatmul.f32.gmra.mxu0 %v1749
  %v1771 = vpop.f32.mrf.mxu0
  %v1772 = vadd.f32 %v48, %v1771
  %1773 = vdwg.mxu0
  %1776 = vrot.lane.b32.xlu0 %v1769, 120
  %v1777 = vpop.permute.xlu0 %1776
  %1778 = vrot.lane.b32.xlu0 %v1772, 120
  %v1779 = vpop.permute.xlu0 %1778
  %v1780 = vsel %vm85, %v1769, 0
  %v1782 = vsel %vm85, %v1772, 0
  %v1784 = vsel %vm85, %v1777, 0
  %v1786 = vsel %vm85, %v1779, 0
  %1788 = vmatpush.xpose.msra.mxu0 0.0
  %1789 = vmatpush.xpose.msra.mxu0 0.0
  %1790 = vmatpush.xpose.msra.mxu0 0.0
  %1791 = vmatpush.xpose.msra.mxu0 0.0
  %1792 = vmatpush.xpose.msra.mxu0 0.0
  %1793 = vmatpush.xpose.msra.mxu0 0.0
  %1794 = vmatpush.xpose.msra.mxu0 0.0
  %1795 = vmatpush.xpose.msra.mxu0 0.0
  %1796 = vmatpush.xpose.msra.mxu0 0.0
  %1797 = vmatpush.xpose.msra.mxu0 0.0
  %1798 = vmatpush.xpose.msra.mxu0 0.0
  %1799 = vmatpush.xpose.msra.mxu0 0.0
  %1800 = vmatpush.xpose.msra.mxu0 0.0
  %1801 = vmatpush.xpose.msra.mxu0 0.0
  %1802 = vmatpush.xpose.msra.mxu0 %v1786
  %1803 = vmatpush.xpose.msra.mxu0 %v1784
  %1804 = vmatmul.f32.gmra.mxu0 %v1780
  %v1805 = vpop.f32.mrf.mxu0
  %v1806 = vadd.f32 0.0, %v1805
  %1807 = vmatmul.f32.gmra.mxu0 %v1782
  %v1808 = vpop.f32.mrf.mxu0
  %v1809 = vadd.f32 0.0, %v1808
  %1810 = vdwg.mxu0
  %v1811 = vmul.f32 %v1806, 0.70710677
  %v1812 = vmul.f32 %v1809, 0.70710677
  %v1813 = vsel %vm119, %v1811, -inf
  %1814 = vmax.xlane.f32.xlu0 %v1813
  %v1815 = vpop.xlane.xlu0 %1814
  %v1816 = vsel %vm123, %v1812, -inf
  %1817 = vmax.xlane.f32.xlu0 %v1816
  %v1818 = vpop.xlane.xlu0 %1817
  %v1819 = vsub.f32 %v1811, %v1815
  %v1820 = vsub.f32 %v1812, %v1818
  %v1821 = vmul.f32 %v1819, 1.442695
  %v1822 = vpow.pop %v1821
  %v1823 = vmul.f32 %v1820, 1.442695
  %v1824 = vpow.pop %v1823
  %v1825 = vsel %vm119, %v1822, 0.0
  %1826 = vadd.xlane.f32.xlu0 %v1825
  %v1827 = vpop.xlane.xlu0 %1826
  %v1828 = vsel %vm123, %v1824, 0.0
  %1829 = vadd.xlane.f32.xlu0 %v1828
  %v1830 = vpop.xlane.xlu0 %1829
  %v1831 = vrcp.pop %v1827
  %v1832 = vrcp.pop %v1830
  %v1833 = vmul.f32 %v1822, %v1831
  %v1834 = vmul.f32 %v1824, %v1832
  %1835 = vrot.lane.b32.xlu0 %v1769, 112
  %v1836 = vpop.permute.xlu0 %1835
  %1837 = vrot.lane.b32.xlu0 %v1772, 112
  %v1838 = vpop.permute.xlu0 %1837
  %v1841 = vsel %vm119, %v1833, 0
  %v1844 = vsel %vm119, %v1834, 0
  %v1846 = vsel %vm154, %v1838, 0
  %1848 = vmatpush.msra.mxu0 0.0
  %1849 = vmatpush.msra.mxu0 0.0
  %1850 = vmatpush.msra.mxu0 0.0
  %1851 = vmatpush.msra.mxu0 0.0
  %1852 = vmatpush.msra.mxu0 0.0
  %1853 = vmatpush.msra.mxu0 0.0
  %1854 = vmatpush.msra.mxu0 0.0
  %1855 = vmatpush.msra.mxu0 0.0
  %1856 = vmatpush.msra.mxu0 0.0
  %1857 = vmatpush.msra.mxu0 0.0
  %1858 = vmatpush.msra.mxu0 0.0
  %1859 = vmatpush.msra.mxu0 0.0
  %1860 = vmatpush.msra.mxu0 0.0
  %1861 = vmatpush.msra.mxu0 0.0
  %1862 = vmatpush.msra.mxu0 %v1846
  %1863 = vmatpush.msra.mxu0 %v1836
  %1864 = vmatmul.f32.gmra.mxu0 %v1841
  %v1865 = vpop.f32.mrf.mxu0
  %v1866 = vadd.f32 0.0, %v1865
  %1867 = vmatmul.f32.gmra.mxu0 %v1844
  %v1868 = vpop.f32.mrf.mxu0
  %v1869 = vadd.f32 0.0, %v1868
  %1870 = vdwg.mxu0
  %1871 = vrot.lane.b32.xlu0 %v1769, 126
  %v1872 = vpop.permute.xlu0 %1871
  %1873 = vrot.lane.b32.xlu0 %v1772, 126
  %v1874 = vpop.permute.xlu0 %1873
  %1875 = vrot.lane.b32.xlu0 %v1769, 118
  %v1876 = vpop.permute.xlu0 %1875
  %1877 = vrot.lane.b32.xlu0 %v1772, 118
  %v1878 = vpop.permute.xlu0 %1877
  %v1879 = vsel %vm85, %v1872, 0
  %v1881 = vsel %vm85, %v1874, 0
  %v1883 = vsel %vm85, %v1876, 0
  %v1885 = vsel %vm85, %v1878, 0
  %1887 = vmatpush.xpose.msra.mxu0 0.0
  %1888 = vmatpush.xpose.msra.mxu0 0.0
  %1889 = vmatpush.xpose.msra.mxu0 0.0
  %1890 = vmatpush.xpose.msra.mxu0 0.0
  %1891 = vmatpush.xpose.msra.mxu0 0.0
  %1892 = vmatpush.xpose.msra.mxu0 0.0
  %1893 = vmatpush.xpose.msra.mxu0 0.0
  %1894 = vmatpush.xpose.msra.mxu0 0.0
  %1895 = vmatpush.xpose.msra.mxu0 0.0
  %1896 = vmatpush.xpose.msra.mxu0 0.0
  %1897 = vmatpush.xpose.msra.mxu0 0.0
  %1898 = vmatpush.xpose.msra.mxu0 0.0
  %1899 = vmatpush.xpose.msra.mxu0 0.0
  %1900 = vmatpush.xpose.msra.mxu0 0.0
  %1901 = vmatpush.xpose.msra.mxu0 %v1885
  %1902 = vmatpush.xpose.msra.mxu0 %v1883
  %1903 = vmatmul.f32.gmra.mxu0 %v1879
  %v1904 = vpop.f32.mrf.mxu0
  %v1905 = vadd.f32 0.0, %v1904
  %1906 = vmatmul.f32.gmra.mxu0 %v1881
  %v1907 = vpop.f32.mrf.mxu0
  %v1908 = vadd.f32 0.0, %v1907
  %1909 = vdwg.mxu0
  %v1910 = vmul.f32 %v1905, 0.70710677
  %v1911 = vmul.f32 %v1908, 0.70710677
  %v1912 = vsel %vm119, %v1910, -inf
  %1913 = vmax.xlane.f32.xlu0 %v1912
  %v1914 = vpop.xlane.xlu0 %1913
  %v1915 = vsel %vm123, %v1911, -inf
  %1916 = vmax.xlane.f32.xlu0 %v1915
  %v1917 = vpop.xlane.xlu0 %1916
  %v1918 = vsub.f32 %v1910, %v1914
  %v1919 = vsub.f32 %v1911, %v1917
  %v1920 = vmul.f32 %v1918, 1.442695
  %v1921 = vpow.pop %v1920
  %v1922 = vmul.f32 %v1919, 1.442695
  %v1923 = vpow.pop %v1922
  %v1924 = vsel %vm119, %v1921, 0.0
  %1925 = vadd.xlane.f32.xlu0 %v1924
  %v1926 = vpop.xlane.xlu0 %1925
  %v1927 = vsel %vm123, %v1923, 0.0
  %1928 = vadd.xlane.f32.xlu0 %v1927
  %v1929 = vpop.xlane.xlu0 %1928
  %v1930 = vrcp.pop %v1926
  %v1931 = vrcp.pop %v1929
  %v1932 = vmul.f32 %v1921, %v1930
  %v1933 = vmul.f32 %v1923, %v1931
  %1934 = vrot.lane.b32.xlu0 %v1769, 110
  %v1935 = vpop.permute.xlu0 %1934
  %1936 = vrot.lane.b32.xlu0 %v1772, 110
  %v1937 = vpop.permute.xlu0 %1936
  %v1940 = vsel %vm119, %v1932, 0
  %v1943 = vsel %vm119, %v1933, 0
  %v1945 = vsel %vm154, %v1937, 0
  %1947 = vmatpush.msra.mxu0 0.0
  %1948 = vmatpush.msra.mxu0 0.0
  %1949 = vmatpush.msra.mxu0 0.0
  %1950 = vmatpush.msra.mxu0 0.0
  %1951 = vmatpush.msra.mxu0 0.0
  %1952 = vmatpush.msra.mxu0 0.0
  %1953 = vmatpush.msra.mxu0 0.0
  %1954 = vmatpush.msra.mxu0 0.0
  %1955 = vmatpush.msra.mxu0 0.0
  %1956 = vmatpush.msra.mxu0 0.0
  %1957 = vmatpush.msra.mxu0 0.0
  %1958 = vmatpush.msra.mxu0 0.0
  %1959 = vmatpush.msra.mxu0 0.0
  %1960 = vmatpush.msra.mxu0 0.0
  %1961 = vmatpush.msra.mxu0 %v1945
  %1962 = vmatpush.msra.mxu0 %v1935
  %1963 = vmatmul.f32.gmra.mxu0 %v1940
  %v1964 = vpop.f32.mrf.mxu0
  %v1965 = vadd.f32 0.0, %v1964
  %1966 = vmatmul.f32.gmra.mxu0 %v1943
  %v1967 = vpop.f32.mrf.mxu0
  %v1968 = vadd.f32 0.0, %v1967
  %1969 = vdwg.mxu0
  %v1971 = vsel %vm85, %v1965, 0
  %v1974 = vsel %vm85, %v1968, 0
  %1976 = vmatpush.msra.mxu0 0.0
  %1977 = vmatpush.msra.mxu0 0.0
  %1978 = vmatpush.msra.mxu0 0.0
  %1979 = vmatpush.msra.mxu0 0.0
  %1980 = vmatpush.msra.mxu0 0.0
  %1981 = vmatpush.msra.mxu0 0.0
  %1982 = vmatpush.msra.mxu0 0.0
  %1983 = vmatpush.msra.mxu0 0.0
  %1984 = vmatpush.msra.mxu0 0.0
  %1985 = vmatpush.msra.mxu0 0.0
  %1986 = vmatpush.msra.mxu0 0.0
  %1987 = vmatpush.msra.mxu0 0.0
  %1988 = vmatpush.msra.mxu0 0.0
  %1989 = vmatpush.msra.mxu0 0.0
  %1990 = vmatpush.msra.mxu0 0.0
  %1991 = vmatpush.msra.mxu0 %v287
  %1992 = vmatmul.f32.gmra.mxu0 %v1971
  %v1993 = vpop.f32.mrf.mxu0
  %v1994 = vadd.f32 0.0, %v1993
  %1995 = vmatmul.f32.gmra.mxu0 %v1974
  %v1996 = vpop.f32.mrf.mxu0
  %v1997 = vadd.f32 0.0, %v1996
  %1998 = vdwg.mxu0
  %v2000 = vsel %vm85, %v1866, 0
  %v2003 = vsel %vm85, %v1869, 0
  %2005 = vmatpush.msra.mxu0 0.0
  %2006 = vmatpush.msra.mxu0 0.0
  %2007 = vmatpush.msra.mxu0 0.0
  %2008 = vmatpush.msra.mxu0 0.0
  %2009 = vmatpush.msra.mxu0 0.0
  %2010 = vmatpush.msra.mxu0 0.0
  %2011 = vmatpush.msra.mxu0 0.0
  %2012 = vmatpush.msra.mxu0 0.0
  %2013 = vmatpush.msra.mxu0 0.0
  %2014 = vmatpush.msra.mxu0 0.0
  %2015 = vmatpush.msra.mxu0 0.0
  %2016 = vmatpush.msra.mxu0 0.0
  %2017 = vmatpush.msra.mxu0 0.0
  %2018 = vmatpush.msra.mxu0 0.0
  %2019 = vmatpush.msra.mxu0 0.0
  %2020 = vmatpush.msra.mxu0 %v318
  %2021 = vmatmul.f32.gmra.mxu0 %v2000
  %v2022 = vpop.f32.mrf.mxu0
  %v2023 = vadd.f32 %v1994, %v2022
  %2024 = vmatmul.f32.gmra.mxu0 %v2003
  %v2025 = vpop.f32.mrf.mxu0
  %v2026 = vadd.f32 %v1997, %v2025
  %2027 = vdwg.mxu0
  %2028 = vrot.lane.b32.xlu0 %v1769, 124
  %v2029 = vpop.permute.xlu0 %2028
  %2030 = vrot.lane.b32.xlu0 %v1772, 124
  %v2031 = vpop.permute.xlu0 %2030
  %2032 = vrot.lane.b32.xlu0 %v1769, 116
  %v2033 = vpop.permute.xlu0 %2032
  %2034 = vrot.lane.b32.xlu0 %v1772, 116
  %v2035 = vpop.permute.xlu0 %2034
  %v2036 = vsel %vm85, %v2029, 0
  %v2038 = vsel %vm85, %v2031, 0
  %v2040 = vsel %vm85, %v2033, 0
  %v2042 = vsel %vm85, %v2035, 0
  %2044 = vmatpush.xpose.msra.mxu0 0.0
  %2045 = vmatpush.xpose.msra.mxu0 0.0
  %2046 = vmatpush.xpose.msra.mxu0 0.0
  %2047 = vmatpush.xpose.msra.mxu0 0.0
  %2048 = vmatpush.xpose.msra.mxu0 0.0
  %2049 = vmatpush.xpose.msra.mxu0 0.0
  %2050 = vmatpush.xpose.msra.mxu0 0.0
  %2051 = vmatpush.xpose.msra.mxu0 0.0
  %2052 = vmatpush.xpose.msra.mxu0 0.0
  %2053 = vmatpush.xpose.msra.mxu0 0.0
  %2054 = vmatpush.xpose.msra.mxu0 0.0
  %2055 = vmatpush.xpose.msra.mxu0 0.0
  %2056 = vmatpush.xpose.msra.mxu0 0.0
  %2057 = vmatpush.xpose.msra.mxu0 0.0
  %2058 = vmatpush.xpose.msra.mxu0 %v2042
  %2059 = vmatpush.xpose.msra.mxu0 %v2040
  %2060 = vmatmul.f32.gmra.mxu0 %v2036
  %v2061 = vpop.f32.mrf.mxu0
  %v2062 = vadd.f32 0.0, %v2061
  %2063 = vmatmul.f32.gmra.mxu0 %v2038
  %v2064 = vpop.f32.mrf.mxu0
  %v2065 = vadd.f32 0.0, %v2064
  %2066 = vdwg.mxu0
  %v2067 = vmul.f32 %v2062, 0.70710677
  %v2068 = vmul.f32 %v2065, 0.70710677
  %v2069 = vsel %vm119, %v2067, -inf
  %2070 = vmax.xlane.f32.xlu0 %v2069
  %v2071 = vpop.xlane.xlu0 %2070
  %v2072 = vsel %vm123, %v2068, -inf
  %2073 = vmax.xlane.f32.xlu0 %v2072
  %v2074 = vpop.xlane.xlu0 %2073
  %v2075 = vsub.f32 %v2067, %v2071
  %v2076 = vsub.f32 %v2068, %v2074
  %v2077 = vmul.f32 %v2075, 1.442695
  %v2078 = vpow.pop %v2077
  %v2079 = vmul.f32 %v2076, 1.442695
  %v2080 = vpow.pop %v2079
  %v2081 = vsel %vm119, %v2078, 0.0
  %2082 = vadd.xlane.f32.xlu0 %v2081
  %v2083 = vpop.xlane.xlu0 %2082
  %v2084 = vsel %vm123, %v2080, 0.0
  %2085 = vadd.xlane.f32.xlu0 %v2084
  %v2086 = vpop.xlane.xlu0 %2085
  %v2087 = vrcp.pop %v2083
  %v2088 = vrcp.pop %v2086
  %v2089 = vmul.f32 %v2078, %v2087
  %v2090 = vmul.f32 %v2080, %v2088
  %2091 = vrot.lane.b32.xlu0 %v1769, 108
  %v2092 = vpop.permute.xlu0 %2091
  %2093 = vrot.lane.b32.xlu0 %v1772, 108
  %v2094 = vpop.permute.xlu0 %2093
  %v2097 = vsel %vm119, %v2089, 0
  %v2100 = vsel %vm119, %v2090, 0
  %v2102 = vsel %vm154, %v2094, 0
  %2104 = vmatpush.msra.mxu0 0.0
  %2105 = vmatpush.msra.mxu0 0.0
  %2106 = vmatpush.msra.mxu0 0.0
  %2107 = vmatpush.msra.mxu0 0.0
  %2108 = vmatpush.msra.mxu0 0.0
  %2109 = vmatpush.msra.mxu0 0.0
  %2110 = vmatpush.msra.mxu0 0.0
  %2111 = vmatpush.msra.mxu0 0.0
  %2112 = vmatpush.msra.mxu0 0.0
  %2113 = vmatpush.msra.mxu0 0.0
  %2114 = vmatpush.msra.mxu0 0.0
  %2115 = vmatpush.msra.mxu0 0.0
  %2116 = vmatpush.msra.mxu0 0.0
  %2117 = vmatpush.msra.mxu0 0.0
  %2118 = vmatpush.msra.mxu0 %v2102
  %2119 = vmatpush.msra.mxu0 %v2092
  %2120 = vmatmul.f32.gmra.mxu0 %v2097
  %v2121 = vpop.f32.mrf.mxu0
  %v2122 = vadd.f32 0.0, %v2121
  %2123 = vmatmul.f32.gmra.mxu0 %v2100
  %v2124 = vpop.f32.mrf.mxu0
  %v2125 = vadd.f32 0.0, %v2124
  %2126 = vdwg.mxu0
  %v2128 = vsel %vm85, %v2122, 0
  %v2131 = vsel %vm85, %v2125, 0
  %2133 = vmatpush.msra.mxu0 0.0
  %2134 = vmatpush.msra.mxu0 0.0
  %2135 = vmatpush.msra.mxu0 0.0
  %2136 = vmatpush.msra.mxu0 0.0
  %2137 = vmatpush.msra.mxu0 0.0
  %2138 = vmatpush.msra.mxu0 0.0
  %2139 = vmatpush.msra.mxu0 0.0
  %2140 = vmatpush.msra.mxu0 0.0
  %2141 = vmatpush.msra.mxu0 0.0
  %2142 = vmatpush.msra.mxu0 0.0
  %2143 = vmatpush.msra.mxu0 0.0
  %2144 = vmatpush.msra.mxu0 0.0
  %2145 = vmatpush.msra.mxu0 0.0
  %2146 = vmatpush.msra.mxu0 0.0
  %2147 = vmatpush.msra.mxu0 0.0
  %2148 = vmatpush.msra.mxu0 %v449
  %2149 = vmatmul.f32.gmra.mxu0 %v2128
  %v2150 = vpop.f32.mrf.mxu0
  %v2151 = vadd.f32 0.0, %v2150
  %2152 = vmatmul.f32.gmra.mxu0 %v2131
  %v2153 = vpop.f32.mrf.mxu0
  %v2154 = vadd.f32 0.0, %v2153
  %2155 = vdwg.mxu0
  %v2156 = vadd.f32 %v2023, %v2151
  %v2157 = vadd.f32 %v2026, %v2154
  %2158 = vrot.lane.b32.xlu0 %v1769, 122
  %v2159 = vpop.permute.xlu0 %2158
  %2160 = vrot.lane.b32.xlu0 %v1772, 122
  %v2161 = vpop.permute.xlu0 %2160
  %2162 = vrot.lane.b32.xlu0 %v1769, 114
  %v2163 = vpop.permute.xlu0 %2162
  %2164 = vrot.lane.b32.xlu0 %v1772, 114
  %v2165 = vpop.permute.xlu0 %2164
  %v2166 = vsel %vm85, %v2159, 0
  %v2168 = vsel %vm85, %v2161, 0
  %v2170 = vsel %vm85, %v2163, 0
  %v2172 = vsel %vm85, %v2165, 0
  %2174 = vmatpush.xpose.msra.mxu0 0.0
  %2175 = vmatpush.xpose.msra.mxu0 0.0
  %2176 = vmatpush.xpose.msra.mxu0 0.0
  %2177 = vmatpush.xpose.msra.mxu0 0.0
  %2178 = vmatpush.xpose.msra.mxu0 0.0
  %2179 = vmatpush.xpose.msra.mxu0 0.0
  %2180 = vmatpush.xpose.msra.mxu0 0.0
  %2181 = vmatpush.xpose.msra.mxu0 0.0
  %2182 = vmatpush.xpose.msra.mxu0 0.0
  %2183 = vmatpush.xpose.msra.mxu0 0.0
  %2184 = vmatpush.xpose.msra.mxu0 0.0
  %2185 = vmatpush.xpose.msra.mxu0 0.0
  %2186 = vmatpush.xpose.msra.mxu0 0.0
  %2187 = vmatpush.xpose.msra.mxu0 0.0
  %2188 = vmatpush.xpose.msra.mxu0 %v2172
  %2189 = vmatpush.xpose.msra.mxu0 %v2170
  %2190 = vmatmul.f32.gmra.mxu0 %v2166
  %v2191 = vpop.f32.mrf.mxu0
  %v2192 = vadd.f32 0.0, %v2191
  %2193 = vmatmul.f32.gmra.mxu0 %v2168
  %v2194 = vpop.f32.mrf.mxu0
  %v2195 = vadd.f32 0.0, %v2194
  %2196 = vdwg.mxu0
  %v2197 = vmul.f32 %v2192, 0.70710677
  %v2198 = vmul.f32 %v2195, 0.70710677
  %v2199 = vsel %vm119, %v2197, -inf
  %2200 = vmax.xlane.f32.xlu0 %v2199
  %v2201 = vpop.xlane.xlu0 %2200
  %v2202 = vsel %vm123, %v2198, -inf
  %2203 = vmax.xlane.f32.xlu0 %v2202
  %v2204 = vpop.xlane.xlu0 %2203
  %v2205 = vsub.f32 %v2197, %v2201
  %v2206 = vsub.f32 %v2198, %v2204
  %v2207 = vmul.f32 %v2205, 1.442695
  %v2208 = vpow.pop %v2207
  %v2209 = vmul.f32 %v2206, 1.442695
  %v2210 = vpow.pop %v2209
  %v2211 = vsel %vm119, %v2208, 0.0
  %2212 = vadd.xlane.f32.xlu0 %v2211
  %v2213 = vpop.xlane.xlu0 %2212
  %v2214 = vsel %vm123, %v2210, 0.0
  %2215 = vadd.xlane.f32.xlu0 %v2214
  %v2216 = vpop.xlane.xlu0 %2215
  %v2217 = vrcp.pop %v2213
  %v2218 = vrcp.pop %v2216
  %v2219 = vmul.f32 %v2208, %v2217
  %v2220 = vmul.f32 %v2210, %v2218
  %2221 = vrot.lane.b32.xlu0 %v1769, 106
  %v2222 = vpop.permute.xlu0 %2221
  %2223 = vrot.lane.b32.xlu0 %v1772, 106
  %v2224 = vpop.permute.xlu0 %2223
  %v2227 = vsel %vm119, %v2219, 0
  %v2230 = vsel %vm119, %v2220, 0
  %v2232 = vsel %vm154, %v2224, 0
  %2234 = vmatpush.msra.mxu0 0.0
  %2235 = vmatpush.msra.mxu0 0.0
  %2236 = vmatpush.msra.mxu0 0.0
  %2237 = vmatpush.msra.mxu0 0.0
  %2238 = vmatpush.msra.mxu0 0.0
  %2239 = vmatpush.msra.mxu0 0.0
  %2240 = vmatpush.msra.mxu0 0.0
  %2241 = vmatpush.msra.mxu0 0.0
  %2242 = vmatpush.msra.mxu0 0.0
  %2243 = vmatpush.msra.mxu0 0.0
  %2244 = vmatpush.msra.mxu0 0.0
  %2245 = vmatpush.msra.mxu0 0.0
  %2246 = vmatpush.msra.mxu0 0.0
  %2247 = vmatpush.msra.mxu0 0.0
  %2248 = vmatpush.msra.mxu0 %v2232
  %2249 = vmatpush.msra.mxu0 %v2222
  %2250 = vmatmul.f32.gmra.mxu0 %v2227
  %v2251 = vpop.f32.mrf.mxu0
  %v2252 = vadd.f32 0.0, %v2251
  %2253 = vmatmul.f32.gmra.mxu0 %v2230
  %v2254 = vpop.f32.mrf.mxu0
  %v2255 = vadd.f32 0.0, %v2254
  %2256 = vdwg.mxu0
  %v2258 = vsel %vm85, %v2252, 0
  %v2261 = vsel %vm85, %v2255, 0
  %2263 = vmatpush.msra.mxu0 0.0
  %2264 = vmatpush.msra.mxu0 0.0
  %2265 = vmatpush.msra.mxu0 0.0
  %2266 = vmatpush.msra.mxu0 0.0
  %2267 = vmatpush.msra.mxu0 0.0
  %2268 = vmatpush.msra.mxu0 0.0
  %2269 = vmatpush.msra.mxu0 0.0
  %2270 = vmatpush.msra.mxu0 0.0
  %2271 = vmatpush.msra.mxu0 0.0
  %2272 = vmatpush.msra.mxu0 0.0
  %2273 = vmatpush.msra.mxu0 0.0
  %2274 = vmatpush.msra.mxu0 0.0
  %2275 = vmatpush.msra.mxu0 0.0
  %2276 = vmatpush.msra.mxu0 0.0
  %2277 = vmatpush.msra.mxu0 0.0
  %2278 = vmatpush.msra.mxu0 %v582
  %2279 = vmatmul.f32.gmra.mxu0 %v2258
  %v2280 = vpop.f32.mrf.mxu0
  %v2281 = vadd.f32 0.0, %v2280
  %2282 = vmatmul.f32.gmra.mxu0 %v2261
  %v2283 = vpop.f32.mrf.mxu0
  %v2284 = vadd.f32 0.0, %v2283
  %2285 = vdwg.mxu0
  %v2286 = vadd.f32 %v2156, %v2281
  %v2287 = vadd.f32 %v2157, %v2284
  %v2288 = vadd.f32 %v2286, %v609
  %v2289 = vadd.f32 %v2287, %v609
  %v2290 = vadd.f32 %v1743, %v2288
  %v2291 = vadd.f32 %v1744, %v2289
  %v2292 = vsel %vm49, %v2290, 0.0
  %2293 = vadd.xlane.f32.xlu0 %v2292
  %v2294 = vpop.xlane.xlu0 %2293
  %v2295 = vsel %vm617, %v2291, 0.0
  %2296 = vadd.xlane.f32.xlu0 %v2295
  %v2297 = vpop.xlane.xlu0 %2296
  %v2298 = vmul.f32 %v2294, %v627
  %v2299 = vmul.f32 %v2297, %v627
  %v2300 = vsub.f32 %v2290, %v2298
  %v2301 = vsub.f32 %v2291, %v2299
  %v2302 = vmul.f32 %v2300, %v2300
  %v2303 = vmul.f32 %v2301, %v2301
  %v2304 = vsel %vm49, %v2302, 0.0
  %2305 = vadd.xlane.f32.xlu0 %v2304
  %v2306 = vpop.xlane.xlu0 %2305
  %v2307 = vsel %vm617, %v2303, 0.0
  %2308 = vadd.xlane.f32.xlu0 %v2307
  %v2309 = vpop.xlane.xlu0 %2308
  %v2310 = vmul.f32 %v2306, %v627
  %v2311 = vmul.f32 %v2309, %v627
  %v2312 = vadd.f32 %v2310, 1e-05
  %v2313 = vadd.f32 %v2311, 1e-05
  %v2314 = vrsqrt.pop %v2312
  %v2315 = vmul.f32 %v2314, %v2312
  %v2316 = vmul.f32 %v2315, %v2314
  %v2317 = vmul.f32 0.5, %v2316
  %v2318 = vsub.f32 1.5, %v2317
  %v2319 = vmul.f32 %v2314, %v2318
  %vm2320 = vweird.f32 %v2312
  %vm2321 = vweird.f32 %v2314
  %vm2322 = vmor %vm2320, %vm2321
  %v2323 = vsel %vm2322, %v2314, %v2319
  %v2324 = vrsqrt.pop %v2313
  %v2325 = vmul.f32 %v2324, %v2313
  %v2326 = vmul.f32 %v2325, %v2324
  %v2327 = vmul.f32 0.5, %v2326
  %v2328 = vsub.f32 1.5, %v2327
  %v2329 = vmul.f32 %v2324, %v2328
  %vm2330 = vweird.f32 %v2313
  %vm2331 = vweird.f32 %v2324
  %vm2332 = vmor %vm2330, %vm2331
  %v2333 = vsel %vm2332, %v2324, %v2329
  %v2334 = vmul.f32 %v2300, %v2323
  %v2335 = vmul.f32 %v2301, %v2333
  %v2336 = vmul.f32 %v2334, %v666
  %v2337 = vmul.f32 %v2335, %v666
  %v2338 = vadd.f32 %v2336, %v669
  %v2339 = vadd.f32 %v2337, %v669
  %v2341 = vsel %vm49, %v2338, 0
  %v2344 = vsel %vm49, %v2339, 0
  %2346 = vmatpush.msra.mxu0 0.0
  %2347 = vmatpush.msra.mxu0 0.0
  %2348 = vmatpush.msra.mxu0 0.0
  %2349 = vmatpush.msra.mxu0 0.0
  %2350 = vmatpush.msra.mxu0 0.0
  %2351 = vmatpush.msra.mxu0 0.0
  %2352 = vmatpush.msra.mxu0 0.0
  %2353 = vmatpush.msra.mxu0 0.0
  %2354 = vmatpush.msra.mxu0 0.0
  %2355 = vmatpush.msra.mxu0 0.0
  %2356 = vmatpush.msra.mxu0 0.0
  %2357 = vmatpush.msra.mxu0 0.0
  %2358 = vmatpush.msra.mxu0 0.0
  %2359 = vmatpush.msra.mxu0 0.0
  %2360 = vmatpush.msra.mxu0 0.0
  %2361 = vmatpush.msra.mxu0 %v27
  %2362 = vmatmul.f32.gmra.mxu0 %v2341
  %v2363 = vpop.f32.mrf.mxu0
  %v2364 = vadd.f32 %v672, %v2363
  %2365 = vmatmul.f32.gmra.mxu0 %v2344
  %v2366 = vpop.f32.mrf.mxu0
  %v2367 = vadd.f32 %v672, %v2366
  %2368 = vdwg.mxu0
  %v2369 = vmax.f32 %v2364, 0.0
  %v2370 = vmax.f32 %v2367, 0.0
  %v2372 = vsel %vm705, %v2369, 0
  %v2375 = vsel %vm705, %v2370, 0
  %2377 = vmatpush.msra.mxu0 0.0
  %2378 = vmatpush.msra.mxu0 0.0
  %2379 = vmatpush.msra.mxu0 0.0
  %2380 = vmatpush.msra.mxu0 0.0
  %2381 = vmatpush.msra.mxu0 0.0
  %2382 = vmatpush.msra.mxu0 0.0
  %2383 = vmatpush.msra.mxu0 0.0
  %2384 = vmatpush.msra.mxu0 0.0
  %2385 = vmatpush.msra.mxu0 0.0
  %2386 = vmatpush.msra.mxu0 0.0
  %2387 = vmatpush.msra.mxu0 0.0
  %2388 = vmatpush.msra.mxu0 0.0
  %2389 = vmatpush.msra.mxu0 0.0
  %2390 = vmatpush.msra.mxu0 0.0
  %2391 = vmatpush.msra.mxu0 %v29
  %2392 = vmatpush.msra.mxu0 %v28
  %2393 = vmatmul.f32.gmra.mxu0 %v2372
  %v2394 = vpop.f32.mrf.mxu0
  %v2395 = vadd.f32 %v704, %v2394
  %2396 = vmatmul.f32.gmra.mxu0 %v2375
  %v2397 = vpop.f32.mrf.mxu0
  %v2398 = vadd.f32 %v704, %v2397
  %2399 = vdwg.mxu0
  %v2400 = vadd.f32 %v2338, %v2395
  %v2401 = vadd.f32 %v2339, %v2398
  %v2402 = vsel %vm49, %v2400, 0.0
  %2403 = vadd.xlane.f32.xlu0 %v2402
  %v2404 = vpop.xlane.xlu0 %2403
  %v2405 = vsel %vm617, %v2401, 0.0
  %2406 = vadd.xlane.f32.xlu0 %v2405
  %v2407 = vpop.xlane.xlu0 %2406
  %v2408 = vmul.f32 %v2404, %v627
  %v2409 = vmul.f32 %v2407, %v627
  %v2410 = vsub.f32 %v2400, %v2408
  %v2411 = vsub.f32 %v2401, %v2409
  %v2412 = vmul.f32 %v2410, %v2410
  %v2413 = vmul.f32 %v2411, %v2411
  %v2414 = vsel %vm49, %v2412, 0.0
  %2415 = vadd.xlane.f32.xlu0 %v2414
  %v2416 = vpop.xlane.xlu0 %2415
  %v2417 = vsel %vm617, %v2413, 0.0
  %2418 = vadd.xlane.f32.xlu0 %v2417
  %v2419 = vpop.xlane.xlu0 %2418
  %v2420 = vmul.f32 %v2416, %v627
  %v2421 = vmul.f32 %v2419, %v627
  %v2422 = vadd.f32 %v2420, 1e-05
  %v2423 = vadd.f32 %v2421, 1e-05
  %v2424 = vrsqrt.pop %v2422
  %v2425 = vmul.f32 %v2424, %v2422
  %v2426 = vmul.f32 %v2425, %v2424
  %v2427 = vmul.f32 0.5, %v2426
  %v2428 = vsub.f32 1.5, %v2427
  %v2429 = vmul.f32 %v2424, %v2428
  %vm2430 = vweird.f32 %v2422
  %vm2431 = vweird.f32 %v2424
  %vm2432 = vmor %vm2430, %vm2431
  %v2433 = vsel %vm2432, %v2424, %v2429
  %v2434 = vrsqrt.pop %v2423
  %v2435 = vmul.f32 %v2434, %v2423
  %v2436 = vmul.f32 %v2435, %v2434
  %v2437 = vmul.f32 0.5, %v2436
  %v2438 = vsub.f32 1.5, %v2437
  %v2439 = vmul.f32 %v2434, %v2438
  %vm2440 = vweird.f32 %v2423
  %vm2441 = vweird.f32 %v2434
  %vm2442 = vmor %vm2440, %vm2441
  %v2443 = vsel %vm2442, %v2434, %v2439
  %v2444 = vmul.f32 %v2410, %v2433
  %v2445 = vmul.f32 %v2411, %v2443
  %v2446 = vmul.f32 %v2444, %v781
  %v2447 = vmul.f32 %v2445, %v781
  %v2448 = vadd.f32 %v2446, %v784
  %v2449 = vadd.f32 %v2447, %v784
  %v2451 = vsel %vm49, %v2448, 0
  %v2454 = vsel %vm49, %v2449, 0
  %2456 = vmatpush.msra.mxu0 0.0
  %2457 = vmatpush.msra.mxu0 0.0
  %2458 = vmatpush.msra.mxu0 0.0
  %2459 = vmatpush.msra.mxu0 0.0
  %2460 = vmatpush.msra.mxu0 0.0
  %2461 = vmatpush.msra.mxu0 0.0
  %2462 = vmatpush.msra.mxu0 0.0
  %2463 = vmatpush.msra.mxu0 0.0
  %2464 = vmatpush.msra.mxu0 0.0
  %2465 = vmatpush.msra.mxu0 0.0
  %2466 = vmatpush.msra.mxu0 0.0
  %2467 = vmatpush.msra.mxu0 0.0
  %2468 = vmatpush.msra.mxu0 0.0
  %2469 = vmatpush.msra.mxu0 0.0
  %2470 = vmatpush.msra.mxu0 0.0
  %2471 = vmatpush.msra.mxu0 %v1150
  %2472 = vmatmul.f32.gmra.mxu0 %v2451
  %v2473 = vpop.f32.mrf.mxu0
  %v2474 = vadd.f32 %v1154, %v2473
  %2475 = vmatmul.f32.gmra.mxu0 %v2454
  %v2476 = vpop.f32.mrf.mxu0
  %v2477 = vadd.f32 %v1154, %v2476
  %2478 = vdwg.mxu0
  %v2480 = vsel %vm85, %v2474, 0
  %v2483 = vsel %vm85, %v2477, 0
  %2485 = vmatpush.xpose.msra.mxu0 0.0
  %2486 = vmatpush.xpose.msra.mxu0 0.0
  %2487 = vmatpush.xpose.msra.mxu0 0.0
  %2488 = vmatpush.xpose.msra.mxu0 0.0
  %2489 = vmatpush.xpose.msra.mxu0 0.0
  %2490 = vmatpush.xpose.msra.mxu0 0.0
  %2491 = vmatpush.xpose.msra.mxu0 0.0
  %2492 = vmatpush.xpose.msra.mxu0 0.0
  %2493 = vmatpush.xpose.msra.mxu0 0.0
  %2494 = vmatpush.xpose.msra.mxu0 0.0
  %2495 = vmatpush.xpose.msra.mxu0 0.0
  %2496 = vmatpush.xpose.msra.mxu0 0.0
  %2497 = vmatpush.xpose.msra.mxu0 0.0
  %2498 = vmatpush.xpose.msra.mxu0 0.0
  %2499 = vmatpush.xpose.msra.mxu0 %v2483
  %2500 = vmatpush.xpose.msra.mxu0 %v2480
  %2501 = vmatmul.f32.gmra.mxu0 %v1186
  %v2502 = vpop.f32.mrf.mxu0
  %v2503 = vadd.f32 0.0, %v2502
  %2504 = vdwg.mxu0
  %v2505 = vmul.f32 %v2503, 0.70710677
  %v2506 = vsel %vm1215, %v2505, -inf
  %2507 = vmax.xlane.f32.xlu0 %v2506
  %v2508 = vpop.xlane.xlu0 %2507
  %v2509 = vsub.f32 %v2505, %v2508
  %v2510 = vmul.f32 %v2509, 1.442695
  %v2511 = vpow.pop %v2510
  %v2512 = vsel %vm1215, %v2511, 0.0
  %2513 = vadd.xlane.f32.xlu0 %v2512
  %v2514 = vpop.xlane.xlu0 %2513
  %v2515 = vrcp.pop %v2514
  %v2516 = vmul.f32 %v2511, %v2515
  %2517 = vrot.lane.b32.xlu0 %v2474, 120
  %v2518 = vpop.permute.xlu0 %2517
  %2519 = vrot.lane.b32.xlu0 %v2477, 120
  %v2520 = vpop.permute.xlu0 %2519
  %v2523 = vsel %vm119, %v2516, 0
  %v2525 = vsel %vm154, %v2520, 0
  %2527 = vmatpush.msra.mxu0 0.0
  %2528 = vmatpush.msra.mxu0 0.0
  %2529 = vmatpush.msra.mxu0 0.0
  %2530 = vmatpush.msra.mxu0 0.0
  %2531 = vmatpush.msra.mxu0 0.0
  %2532 = vmatpush.msra.mxu0 0.0
  %2533 = vmatpush.msra.mxu0 0.0
  %2534 = vmatpush.msra.mxu0 0.0
  %2535 = vmatpush.msra.mxu0 0.0
  %2536 = vmatpush.msra.mxu0 0.0
  %2537 = vmatpush.msra.mxu0 0.0
  %2538 = vmatpush.msra.mxu0 0.0
  %2539 = vmatpush.msra.mxu0 0.0
  %2540 = vmatpush.msra.mxu0 0.0
  %2541 = vmatpush.msra.mxu0 %v2525
  %2542 = vmatpush.msra.mxu0 %v2518
  %2543 = vmatmul.f32.gmra.mxu0 %v2523
  %v2544 = vpop.f32.mrf.mxu0
  %v2545 = vadd.f32 0.0, %v2544
  %2546 = vdwg.mxu0
  %2547 = vrot.lane.b32.xlu0 %v2474, 126
  %v2548 = vpop.permute.xlu0 %2547
  %2549 = vrot.lane.b32.xlu0 %v2477, 126
  %v2550 = vpop.permute.xlu0 %2549
  %v2551 = vsel %vm85, %v2548, 0
  %v2553 = vsel %vm85, %v2550, 0
  %2555 = vmatpush.xpose.msra.mxu0 0.0
  %2556 = vmatpush.xpose.msra.mxu0 0.0
  %2557 = vmatpush.xpose.msra.mxu0 0.0
  %2558 = vmatpush.xpose.msra.mxu0 0.0
  %2559 = vmatpush.xpose.msra.mxu0 0.0
  %2560 = vmatpush.xpose.msra.mxu0 0.0
  %2561 = vmatpush.xpose.msra.mxu0 0.0
  %2562 = vmatpush.xpose.msra.mxu0 0.0
  %2563 = vmatpush.xpose.msra.mxu0 0.0
  %2564 = vmatpush.xpose.msra.mxu0 0.0
  %2565 = vmatpush.xpose.msra.mxu0 0.0
  %2566 = vmatpush.xpose.msra.mxu0 0.0
  %2567 = vmatpush.xpose.msra.mxu0 0.0
  %2568 = vmatpush.xpose.msra.mxu0 0.0
  %2569 = vmatpush.xpose.msra.mxu0 %v2553
  %2570 = vmatpush.xpose.msra.mxu0 %v2551
  %2571 = vmatmul.f32.gmra.mxu0 %v1263
  %v2572 = vpop.f32.mrf.mxu0
  %v2573 = vadd.f32 0.0, %v2572
  %2574 = vdwg.mxu0
  %v2575 = vmul.f32 %v2573, 0.70710677
  %v2576 = vsel %vm1215, %v2575, -inf
  %2577 = vmax.xlane.f32.xlu0 %v2576
  %v2578 = vpop.xlane.xlu0 %2577
  %v2579 = vsub.f32 %v2575, %v2578
  %v2580 = vmul.f32 %v2579, 1.442695
  %v2581 = vpow.pop %v2580
  %v2582 = vsel %vm1215, %v2581, 0.0
  %2583 = vadd.xlane.f32.xlu0 %v2582
  %v2584 = vpop.xlane.xlu0 %2583
  %v2585 = vrcp.pop %v2584
  %v2586 = vmul.f32 %v2581, %v2585
  %2587 = vrot.lane.b32.xlu0 %v2474, 118
  %v2588 = vpop.permute.xlu0 %2587
  %2589 = vrot.lane.b32.xlu0 %v2477, 118
  %v2590 = vpop.permute.xlu0 %2589
  %v2593 = vsel %vm119, %v2586, 0
  %v2595 = vsel %vm154, %v2590, 0
  %2597 = vmatpush.msra.mxu0 0.0
  %2598 = vmatpush.msra.mxu0 0.0
  %2599 = vmatpush.msra.mxu0 0.0
  %2600 = vmatpush.msra.mxu0 0.0
  %2601 = vmatpush.msra.mxu0 0.0
  %2602 = vmatpush.msra.mxu0 0.0
  %2603 = vmatpush.msra.mxu0 0.0
  %2604 = vmatpush.msra.mxu0 0.0
  %2605 = vmatpush.msra.mxu0 0.0
  %2606 = vmatpush.msra.mxu0 0.0
  %2607 = vmatpush.msra.mxu0 0.0
  %2608 = vmatpush.msra.mxu0 0.0
  %2609 = vmatpush.msra.mxu0 0.0
  %2610 = vmatpush.msra.mxu0 0.0
  %2611 = vmatpush.msra.mxu0 %v2595
  %2612 = vmatpush.msra.mxu0 %v2588
  %2613 = vmatmul.f32.gmra.mxu0 %v2593
  %v2614 = vpop.f32.mrf.mxu0
  %v2615 = vadd.f32 0.0, %v2614
  %2616 = vdwg.mxu0
  %v2618 = vsel %vm85, %v2615, 0
  %2620 = vmatpush.msra.mxu0 0.0
  %2621 = vmatpush.msra.mxu0 0.0
  %2622 = vmatpush.msra.mxu0 0.0
  %2623 = vmatpush.msra.mxu0 0.0
  %2624 = vmatpush.msra.mxu0 0.0
  %2625 = vmatpush.msra.mxu0 0.0
  %2626 = vmatpush.msra.mxu0 0.0
  %2627 = vmatpush.msra.mxu0 0.0
  %2628 = vmatpush.msra.mxu0 0.0
  %2629 = vmatpush.msra.mxu0 0.0
  %2630 = vmatpush.msra.mxu0 0.0
  %2631 = vmatpush.msra.mxu0 0.0
  %2632 = vmatpush.msra.mxu0 0.0
  %2633 = vmatpush.msra.mxu0 0.0
  %2634 = vmatpush.msra.mxu0 0.0
  %2635 = vmatpush.msra.mxu0 %v1336
  %2636 = vmatmul.f32.gmra.mxu0 %v2618
  %v2637 = vpop.f32.mrf.mxu0
  %v2638 = vadd.f32 0.0, %v2637
  %2639 = vdwg.mxu0
  %v2641 = vsel %vm85, %v2545, 0
  %2643 = vmatpush.msra.mxu0 0.0
  %2644 = vmatpush.msra.mxu0 0.0
  %2645 = vmatpush.msra.mxu0 0.0
  %2646 = vmatpush.msra.mxu0 0.0
  %2647 = vmatpush.msra.mxu0 0.0
  %2648 = vmatpush.msra.mxu0 0.0
  %2649 = vmatpush.msra.mxu0 0.0
  %2650 = vmatpush.msra.mxu0 0.0
  %2651 = vmatpush.msra.mxu0 0.0
  %2652 = vmatpush.msra.mxu0 0.0
  %2653 = vmatpush.msra.mxu0 0.0
  %2654 = vmatpush.msra.mxu0 0.0
  %2655 = vmatpush.msra.mxu0 0.0
  %2656 = vmatpush.msra.mxu0 0.0
  %2657 = vmatpush.msra.mxu0 0.0
  %2658 = vmatpush.msra.mxu0 %v1361
  %2659 = vmatmul.f32.gmra.mxu0 %v2641
  %v2660 = vpop.f32.mrf.mxu0
  %v2661 = vadd.f32 %v2638, %v2660
  %2662 = vdwg.mxu0
  %2663 = vrot.lane.b32.xlu0 %v2474, 124
  %v2664 = vpop.permute.xlu0 %2663
  %2665 = vrot.lane.b32.xlu0 %v2477, 124
  %v2666 = vpop.permute.xlu0 %2665
  %v2667 = vsel %vm85, %v2664, 0
  %v2669 = vsel %vm85, %v2666, 0
  %2671 = vmatpush.xpose.msra.mxu0 0.0
  %2672 = vmatpush.xpose.msra.mxu0 0.0
  %2673 = vmatpush.xpose.msra.mxu0 0.0
  %2674 = vmatpush.xpose.msra.mxu0 0.0
  %2675 = vmatpush.xpose.msra.mxu0 0.0
  %2676 = vmatpush.xpose.msra.mxu0 0.0
  %2677 = vmatpush.xpose.msra.mxu0 0.0
  %2678 = vmatpush.xpose.msra.mxu0 0.0
  %2679 = vmatpush.xpose.msra.mxu0 0.0
  %2680 = vmatpush.xpose.msra.mxu0 0.0
  %2681 = vmatpush.xpose.msra.mxu0 0.0
  %2682 = vmatpush.xpose.msra.mxu0 0.0
  %2683 = vmatpush.xpose.msra.mxu0 0.0
  %2684 = vmatpush.xpose.msra.mxu0 0.0
  %2685 = vmatpush.xpose.msra.mxu0 %v2669
  %2686 = vmatpush.xpose.msra.mxu0 %v2667
  %2687 = vmatmul.f32.gmra.mxu0 %v1389
  %v2688 = vpop.f32.mrf.mxu0
  %v2689 = vadd.f32 0.0, %v2688
  %2690 = vdwg.mxu0
  %v2691 = vmul.f32 %v2689, 0.70710677
  %v2692 = vsel %vm1215, %v2691, -inf
  %2693 = vmax.xlane.f32.xlu0 %v2692
  %v2694 = vpop.xlane.xlu0 %2693
  %v2695 = vsub.f32 %v2691, %v2694
  %v2696 = vmul.f32 %v2695, 1.442695
  %v2697 = vpow.pop %v2696
  %v2698 = vsel %vm1215, %v2697, 0.0
  %2699 = vadd.xlane.f32.xlu0 %v2698
  %v2700 = vpop.xlane.xlu0 %2699
  %v2701 = vrcp.pop %v2700
  %v2702 = vmul.f32 %v2697, %v2701
  %2703 = vrot.lane.b32.xlu0 %v2474, 116
  %v2704 = vpop.permute.xlu0 %2703
  %2705 = vrot.lane.b32.xlu0 %v2477, 116
  %v2706 = vpop.permute.xlu0 %2705
  %v2709 = vsel %vm119, %v2702, 0
  %v2711 = vsel %vm154, %v2706, 0
  %2713 = vmatpush.msra.mxu0 0.0
  %2714 = vmatpush.msra.mxu0 0.0
  %2715 = vmatpush.msra.mxu0 0.0
  %2716 = vmatpush.msra.mxu0 0.0
  %2717 = vmatpush.msra.mxu0 0.0
  %2718 = vmatpush.msra.mxu0 0.0
  %2719 = vmatpush.msra.mxu0 0.0
  %2720 = vmatpush.msra.mxu0 0.0
  %2721 = vmatpush.msra.mxu0 0.0
  %2722 = vmatpush.msra.mxu0 0.0
  %2723 = vmatpush.msra.mxu0 0.0
  %2724 = vmatpush.msra.mxu0 0.0
  %2725 = vmatpush.msra.mxu0 0.0
  %2726 = vmatpush.msra.mxu0 0.0
  %2727 = vmatpush.msra.mxu0 %v2711
  %2728 = vmatpush.msra.mxu0 %v2704
  %2729 = vmatmul.f32.gmra.mxu0 %v2709
  %v2730 = vpop.f32.mrf.mxu0
  %v2731 = vadd.f32 0.0, %v2730
  %2732 = vdwg.mxu0
  %v2734 = vsel %vm85, %v2731, 0
  %2736 = vmatpush.msra.mxu0 0.0
  %2737 = vmatpush.msra.mxu0 0.0
  %2738 = vmatpush.msra.mxu0 0.0
  %2739 = vmatpush.msra.mxu0 0.0
  %2740 = vmatpush.msra.mxu0 0.0
  %2741 = vmatpush.msra.mxu0 0.0
  %2742 = vmatpush.msra.mxu0 0.0
  %2743 = vmatpush.msra.mxu0 0.0
  %2744 = vmatpush.msra.mxu0 0.0
  %2745 = vmatpush.msra.mxu0 0.0
  %2746 = vmatpush.msra.mxu0 0.0
  %2747 = vmatpush.msra.mxu0 0.0
  %2748 = vmatpush.msra.mxu0 0.0
  %2749 = vmatpush.msra.mxu0 0.0
  %2750 = vmatpush.msra.mxu0 0.0
  %2751 = vmatpush.msra.mxu0 %v1461
  %2752 = vmatmul.f32.gmra.mxu0 %v2734
  %v2753 = vpop.f32.mrf.mxu0
  %v2754 = vadd.f32 0.0, %v2753
  %2755 = vdwg.mxu0
  %v2756 = vadd.f32 %v2661, %v2754
  %2757 = vrot.lane.b32.xlu0 %v2474, 122
  %v2758 = vpop.permute.xlu0 %2757
  %2759 = vrot.lane.b32.xlu0 %v2477, 122
  %v2760 = vpop.permute.xlu0 %2759
  %v2761 = vsel %vm85, %v2758, 0
  %v2763 = vsel %vm85, %v2760, 0
  %2765 = vmatpush.xpose.msra.mxu0 0.0
  %2766 = vmatpush.xpose.msra.mxu0 0.0
  %2767 = vmatpush.xpose.msra.mxu0 0.0
  %2768 = vmatpush.xpose.msra.mxu0 0.0
  %2769 = vmatpush.xpose.msra.mxu0 0.0
  %2770 = vmatpush.xpose.msra.mxu0 0.0
  %2771 = vmatpush.xpose.msra.mxu0 0.0
  %2772 = vmatpush.xpose.msra.mxu0 0.0
  %2773 = vmatpush.xpose.msra.mxu0 0.0
  %2774 = vmatpush.xpose.msra.mxu0 0.0
  %2775 = vmatpush.xpose.msra.mxu0 0.0
  %2776 = vmatpush.xpose.msra.mxu0 0.0
  %2777 = vmatpush.xpose.msra.mxu0 0.0
  %2778 = vmatpush.xpose.msra.mxu0 0.0
  %2779 = vmatpush.xpose.msra.mxu0 %v2763
  %2780 = vmatpush.xpose.msra.mxu0 %v2761
  %2781 = vmatmul.f32.gmra.mxu0 %v1490
  %v2782 = vpop.f32.mrf.mxu0
  %v2783 = vadd.f32 0.0, %v2782
  %2784 = vdwg.mxu0
  %v2785 = vmul.f32 %v2783, 0.70710677
  %v2786 = vsel %vm1215, %v2785, -inf
  %2787 = vmax.xlane.f32.xlu0 %v2786
  %v2788 = vpop.xlane.xlu0 %2787
  %v2789 = vsub.f32 %v2785, %v2788
  %v2790 = vmul.f32 %v2789, 1.442695
  %v2791 = vpow.pop %v2790
  %v2792 = vsel %vm1215, %v2791, 0.0
  %2793 = vadd.xlane.f32.xlu0 %v2792
  %v2794 = vpop.xlane.xlu0 %2793
  %v2795 = vrcp.pop %v2794
  %v2796 = vmul.f32 %v2791, %v2795
  %2797 = vrot.lane.b32.xlu0 %v2474, 114
  %v2798 = vpop.permute.xlu0 %2797
  %2799 = vrot.lane.b32.xlu0 %v2477, 114
  %v2800 = vpop.permute.xlu0 %2799
  %v2803 = vsel %vm119, %v2796, 0
  %v2805 = vsel %vm154, %v2800, 0
  %2807 = vmatpush.msra.mxu0 0.0
  %2808 = vmatpush.msra.mxu0 0.0
  %2809 = vmatpush.msra.mxu0 0.0
  %2810 = vmatpush.msra.mxu0 0.0
  %2811 = vmatpush.msra.mxu0 0.0
  %2812 = vmatpush.msra.mxu0 0.0
  %2813 = vmatpush.msra.mxu0 0.0
  %2814 = vmatpush.msra.mxu0 0.0
  %2815 = vmatpush.msra.mxu0 0.0
  %2816 = vmatpush.msra.mxu0 0.0
  %2817 = vmatpush.msra.mxu0 0.0
  %2818 = vmatpush.msra.mxu0 0.0
  %2819 = vmatpush.msra.mxu0 0.0
  %2820 = vmatpush.msra.mxu0 0.0
  %2821 = vmatpush.msra.mxu0 %v2805
  %2822 = vmatpush.msra.mxu0 %v2798
  %2823 = vmatmul.f32.gmra.mxu0 %v2803
  %v2824 = vpop.f32.mrf.mxu0
  %v2825 = vadd.f32 0.0, %v2824
  %2826 = vdwg.mxu0
  %v2828 = vsel %vm85, %v2825, 0
  %2830 = vmatpush.msra.mxu0 0.0
  %2831 = vmatpush.msra.mxu0 0.0
  %2832 = vmatpush.msra.mxu0 0.0
  %2833 = vmatpush.msra.mxu0 0.0
  %2834 = vmatpush.msra.mxu0 0.0
  %2835 = vmatpush.msra.mxu0 0.0
  %2836 = vmatpush.msra.mxu0 0.0
  %2837 = vmatpush.msra.mxu0 0.0
  %2838 = vmatpush.msra.mxu0 0.0
  %2839 = vmatpush.msra.mxu0 0.0
  %2840 = vmatpush.msra.mxu0 0.0
  %2841 = vmatpush.msra.mxu0 0.0
  %2842 = vmatpush.msra.mxu0 0.0
  %2843 = vmatpush.msra.mxu0 0.0
  %2844 = vmatpush.msra.mxu0 0.0
  %2845 = vmatpush.msra.mxu0 %v1562
  %2846 = vmatmul.f32.gmra.mxu0 %v2828
  %v2847 = vpop.f32.mrf.mxu0
  %v2848 = vadd.f32 0.0, %v2847
  %2849 = vdwg.mxu0
  %v2850 = vadd.f32 %v2756, %v2848
  %v2851 = vadd.f32 %v2850, %v1585
  %v2852 = vadd.f32 %v1121, %v2851
  %v2853 = vsel %vm1093, %v2852, 0.0
  %2854 = vadd.xlane.f32.xlu0 %v2853
  %v2855 = vpop.xlane.xlu0 %2854
  %v2856 = vmul.f32 %v2855, %v627
  %v2857 = vsub.f32 %v2852, %v2856
  %v2858 = vmul.f32 %v2857, %v2857
  %v2859 = vsel %vm1093, %v2858, 0.0
  %2860 = vadd.xlane.f32.xlu0 %v2859
  %v2861 = vpop.xlane.xlu0 %2860
  %v2862 = vmul.f32 %v2861, %v627
  %v2863 = vadd.f32 %v2862, 1e-05
  %v2864 = vrsqrt.pop %v2863
  %v2865 = vmul.f32 %v2864, %v2863
  %v2866 = vmul.f32 %v2865, %v2864
  %v2867 = vmul.f32 0.5, %v2866
  %v2868 = vsub.f32 1.5, %v2867
  %v2869 = vmul.f32 %v2864, %v2868
  %vm2870 = vweird.f32 %v2863
  %vm2871 = vweird.f32 %v2864
  %vm2872 = vmor %vm2870, %vm2871
  %v2873 = vsel %vm2872, %v2864, %v2869
  %v2874 = vmul.f32 %v2857, %v2873
  %v2875 = vmul.f32 %v2874, %v1611
  %v2876 = vadd.f32 %v2875, %v1614
  %v2878 = vsel %vm49, %v2876, 0
  %2880 = vmatpush.msra.mxu0 0.0
  %2881 = vmatpush.msra.mxu0 0.0
  %2882 = vmatpush.msra.mxu0 0.0
  %2883 = vmatpush.msra.mxu0 0.0
  %2884 = vmatpush.msra.mxu0 0.0
  %2885 = vmatpush.msra.mxu0 0.0
  %2886 = vmatpush.msra.mxu0 0.0
  %2887 = vmatpush.msra.mxu0 0.0
  %2888 = vmatpush.msra.mxu0 0.0
  %2889 = vmatpush.msra.mxu0 0.0
  %2890 = vmatpush.msra.mxu0 0.0
  %2891 = vmatpush.msra.mxu0 0.0
  %2892 = vmatpush.msra.mxu0 0.0
  %2893 = vmatpush.msra.mxu0 0.0
  %2894 = vmatpush.msra.mxu0 0.0
  %2895 = vmatpush.msra.mxu0 %v34
  %2896 = vmatmul.f32.gmra.mxu0 %v2878
  %v2897 = vpop.f32.mrf.mxu0
  %v2898 = vadd.f32 %v40, %v2897
  %2899 = vdwg.mxu0
  %v2900 = vmax.f32 %v2898, 0.0
  %v2902 = vsel %vm705, %v2900, 0
  %2904 = vmatpush.msra.mxu0 0.0
  %2905 = vmatpush.msra.mxu0 0.0
  %2906 = vmatpush.msra.mxu0 0.0
  %2907 = vmatpush.msra.mxu0 0.0
  %2908 = vmatpush.msra.mxu0 0.0
  %2909 = vmatpush.msra.mxu0 0.0
  %2910 = vmatpush.msra.mxu0 0.0
  %2911 = vmatpush.msra.mxu0 0.0
  %2912 = vmatpush.msra.mxu0 0.0
  %2913 = vmatpush.msra.mxu0 0.0
  %2914 = vmatpush.msra.mxu0 0.0
  %2915 = vmatpush.msra.mxu0 0.0
  %2916 = vmatpush.msra.mxu0 0.0
  %2917 = vmatpush.msra.mxu0 0.0
  %2918 = vmatpush.msra.mxu0 %v36
  %2919 = vmatpush.msra.mxu0 %v35
  %2920 = vmatmul.f32.gmra.mxu0 %v2902
  %v2921 = vpop.f32.mrf.mxu0
  %v2922 = vadd.f32 %v1642, %v2921
  %2923 = vdwg.mxu0
  %v2924 = vadd.f32 %v2876, %v2922
  %v2925 = vsel %vm1093, %v2924, 0.0
  %2926 = vadd.xlane.f32.xlu0 %v2925
  %v2927 = vpop.xlane.xlu0 %2926
  %v2928 = vmul.f32 %v2927, %v627
  %v2929 = vsub.f32 %v2924, %v2928
  %v2930 = vmul.f32 %v2929, %v2929
  %v2931 = vsel %vm1093, %v2930, 0.0
  %2932 = vadd.xlane.f32.xlu0 %v2931
  %v2933 = vpop.xlane.xlu0 %2932
  %v2934 = vmul.f32 %v2933, %v627
  %v2935 = vadd.f32 %v2934, 1e-05
  %v2936 = vrsqrt.pop %v2935
  %v2937 = vmul.f32 %v2936, %v2935
  %v2938 = vmul.f32 %v2937, %v2936
  %v2939 = vmul.f32 0.5, %v2938
  %v2940 = vsub.f32 1.5, %v2939
  %v2941 = vmul.f32 %v2936, %v2940
  %vm2942 = vweird.f32 %v2935
  %vm2943 = vweird.f32 %v2936
  %vm2944 = vmor %vm2942, %vm2943
  %v2945 = vsel %vm2944, %v2936, %v2941
  %v2946 = vmul.f32 %v2929, %v2945
  %v2947 = vmul.f32 %v2946, %v1690
  %v2948 = vadd.f32 %v2947, %v1693
  %v2950 = vsel %vm49, %v2948, 0
  %2952 = vmatpush.msra.mxu0 0.0
  %2953 = vmatpush.msra.mxu0 0.0
  %2954 = vmatpush.msra.mxu0 0.0
  %2955 = vmatpush.msra.mxu0 0.0
  %2956 = vmatpush.msra.mxu0 0.0
  %2957 = vmatpush.msra.mxu0 0.0
  %2958 = vmatpush.msra.mxu0 0.0
  %2959 = vmatpush.msra.mxu0 0.0
  %2960 = vmatpush.msra.mxu0 0.0
  %2961 = vmatpush.msra.mxu0 0.0
  %2962 = vmatpush.msra.mxu0 0.0
  %2963 = vmatpush.msra.mxu0 0.0
  %2964 = vmatpush.msra.mxu0 0.0
  %2965 = vmatpush.msra.mxu0 0.0
  %2966 = vmatpush.msra.mxu0 0.0
  %2967 = vmatpush.msra.mxu0 %v37
  %2968 = vmatmul.f32.gmra.mxu0 %v2950
  %v2969 = vpop.f32.mrf.mxu0
  %v2970 = vadd.f32 %v1696, %v2969
  %2971 = vdwg.mxu0
  %v2972 = vsub.f32 0.0, %v2970
  %v2973 = vmul.f32 %v2972, 1.442695
  %v2974 = vpow.pop %v2973
  %v2975 = vadd.f32 %v2974, 1.0
  %v2976 = vrcp.pop %v2975
  %2979 = vrot.lane.b32.xlu0 %v20, 124
  %v2980 = vpop.permute.xlu0 %2979
  %2981 = vrot.lane.b32.xlu0 %v21, 124
  %v2982 = vpop.permute.xlu0 %2981
  %v2985 = vsel %vm41, %v2980, 0.0
  %v2986 = vsel %vm41, %v2982, 0.0
  %v2987 = vmul.f32 %v2985, 2.0
  %v2988 = vmul.f32 %v2986, 2.0
  %v2989 = vadd.f32 %v2987, %v23
  %v2990 = vadd.f32 %v2988, %v24
  %v2992 = vsel %vm49, %v2989, 0
  %v2995 = vsel %vm49, %v2990, 0
  %2997 = vmatpush.msra.mxu0 0.0
  %2998 = vmatpush.msra.mxu0 0.0
  %2999 = vmatpush.msra.mxu0 0.0
  %3000 = vmatpush.msra.mxu0 0.0
  %3001 = vmatpush.msra.mxu0 0.0
  %3002 = vmatpush.msra.mxu0 0.0
  %3003 = vmatpush.msra.mxu0 0.0
  %3004 = vmatpush.msra.mxu0 0.0
  %3005 = vmatpush.msra.mxu0 0.0
  %3006 = vmatpush.msra.mxu0 0.0
  %3007 = vmatpush.msra.mxu0 0.0
  %3008 = vmatpush.msra.mxu0 0.0
  %3009 = vmatpush.msra.mxu0 0.0
  %3010 = vmatpush.msra.mxu0 0.0
  %3011 = vmatpush.msra.mxu0 0.0
  %3012 = vmatpush.msra.mxu0 %v25
  %3013 = vmatmul.f32.gmra.mxu0 %v2992
  %v3014 = vpop.f32.mrf.mxu0
  %v3015 = vadd.f32 %v48, %v3014
  %3016 = vmatmul.f32.gmra.mxu0 %v2995
  %v3017 = vpop.f32.mrf.mxu0
  %v3018 = vadd.f32 %v48, %v3017
  %3019 = vdwg.mxu0
  %3022 = vrot.lane.b32.xlu0 %v3015, 120
  %v3023 = vpop.permute.xlu0 %3022
  %3024 = vrot.lane.b32.xlu0 %v3018, 120
  %v3025 = vpop.permute.xlu0 %3024
  %v3026 = vsel %vm85, %v3015, 0
  %v3028 = vsel %vm85, %v3018, 0
  %v3030 = vsel %vm85, %v3023, 0
  %v3032 = vsel %vm85, %v3025, 0
  %3034 = vmatpush.xpose.msra.mxu0 0.0
  %3035 = vmatpush.xpose.msra.mxu0 0.0
  %3036 = vmatpush.xpose.msra.mxu0 0.0
  %3037 = vmatpush.xpose.msra.mxu0 0.0
  %3038 = vmatpush.xpose.msra.mxu0 0.0
  %3039 = vmatpush.xpose.msra.mxu0 0.0
  %3040 = vmatpush.xpose.msra.mxu0 0.0
  %3041 = vmatpush.xpose.msra.mxu0 0.0
  %3042 = vmatpush.xpose.msra.mxu0 0.0
  %3043 = vmatpush.xpose.msra.mxu0 0.0
  %3044 = vmatpush.xpose.msra.mxu0 0.0
  %3045 = vmatpush.xpose.msra.mxu0 0.0
  %3046 = vmatpush.xpose.msra.mxu0 0.0
  %3047 = vmatpush.xpose.msra.mxu0 0.0
  %3048 = vmatpush.xpose.msra.mxu0 %v3032
  %3049 = vmatpush.xpose.msra.mxu0 %v3030
  %3050 = vmatmul.f32.gmra.mxu0 %v3026
  %v3051 = vpop.f32.mrf.mxu0
  %v3052 = vadd.f32 0.0, %v3051
  %3053 = vmatmul.f32.gmra.mxu0 %v3028
  %v3054 = vpop.f32.mrf.mxu0
  %v3055 = vadd.f32 0.0, %v3054
  %3056 = vdwg.mxu0
  %v3057 = vmul.f32 %v3052, 0.70710677
  %v3058 = vmul.f32 %v3055, 0.70710677
  %v3059 = vsel %vm119, %v3057, -inf
  %3060 = vmax.xlane.f32.xlu0 %v3059
  %v3061 = vpop.xlane.xlu0 %3060
  %v3062 = vsel %vm123, %v3058, -inf
  %3063 = vmax.xlane.f32.xlu0 %v3062
  %v3064 = vpop.xlane.xlu0 %3063
  %v3065 = vsub.f32 %v3057, %v3061
  %v3066 = vsub.f32 %v3058, %v3064
  %v3067 = vmul.f32 %v3065, 1.442695
  %v3068 = vpow.pop %v3067
  %v3069 = vmul.f32 %v3066, 1.442695
  %v3070 = vpow.pop %v3069
  %v3071 = vsel %vm119, %v3068, 0.0
  %3072 = vadd.xlane.f32.xlu0 %v3071
  %v3073 = vpop.xlane.xlu0 %3072
  %v3074 = vsel %vm123, %v3070, 0.0
  %3075 = vadd.xlane.f32.xlu0 %v3074
  %v3076 = vpop.xlane.xlu0 %3075
  %v3077 = vrcp.pop %v3073
  %v3078 = vrcp.pop %v3076
  %v3079 = vmul.f32 %v3068, %v3077
  %v3080 = vmul.f32 %v3070, %v3078
  %3081 = vrot.lane.b32.xlu0 %v3015, 112
  %v3082 = vpop.permute.xlu0 %3081
  %3083 = vrot.lane.b32.xlu0 %v3018, 112
  %v3084 = vpop.permute.xlu0 %3083
  %v3087 = vsel %vm119, %v3079, 0
  %v3090 = vsel %vm119, %v3080, 0
  %v3092 = vsel %vm154, %v3084, 0
  %3094 = vmatpush.msra.mxu0 0.0
  %3095 = vmatpush.msra.mxu0 0.0
  %3096 = vmatpush.msra.mxu0 0.0
  %3097 = vmatpush.msra.mxu0 0.0
  %3098 = vmatpush.msra.mxu0 0.0
  %3099 = vmatpush.msra.mxu0 0.0
  %3100 = vmatpush.msra.mxu0 0.0
  %3101 = vmatpush.msra.mxu0 0.0
  %3102 = vmatpush.msra.mxu0 0.0
  %3103 = vmatpush.msra.mxu0 0.0
  %3104 = vmatpush.msra.mxu0 0.0
  %3105 = vmatpush.msra.mxu0 0.0
  %3106 = vmatpush.msra.mxu0 0.0
  %3107 = vmatpush.msra.mxu0 0.0
  %3108 = vmatpush.msra.mxu0 %v3092
  %3109 = vmatpush.msra.mxu0 %v3082
  %3110 = vmatmul.f32.gmra.mxu0 %v3087
  %v3111 = vpop.f32.mrf.mxu0
  %v3112 = vadd.f32 0.0, %v3111
  %3113 = vmatmul.f32.gmra.mxu0 %v3090
  %v3114 = vpop.f32.mrf.mxu0
  %v3115 = vadd.f32 0.0, %v3114
  %3116 = vdwg.mxu0
  %3117 = vrot.lane.b32.xlu0 %v3015, 126
  %v3118 = vpop.permute.xlu0 %3117
  %3119 = vrot.lane.b32.xlu0 %v3018, 126
  %v3120 = vpop.permute.xlu0 %3119
  %3121 = vrot.lane.b32.xlu0 %v3015, 118
  %v3122 = vpop.permute.xlu0 %3121
  %3123 = vrot.lane.b32.xlu0 %v3018, 118
  %v3124 = vpop.permute.xlu0 %3123
  %v3125 = vsel %vm85, %v3118, 0
  %v3127 = vsel %vm85, %v3120, 0
  %v3129 = vsel %vm85, %v3122, 0
  %v3131 = vsel %vm85, %v3124, 0
  %3133 = vmatpush.xpose.msra.mxu0 0.0
  %3134 = vmatpush.xpose.msra.mxu0 0.0
  %3135 = vmatpush.xpose.msra.mxu0 0.0
  %3136 = vmatpush.xpose.msra.mxu0 0.0
  %3137 = vmatpush.xpose.msra.mxu0 0.0
  %3138 = vmatpush.xpose.msra.mxu0 0.0
  %3139 = vmatpush.xpose.msra.mxu0 0.0
  %3140 = vmatpush.xpose.msra.mxu0 0.0
  %3141 = vmatpush.xpose.msra.mxu0 0.0
  %3142 = vmatpush.xpose.msra.mxu0 0.0
  %3143 = vmatpush.xpose.msra.mxu0 0.0
  %3144 = vmatpush.xpose.msra.mxu0 0.0
  %3145 = vmatpush.xpose.msra.mxu0 0.0
  %3146 = vmatpush.xpose.msra.mxu0 0.0
  %3147 = vmatpush.xpose.msra.mxu0 %v3131
  %3148 = vmatpush.xpose.msra.mxu0 %v3129
  %3149 = vmatmul.f32.gmra.mxu0 %v3125
  %v3150 = vpop.f32.mrf.mxu0
  %v3151 = vadd.f32 0.0, %v3150
  %3152 = vmatmul.f32.gmra.mxu0 %v3127
  %v3153 = vpop.f32.mrf.mxu0
  %v3154 = vadd.f32 0.0, %v3153
  %3155 = vdwg.mxu0
  %v3156 = vmul.f32 %v3151, 0.70710677
  %v3157 = vmul.f32 %v3154, 0.70710677
  %v3158 = vsel %vm119, %v3156, -inf
  %3159 = vmax.xlane.f32.xlu0 %v3158
  %v3160 = vpop.xlane.xlu0 %3159
  %v3161 = vsel %vm123, %v3157, -inf
  %3162 = vmax.xlane.f32.xlu0 %v3161
  %v3163 = vpop.xlane.xlu0 %3162
  %v3164 = vsub.f32 %v3156, %v3160
  %v3165 = vsub.f32 %v3157, %v3163
  %v3166 = vmul.f32 %v3164, 1.442695
  %v3167 = vpow.pop %v3166
  %v3168 = vmul.f32 %v3165, 1.442695
  %v3169 = vpow.pop %v3168
  %v3170 = vsel %vm119, %v3167, 0.0
  %3171 = vadd.xlane.f32.xlu0 %v3170
  %v3172 = vpop.xlane.xlu0 %3171
  %v3173 = vsel %vm123, %v3169, 0.0
  %3174 = vadd.xlane.f32.xlu0 %v3173
  %v3175 = vpop.xlane.xlu0 %3174
  %v3176 = vrcp.pop %v3172
  %v3177 = vrcp.pop %v3175
  %v3178 = vmul.f32 %v3167, %v3176
  %v3179 = vmul.f32 %v3169, %v3177
  %3180 = vrot.lane.b32.xlu0 %v3015, 110
  %v3181 = vpop.permute.xlu0 %3180
  %3182 = vrot.lane.b32.xlu0 %v3018, 110
  %v3183 = vpop.permute.xlu0 %3182
  %v3186 = vsel %vm119, %v3178, 0
  %v3189 = vsel %vm119, %v3179, 0
  %v3191 = vsel %vm154, %v3183, 0
  %3193 = vmatpush.msra.mxu0 0.0
  %3194 = vmatpush.msra.mxu0 0.0
  %3195 = vmatpush.msra.mxu0 0.0
  %3196 = vmatpush.msra.mxu0 0.0
  %3197 = vmatpush.msra.mxu0 0.0
  %3198 = vmatpush.msra.mxu0 0.0
  %3199 = vmatpush.msra.mxu0 0.0
  %3200 = vmatpush.msra.mxu0 0.0
  %3201 = vmatpush.msra.mxu0 0.0
  %3202 = vmatpush.msra.mxu0 0.0
  %3203 = vmatpush.msra.mxu0 0.0
  %3204 = vmatpush.msra.mxu0 0.0
  %3205 = vmatpush.msra.mxu0 0.0
  %3206 = vmatpush.msra.mxu0 0.0
  %3207 = vmatpush.msra.mxu0 %v3191
  %3208 = vmatpush.msra.mxu0 %v3181
  %3209 = vmatmul.f32.gmra.mxu0 %v3186
  %v3210 = vpop.f32.mrf.mxu0
  %v3211 = vadd.f32 0.0, %v3210
  %3212 = vmatmul.f32.gmra.mxu0 %v3189
  %v3213 = vpop.f32.mrf.mxu0
  %v3214 = vadd.f32 0.0, %v3213
  %3215 = vdwg.mxu0
  %v3217 = vsel %vm85, %v3211, 0
  %v3220 = vsel %vm85, %v3214, 0
  %3222 = vmatpush.msra.mxu0 0.0
  %3223 = vmatpush.msra.mxu0 0.0
  %3224 = vmatpush.msra.mxu0 0.0
  %3225 = vmatpush.msra.mxu0 0.0
  %3226 = vmatpush.msra.mxu0 0.0
  %3227 = vmatpush.msra.mxu0 0.0
  %3228 = vmatpush.msra.mxu0 0.0
  %3229 = vmatpush.msra.mxu0 0.0
  %3230 = vmatpush.msra.mxu0 0.0
  %3231 = vmatpush.msra.mxu0 0.0
  %3232 = vmatpush.msra.mxu0 0.0
  %3233 = vmatpush.msra.mxu0 0.0
  %3234 = vmatpush.msra.mxu0 0.0
  %3235 = vmatpush.msra.mxu0 0.0
  %3236 = vmatpush.msra.mxu0 0.0
  %3237 = vmatpush.msra.mxu0 %v287
  %3238 = vmatmul.f32.gmra.mxu0 %v3217
  %v3239 = vpop.f32.mrf.mxu0
  %v3240 = vadd.f32 0.0, %v3239
  %3241 = vmatmul.f32.gmra.mxu0 %v3220
  %v3242 = vpop.f32.mrf.mxu0
  %v3243 = vadd.f32 0.0, %v3242
  %3244 = vdwg.mxu0
  %v3246 = vsel %vm85, %v3112, 0
  %v3249 = vsel %vm85, %v3115, 0
  %3251 = vmatpush.msra.mxu0 0.0
  %3252 = vmatpush.msra.mxu0 0.0
  %3253 = vmatpush.msra.mxu0 0.0
  %3254 = vmatpush.msra.mxu0 0.0
  %3255 = vmatpush.msra.mxu0 0.0
  %3256 = vmatpush.msra.mxu0 0.0
  %3257 = vmatpush.msra.mxu0 0.0
  %3258 = vmatpush.msra.mxu0 0.0
  %3259 = vmatpush.msra.mxu0 0.0
  %3260 = vmatpush.msra.mxu0 0.0
  %3261 = vmatpush.msra.mxu0 0.0
  %3262 = vmatpush.msra.mxu0 0.0
  %3263 = vmatpush.msra.mxu0 0.0
  %3264 = vmatpush.msra.mxu0 0.0
  %3265 = vmatpush.msra.mxu0 0.0
  %3266 = vmatpush.msra.mxu0 %v318
  %3267 = vmatmul.f32.gmra.mxu0 %v3246
  %v3268 = vpop.f32.mrf.mxu0
  %v3269 = vadd.f32 %v3240, %v3268
  %3270 = vmatmul.f32.gmra.mxu0 %v3249
  %v3271 = vpop.f32.mrf.mxu0
  %v3272 = vadd.f32 %v3243, %v3271
  %3273 = vdwg.mxu0
  %3274 = vrot.lane.b32.xlu0 %v3015, 124
  %v3275 = vpop.permute.xlu0 %3274
  %3276 = vrot.lane.b32.xlu0 %v3018, 124
  %v3277 = vpop.permute.xlu0 %3276
  %3278 = vrot.lane.b32.xlu0 %v3015, 116
  %v3279 = vpop.permute.xlu0 %3278
  %3280 = vrot.lane.b32.xlu0 %v3018, 116
  %v3281 = vpop.permute.xlu0 %3280
  %v3282 = vsel %vm85, %v3275, 0
  %v3284 = vsel %vm85, %v3277, 0
  %v3286 = vsel %vm85, %v3279, 0
  %v3288 = vsel %vm85, %v3281, 0
  %3290 = vmatpush.xpose.msra.mxu0 0.0
  %3291 = vmatpush.xpose.msra.mxu0 0.0
  %3292 = vmatpush.xpose.msra.mxu0 0.0
  %3293 = vmatpush.xpose.msra.mxu0 0.0
  %3294 = vmatpush.xpose.msra.mxu0 0.0
  %3295 = vmatpush.xpose.msra.mxu0 0.0
  %3296 = vmatpush.xpose.msra.mxu0 0.0
  %3297 = vmatpush.xpose.msra.mxu0 0.0
  %3298 = vmatpush.xpose.msra.mxu0 0.0
  %3299 = vmatpush.xpose.msra.mxu0 0.0
  %3300 = vmatpush.xpose.msra.mxu0 0.0
  %3301 = vmatpush.xpose.msra.mxu0 0.0
  %3302 = vmatpush.xpose.msra.mxu0 0.0
  %3303 = vmatpush.xpose.msra.mxu0 0.0
  %3304 = vmatpush.xpose.msra.mxu0 %v3288
  %3305 = vmatpush.xpose.msra.mxu0 %v3286
  %3306 = vmatmul.f32.gmra.mxu0 %v3282
  %v3307 = vpop.f32.mrf.mxu0
  %v3308 = vadd.f32 0.0, %v3307
  %3309 = vmatmul.f32.gmra.mxu0 %v3284
  %v3310 = vpop.f32.mrf.mxu0
  %v3311 = vadd.f32 0.0, %v3310
  %3312 = vdwg.mxu0
  %v3313 = vmul.f32 %v3308, 0.70710677
  %v3314 = vmul.f32 %v3311, 0.70710677
  %v3315 = vsel %vm119, %v3313, -inf
  %3316 = vmax.xlane.f32.xlu0 %v3315
  %v3317 = vpop.xlane.xlu0 %3316
  %v3318 = vsel %vm123, %v3314, -inf
  %3319 = vmax.xlane.f32.xlu0 %v3318
  %v3320 = vpop.xlane.xlu0 %3319
  %v3321 = vsub.f32 %v3313, %v3317
  %v3322 = vsub.f32 %v3314, %v3320
  %v3323 = vmul.f32 %v3321, 1.442695
  %v3324 = vpow.pop %v3323
  %v3325 = vmul.f32 %v3322, 1.442695
  %v3326 = vpow.pop %v3325
  %v3327 = vsel %vm119, %v3324, 0.0
  %3328 = vadd.xlane.f32.xlu0 %v3327
  %v3329 = vpop.xlane.xlu0 %3328
  %v3330 = vsel %vm123, %v3326, 0.0
  %3331 = vadd.xlane.f32.xlu0 %v3330
  %v3332 = vpop.xlane.xlu0 %3331
  %v3333 = vrcp.pop %v3329
  %v3334 = vrcp.pop %v3332
  %v3335 = vmul.f32 %v3324, %v3333
  %v3336 = vmul.f32 %v3326, %v3334
  %3337 = vrot.lane.b32.xlu0 %v3015, 108
  %v3338 = vpop.permute.xlu0 %3337
  %3339 = vrot.lane.b32.xlu0 %v3018, 108
  %v3340 = vpop.permute.xlu0 %3339
  %v3343 = vsel %vm119, %v3335, 0
  %v3346 = vsel %vm119, %v3336, 0
  %v3348 = vsel %vm154, %v3340, 0
  %3350 = vmatpush.msra.mxu0 0.0
  %3351 = vmatpush.msra.mxu0 0.0
  %3352 = vmatpush.msra.mxu0 0.0
  %3353 = vmatpush.msra.mxu0 0.0
  %3354 = vmatpush.msra.mxu0 0.0
  %3355 = vmatpush.msra.mxu0 0.0
  %3356 = vmatpush.msra.mxu0 0.0
  %3357 = vmatpush.msra.mxu0 0.0
  %3358 = vmatpush.msra.mxu0 0.0
  %3359 = vmatpush.msra.mxu0 0.0
  %3360 = vmatpush.msra.mxu0 0.0
  %3361 = vmatpush.msra.mxu0 0.0
  %3362 = vmatpush.msra.mxu0 0.0
  %3363 = vmatpush.msra.mxu0 0.0
  %3364 = vmatpush.msra.mxu0 %v3348
  %3365 = vmatpush.msra.mxu0 %v3338
  %3366 = vmatmul.f32.gmra.mxu0 %v3343
  %v3367 = vpop.f32.mrf.mxu0
  %v3368 = vadd.f32 0.0, %v3367
  %3369 = vmatmul.f32.gmra.mxu0 %v3346
  %v3370 = vpop.f32.mrf.mxu0
  %v3371 = vadd.f32 0.0, %v3370
  %3372 = vdwg.mxu0
  %v3374 = vsel %vm85, %v3368, 0
  %v3377 = vsel %vm85, %v3371, 0
  %3379 = vmatpush.msra.mxu0 0.0
  %3380 = vmatpush.msra.mxu0 0.0
  %3381 = vmatpush.msra.mxu0 0.0
  %3382 = vmatpush.msra.mxu0 0.0
  %3383 = vmatpush.msra.mxu0 0.0
  %3384 = vmatpush.msra.mxu0 0.0
  %3385 = vmatpush.msra.mxu0 0.0
  %3386 = vmatpush.msra.mxu0 0.0
  %3387 = vmatpush.msra.mxu0 0.0
  %3388 = vmatpush.msra.mxu0 0.0
  %3389 = vmatpush.msra.mxu0 0.0
  %3390 = vmatpush.msra.mxu0 0.0
  %3391 = vmatpush.msra.mxu0 0.0
  %3392 = vmatpush.msra.mxu0 0.0
  %3393 = vmatpush.msra.mxu0 0.0
  %3394 = vmatpush.msra.mxu0 %v449
  %3395 = vmatmul.f32.gmra.mxu0 %v3374
  %v3396 = vpop.f32.mrf.mxu0
  %v3397 = vadd.f32 0.0, %v3396
  %3398 = vmatmul.f32.gmra.mxu0 %v3377
  %v3399 = vpop.f32.mrf.mxu0
  %v3400 = vadd.f32 0.0, %v3399
  %3401 = vdwg.mxu0
  %v3402 = vadd.f32 %v3269, %v3397
  %v3403 = vadd.f32 %v3272, %v3400
  %3404 = vrot.lane.b32.xlu0 %v3015, 122
  %v3405 = vpop.permute.xlu0 %3404
  %3406 = vrot.lane.b32.xlu0 %v3018, 122
  %v3407 = vpop.permute.xlu0 %3406
  %3408 = vrot.lane.b32.xlu0 %v3015, 114
  %v3409 = vpop.permute.xlu0 %3408
  %3410 = vrot.lane.b32.xlu0 %v3018, 114
  %v3411 = vpop.permute.xlu0 %3410
  %v3412 = vsel %vm85, %v3405, 0
  %v3414 = vsel %vm85, %v3407, 0
  %v3416 = vsel %vm85, %v3409, 0
  %v3418 = vsel %vm85, %v3411, 0
  %3420 = vmatpush.xpose.msra.mxu0 0.0
  %3421 = vmatpush.xpose.msra.mxu0 0.0
  %3422 = vmatpush.xpose.msra.mxu0 0.0
  %3423 = vmatpush.xpose.msra.mxu0 0.0
  %3424 = vmatpush.xpose.msra.mxu0 0.0
  %3425 = vmatpush.xpose.msra.mxu0 0.0
  %3426 = vmatpush.xpose.msra.mxu0 0.0
  %3427 = vmatpush.xpose.msra.mxu0 0.0
  %3428 = vmatpush.xpose.msra.mxu0 0.0
  %3429 = vmatpush.xpose.msra.mxu0 0.0
  %3430 = vmatpush.xpose.msra.mxu0 0.0
  %3431 = vmatpush.xpose.msra.mxu0 0.0
  %3432 = vmatpush.xpose.msra.mxu0 0.0
  %3433 = vmatpush.xpose.msra.mxu0 0.0
  %3434 = vmatpush.xpose.msra.mxu0 %v3418
  %3435 = vmatpush.xpose.msra.mxu0 %v3416
  %3436 = vmatmul.f32.gmra.mxu0 %v3412
  %v3437 = vpop.f32.mrf.mxu0
  %v3438 = vadd.f32 0.0, %v3437
  %3439 = vmatmul.f32.gmra.mxu0 %v3414
  %v3440 = vpop.f32.mrf.mxu0
  %v3441 = vadd.f32 0.0, %v3440
  %3442 = vdwg.mxu0
  %v3443 = vmul.f32 %v3438, 0.70710677
  %v3444 = vmul.f32 %v3441, 0.70710677
  %v3445 = vsel %vm119, %v3443, -inf
  %3446 = vmax.xlane.f32.xlu0 %v3445
  %v3447 = vpop.xlane.xlu0 %3446
  %v3448 = vsel %vm123, %v3444, -inf
  %3449 = vmax.xlane.f32.xlu0 %v3448
  %v3450 = vpop.xlane.xlu0 %3449
  %v3451 = vsub.f32 %v3443, %v3447
  %v3452 = vsub.f32 %v3444, %v3450
  %v3453 = vmul.f32 %v3451, 1.442695
  %v3454 = vpow.pop %v3453
  %v3455 = vmul.f32 %v3452, 1.442695
  %v3456 = vpow.pop %v3455
  %v3457 = vsel %vm119, %v3454, 0.0
  %3458 = vadd.xlane.f32.xlu0 %v3457
  %v3459 = vpop.xlane.xlu0 %3458
  %v3460 = vsel %vm123, %v3456, 0.0
  %3461 = vadd.xlane.f32.xlu0 %v3460
  %v3462 = vpop.xlane.xlu0 %3461
  %v3463 = vrcp.pop %v3459
  %v3464 = vrcp.pop %v3462
  %v3465 = vmul.f32 %v3454, %v3463
  %v3466 = vmul.f32 %v3456, %v3464
  %3467 = vrot.lane.b32.xlu0 %v3015, 106
  %v3468 = vpop.permute.xlu0 %3467
  %3469 = vrot.lane.b32.xlu0 %v3018, 106
  %v3470 = vpop.permute.xlu0 %3469
  %v3473 = vsel %vm119, %v3465, 0
  %v3476 = vsel %vm119, %v3466, 0
  %v3478 = vsel %vm154, %v3470, 0
  %3480 = vmatpush.msra.mxu0 0.0
  %3481 = vmatpush.msra.mxu0 0.0
  %3482 = vmatpush.msra.mxu0 0.0
  %3483 = vmatpush.msra.mxu0 0.0
  %3484 = vmatpush.msra.mxu0 0.0
  %3485 = vmatpush.msra.mxu0 0.0
  %3486 = vmatpush.msra.mxu0 0.0
  %3487 = vmatpush.msra.mxu0 0.0
  %3488 = vmatpush.msra.mxu0 0.0
  %3489 = vmatpush.msra.mxu0 0.0
  %3490 = vmatpush.msra.mxu0 0.0
  %3491 = vmatpush.msra.mxu0 0.0
  %3492 = vmatpush.msra.mxu0 0.0
  %3493 = vmatpush.msra.mxu0 0.0
  %3494 = vmatpush.msra.mxu0 %v3478
  %3495 = vmatpush.msra.mxu0 %v3468
  %3496 = vmatmul.f32.gmra.mxu0 %v3473
  %v3497 = vpop.f32.mrf.mxu0
  %v3498 = vadd.f32 0.0, %v3497
  %3499 = vmatmul.f32.gmra.mxu0 %v3476
  %v3500 = vpop.f32.mrf.mxu0
  %v3501 = vadd.f32 0.0, %v3500
  %3502 = vdwg.mxu0
  %v3504 = vsel %vm85, %v3498, 0
  %v3507 = vsel %vm85, %v3501, 0
  %3509 = vmatpush.msra.mxu0 0.0
  %3510 = vmatpush.msra.mxu0 0.0
  %3511 = vmatpush.msra.mxu0 0.0
  %3512 = vmatpush.msra.mxu0 0.0
  %3513 = vmatpush.msra.mxu0 0.0
  %3514 = vmatpush.msra.mxu0 0.0
  %3515 = vmatpush.msra.mxu0 0.0
  %3516 = vmatpush.msra.mxu0 0.0
  %3517 = vmatpush.msra.mxu0 0.0
  %3518 = vmatpush.msra.mxu0 0.0
  %3519 = vmatpush.msra.mxu0 0.0
  %3520 = vmatpush.msra.mxu0 0.0
  %3521 = vmatpush.msra.mxu0 0.0
  %3522 = vmatpush.msra.mxu0 0.0
  %3523 = vmatpush.msra.mxu0 0.0
  %3524 = vmatpush.msra.mxu0 %v582
  %3525 = vmatmul.f32.gmra.mxu0 %v3504
  %v3526 = vpop.f32.mrf.mxu0
  %v3527 = vadd.f32 0.0, %v3526
  %3528 = vmatmul.f32.gmra.mxu0 %v3507
  %v3529 = vpop.f32.mrf.mxu0
  %v3530 = vadd.f32 0.0, %v3529
  %3531 = vdwg.mxu0
  %v3532 = vadd.f32 %v3402, %v3527
  %v3533 = vadd.f32 %v3403, %v3530
  %v3534 = vadd.f32 %v3532, %v609
  %v3535 = vadd.f32 %v3533, %v609
  %v3536 = vadd.f32 %v2989, %v3534
  %v3537 = vadd.f32 %v2990, %v3535
  %v3538 = vsel %vm49, %v3536, 0.0
  %3539 = vadd.xlane.f32.xlu0 %v3538
  %v3540 = vpop.xlane.xlu0 %3539
  %v3541 = vsel %vm617, %v3537, 0.0
  %3542 = vadd.xlane.f32.xlu0 %v3541
  %v3543 = vpop.xlane.xlu0 %3542
  %v3544 = vmul.f32 %v3540, %v627
  %v3545 = vmul.f32 %v3543, %v627
  %v3546 = vsub.f32 %v3536, %v3544
  %v3547 = vsub.f32 %v3537, %v3545
  %v3548 = vmul.f32 %v3546, %v3546
  %v3549 = vmul.f32 %v3547, %v3547
  %v3550 = vsel %vm49, %v3548, 0.0
  %3551 = vadd.xlane.f32.xlu0 %v3550
  %v3552 = vpop.xlane.xlu0 %3551
  %v3553 = vsel %vm617, %v3549, 0.0
  %3554 = vadd.xlane.f32.xlu0 %v3553
  %v3555 = vpop.xlane.xlu0 %3554
  %v3556 = vmul.f32 %v3552, %v627
  %v3557 = vmul.f32 %v3555, %v627
  %v3558 = vadd.f32 %v3556, 1e-05
  %v3559 = vadd.f32 %v3557, 1e-05
  %v3560 = vrsqrt.pop %v3558
  %v3561 = vmul.f32 %v3560, %v3558
  %v3562 = vmul.f32 %v3561, %v3560
  %v3563 = vmul.f32 0.5, %v3562
  %v3564 = vsub.f32 1.5, %v3563
  %v3565 = vmul.f32 %v3560, %v3564
  %vm3566 = vweird.f32 %v3558
  %vm3567 = vweird.f32 %v3560
  %vm3568 = vmor %vm3566, %vm3567
  %v3569 = vsel %vm3568, %v3560, %v3565
  %v3570 = vrsqrt.pop %v3559
  %v3571 = vmul.f32 %v3570, %v3559
  %v3572 = vmul.f32 %v3571, %v3570
  %v3573 = vmul.f32 0.5, %v3572
  %v3574 = vsub.f32 1.5, %v3573
  %v3575 = vmul.f32 %v3570, %v3574
  %vm3576 = vweird.f32 %v3559
  %vm3577 = vweird.f32 %v3570
  %vm3578 = vmor %vm3576, %vm3577
  %v3579 = vsel %vm3578, %v3570, %v3575
  %v3580 = vmul.f32 %v3546, %v3569
  %v3581 = vmul.f32 %v3547, %v3579
  %v3582 = vmul.f32 %v3580, %v666
  %v3583 = vmul.f32 %v3581, %v666
  %v3584 = vadd.f32 %v3582, %v669
  %v3585 = vadd.f32 %v3583, %v669
  %v3587 = vsel %vm49, %v3584, 0
  %v3590 = vsel %vm49, %v3585, 0
  %3592 = vmatpush.msra.mxu0 0.0
  %3593 = vmatpush.msra.mxu0 0.0
  %3594 = vmatpush.msra.mxu0 0.0
  %3595 = vmatpush.msra.mxu0 0.0
  %3596 = vmatpush.msra.mxu0 0.0
  %3597 = vmatpush.msra.mxu0 0.0
  %3598 = vmatpush.msra.mxu0 0.0
  %3599 = vmatpush.msra.mxu0 0.0
  %3600 = vmatpush.msra.mxu0 0.0
  %3601 = vmatpush.msra.mxu0 0.0
  %3602 = vmatpush.msra.mxu0 0.0
  %3603 = vmatpush.msra.mxu0 0.0
  %3604 = vmatpush.msra.mxu0 0.0
  %3605 = vmatpush.msra.mxu0 0.0
  %3606 = vmatpush.msra.mxu0 0.0
  %3607 = vmatpush.msra.mxu0 %v27
  %3608 = vmatmul.f32.gmra.mxu0 %v3587
  %v3609 = vpop.f32.mrf.mxu0
  %v3610 = vadd.f32 %v672, %v3609
  %3611 = vmatmul.f32.gmra.mxu0 %v3590
  %v3612 = vpop.f32.mrf.mxu0
  %v3613 = vadd.f32 %v672, %v3612
  %3614 = vdwg.mxu0
  %v3615 = vmax.f32 %v3610, 0.0
  %v3616 = vmax.f32 %v3613, 0.0
  %v3618 = vsel %vm705, %v3615, 0
  %v3621 = vsel %vm705, %v3616, 0
  %3623 = vmatpush.msra.mxu0 0.0
  %3624 = vmatpush.msra.mxu0 0.0
  %3625 = vmatpush.msra.mxu0 0.0
  %3626 = vmatpush.msra.mxu0 0.0
  %3627 = vmatpush.msra.mxu0 0.0
  %3628 = vmatpush.msra.mxu0 0.0
  %3629 = vmatpush.msra.mxu0 0.0
  %3630 = vmatpush.msra.mxu0 0.0
  %3631 = vmatpush.msra.mxu0 0.0
  %3632 = vmatpush.msra.mxu0 0.0
  %3633 = vmatpush.msra.mxu0 0.0
  %3634 = vmatpush.msra.mxu0 0.0
  %3635 = vmatpush.msra.mxu0 0.0
  %3636 = vmatpush.msra.mxu0 0.0
  %3637 = vmatpush.msra.mxu0 %v29
  %3638 = vmatpush.msra.mxu0 %v28
  %3639 = vmatmul.f32.gmra.mxu0 %v3618
  %v3640 = vpop.f32.mrf.mxu0
  %v3641 = vadd.f32 %v704, %v3640
  %3642 = vmatmul.f32.gmra.mxu0 %v3621
  %v3643 = vpop.f32.mrf.mxu0
  %v3644 = vadd.f32 %v704, %v3643
  %3645 = vdwg.mxu0
  %v3646 = vadd.f32 %v3584, %v3641
  %v3647 = vadd.f32 %v3585, %v3644
  %v3648 = vsel %vm49, %v3646, 0.0
  %3649 = vadd.xlane.f32.xlu0 %v3648
  %v3650 = vpop.xlane.xlu0 %3649
  %v3651 = vsel %vm617, %v3647, 0.0
  %3652 = vadd.xlane.f32.xlu0 %v3651
  %v3653 = vpop.xlane.xlu0 %3652
  %v3654 = vmul.f32 %v3650, %v627
  %v3655 = vmul.f32 %v3653, %v627
  %v3656 = vsub.f32 %v3646, %v3654
  %v3657 = vsub.f32 %v3647, %v3655
  %v3658 = vmul.f32 %v3656, %v3656
  %v3659 = vmul.f32 %v3657, %v3657
  %v3660 = vsel %vm49, %v3658, 0.0
  %3661 = vadd.xlane.f32.xlu0 %v3660
  %v3662 = vpop.xlane.xlu0 %3661
  %v3663 = vsel %vm617, %v3659, 0.0
  %3664 = vadd.xlane.f32.xlu0 %v3663
  %v3665 = vpop.xlane.xlu0 %3664
  %v3666 = vmul.f32 %v3662, %v627
  %v3667 = vmul.f32 %v3665, %v627
  %v3668 = vadd.f32 %v3666, 1e-05
  %v3669 = vadd.f32 %v3667, 1e-05
  %v3670 = vrsqrt.pop %v3668
  %v3671 = vmul.f32 %v3670, %v3668
  %v3672 = vmul.f32 %v3671, %v3670
  %v3673 = vmul.f32 0.5, %v3672
  %v3674 = vsub.f32 1.5, %v3673
  %v3675 = vmul.f32 %v3670, %v3674
  %vm3676 = vweird.f32 %v3668
  %vm3677 = vweird.f32 %v3670
  %vm3678 = vmor %vm3676, %vm3677
  %v3679 = vsel %vm3678, %v3670, %v3675
  %v3680 = vrsqrt.pop %v3669
  %v3681 = vmul.f32 %v3680, %v3669
  %v3682 = vmul.f32 %v3681, %v3680
  %v3683 = vmul.f32 0.5, %v3682
  %v3684 = vsub.f32 1.5, %v3683
  %v3685 = vmul.f32 %v3680, %v3684
  %vm3686 = vweird.f32 %v3669
  %vm3687 = vweird.f32 %v3680
  %vm3688 = vmor %vm3686, %vm3687
  %v3689 = vsel %vm3688, %v3680, %v3685
  %v3690 = vmul.f32 %v3656, %v3679
  %v3691 = vmul.f32 %v3657, %v3689
  %v3692 = vmul.f32 %v3690, %v781
  %v3693 = vmul.f32 %v3691, %v781
  %v3694 = vadd.f32 %v3692, %v784
  %v3695 = vadd.f32 %v3693, %v784
  %3696 = vrot.lane.b32.xlu0 %v788, 124
  %v3697 = vpop.permute.xlu0 %3696
  %v3699 = vsel %vm41, %v3697, %v22
  %v3701 = vsel %vm49, %v3699, 0
  %3703 = vmatpush.msra.mxu0 0.0
  %3704 = vmatpush.msra.mxu0 0.0
  %3705 = vmatpush.msra.mxu0 0.0
  %3706 = vmatpush.msra.mxu0 0.0
  %3707 = vmatpush.msra.mxu0 0.0
  %3708 = vmatpush.msra.mxu0 0.0
  %3709 = vmatpush.msra.mxu0 0.0
  %3710 = vmatpush.msra.mxu0 0.0
  %3711 = vmatpush.msra.mxu0 0.0
  %3712 = vmatpush.msra.mxu0 0.0
  %3713 = vmatpush.msra.mxu0 0.0
  %3714 = vmatpush.msra.mxu0 0.0
  %3715 = vmatpush.msra.mxu0 0.0
  %3716 = vmatpush.msra.mxu0 0.0
  %3717 = vmatpush.msra.mxu0 0.0
  %3718 = vmatpush.msra.mxu0 %v30
  %3719 = vmatmul.f32.gmra.mxu0 %v3701
  %v3720 = vpop.f32.mrf.mxu0
  %v3721 = vadd.f32 %v39, %v3720
  %3722 = vdwg.mxu0
  %3724 = vrot.lane.b32.xlu0 %v3721, 120
  %v3725 = vpop.permute.xlu0 %3724
  %v3727 = vmul.f32 %v3721, %v3725
  %v3728 = vsel %vm821, %v3727, 0.0
  %3729 = vadd.xlane.f32.xlu0 %v3728
  %v3730 = vpop.xlane.xlu0 %3729
  %v3731 = vmul.f32 %v3730, 0.70710677
  %v3732 = vsub.f32 %v3731, %v3731
  %v3733 = vmul.f32 %v3732, 1.442695
  %v3734 = vpow.pop %v3733
  %v3735 = vadd.f32 %v3734, 0.0
  %v3736 = vrcp.pop %v3735
  %v3737 = vmul.f32 %v3734, %v3736
  %3738 = vrot.lane.b32.xlu0 %v3721, 112
  %v3739 = vpop.permute.xlu0 %3738
  %v3741 = vsel %vm834, %v3737, 0
  %v3743 = vsel %vm838, %v3739, 0
  %3745 = vmatpush.msra.mxu0 0.0
  %3746 = vmatpush.msra.mxu0 0.0
  %3747 = vmatpush.msra.mxu0 0.0
  %3748 = vmatpush.msra.mxu0 0.0
  %3749 = vmatpush.msra.mxu0 0.0
  %3750 = vmatpush.msra.mxu0 0.0
  %3751 = vmatpush.msra.mxu0 0.0
  %3752 = vmatpush.msra.mxu0 0.0
  %3753 = vmatpush.msra.mxu0 0.0
  %3754 = vmatpush.msra.mxu0 0.0
  %3755 = vmatpush.msra.mxu0 0.0
  %3756 = vmatpush.msra.mxu0 0.0
  %3757 = vmatpush.msra.mxu0 0.0
  %3758 = vmatpush.msra.mxu0 0.0
  %3759 = vmatpush.msra.mxu0 0.0
  %3760 = vmatpush.msra.mxu0 %v3743
  %3761 = vmatmul.f32.gmra.mxu0 %v3741
  %v3762 = vpop.f32.mrf.mxu0
  %v3763 = vadd.f32 0.0, %v3762
  %3764 = vdwg.mxu0
  %3766 = vrot.lane.b32.xlu0 %v3727, 126
  %v3767 = vpop.permute.xlu0 %3766
  %v3769 = vsel %vm821, %v3767, 0.0
  %3770 = vadd.xlane.f32.xlu0 %v3769
  %v3771 = vpop.xlane.xlu0 %3770
  %v3772 = vmul.f32 %v3771, 0.70710677
  %v3773 = vsub.f32 %v3772, %v3772
  %v3774 = vmul.f32 %v3773, 1.442695
  %v3775 = vpow.pop %v3774
  %v3776 = vadd.f32 %v3775, 0.0
  %v3777 = vrcp.pop %v3776
  %v3778 = vmul.f32 %v3775, %v3777
  %3779 = vrot.lane.b32.xlu0 %v3721, 110
  %v3780 = vpop.permute.xlu0 %3779
  %v3782 = vsel %vm834, %v3778, 0
  %v3784 = vsel %vm838, %v3780, 0
  %3786 = vmatpush.msra.mxu0 0.0
  %3787 = vmatpush.msra.mxu0 0.0
  %3788 = vmatpush.msra.mxu0 0.0
  %3789 = vmatpush.msra.mxu0 0.0
  %3790 = vmatpush.msra.mxu0 0.0
  %3791 = vmatpush.msra.mxu0 0.0
  %3792 = vmatpush.msra.mxu0 0.0
  %3793 = vmatpush.msra.mxu0 0.0
  %3794 = vmatpush.msra.mxu0 0.0
  %3795 = vmatpush.msra.mxu0 0.0
  %3796 = vmatpush.msra.mxu0 0.0
  %3797 = vmatpush.msra.mxu0 0.0
  %3798 = vmatpush.msra.mxu0 0.0
  %3799 = vmatpush.msra.mxu0 0.0
  %3800 = vmatpush.msra.mxu0 0.0
  %3801 = vmatpush.msra.mxu0 %v3784
  %3802 = vmatmul.f32.gmra.mxu0 %v3782
  %v3803 = vpop.f32.mrf.mxu0
  %v3804 = vadd.f32 0.0, %v3803
  %3805 = vdwg.mxu0
  %v3807 = vsel %vm85, %v3804, 0
  %3809 = vmatpush.msra.mxu0 0.0
  %3810 = vmatpush.msra.mxu0 0.0
  %3811 = vmatpush.msra.mxu0 0.0
  %3812 = vmatpush.msra.mxu0 0.0
  %3813 = vmatpush.msra.mxu0 0.0
  %3814 = vmatpush.msra.mxu0 0.0
  %3815 = vmatpush.msra.mxu0 0.0
  %3816 = vmatpush.msra.mxu0 0.0
  %3817 = vmatpush.msra.mxu0 0.0
  %3818 = vmatpush.msra.mxu0 0.0
  %3819 = vmatpush.msra.mxu0 0.0
  %3820 = vmatpush.msra.mxu0 0.0
  %3821 = vmatpush.msra.mxu0 0.0
  %3822 = vmatpush.msra.mxu0 0.0
  %3823 = vmatpush.msra.mxu0 0.0
  %3824 = vmatpush.msra.mxu0 %v907
  %3825 = vmatmul.f32.gmra.mxu0 %v3807
  %v3826 = vpop.f32.mrf.mxu0
  %v3827 = vadd.f32 0.0, %v3826
  %3828 = vdwg.mxu0
  %v3830 = vsel %vm85, %v3763, 0
  %3832 = vmatpush.msra.mxu0 0.0
  %3833 = vmatpush.msra.mxu0 0.0
  %3834 = vmatpush.msra.mxu0 0.0
  %3835 = vmatpush.msra.mxu0 0.0
  %3836 = vmatpush.msra.mxu0 0.0
  %3837 = vmatpush.msra.mxu0 0.0
  %3838 = vmatpush.msra.mxu0 0.0
  %3839 = vmatpush.msra.mxu0 0.0
  %3840 = vmatpush.msra.mxu0 0.0
  %3841 = vmatpush.msra.mxu0 0.0
  %3842 = vmatpush.msra.mxu0 0.0
  %3843 = vmatpush.msra.mxu0 0.0
  %3844 = vmatpush.msra.mxu0 0.0
  %3845 = vmatpush.msra.mxu0 0.0
  %3846 = vmatpush.msra.mxu0 0.0
  %3847 = vmatpush.msra.mxu0 %v932
  %3848 = vmatmul.f32.gmra.mxu0 %v3830
  %v3849 = vpop.f32.mrf.mxu0
  %v3850 = vadd.f32 %v3827, %v3849
  %3851 = vdwg.mxu0
  %3852 = vrot.lane.b32.xlu0 %v3727, 124
  %v3853 = vpop.permute.xlu0 %3852
  %v3855 = vsel %vm821, %v3853, 0.0
  %3856 = vadd.xlane.f32.xlu0 %v3855
  %v3857 = vpop.xlane.xlu0 %3856
  %v3858 = vmul.f32 %v3857, 0.70710677
  %v3859 = vsub.f32 %v3858, %v3858
  %v3860 = vmul.f32 %v3859, 1.442695
  %v3861 = vpow.pop %v3860
  %v3862 = vadd.f32 %v3861, 0.0
  %v3863 = vrcp.pop %v3862
  %v3864 = vmul.f32 %v3861, %v3863
  %3865 = vrot.lane.b32.xlu0 %v3721, 108
  %v3866 = vpop.permute.xlu0 %3865
  %v3868 = vsel %vm834, %v3864, 0
  %v3870 = vsel %vm838, %v3866, 0
  %3872 = vmatpush.msra.mxu0 0.0
  %3873 = vmatpush.msra.mxu0 0.0
  %3874 = vmatpush.msra.mxu0 0.0
  %3875 = vmatpush.msra.mxu0 0.0
  %3876 = vmatpush.msra.mxu0 0.0
  %3877 = vmatpush.msra.mxu0 0.0
  %3878 = vmatpush.msra.mxu0 0.0
  %3879 = vmatpush.msra.mxu0 0.0
  %3880 = vmatpush.msra.mxu0 0.0
  %3881 = vmatpush.msra.mxu0 0.0
  %3882 = vmatpush.msra.mxu0 0.0
  %3883 = vmatpush.msra.mxu0 0.0
  %3884 = vmatpush.msra.mxu0 0.0
  %3885 = vmatpush.msra.mxu0 0.0
  %3886 = vmatpush.msra.mxu0 0.0
  %3887 = vmatpush.msra.mxu0 %v3870
  %3888 = vmatmul.f32.gmra.mxu0 %v3868
  %v3889 = vpop.f32.mrf.mxu0
  %v3890 = vadd.f32 0.0, %v3889
  %3891 = vdwg.mxu0
  %v3893 = vsel %vm85, %v3890, 0
  %3895 = vmatpush.msra.mxu0 0.0
  %3896 = vmatpush.msra.mxu0 0.0
  %3897 = vmatpush.msra.mxu0 0.0
  %3898 = vmatpush.msra.mxu0 0.0
  %3899 = vmatpush.msra.mxu0 0.0
  %3900 = vmatpush.msra.mxu0 0.0
  %3901 = vmatpush.msra.mxu0 0.0
  %3902 = vmatpush.msra.mxu0 0.0
  %3903 = vmatpush.msra.mxu0 0.0
  %3904 = vmatpush.msra.mxu0 0.0
  %3905 = vmatpush.msra.mxu0 0.0
  %3906 = vmatpush.msra.mxu0 0.0
  %3907 = vmatpush.msra.mxu0 0.0
  %3908 = vmatpush.msra.mxu0 0.0
  %3909 = vmatpush.msra.mxu0 0.0
  %3910 = vmatpush.msra.mxu0 %v998
  %3911 = vmatmul.f32.gmra.mxu0 %v3893
  %v3912 = vpop.f32.mrf.mxu0
  %v3913 = vadd.f32 0.0, %v3912
  %3914 = vdwg.mxu0
  %v3915 = vadd.f32 %v3850, %v3913
  %3916 = vrot.lane.b32.xlu0 %v3727, 122
  %v3917 = vpop.permute.xlu0 %3916
  %v3919 = vsel %vm821, %v3917, 0.0
  %3920 = vadd.xlane.f32.xlu0 %v3919
  %v3921 = vpop.xlane.xlu0 %3920
  %v3922 = vmul.f32 %v3921, 0.70710677
  %v3923 = vsub.f32 %v3922, %v3922
  %v3924 = vmul.f32 %v3923, 1.442695
  %v3925 = vpow.pop %v3924
  %v3926 = vadd.f32 %v3925, 0.0
  %v3927 = vrcp.pop %v3926
  %v3928 = vmul.f32 %v3925, %v3927
  %3929 = vrot.lane.b32.xlu0 %v3721, 106
  %v3930 = vpop.permute.xlu0 %3929
  %v3932 = vsel %vm834, %v3928, 0
  %v3934 = vsel %vm838, %v3930, 0
  %3936 = vmatpush.msra.mxu0 0.0
  %3937 = vmatpush.msra.mxu0 0.0
  %3938 = vmatpush.msra.mxu0 0.0
  %3939 = vmatpush.msra.mxu0 0.0
  %3940 = vmatpush.msra.mxu0 0.0
  %3941 = vmatpush.msra.mxu0 0.0
  %3942 = vmatpush.msra.mxu0 0.0
  %3943 = vmatpush.msra.mxu0 0.0
  %3944 = vmatpush.msra.mxu0 0.0
  %3945 = vmatpush.msra.mxu0 0.0
  %3946 = vmatpush.msra.mxu0 0.0
  %3947 = vmatpush.msra.mxu0 0.0
  %3948 = vmatpush.msra.mxu0 0.0
  %3949 = vmatpush.msra.mxu0 0.0
  %3950 = vmatpush.msra.mxu0 0.0
  %3951 = vmatpush.msra.mxu0 %v3934
  %3952 = vmatmul.f32.gmra.mxu0 %v3932
  %v3953 = vpop.f32.mrf.mxu0
  %v3954 = vadd.f32 0.0, %v3953
  %3955 = vdwg.mxu0
  %v3957 = vsel %vm85, %v3954, 0
  %3959 = vmatpush.msra.mxu0 0.0
  %3960 = vmatpush.msra.mxu0 0.0
  %3961 = vmatpush.msra.mxu0 0.0
  %3962 = vmatpush.msra.mxu0 0.0
  %3963 = vmatpush.msra.mxu0 0.0
  %3964 = vmatpush.msra.mxu0 0.0
  %3965 = vmatpush.msra.mxu0 0.0
  %3966 = vmatpush.msra.mxu0 0.0
  %3967 = vmatpush.msra.mxu0 0.0
  %3968 = vmatpush.msra.mxu0 0.0
  %3969 = vmatpush.msra.mxu0 0.0
  %3970 = vmatpush.msra.mxu0 0.0
  %3971 = vmatpush.msra.mxu0 0.0
  %3972 = vmatpush.msra.mxu0 0.0
  %3973 = vmatpush.msra.mxu0 0.0
  %3974 = vmatpush.msra.mxu0 %v1065
  %3975 = vmatmul.f32.gmra.mxu0 %v3957
  %v3976 = vpop.f32.mrf.mxu0
  %v3977 = vadd.f32 0.0, %v3976
  %3978 = vdwg.mxu0
  %v3979 = vadd.f32 %v3915, %v3977
  %v3980 = vadd.f32 %v3979, %v1089
  %v3981 = vadd.f32 %v3699, %v3980
  %v3982 = vsel %vm1093, %v3981, 0.0
  %3983 = vadd.xlane.f32.xlu0 %v3982
  %v3984 = vpop.xlane.xlu0 %3983
  %v3985 = vmul.f32 %v3984, %v627
  %v3986 = vsub.f32 %v3981, %v3985
  %v3987 = vmul.f32 %v3986, %v3986
  %v3988 = vsel %vm1093, %v3987, 0.0
  %3989 = vadd.xlane.f32.xlu0 %v3988
  %v3990 = vpop.xlane.xlu0 %3989
  %v3991 = vmul.f32 %v3990, %v627
  %v3992 = vadd.f32 %v3991, 1e-05
  %v3993 = vrsqrt.pop %v3992
  %v3994 = vmul.f32 %v3993, %v3992
  %v3995 = vmul.f32 %v3994, %v3993
  %v3996 = vmul.f32 0.5, %v3995
  %v3997 = vsub.f32 1.5, %v3996
  %v3998 = vmul.f32 %v3993, %v3997
  %vm3999 = vweird.f32 %v3992
  %vm4000 = vweird.f32 %v3993
  %vm4001 = vmor %vm3999, %vm4000
  %v4002 = vsel %vm4001, %v3993, %v3998
  %v4003 = vmul.f32 %v3986, %v4002
  %v4004 = vmul.f32 %v4003, %v1116
  %v4005 = vadd.f32 %v4004, %v1119
  %v4007 = vsel %vm49, %v4005, 0
  %4009 = vmatpush.msra.mxu0 0.0
  %4010 = vmatpush.msra.mxu0 0.0
  %4011 = vmatpush.msra.mxu0 0.0
  %4012 = vmatpush.msra.mxu0 0.0
  %4013 = vmatpush.msra.mxu0 0.0
  %4014 = vmatpush.msra.mxu0 0.0
  %4015 = vmatpush.msra.mxu0 0.0
  %4016 = vmatpush.msra.mxu0 0.0
  %4017 = vmatpush.msra.mxu0 0.0
  %4018 = vmatpush.msra.mxu0 0.0
  %4019 = vmatpush.msra.mxu0 0.0
  %4020 = vmatpush.msra.mxu0 0.0
  %4021 = vmatpush.msra.mxu0 0.0
  %4022 = vmatpush.msra.mxu0 0.0
  %4023 = vmatpush.msra.mxu0 0.0
  %4024 = vmatpush.msra.mxu0 %v32
  %4025 = vmatmul.f32.gmra.mxu0 %v4007
  %v4026 = vpop.f32.mrf.mxu0
  %v4027 = vadd.f32 %v1122, %v4026
  %4028 = vdwg.mxu0
  %v4030 = vsel %vm49, %v3694, 0
  %v4033 = vsel %vm49, %v3695, 0
  %4035 = vmatpush.msra.mxu0 0.0
  %4036 = vmatpush.msra.mxu0 0.0
  %4037 = vmatpush.msra.mxu0 0.0
  %4038 = vmatpush.msra.mxu0 0.0
  %4039 = vmatpush.msra.mxu0 0.0
  %4040 = vmatpush.msra.mxu0 0.0
  %4041 = vmatpush.msra.mxu0 0.0
  %4042 = vmatpush.msra.mxu0 0.0
  %4043 = vmatpush.msra.mxu0 0.0
  %4044 = vmatpush.msra.mxu0 0.0
  %4045 = vmatpush.msra.mxu0 0.0
  %4046 = vmatpush.msra.mxu0 0.0
  %4047 = vmatpush.msra.mxu0 0.0
  %4048 = vmatpush.msra.mxu0 0.0
  %4049 = vmatpush.msra.mxu0 0.0
  %4050 = vmatpush.msra.mxu0 %v1150
  %4051 = vmatmul.f32.gmra.mxu0 %v4030
  %v4052 = vpop.f32.mrf.mxu0
  %v4053 = vadd.f32 %v1154, %v4052
  %4054 = vmatmul.f32.gmra.mxu0 %v4033
  %v4055 = vpop.f32.mrf.mxu0
  %v4056 = vadd.f32 %v1154, %v4055
  %4057 = vdwg.mxu0
  %v4059 = vsel %vm85, %v4027, 0
  %v4062 = vsel %vm85, %v4053, 0
  %v4065 = vsel %vm85, %v4056, 0
  %4067 = vmatpush.xpose.msra.mxu0 0.0
  %4068 = vmatpush.xpose.msra.mxu0 0.0
  %4069 = vmatpush.xpose.msra.mxu0 0.0
  %4070 = vmatpush.xpose.msra.mxu0 0.0
  %4071 = vmatpush.xpose.msra.mxu0 0.0
  %4072 = vmatpush.xpose.msra.mxu0 0.0
  %4073 = vmatpush.xpose.msra.mxu0 0.0
  %4074 = vmatpush.xpose.msra.mxu0 0.0
  %4075 = vmatpush.xpose.msra.mxu0 0.0
  %4076 = vmatpush.xpose.msra.mxu0 0.0
  %4077 = vmatpush.xpose.msra.mxu0 0.0
  %4078 = vmatpush.xpose.msra.mxu0 0.0
  %4079 = vmatpush.xpose.msra.mxu0 0.0
  %4080 = vmatpush.xpose.msra.mxu0 0.0
  %4081 = vmatpush.xpose.msra.mxu0 %v4065
  %4082 = vmatpush.xpose.msra.mxu0 %v4062
  %4083 = vmatmul.f32.gmra.mxu0 %v4059
  %v4084 = vpop.f32.mrf.mxu0
  %v4085 = vadd.f32 0.0, %v4084
  %4086 = vdwg.mxu0
  %v4087 = vmul.f32 %v4085, 0.70710677
  %v4088 = vsel %vm1215, %v4087, -inf
  %4089 = vmax.xlane.f32.xlu0 %v4088
  %v4090 = vpop.xlane.xlu0 %4089
  %v4091 = vsub.f32 %v4087, %v4090
  %v4092 = vmul.f32 %v4091, 1.442695
  %v4093 = vpow.pop %v4092
  %v4094 = vsel %vm1215, %v4093, 0.0
  %4095 = vadd.xlane.f32.xlu0 %v4094
  %v4096 = vpop.xlane.xlu0 %4095
  %v4097 = vrcp.pop %v4096
  %v4098 = vmul.f32 %v4093, %v4097
  %4099 = vrot.lane.b32.xlu0 %v4053, 120
  %v4100 = vpop.permute.xlu0 %4099
  %4101 = vrot.lane.b32.xlu0 %v4056, 120
  %v4102 = vpop.permute.xlu0 %4101
  %v4105 = vsel %vm119, %v4098, 0
  %v4107 = vsel %vm154, %v4102, 0
  %4109 = vmatpush.msra.mxu0 0.0
  %4110 = vmatpush.msra.mxu0 0.0
  %4111 = vmatpush.msra.mxu0 0.0
  %4112 = vmatpush.msra.mxu0 0.0
  %4113 = vmatpush.msra.mxu0 0.0
  %4114 = vmatpush.msra.mxu0 0.0
  %4115 = vmatpush.msra.mxu0 0.0
  %4116 = vmatpush.msra.mxu0 0.0
  %4117 = vmatpush.msra.mxu0 0.0
  %4118 = vmatpush.msra.mxu0 0.0
  %4119 = vmatpush.msra.mxu0 0.0
  %4120 = vmatpush.msra.mxu0 0.0
  %4121 = vmatpush.msra.mxu0 0.0
  %4122 = vmatpush.msra.mxu0 0.0
  %4123 = vmatpush.msra.mxu0 %v4107
  %4124 = vmatpush.msra.mxu0 %v4100
  %4125 = vmatmul.f32.gmra.mxu0 %v4105
  %v4126 = vpop.f32.mrf.mxu0
  %v4127 = vadd.f32 0.0, %v4126
  %4128 = vdwg.mxu0
  %4129 = vrot.lane.b32.xlu0 %v4027, 126
  %v4130 = vpop.permute.xlu0 %4129
  %4131 = vrot.lane.b32.xlu0 %v4053, 126
  %v4132 = vpop.permute.xlu0 %4131
  %4133 = vrot.lane.b32.xlu0 %v4056, 126
  %v4134 = vpop.permute.xlu0 %4133
  %v4135 = vsel %vm85, %v4130, 0
  %v4137 = vsel %vm85, %v4132, 0
  %v4139 = vsel %vm85, %v4134, 0
  %4141 = vmatpush.xpose.msra.mxu0 0.0
  %4142 = vmatpush.xpose.msra.mxu0 0.0
  %4143 = vmatpush.xpose.msra.mxu0 0.0
  %4144 = vmatpush.xpose.msra.mxu0 0.0
  %4145 = vmatpush.xpose.msra.mxu0 0.0
  %4146 = vmatpush.xpose.msra.mxu0 0.0
  %4147 = vmatpush.xpose.msra.mxu0 0.0
  %4148 = vmatpush.xpose.msra.mxu0 0.0
  %4149 = vmatpush.xpose.msra.mxu0 0.0
  %4150 = vmatpush.xpose.msra.mxu0 0.0
  %4151 = vmatpush.xpose.msra.mxu0 0.0
  %4152 = vmatpush.xpose.msra.mxu0 0.0
  %4153 = vmatpush.xpose.msra.mxu0 0.0
  %4154 = vmatpush.xpose.msra.mxu0 0.0
  %4155 = vmatpush.xpose.msra.mxu0 %v4139
  %4156 = vmatpush.xpose.msra.mxu0 %v4137
  %4157 = vmatmul.f32.gmra.mxu0 %v4135
  %v4158 = vpop.f32.mrf.mxu0
  %v4159 = vadd.f32 0.0, %v4158
  %4160 = vdwg.mxu0
  %v4161 = vmul.f32 %v4159, 0.70710677
  %v4162 = vsel %vm1215, %v4161, -inf
  %4163 = vmax.xlane.f32.xlu0 %v4162
  %v4164 = vpop.xlane.xlu0 %4163
  %v4165 = vsub.f32 %v4161, %v4164
  %v4166 = vmul.f32 %v4165, 1.442695
  %v4167 = vpow.pop %v4166
  %v4168 = vsel %vm1215, %v4167, 0.0
  %4169 = vadd.xlane.f32.xlu0 %v4168
  %v4170 = vpop.xlane.xlu0 %4169
  %v4171 = vrcp.pop %v4170
  %v4172 = vmul.f32 %v4167, %v4171
  %4173 = vrot.lane.b32.xlu0 %v4053, 118
  %v4174 = vpop.permute.xlu0 %4173
  %4175 = vrot.lane.b32.xlu0 %v4056, 118
  %v4176 = vpop.permute.xlu0 %4175
  %v4179 = vsel %vm119, %v4172, 0
  %v4181 = vsel %vm154, %v4176, 0
  %4183 = vmatpush.msra.mxu0 0.0
  %4184 = vmatpush.msra.mxu0 0.0
  %4185 = vmatpush.msra.mxu0 0.0
  %4186 = vmatpush.msra.mxu0 0.0
  %4187 = vmatpush.msra.mxu0 0.0
  %4188 = vmatpush.msra.mxu0 0.0
  %4189 = vmatpush.msra.mxu0 0.0
  %4190 = vmatpush.msra.mxu0 0.0
  %4191 = vmatpush.msra.mxu0 0.0
  %4192 = vmatpush.msra.mxu0 0.0
  %4193 = vmatpush.msra.mxu0 0.0
  %4194 = vmatpush.msra.mxu0 0.0
  %4195 = vmatpush.msra.mxu0 0.0
  %4196 = vmatpush.msra.mxu0 0.0
  %4197 = vmatpush.msra.mxu0 %v4181
  %4198 = vmatpush.msra.mxu0 %v4174
  %4199 = vmatmul.f32.gmra.mxu0 %v4179
  %v4200 = vpop.f32.mrf.mxu0
  %v4201 = vadd.f32 0.0, %v4200
  %4202 = vdwg.mxu0
  %v4204 = vsel %vm85, %v4201, 0
  %4206 = vmatpush.msra.mxu0 0.0
  %4207 = vmatpush.msra.mxu0 0.0
  %4208 = vmatpush.msra.mxu0 0.0
  %4209 = vmatpush.msra.mxu0 0.0
  %4210 = vmatpush.msra.mxu0 0.0
  %4211 = vmatpush.msra.mxu0 0.0
  %4212 = vmatpush.msra.mxu0 0.0
  %4213 = vmatpush.msra.mxu0 0.0
  %4214 = vmatpush.msra.mxu0 0.0
  %4215 = vmatpush.msra.mxu0 0.0
  %4216 = vmatpush.msra.mxu0 0.0
  %4217 = vmatpush.msra.mxu0 0.0
  %4218 = vmatpush.msra.mxu0 0.0
  %4219 = vmatpush.msra.mxu0 0.0
  %4220 = vmatpush.msra.mxu0 0.0
  %4221 = vmatpush.msra.mxu0 %v1336
  %4222 = vmatmul.f32.gmra.mxu0 %v4204
  %v4223 = vpop.f32.mrf.mxu0
  %v4224 = vadd.f32 0.0, %v4223
  %4225 = vdwg.mxu0
  %v4227 = vsel %vm85, %v4127, 0
  %4229 = vmatpush.msra.mxu0 0.0
  %4230 = vmatpush.msra.mxu0 0.0
  %4231 = vmatpush.msra.mxu0 0.0
  %4232 = vmatpush.msra.mxu0 0.0
  %4233 = vmatpush.msra.mxu0 0.0
  %4234 = vmatpush.msra.mxu0 0.0
  %4235 = vmatpush.msra.mxu0 0.0
  %4236 = vmatpush.msra.mxu0 0.0
  %4237 = vmatpush.msra.mxu0 0.0
  %4238 = vmatpush.msra.mxu0 0.0
  %4239 = vmatpush.msra.mxu0 0.0
  %4240 = vmatpush.msra.mxu0 0.0
  %4241 = vmatpush.msra.mxu0 0.0
  %4242 = vmatpush.msra.mxu0 0.0
  %4243 = vmatpush.msra.mxu0 0.0
  %4244 = vmatpush.msra.mxu0 %v1361
  %4245 = vmatmul.f32.gmra.mxu0 %v4227
  %v4246 = vpop.f32.mrf.mxu0
  %v4247 = vadd.f32 %v4224, %v4246
  %4248 = vdwg.mxu0
  %4249 = vrot.lane.b32.xlu0 %v4027, 124
  %v4250 = vpop.permute.xlu0 %4249
  %4251 = vrot.lane.b32.xlu0 %v4053, 124
  %v4252 = vpop.permute.xlu0 %4251
  %4253 = vrot.lane.b32.xlu0 %v4056, 124
  %v4254 = vpop.permute.xlu0 %4253
  %v4255 = vsel %vm85, %v4250, 0
  %v4257 = vsel %vm85, %v4252, 0
  %v4259 = vsel %vm85, %v4254, 0
  %4261 = vmatpush.xpose.msra.mxu0 0.0
  %4262 = vmatpush.xpose.msra.mxu0 0.0
  %4263 = vmatpush.xpose.msra.mxu0 0.0
  %4264 = vmatpush.xpose.msra.mxu0 0.0
  %4265 = vmatpush.xpose.msra.mxu0 0.0
  %4266 = vmatpush.xpose.msra.mxu0 0.0
  %4267 = vmatpush.xpose.msra.mxu0 0.0
  %4268 = vmatpush.xpose.msra.mxu0 0.0
  %4269 = vmatpush.xpose.msra.mxu0 0.0
  %4270 = vmatpush.xpose.msra.mxu0 0.0
  %4271 = vmatpush.xpose.msra.mxu0 0.0
  %4272 = vmatpush.xpose.msra.mxu0 0.0
  %4273 = vmatpush.xpose.msra.mxu0 0.0
  %4274 = vmatpush.xpose.msra.mxu0 0.0
  %4275 = vmatpush.xpose.msra.mxu0 %v4259
  %4276 = vmatpush.xpose.msra.mxu0 %v4257
  %4277 = vmatmul.f32.gmra.mxu0 %v4255
  %v4278 = vpop.f32.mrf.mxu0
  %v4279 = vadd.f32 0.0, %v4278
  %4280 = vdwg.mxu0
  %v4281 = vmul.f32 %v4279, 0.70710677
  %v4282 = vsel %vm1215, %v4281, -inf
  %4283 = vmax.xlane.f32.xlu0 %v4282
  %v4284 = vpop.xlane.xlu0 %4283
  %v4285 = vsub.f32 %v4281, %v4284
  %v4286 = vmul.f32 %v4285, 1.442695
  %v4287 = vpow.pop %v4286
  %v4288 = vsel %vm1215, %v4287, 0.0
  %4289 = vadd.xlane.f32.xlu0 %v4288
  %v4290 = vpop.xlane.xlu0 %4289
  %v4291 = vrcp.pop %v4290
  %v4292 = vmul.f32 %v4287, %v4291
  %4293 = vrot.lane.b32.xlu0 %v4053, 116
  %v4294 = vpop.permute.xlu0 %4293
  %4295 = vrot.lane.b32.xlu0 %v4056, 116
  %v4296 = vpop.permute.xlu0 %4295
  %v4299 = vsel %vm119, %v4292, 0
  %v4301 = vsel %vm154, %v4296, 0
  %4303 = vmatpush.msra.mxu0 0.0
  %4304 = vmatpush.msra.mxu0 0.0
  %4305 = vmatpush.msra.mxu0 0.0
  %4306 = vmatpush.msra.mxu0 0.0
  %4307 = vmatpush.msra.mxu0 0.0
  %4308 = vmatpush.msra.mxu0 0.0
  %4309 = vmatpush.msra.mxu0 0.0
  %4310 = vmatpush.msra.mxu0 0.0
  %4311 = vmatpush.msra.mxu0 0.0
  %4312 = vmatpush.msra.mxu0 0.0
  %4313 = vmatpush.msra.mxu0 0.0
  %4314 = vmatpush.msra.mxu0 0.0
  %4315 = vmatpush.msra.mxu0 0.0
  %4316 = vmatpush.msra.mxu0 0.0
  %4317 = vmatpush.msra.mxu0 %v4301
  %4318 = vmatpush.msra.mxu0 %v4294
  %4319 = vmatmul.f32.gmra.mxu0 %v4299
  %v4320 = vpop.f32.mrf.mxu0
  %v4321 = vadd.f32 0.0, %v4320
  %4322 = vdwg.mxu0
  %v4324 = vsel %vm85, %v4321, 0
  %4326 = vmatpush.msra.mxu0 0.0
  %4327 = vmatpush.msra.mxu0 0.0
  %4328 = vmatpush.msra.mxu0 0.0
  %4329 = vmatpush.msra.mxu0 0.0
  %4330 = vmatpush.msra.mxu0 0.0
  %4331 = vmatpush.msra.mxu0 0.0
  %4332 = vmatpush.msra.mxu0 0.0
  %4333 = vmatpush.msra.mxu0 0.0
  %4334 = vmatpush.msra.mxu0 0.0
  %4335 = vmatpush.msra.mxu0 0.0
  %4336 = vmatpush.msra.mxu0 0.0
  %4337 = vmatpush.msra.mxu0 0.0
  %4338 = vmatpush.msra.mxu0 0.0
  %4339 = vmatpush.msra.mxu0 0.0
  %4340 = vmatpush.msra.mxu0 0.0
  %4341 = vmatpush.msra.mxu0 %v1461
  %4342 = vmatmul.f32.gmra.mxu0 %v4324
  %v4343 = vpop.f32.mrf.mxu0
  %v4344 = vadd.f32 0.0, %v4343
  %4345 = vdwg.mxu0
  %v4346 = vadd.f32 %v4247, %v4344
  %4347 = vrot.lane.b32.xlu0 %v4027, 122
  %v4348 = vpop.permute.xlu0 %4347
  %4349 = vrot.lane.b32.xlu0 %v4053, 122
  %v4350 = vpop.permute.xlu0 %4349
  %4351 = vrot.lane.b32.xlu0 %v4056, 122
  %v4352 = vpop.permute.xlu0 %4351
  %v4353 = vsel %vm85, %v4348, 0
  %v4355 = vsel %vm85, %v4350, 0
  %v4357 = vsel %vm85, %v4352, 0
  %4359 = vmatpush.xpose.msra.mxu0 0.0
  %4360 = vmatpush.xpose.msra.mxu0 0.0
  %4361 = vmatpush.xpose.msra.mxu0 0.0
  %4362 = vmatpush.xpose.msra.mxu0 0.0
  %4363 = vmatpush.xpose.msra.mxu0 0.0
  %4364 = vmatpush.xpose.msra.mxu0 0.0
  %4365 = vmatpush.xpose.msra.mxu0 0.0
  %4366 = vmatpush.xpose.msra.mxu0 0.0
  %4367 = vmatpush.xpose.msra.mxu0 0.0
  %4368 = vmatpush.xpose.msra.mxu0 0.0
  %4369 = vmatpush.xpose.msra.mxu0 0.0
  %4370 = vmatpush.xpose.msra.mxu0 0.0
  %4371 = vmatpush.xpose.msra.mxu0 0.0
  %4372 = vmatpush.xpose.msra.mxu0 0.0
  %4373 = vmatpush.xpose.msra.mxu0 %v4357
  %4374 = vmatpush.xpose.msra.mxu0 %v4355
  %4375 = vmatmul.f32.gmra.mxu0 %v4353
  %v4376 = vpop.f32.mrf.mxu0
  %v4377 = vadd.f32 0.0, %v4376
  %4378 = vdwg.mxu0
  %v4379 = vmul.f32 %v4377, 0.70710677
  %v4380 = vsel %vm1215, %v4379, -inf
  %4381 = vmax.xlane.f32.xlu0 %v4380
  %v4382 = vpop.xlane.xlu0 %4381
  %v4383 = vsub.f32 %v4379, %v4382
  %v4384 = vmul.f32 %v4383, 1.442695
  %v4385 = vpow.pop %v4384
  %v4386 = vsel %vm1215, %v4385, 0.0
  %4387 = vadd.xlane.f32.xlu0 %v4386
  %v4388 = vpop.xlane.xlu0 %4387
  %v4389 = vrcp.pop %v4388
  %v4390 = vmul.f32 %v4385, %v4389
  %4391 = vrot.lane.b32.xlu0 %v4053, 114
  %v4392 = vpop.permute.xlu0 %4391
  %4393 = vrot.lane.b32.xlu0 %v4056, 114
  %v4394 = vpop.permute.xlu0 %4393
  %v4397 = vsel %vm119, %v4390, 0
  %v4399 = vsel %vm154, %v4394, 0
  %4401 = vmatpush.msra.mxu0 0.0
  %4402 = vmatpush.msra.mxu0 0.0
  %4403 = vmatpush.msra.mxu0 0.0
  %4404 = vmatpush.msra.mxu0 0.0
  %4405 = vmatpush.msra.mxu0 0.0
  %4406 = vmatpush.msra.mxu0 0.0
  %4407 = vmatpush.msra.mxu0 0.0
  %4408 = vmatpush.msra.mxu0 0.0
  %4409 = vmatpush.msra.mxu0 0.0
  %4410 = vmatpush.msra.mxu0 0.0
  %4411 = vmatpush.msra.mxu0 0.0
  %4412 = vmatpush.msra.mxu0 0.0
  %4413 = vmatpush.msra.mxu0 0.0
  %4414 = vmatpush.msra.mxu0 0.0
  %4415 = vmatpush.msra.mxu0 %v4399
  %4416 = vmatpush.msra.mxu0 %v4392
  %4417 = vmatmul.f32.gmra.mxu0 %v4397
  %v4418 = vpop.f32.mrf.mxu0
  %v4419 = vadd.f32 0.0, %v4418
  %4420 = vdwg.mxu0
  %v4422 = vsel %vm85, %v4419, 0
  %4424 = vmatpush.msra.mxu0 0.0
  %4425 = vmatpush.msra.mxu0 0.0
  %4426 = vmatpush.msra.mxu0 0.0
  %4427 = vmatpush.msra.mxu0 0.0
  %4428 = vmatpush.msra.mxu0 0.0
  %4429 = vmatpush.msra.mxu0 0.0
  %4430 = vmatpush.msra.mxu0 0.0
  %4431 = vmatpush.msra.mxu0 0.0
  %4432 = vmatpush.msra.mxu0 0.0
  %4433 = vmatpush.msra.mxu0 0.0
  %4434 = vmatpush.msra.mxu0 0.0
  %4435 = vmatpush.msra.mxu0 0.0
  %4436 = vmatpush.msra.mxu0 0.0
  %4437 = vmatpush.msra.mxu0 0.0
  %4438 = vmatpush.msra.mxu0 0.0
  %4439 = vmatpush.msra.mxu0 %v1562
  %4440 = vmatmul.f32.gmra.mxu0 %v4422
  %v4441 = vpop.f32.mrf.mxu0
  %v4442 = vadd.f32 0.0, %v4441
  %4443 = vdwg.mxu0
  %v4444 = vadd.f32 %v4346, %v4442
  %v4445 = vadd.f32 %v4444, %v1585
  %v4446 = vadd.f32 %v4005, %v4445
  %v4447 = vsel %vm1093, %v4446, 0.0
  %4448 = vadd.xlane.f32.xlu0 %v4447
  %v4449 = vpop.xlane.xlu0 %4448
  %v4450 = vmul.f32 %v4449, %v627
  %v4451 = vsub.f32 %v4446, %v4450
  %v4452 = vmul.f32 %v4451, %v4451
  %v4453 = vsel %vm1093, %v4452, 0.0
  %4454 = vadd.xlane.f32.xlu0 %v4453
  %v4455 = vpop.xlane.xlu0 %4454
  %v4456 = vmul.f32 %v4455, %v627
  %v4457 = vadd.f32 %v4456, 1e-05
  %v4458 = vrsqrt.pop %v4457
  %v4459 = vmul.f32 %v4458, %v4457
  %v4460 = vmul.f32 %v4459, %v4458
  %v4461 = vmul.f32 0.5, %v4460
  %v4462 = vsub.f32 1.5, %v4461
  %v4463 = vmul.f32 %v4458, %v4462
  %vm4464 = vweird.f32 %v4457
  %vm4465 = vweird.f32 %v4458
  %vm4466 = vmor %vm4464, %vm4465
  %v4467 = vsel %vm4466, %v4458, %v4463
  %v4468 = vmul.f32 %v4451, %v4467
  %v4469 = vmul.f32 %v4468, %v1611
  %v4470 = vadd.f32 %v4469, %v1614
  %v4472 = vsel %vm49, %v4470, 0
  %4474 = vmatpush.msra.mxu0 0.0
  %4475 = vmatpush.msra.mxu0 0.0
  %4476 = vmatpush.msra.mxu0 0.0
  %4477 = vmatpush.msra.mxu0 0.0
  %4478 = vmatpush.msra.mxu0 0.0
  %4479 = vmatpush.msra.mxu0 0.0
  %4480 = vmatpush.msra.mxu0 0.0
  %4481 = vmatpush.msra.mxu0 0.0
  %4482 = vmatpush.msra.mxu0 0.0
  %4483 = vmatpush.msra.mxu0 0.0
  %4484 = vmatpush.msra.mxu0 0.0
  %4485 = vmatpush.msra.mxu0 0.0
  %4486 = vmatpush.msra.mxu0 0.0
  %4487 = vmatpush.msra.mxu0 0.0
  %4488 = vmatpush.msra.mxu0 0.0
  %4489 = vmatpush.msra.mxu0 %v34
  %4490 = vmatmul.f32.gmra.mxu0 %v4472
  %v4491 = vpop.f32.mrf.mxu0
  %v4492 = vadd.f32 %v40, %v4491
  %4493 = vdwg.mxu0
  %v4494 = vmax.f32 %v4492, 0.0
  %v4496 = vsel %vm705, %v4494, 0
  %4498 = vmatpush.msra.mxu0 0.0
  %4499 = vmatpush.msra.mxu0 0.0
  %4500 = vmatpush.msra.mxu0 0.0
  %4501 = vmatpush.msra.mxu0 0.0
  %4502 = vmatpush.msra.mxu0 0.0
  %4503 = vmatpush.msra.mxu0 0.0
  %4504 = vmatpush.msra.mxu0 0.0
  %4505 = vmatpush.msra.mxu0 0.0
  %4506 = vmatpush.msra.mxu0 0.0
  %4507 = vmatpush.msra.mxu0 0.0
  %4508 = vmatpush.msra.mxu0 0.0
  %4509 = vmatpush.msra.mxu0 0.0
  %4510 = vmatpush.msra.mxu0 0.0
  %4511 = vmatpush.msra.mxu0 0.0
  %4512 = vmatpush.msra.mxu0 %v36
  %4513 = vmatpush.msra.mxu0 %v35
  %4514 = vmatmul.f32.gmra.mxu0 %v4496
  %v4515 = vpop.f32.mrf.mxu0
  %v4516 = vadd.f32 %v1642, %v4515
  %4517 = vdwg.mxu0
  %v4518 = vadd.f32 %v4470, %v4516
  %v4519 = vsel %vm1093, %v4518, 0.0
  %4520 = vadd.xlane.f32.xlu0 %v4519
  %v4521 = vpop.xlane.xlu0 %4520
  %v4522 = vmul.f32 %v4521, %v627
  %v4523 = vsub.f32 %v4518, %v4522
  %v4524 = vmul.f32 %v4523, %v4523
  %v4525 = vsel %vm1093, %v4524, 0.0
  %4526 = vadd.xlane.f32.xlu0 %v4525
  %v4527 = vpop.xlane.xlu0 %4526
  %v4528 = vmul.f32 %v4527, %v627
  %v4529 = vadd.f32 %v4528, 1e-05
  %v4530 = vrsqrt.pop %v4529
  %v4531 = vmul.f32 %v4530, %v4529
  %v4532 = vmul.f32 %v4531, %v4530
  %v4533 = vmul.f32 0.5, %v4532
  %v4534 = vsub.f32 1.5, %v4533
  %v4535 = vmul.f32 %v4530, %v4534
  %vm4536 = vweird.f32 %v4529
  %vm4537 = vweird.f32 %v4530
  %vm4538 = vmor %vm4536, %vm4537
  %v4539 = vsel %vm4538, %v4530, %v4535
  %v4540 = vmul.f32 %v4523, %v4539
  %v4541 = vmul.f32 %v4540, %v1690
  %v4542 = vadd.f32 %v4541, %v1693
  %v4544 = vsel %vm49, %v4542, 0
  %4546 = vmatpush.msra.mxu0 0.0
  %4547 = vmatpush.msra.mxu0 0.0
  %4548 = vmatpush.msra.mxu0 0.0
  %4549 = vmatpush.msra.mxu0 0.0
  %4550 = vmatpush.msra.mxu0 0.0
  %4551 = vmatpush.msra.mxu0 0.0
  %4552 = vmatpush.msra.mxu0 0.0
  %4553 = vmatpush.msra.mxu0 0.0
  %4554 = vmatpush.msra.mxu0 0.0
  %4555 = vmatpush.msra.mxu0 0.0
  %4556 = vmatpush.msra.mxu0 0.0
  %4557 = vmatpush.msra.mxu0 0.0
  %4558 = vmatpush.msra.mxu0 0.0
  %4559 = vmatpush.msra.mxu0 0.0
  %4560 = vmatpush.msra.mxu0 0.0
  %4561 = vmatpush.msra.mxu0 %v37
  %4562 = vmatmul.f32.gmra.mxu0 %v4544
  %v4563 = vpop.f32.mrf.mxu0
  %v4564 = vadd.f32 %v1696, %v4563
  %4565 = vdwg.mxu0
  %v4566 = vsub.f32 0.0, %v4564
  %v4567 = vmul.f32 %v4566, 1.442695
  %v4568 = vpow.pop %v4567
  %v4569 = vadd.f32 %v4568, 1.0
  %v4570 = vrcp.pop %v4569
  %v4571 = vperm.slane %v4570, 0
  %v4572 = vsub.f32 %v4571, %v2980
  %v4573 = vsub.f32 %v4571, %v2982
  %v4574 = vmul.f32 %v4572, %v4572
  %v4575 = vmul.f32 %v4573, %v4573
  %4578 = vrot.lane.b32.xlu0 %v4574, 4
  %v4579 = vpop.permute.xlu0 %4578
  %4580 = vrot.lane.b32.xlu0 %v4575, 4
  %v4581 = vpop.permute.xlu0 %4580
  %v4584 = vsel %vm41, %v2980, %v4579
  %v4585 = vsel %vm41, %v2982, %v4581
  %v4586 = vmul.f32 %v4584, 2.0
  %v4587 = vmul.f32 %v4585, 2.0
  %v4588 = vadd.f32 %v4586, %v23
  %v4589 = vadd.f32 %v4587, %v24
  %v4591 = vsel %vm49, %v4588, 0
  %v4594 = vsel %vm49, %v4589, 0
  %4596 = vmatpush.msra.mxu0 0.0
  %4597 = vmatpush.msra.mxu0 0.0
  %4598 = vmatpush.msra.mxu0 0.0
  %4599 = vmatpush.msra.mxu0 0.0
  %4600 = vmatpush.msra.mxu0 0.0
  %4601 = vmatpush.msra.mxu0 0.0
  %4602 = vmatpush.msra.mxu0 0.0
  %4603 = vmatpush.msra.mxu0 0.0
  %4604 = vmatpush.msra.mxu0 0.0
  %4605 = vmatpush.msra.mxu0 0.0
  %4606 = vmatpush.msra.mxu0 0.0
  %4607 = vmatpush.msra.mxu0 0.0
  %4608 = vmatpush.msra.mxu0 0.0
  %4609 = vmatpush.msra.mxu0 0.0
  %4610 = vmatpush.msra.mxu0 0.0
  %4611 = vmatpush.msra.mxu0 %v25
  %4612 = vmatmul.f32.gmra.mxu0 %v4591
  %v4613 = vpop.f32.mrf.mxu0
  %v4614 = vadd.f32 %v48, %v4613
  %4615 = vmatmul.f32.gmra.mxu0 %v4594
  %v4616 = vpop.f32.mrf.mxu0
  %v4617 = vadd.f32 %v48, %v4616
  %4618 = vdwg.mxu0
  %4621 = vrot.lane.b32.xlu0 %v4614, 120
  %v4622 = vpop.permute.xlu0 %4621
  %4623 = vrot.lane.b32.xlu0 %v4617, 120
  %v4624 = vpop.permute.xlu0 %4623
  %v4625 = vsel %vm85, %v4614, 0
  %v4627 = vsel %vm85, %v4617, 0
  %v4629 = vsel %vm85, %v4622, 0
  %v4631 = vsel %vm85, %v4624, 0
  %4633 = vmatpush.xpose.msra.mxu0 0.0
  %4634 = vmatpush.xpose.msra.mxu0 0.0
  %4635 = vmatpush.xpose.msra.mxu0 0.0
  %4636 = vmatpush.xpose.msra.mxu0 0.0
  %4637 = vmatpush.xpose.msra.mxu0 0.0
  %4638 = vmatpush.xpose.msra.mxu0 0.0
  %4639 = vmatpush.xpose.msra.mxu0 0.0
  %4640 = vmatpush.xpose.msra.mxu0 0.0
  %4641 = vmatpush.xpose.msra.mxu0 0.0
  %4642 = vmatpush.xpose.msra.mxu0 0.0
  %4643 = vmatpush.xpose.msra.mxu0 0.0
  %4644 = vmatpush.xpose.msra.mxu0 0.0
  %4645 = vmatpush.xpose.msra.mxu0 0.0
  %4646 = vmatpush.xpose.msra.mxu0 0.0
  %4647 = vmatpush.xpose.msra.mxu0 %v4631
  %4648 = vmatpush.xpose.msra.mxu0 %v4629
  %4649 = vmatmul.f32.gmra.mxu0 %v4625
  %v4650 = vpop.f32.mrf.mxu0
  %v4651 = vadd.f32 0.0, %v4650
  %4652 = vmatmul.f32.gmra.mxu0 %v4627
  %v4653 = vpop.f32.mrf.mxu0
  %v4654 = vadd.f32 0.0, %v4653
  %4655 = vdwg.mxu0
  %v4656 = vmul.f32 %v4651, 0.70710677
  %v4657 = vmul.f32 %v4654, 0.70710677
  %v4658 = vsel %vm119, %v4656, -inf
  %4659 = vmax.xlane.f32.xlu0 %v4658
  %v4660 = vpop.xlane.xlu0 %4659
  %v4661 = vsel %vm123, %v4657, -inf
  %4662 = vmax.xlane.f32.xlu0 %v4661
  %v4663 = vpop.xlane.xlu0 %4662
  %v4664 = vsub.f32 %v4656, %v4660
  %v4665 = vsub.f32 %v4657, %v4663
  %v4666 = vmul.f32 %v4664, 1.442695
  %v4667 = vpow.pop %v4666
  %v4668 = vmul.f32 %v4665, 1.442695
  %v4669 = vpow.pop %v4668
  %v4670 = vsel %vm119, %v4667, 0.0
  %4671 = vadd.xlane.f32.xlu0 %v4670
  %v4672 = vpop.xlane.xlu0 %4671
  %v4673 = vsel %vm123, %v4669, 0.0
  %4674 = vadd.xlane.f32.xlu0 %v4673
  %v4675 = vpop.xlane.xlu0 %4674
  %v4676 = vrcp.pop %v4672
  %v4677 = vrcp.pop %v4675
  %v4678 = vmul.f32 %v4667, %v4676
  %v4679 = vmul.f32 %v4669, %v4677
  %4680 = vrot.lane.b32.xlu0 %v4614, 112
  %v4681 = vpop.permute.xlu0 %4680
  %4682 = vrot.lane.b32.xlu0 %v4617, 112
  %v4683 = vpop.permute.xlu0 %4682
  %v4686 = vsel %vm119, %v4678, 0
  %v4689 = vsel %vm119, %v4679, 0
  %v4691 = vsel %vm154, %v4683, 0
  %4693 = vmatpush.msra.mxu0 0.0
  %4694 = vmatpush.msra.mxu0 0.0
  %4695 = vmatpush.msra.mxu0 0.0
  %4696 = vmatpush.msra.mxu0 0.0
  %4697 = vmatpush.msra.mxu0 0.0
  %4698 = vmatpush.msra.mxu0 0.0
  %4699 = vmatpush.msra.mxu0 0.0
  %4700 = vmatpush.msra.mxu0 0.0
  %4701 = vmatpush.msra.mxu0 0.0
  %4702 = vmatpush.msra.mxu0 0.0
  %4703 = vmatpush.msra.mxu0 0.0
  %4704 = vmatpush.msra.mxu0 0.0
  %4705 = vmatpush.msra.mxu0 0.0
  %4706 = vmatpush.msra.mxu0 0.0
  %4707 = vmatpush.msra.mxu0 %v4691
  %4708 = vmatpush.msra.mxu0 %v4681
  %4709 = vmatmul.f32.gmra.mxu0 %v4686
  %v4710 = vpop.f32.mrf.mxu0
  %v4711 = vadd.f32 0.0, %v4710
  %4712 = vmatmul.f32.gmra.mxu0 %v4689
  %v4713 = vpop.f32.mrf.mxu0
  %v4714 = vadd.f32 0.0, %v4713
  %4715 = vdwg.mxu0
  %4716 = vrot.lane.b32.xlu0 %v4614, 126
  %v4717 = vpop.permute.xlu0 %4716
  %4718 = vrot.lane.b32.xlu0 %v4617, 126
  %v4719 = vpop.permute.xlu0 %4718
  %4720 = vrot.lane.b32.xlu0 %v4614, 118
  %v4721 = vpop.permute.xlu0 %4720
  %4722 = vrot.lane.b32.xlu0 %v4617, 118
  %v4723 = vpop.permute.xlu0 %4722
  %v4724 = vsel %vm85, %v4717, 0
  %v4726 = vsel %vm85, %v4719, 0
  %v4728 = vsel %vm85, %v4721, 0
  %v4730 = vsel %vm85, %v4723, 0
  %4732 = vmatpush.xpose.msra.mxu0 0.0
  %4733 = vmatpush.xpose.msra.mxu0 0.0
  %4734 = vmatpush.xpose.msra.mxu0 0.0
  %4735 = vmatpush.xpose.msra.mxu0 0.0
  %4736 = vmatpush.xpose.msra.mxu0 0.0
  %4737 = vmatpush.xpose.msra.mxu0 0.0
  %4738 = vmatpush.xpose.msra.mxu0 0.0
  %4739 = vmatpush.xpose.msra.mxu0 0.0
  %4740 = vmatpush.xpose.msra.mxu0 0.0
  %4741 = vmatpush.xpose.msra.mxu0 0.0
  %4742 = vmatpush.xpose.msra.mxu0 0.0
  %4743 = vmatpush.xpose.msra.mxu0 0.0
  %4744 = vmatpush.xpose.msra.mxu0 0.0
  %4745 = vmatpush.xpose.msra.mxu0 0.0
  %4746 = vmatpush.xpose.msra.mxu0 %v4730
  %4747 = vmatpush.xpose.msra.mxu0 %v4728
  %4748 = vmatmul.f32.gmra.mxu0 %v4724
  %v4749 = vpop.f32.mrf.mxu0
  %v4750 = vadd.f32 0.0, %v4749
  %4751 = vmatmul.f32.gmra.mxu0 %v4726
  %v4752 = vpop.f32.mrf.mxu0
  %v4753 = vadd.f32 0.0, %v4752
  %4754 = vdwg.mxu0
  %v4755 = vmul.f32 %v4750, 0.70710677
  %v4756 = vmul.f32 %v4753, 0.70710677
  %v4757 = vsel %vm119, %v4755, -inf
  %4758 = vmax.xlane.f32.xlu0 %v4757
  %v4759 = vpop.xlane.xlu0 %4758
  %v4760 = vsel %vm123, %v4756, -inf
  %4761 = vmax.xlane.f32.xlu0 %v4760
  %v4762 = vpop.xlane.xlu0 %4761
  %v4763 = vsub.f32 %v4755, %v4759
  %v4764 = vsub.f32 %v4756, %v4762
  %v4765 = vmul.f32 %v4763, 1.442695
  %v4766 = vpow.pop %v4765
  %v4767 = vmul.f32 %v4764, 1.442695
  %v4768 = vpow.pop %v4767
  %v4769 = vsel %vm119, %v4766, 0.0
  %4770 = vadd.xlane.f32.xlu0 %v4769
  %v4771 = vpop.xlane.xlu0 %4770
  %v4772 = vsel %vm123, %v4768, 0.0
  %4773 = vadd.xlane.f32.xlu0 %v4772
  %v4774 = vpop.xlane.xlu0 %4773
  %v4775 = vrcp.pop %v4771
  %v4776 = vrcp.pop %v4774
  %v4777 = vmul.f32 %v4766, %v4775
  %v4778 = vmul.f32 %v4768, %v4776
  %4779 = vrot.lane.b32.xlu0 %v4614, 110
  %v4780 = vpop.permute.xlu0 %4779
  %4781 = vrot.lane.b32.xlu0 %v4617, 110
  %v4782 = vpop.permute.xlu0 %4781
  %v4785 = vsel %vm119, %v4777, 0
  %v4788 = vsel %vm119, %v4778, 0
  %v4790 = vsel %vm154, %v4782, 0
  %4792 = vmatpush.msra.mxu0 0.0
  %4793 = vmatpush.msra.mxu0 0.0
  %4794 = vmatpush.msra.mxu0 0.0
  %4795 = vmatpush.msra.mxu0 0.0
  %4796 = vmatpush.msra.mxu0 0.0
  %4797 = vmatpush.msra.mxu0 0.0
  %4798 = vmatpush.msra.mxu0 0.0
  %4799 = vmatpush.msra.mxu0 0.0
  %4800 = vmatpush.msra.mxu0 0.0
  %4801 = vmatpush.msra.mxu0 0.0
  %4802 = vmatpush.msra.mxu0 0.0
  %4803 = vmatpush.msra.mxu0 0.0
  %4804 = vmatpush.msra.mxu0 0.0
  %4805 = vmatpush.msra.mxu0 0.0
  %4806 = vmatpush.msra.mxu0 %v4790
  %4807 = vmatpush.msra.mxu0 %v4780
  %4808 = vmatmul.f32.gmra.mxu0 %v4785
  %v4809 = vpop.f32.mrf.mxu0
  %v4810 = vadd.f32 0.0, %v4809
  %4811 = vmatmul.f32.gmra.mxu0 %v4788
  %v4812 = vpop.f32.mrf.mxu0
  %v4813 = vadd.f32 0.0, %v4812
  %4814 = vdwg.mxu0
  %v4816 = vsel %vm85, %v4810, 0
  %v4819 = vsel %vm85, %v4813, 0
  %4821 = vmatpush.msra.mxu0 0.0
  %4822 = vmatpush.msra.mxu0 0.0
  %4823 = vmatpush.msra.mxu0 0.0
  %4824 = vmatpush.msra.mxu0 0.0
  %4825 = vmatpush.msra.mxu0 0.0
  %4826 = vmatpush.msra.mxu0 0.0
  %4827 = vmatpush.msra.mxu0 0.0
  %4828 = vmatpush.msra.mxu0 0.0
  %4829 = vmatpush.msra.mxu0 0.0
  %4830 = vmatpush.msra.mxu0 0.0
  %4831 = vmatpush.msra.mxu0 0.0
  %4832 = vmatpush.msra.mxu0 0.0
  %4833 = vmatpush.msra.mxu0 0.0
  %4834 = vmatpush.msra.mxu0 0.0
  %4835 = vmatpush.msra.mxu0 0.0
  %4836 = vmatpush.msra.mxu0 %v287
  %4837 = vmatmul.f32.gmra.mxu0 %v4816
  %v4838 = vpop.f32.mrf.mxu0
  %v4839 = vadd.f32 0.0, %v4838
  %4840 = vmatmul.f32.gmra.mxu0 %v4819
  %v4841 = vpop.f32.mrf.mxu0
  %v4842 = vadd.f32 0.0, %v4841
  %4843 = vdwg.mxu0
  %v4845 = vsel %vm85, %v4711, 0
  %v4848 = vsel %vm85, %v4714, 0
  %4850 = vmatpush.msra.mxu0 0.0
  %4851 = vmatpush.msra.mxu0 0.0
  %4852 = vmatpush.msra.mxu0 0.0
  %4853 = vmatpush.msra.mxu0 0.0
  %4854 = vmatpush.msra.mxu0 0.0
  %4855 = vmatpush.msra.mxu0 0.0
  %4856 = vmatpush.msra.mxu0 0.0
  %4857 = vmatpush.msra.mxu0 0.0
  %4858 = vmatpush.msra.mxu0 0.0
  %4859 = vmatpush.msra.mxu0 0.0
  %4860 = vmatpush.msra.mxu0 0.0
  %4861 = vmatpush.msra.mxu0 0.0
  %4862 = vmatpush.msra.mxu0 0.0
  %4863 = vmatpush.msra.mxu0 0.0
  %4864 = vmatpush.msra.mxu0 0.0
  %4865 = vmatpush.msra.mxu0 %v318
  %4866 = vmatmul.f32.gmra.mxu0 %v4845
  %v4867 = vpop.f32.mrf.mxu0
  %v4868 = vadd.f32 %v4839, %v4867
  %4869 = vmatmul.f32.gmra.mxu0 %v4848
  %v4870 = vpop.f32.mrf.mxu0
  %v4871 = vadd.f32 %v4842, %v4870
  %4872 = vdwg.mxu0
  %4873 = vrot.lane.b32.xlu0 %v4614, 124
  %v4874 = vpop.permute.xlu0 %4873
  %4875 = vrot.lane.b32.xlu0 %v4617, 124
  %v4876 = vpop.permute.xlu0 %4875
  %4877 = vrot.lane.b32.xlu0 %v4614, 116
  %v4878 = vpop.permute.xlu0 %4877
  %4879 = vrot.lane.b32.xlu0 %v4617, 116
  %v4880 = vpop.permute.xlu0 %4879
  %v4881 = vsel %vm85, %v4874, 0
  %v4883 = vsel %vm85, %v4876, 0
  %v4885 = vsel %vm85, %v4878, 0
  %v4887 = vsel %vm85, %v4880, 0
  %4889 = vmatpush.xpose.msra.mxu0 0.0
  %4890 = vmatpush.xpose.msra.mxu0 0.0
  %4891 = vmatpush.xpose.msra.mxu0 0.0
  %4892 = vmatpush.xpose.msra.mxu0 0.0
  %4893 = vmatpush.xpose.msra.mxu0 0.0
  %4894 = vmatpush.xpose.msra.mxu0 0.0
  %4895 = vmatpush.xpose.msra.mxu0 0.0
  %4896 = vmatpush.xpose.msra.mxu0 0.0
  %4897 = vmatpush.xpose.msra.mxu0 0.0
  %4898 = vmatpush.xpose.msra.mxu0 0.0
  %4899 = vmatpush.xpose.msra.mxu0 0.0
  %4900 = vmatpush.xpose.msra.mxu0 0.0
  %4901 = vmatpush.xpose.msra.mxu0 0.0
  %4902 = vmatpush.xpose.msra.mxu0 0.0
  %4903 = vmatpush.xpose.msra.mxu0 %v4887
  %4904 = vmatpush.xpose.msra.mxu0 %v4885
  %4905 = vmatmul.f32.gmra.mxu0 %v4881
  %v4906 = vpop.f32.mrf.mxu0
  %v4907 = vadd.f32 0.0, %v4906
  %4908 = vmatmul.f32.gmra.mxu0 %v4883
  %v4909 = vpop.f32.mrf.mxu0
  %v4910 = vadd.f32 0.0, %v4909
  %4911 = vdwg.mxu0
  %v4912 = vmul.f32 %v4907, 0.70710677
  %v4913 = vmul.f32 %v4910, 0.70710677
  %v4914 = vsel %vm119, %v4912, -inf
  %4915 = vmax.xlane.f32.xlu0 %v4914
  %v4916 = vpop.xlane.xlu0 %4915
  %v4917 = vsel %vm123, %v4913, -inf
  %4918 = vmax.xlane.f32.xlu0 %v4917
  %v4919 = vpop.xlane.xlu0 %4918
  %v4920 = vsub.f32 %v4912, %v4916
  %v4921 = vsub.f32 %v4913, %v4919
  %v4922 = vmul.f32 %v4920, 1.442695
  %v4923 = vpow.pop %v4922
  %v4924 = vmul.f32 %v4921, 1.442695
  %v4925 = vpow.pop %v4924
  %v4926 = vsel %vm119, %v4923, 0.0
  %4927 = vadd.xlane.f32.xlu0 %v4926
  %v4928 = vpop.xlane.xlu0 %4927
  %v4929 = vsel %vm123, %v4925, 0.0
  %4930 = vadd.xlane.f32.xlu0 %v4929
  %v4931 = vpop.xlane.xlu0 %4930
  %v4932 = vrcp.pop %v4928
  %v4933 = vrcp.pop %v4931
  %v4934 = vmul.f32 %v4923, %v4932
  %v4935 = vmul.f32 %v4925, %v4933
  %4936 = vrot.lane.b32.xlu0 %v4614, 108
  %v4937 = vpop.permute.xlu0 %4936
  %4938 = vrot.lane.b32.xlu0 %v4617, 108
  %v4939 = vpop.permute.xlu0 %4938
  %v4942 = vsel %vm119, %v4934, 0
  %v4945 = vsel %vm119, %v4935, 0
  %v4947 = vsel %vm154, %v4939, 0
  %4949 = vmatpush.msra.mxu0 0.0
  %4950 = vmatpush.msra.mxu0 0.0
  %4951 = vmatpush.msra.mxu0 0.0
  %4952 = vmatpush.msra.mxu0 0.0
  %4953 = vmatpush.msra.mxu0 0.0
  %4954 = vmatpush.msra.mxu0 0.0
  %4955 = vmatpush.msra.mxu0 0.0
  %4956 = vmatpush.msra.mxu0 0.0
  %4957 = vmatpush.msra.mxu0 0.0
  %4958 = vmatpush.msra.mxu0 0.0
  %4959 = vmatpush.msra.mxu0 0.0
  %4960 = vmatpush.msra.mxu0 0.0
  %4961 = vmatpush.msra.mxu0 0.0
  %4962 = vmatpush.msra.mxu0 0.0
  %4963 = vmatpush.msra.mxu0 %v4947
  %4964 = vmatpush.msra.mxu0 %v4937
  %4965 = vmatmul.f32.gmra.mxu0 %v4942
  %v4966 = vpop.f32.mrf.mxu0
  %v4967 = vadd.f32 0.0, %v4966
  %4968 = vmatmul.f32.gmra.mxu0 %v4945
  %v4969 = vpop.f32.mrf.mxu0
  %v4970 = vadd.f32 0.0, %v4969
  %4971 = vdwg.mxu0
  %v4973 = vsel %vm85, %v4967, 0
  %v4976 = vsel %vm85, %v4970, 0
  %4978 = vmatpush.msra.mxu0 0.0
  %4979 = vmatpush.msra.mxu0 0.0
  %4980 = vmatpush.msra.mxu0 0.0
  %4981 = vmatpush.msra.mxu0 0.0
  %4982 = vmatpush.msra.mxu0 0.0
  %4983 = vmatpush.msra.mxu0 0.0
  %4984 = vmatpush.msra.mxu0 0.0
  %4985 = vmatpush.msra.mxu0 0.0
  %4986 = vmatpush.msra.mxu0 0.0
  %4987 = vmatpush.msra.mxu0 0.0
  %4988 = vmatpush.msra.mxu0 0.0
  %4989 = vmatpush.msra.mxu0 0.0
  %4990 = vmatpush.msra.mxu0 0.0
  %4991 = vmatpush.msra.mxu0 0.0
  %4992 = vmatpush.msra.mxu0 0.0
  %4993 = vmatpush.msra.mxu0 %v449
  %4994 = vmatmul.f32.gmra.mxu0 %v4973
  %v4995 = vpop.f32.mrf.mxu0
  %v4996 = vadd.f32 0.0, %v4995
  %4997 = vmatmul.f32.gmra.mxu0 %v4976
  %v4998 = vpop.f32.mrf.mxu0
  %v4999 = vadd.f32 0.0, %v4998
  %5000 = vdwg.mxu0
  %v5001 = vadd.f32 %v4868, %v4996
  %v5002 = vadd.f32 %v4871, %v4999
  %5003 = vrot.lane.b32.xlu0 %v4614, 122
  %v5004 = vpop.permute.xlu0 %5003
  %5005 = vrot.lane.b32.xlu0 %v4617, 122
  %v5006 = vpop.permute.xlu0 %5005
  %5007 = vrot.lane.b32.xlu0 %v4614, 114
  %v5008 = vpop.permute.xlu0 %5007
  %5009 = vrot.lane.b32.xlu0 %v4617, 114
  %v5010 = vpop.permute.xlu0 %5009
  %v5011 = vsel %vm85, %v5004, 0
  %v5013 = vsel %vm85, %v5006, 0
  %v5015 = vsel %vm85, %v5008, 0
  %v5017 = vsel %vm85, %v5010, 0
  %5019 = vmatpush.xpose.msra.mxu0 0.0
  %5020 = vmatpush.xpose.msra.mxu0 0.0
  %5021 = vmatpush.xpose.msra.mxu0 0.0
  %5022 = vmatpush.xpose.msra.mxu0 0.0
  %5023 = vmatpush.xpose.msra.mxu0 0.0
  %5024 = vmatpush.xpose.msra.mxu0 0.0
  %5025 = vmatpush.xpose.msra.mxu0 0.0
  %5026 = vmatpush.xpose.msra.mxu0 0.0
  %5027 = vmatpush.xpose.msra.mxu0 0.0
  %5028 = vmatpush.xpose.msra.mxu0 0.0
  %5029 = vmatpush.xpose.msra.mxu0 0.0
  %5030 = vmatpush.xpose.msra.mxu0 0.0
  %5031 = vmatpush.xpose.msra.mxu0 0.0
  %5032 = vmatpush.xpose.msra.mxu0 0.0
  %5033 = vmatpush.xpose.msra.mxu0 %v5017
  %5034 = vmatpush.xpose.msra.mxu0 %v5015
  %5035 = vmatmul.f32.gmra.mxu0 %v5011
  %v5036 = vpop.f32.mrf.mxu0
  %v5037 = vadd.f32 0.0, %v5036
  %5038 = vmatmul.f32.gmra.mxu0 %v5013
  %v5039 = vpop.f32.mrf.mxu0
  %v5040 = vadd.f32 0.0, %v5039
  %5041 = vdwg.mxu0
  %v5042 = vmul.f32 %v5037, 0.70710677
  %v5043 = vmul.f32 %v5040, 0.70710677
  %v5044 = vsel %vm119, %v5042, -inf
  %5045 = vmax.xlane.f32.xlu0 %v5044
  %v5046 = vpop.xlane.xlu0 %5045
  %v5047 = vsel %vm123, %v5043, -inf
  %5048 = vmax.xlane.f32.xlu0 %v5047
  %v5049 = vpop.xlane.xlu0 %5048
  %v5050 = vsub.f32 %v5042, %v5046
  %v5051 = vsub.f32 %v5043, %v5049
  %v5052 = vmul.f32 %v5050, 1.442695
  %v5053 = vpow.pop %v5052
  %v5054 = vmul.f32 %v5051, 1.442695
  %v5055 = vpow.pop %v5054
  %v5056 = vsel %vm119, %v5053, 0.0
  %5057 = vadd.xlane.f32.xlu0 %v5056
  %v5058 = vpop.xlane.xlu0 %5057
  %v5059 = vsel %vm123, %v5055, 0.0
  %5060 = vadd.xlane.f32.xlu0 %v5059
  %v5061 = vpop.xlane.xlu0 %5060
  %v5062 = vrcp.pop %v5058
  %v5063 = vrcp.pop %v5061
  %v5064 = vmul.f32 %v5053, %v5062
  %v5065 = vmul.f32 %v5055, %v5063
  %5066 = vrot.lane.b32.xlu0 %v4614, 106
  %v5067 = vpop.permute.xlu0 %5066
  %5068 = vrot.lane.b32.xlu0 %v4617, 106
  %v5069 = vpop.permute.xlu0 %5068
  %v5072 = vsel %vm119, %v5064, 0
  %v5075 = vsel %vm119, %v5065, 0
  %v5077 = vsel %vm154, %v5069, 0
  %5079 = vmatpush.msra.mxu0 0.0
  %5080 = vmatpush.msra.mxu0 0.0
  %5081 = vmatpush.msra.mxu0 0.0
  %5082 = vmatpush.msra.mxu0 0.0
  %5083 = vmatpush.msra.mxu0 0.0
  %5084 = vmatpush.msra.mxu0 0.0
  %5085 = vmatpush.msra.mxu0 0.0
  %5086 = vmatpush.msra.mxu0 0.0
  %5087 = vmatpush.msra.mxu0 0.0
  %5088 = vmatpush.msra.mxu0 0.0
  %5089 = vmatpush.msra.mxu0 0.0
  %5090 = vmatpush.msra.mxu0 0.0
  %5091 = vmatpush.msra.mxu0 0.0
  %5092 = vmatpush.msra.mxu0 0.0
  %5093 = vmatpush.msra.mxu0 %v5077
  %5094 = vmatpush.msra.mxu0 %v5067
  %5095 = vmatmul.f32.gmra.mxu0 %v5072
  %v5096 = vpop.f32.mrf.mxu0
  %v5097 = vadd.f32 0.0, %v5096
  %5098 = vmatmul.f32.gmra.mxu0 %v5075
  %v5099 = vpop.f32.mrf.mxu0
  %v5100 = vadd.f32 0.0, %v5099
  %5101 = vdwg.mxu0
  %v5103 = vsel %vm85, %v5097, 0
  %v5106 = vsel %vm85, %v5100, 0
  %5108 = vmatpush.msra.mxu0 0.0
  %5109 = vmatpush.msra.mxu0 0.0
  %5110 = vmatpush.msra.mxu0 0.0
  %5111 = vmatpush.msra.mxu0 0.0
  %5112 = vmatpush.msra.mxu0 0.0
  %5113 = vmatpush.msra.mxu0 0.0
  %5114 = vmatpush.msra.mxu0 0.0
  %5115 = vmatpush.msra.mxu0 0.0
  %5116 = vmatpush.msra.mxu0 0.0
  %5117 = vmatpush.msra.mxu0 0.0
  %5118 = vmatpush.msra.mxu0 0.0
  %5119 = vmatpush.msra.mxu0 0.0
  %5120 = vmatpush.msra.mxu0 0.0
  %5121 = vmatpush.msra.mxu0 0.0
  %5122 = vmatpush.msra.mxu0 0.0
  %5123 = vmatpush.msra.mxu0 %v582
  %5124 = vmatmul.f32.gmra.mxu0 %v5103
  %v5125 = vpop.f32.mrf.mxu0
  %v5126 = vadd.f32 0.0, %v5125
  %5127 = vmatmul.f32.gmra.mxu0 %v5106
  %v5128 = vpop.f32.mrf.mxu0
  %v5129 = vadd.f32 0.0, %v5128
  %5130 = vdwg.mxu0
  %v5131 = vadd.f32 %v5001, %v5126
  %v5132 = vadd.f32 %v5002, %v5129
  %v5133 = vadd.f32 %v5131, %v609
  %v5134 = vadd.f32 %v5132, %v609
  %v5135 = vadd.f32 %v4588, %v5133
  %v5136 = vadd.f32 %v4589, %v5134
  %v5137 = vsel %vm49, %v5135, 0.0
  %5138 = vadd.xlane.f32.xlu0 %v5137
  %v5139 = vpop.xlane.xlu0 %5138
  %v5140 = vsel %vm617, %v5136, 0.0
  %5141 = vadd.xlane.f32.xlu0 %v5140
  %v5142 = vpop.xlane.xlu0 %5141
  %v5143 = vmul.f32 %v5139, %v627
  %v5144 = vmul.f32 %v5142, %v627
  %v5145 = vsub.f32 %v5135, %v5143
  %v5146 = vsub.f32 %v5136, %v5144
  %v5147 = vmul.f32 %v5145, %v5145
  %v5148 = vmul.f32 %v5146, %v5146
  %v5149 = vsel %vm49, %v5147, 0.0
  %5150 = vadd.xlane.f32.xlu0 %v5149
  %v5151 = vpop.xlane.xlu0 %5150
  %v5152 = vsel %vm617, %v5148, 0.0
  %5153 = vadd.xlane.f32.xlu0 %v5152
  %v5154 = vpop.xlane.xlu0 %5153
  %v5155 = vmul.f32 %v5151, %v627
  %v5156 = vmul.f32 %v5154, %v627
  %v5157 = vadd.f32 %v5155, 1e-05
  %v5158 = vadd.f32 %v5156, 1e-05
  %v5159 = vrsqrt.pop %v5157
  %v5160 = vmul.f32 %v5159, %v5157
  %v5161 = vmul.f32 %v5160, %v5159
  %v5162 = vmul.f32 0.5, %v5161
  %v5163 = vsub.f32 1.5, %v5162
  %v5164 = vmul.f32 %v5159, %v5163
  %vm5165 = vweird.f32 %v5157
  %vm5166 = vweird.f32 %v5159
  %vm5167 = vmor %vm5165, %vm5166
  %v5168 = vsel %vm5167, %v5159, %v5164
  %v5169 = vrsqrt.pop %v5158
  %v5170 = vmul.f32 %v5169, %v5158
  %v5171 = vmul.f32 %v5170, %v5169
  %v5172 = vmul.f32 0.5, %v5171
  %v5173 = vsub.f32 1.5, %v5172
  %v5174 = vmul.f32 %v5169, %v5173
  %vm5175 = vweird.f32 %v5158
  %vm5176 = vweird.f32 %v5169
  %vm5177 = vmor %vm5175, %vm5176
  %v5178 = vsel %vm5177, %v5169, %v5174
  %v5179 = vmul.f32 %v5145, %v5168
  %v5180 = vmul.f32 %v5146, %v5178
  %v5181 = vmul.f32 %v5179, %v666
  %v5182 = vmul.f32 %v5180, %v666
  %v5183 = vadd.f32 %v5181, %v669
  %v5184 = vadd.f32 %v5182, %v669
  %v5186 = vsel %vm49, %v5183, 0
  %v5189 = vsel %vm49, %v5184, 0
  %5191 = vmatpush.msra.mxu0 0.0
  %5192 = vmatpush.msra.mxu0 0.0
  %5193 = vmatpush.msra.mxu0 0.0
  %5194 = vmatpush.msra.mxu0 0.0
  %5195 = vmatpush.msra.mxu0 0.0
  %5196 = vmatpush.msra.mxu0 0.0
  %5197 = vmatpush.msra.mxu0 0.0
  %5198 = vmatpush.msra.mxu0 0.0
  %5199 = vmatpush.msra.mxu0 0.0
  %5200 = vmatpush.msra.mxu0 0.0
  %5201 = vmatpush.msra.mxu0 0.0
  %5202 = vmatpush.msra.mxu0 0.0
  %5203 = vmatpush.msra.mxu0 0.0
  %5204 = vmatpush.msra.mxu0 0.0
  %5205 = vmatpush.msra.mxu0 0.0
  %5206 = vmatpush.msra.mxu0 %v27
  %5207 = vmatmul.f32.gmra.mxu0 %v5186
  %v5208 = vpop.f32.mrf.mxu0
  %v5209 = vadd.f32 %v672, %v5208
  %5210 = vmatmul.f32.gmra.mxu0 %v5189
  %v5211 = vpop.f32.mrf.mxu0
  %v5212 = vadd.f32 %v672, %v5211
  %5213 = vdwg.mxu0
  %v5214 = vmax.f32 %v5209, 0.0
  %v5215 = vmax.f32 %v5212, 0.0
  %v5217 = vsel %vm705, %v5214, 0
  %v5220 = vsel %vm705, %v5215, 0
  %5222 = vmatpush.msra.mxu0 0.0
  %5223 = vmatpush.msra.mxu0 0.0
  %5224 = vmatpush.msra.mxu0 0.0
  %5225 = vmatpush.msra.mxu0 0.0
  %5226 = vmatpush.msra.mxu0 0.0
  %5227 = vmatpush.msra.mxu0 0.0
  %5228 = vmatpush.msra.mxu0 0.0
  %5229 = vmatpush.msra.mxu0 0.0
  %5230 = vmatpush.msra.mxu0 0.0
  %5231 = vmatpush.msra.mxu0 0.0
  %5232 = vmatpush.msra.mxu0 0.0
  %5233 = vmatpush.msra.mxu0 0.0
  %5234 = vmatpush.msra.mxu0 0.0
  %5235 = vmatpush.msra.mxu0 0.0
  %5236 = vmatpush.msra.mxu0 %v29
  %5237 = vmatpush.msra.mxu0 %v28
  %5238 = vmatmul.f32.gmra.mxu0 %v5217
  %v5239 = vpop.f32.mrf.mxu0
  %v5240 = vadd.f32 %v704, %v5239
  %5241 = vmatmul.f32.gmra.mxu0 %v5220
  %v5242 = vpop.f32.mrf.mxu0
  %v5243 = vadd.f32 %v704, %v5242
  %5244 = vdwg.mxu0
  %v5245 = vadd.f32 %v5183, %v5240
  %v5246 = vadd.f32 %v5184, %v5243
  %v5247 = vsel %vm49, %v5245, 0.0
  %5248 = vadd.xlane.f32.xlu0 %v5247
  %v5249 = vpop.xlane.xlu0 %5248
  %v5250 = vsel %vm617, %v5246, 0.0
  %5251 = vadd.xlane.f32.xlu0 %v5250
  %v5252 = vpop.xlane.xlu0 %5251
  %v5253 = vmul.f32 %v5249, %v627
  %v5254 = vmul.f32 %v5252, %v627
  %v5255 = vsub.f32 %v5245, %v5253
  %v5256 = vsub.f32 %v5246, %v5254
  %v5257 = vmul.f32 %v5255, %v5255
  %v5258 = vmul.f32 %v5256, %v5256
  %v5259 = vsel %vm49, %v5257, 0.0
  %5260 = vadd.xlane.f32.xlu0 %v5259
  %v5261 = vpop.xlane.xlu0 %5260
  %v5262 = vsel %vm617, %v5258, 0.0
  %5263 = vadd.xlane.f32.xlu0 %v5262
  %v5264 = vpop.xlane.xlu0 %5263
  %v5265 = vmul.f32 %v5261, %v627
  %v5266 = vmul.f32 %v5264, %v627
  %v5267 = vadd.f32 %v5265, 1e-05
  %v5268 = vadd.f32 %v5266, 1e-05
  %v5269 = vrsqrt.pop %v5267
  %v5270 = vmul.f32 %v5269, %v5267
  %v5271 = vmul.f32 %v5270, %v5269
  %v5272 = vmul.f32 0.5, %v5271
  %v5273 = vsub.f32 1.5, %v5272
  %v5274 = vmul.f32 %v5269, %v5273
  %vm5275 = vweird.f32 %v5267
  %vm5276 = vweird.f32 %v5269
  %vm5277 = vmor %vm5275, %vm5276
  %v5278 = vsel %vm5277, %v5269, %v5274
  %v5279 = vrsqrt.pop %v5268
  %v5280 = vmul.f32 %v5279, %v5268
  %v5281 = vmul.f32 %v5280, %v5279
  %v5282 = vmul.f32 0.5, %v5281
  %v5283 = vsub.f32 1.5, %v5282
  %v5284 = vmul.f32 %v5279, %v5283
  %vm5285 = vweird.f32 %v5268
  %vm5286 = vweird.f32 %v5279
  %vm5287 = vmor %vm5285, %vm5286
  %v5288 = vsel %vm5287, %v5279, %v5284
  %v5289 = vmul.f32 %v5255, %v5278
  %v5290 = vmul.f32 %v5256, %v5288
  %v5291 = vmul.f32 %v5289, %v781
  %v5292 = vmul.f32 %v5290, %v781
  %v5293 = vadd.f32 %v5291, %v784
  %v5294 = vadd.f32 %v5292, %v784
  %v5296 = vsel %vm49, %v5293, 0
  %v5299 = vsel %vm49, %v5294, 0
  %5301 = vmatpush.msra.mxu0 0.0
  %5302 = vmatpush.msra.mxu0 0.0
  %5303 = vmatpush.msra.mxu0 0.0
  %5304 = vmatpush.msra.mxu0 0.0
  %5305 = vmatpush.msra.mxu0 0.0
  %5306 = vmatpush.msra.mxu0 0.0
  %5307 = vmatpush.msra.mxu0 0.0
  %5308 = vmatpush.msra.mxu0 0.0
  %5309 = vmatpush.msra.mxu0 0.0
  %5310 = vmatpush.msra.mxu0 0.0
  %5311 = vmatpush.msra.mxu0 0.0
  %5312 = vmatpush.msra.mxu0 0.0
  %5313 = vmatpush.msra.mxu0 0.0
  %5314 = vmatpush.msra.mxu0 0.0
  %5315 = vmatpush.msra.mxu0 0.0
  %5316 = vmatpush.msra.mxu0 %v1150
  %5317 = vmatmul.f32.gmra.mxu0 %v5296
  %v5318 = vpop.f32.mrf.mxu0
  %v5319 = vadd.f32 %v1154, %v5318
  %5320 = vmatmul.f32.gmra.mxu0 %v5299
  %v5321 = vpop.f32.mrf.mxu0
  %v5322 = vadd.f32 %v1154, %v5321
  %5323 = vdwg.mxu0
  %v5325 = vsel %vm85, %v5319, 0
  %v5328 = vsel %vm85, %v5322, 0
  %5330 = vmatpush.xpose.msra.mxu0 0.0
  %5331 = vmatpush.xpose.msra.mxu0 0.0
  %5332 = vmatpush.xpose.msra.mxu0 0.0
  %5333 = vmatpush.xpose.msra.mxu0 0.0
  %5334 = vmatpush.xpose.msra.mxu0 0.0
  %5335 = vmatpush.xpose.msra.mxu0 0.0
  %5336 = vmatpush.xpose.msra.mxu0 0.0
  %5337 = vmatpush.xpose.msra.mxu0 0.0
  %5338 = vmatpush.xpose.msra.mxu0 0.0
  %5339 = vmatpush.xpose.msra.mxu0 0.0
  %5340 = vmatpush.xpose.msra.mxu0 0.0
  %5341 = vmatpush.xpose.msra.mxu0 0.0
  %5342 = vmatpush.xpose.msra.mxu0 0.0
  %5343 = vmatpush.xpose.msra.mxu0 0.0
  %5344 = vmatpush.xpose.msra.mxu0 %v5328
  %5345 = vmatpush.xpose.msra.mxu0 %v5325
  %5346 = vmatmul.f32.gmra.mxu0 %v4059
  %v5347 = vpop.f32.mrf.mxu0
  %v5348 = vadd.f32 0.0, %v5347
  %5349 = vdwg.mxu0
  %v5350 = vmul.f32 %v5348, 0.70710677
  %v5351 = vsel %vm1215, %v5350, -inf
  %5352 = vmax.xlane.f32.xlu0 %v5351
  %v5353 = vpop.xlane.xlu0 %5352
  %v5354 = vsub.f32 %v5350, %v5353
  %v5355 = vmul.f32 %v5354, 1.442695
  %v5356 = vpow.pop %v5355
  %v5357 = vsel %vm1215, %v5356, 0.0
  %5358 = vadd.xlane.f32.xlu0 %v5357
  %v5359 = vpop.xlane.xlu0 %5358
  %v5360 = vrcp.pop %v5359
  %v5361 = vmul.f32 %v5356, %v5360
  %5362 = vrot.lane.b32.xlu0 %v5319, 120
  %v5363 = vpop.permute.xlu0 %5362
  %5364 = vrot.lane.b32.xlu0 %v5322, 120
  %v5365 = vpop.permute.xlu0 %5364
  %v5368 = vsel %vm119, %v5361, 0
  %v5370 = vsel %vm154, %v5365, 0
  %5372 = vmatpush.msra.mxu0 0.0
  %5373 = vmatpush.msra.mxu0 0.0
  %5374 = vmatpush.msra.mxu0 0.0
  %5375 = vmatpush.msra.mxu0 0.0
  %5376 = vmatpush.msra.mxu0 0.0
  %5377 = vmatpush.msra.mxu0 0.0
  %5378 = vmatpush.msra.mxu0 0.0
  %5379 = vmatpush.msra.mxu0 0.0
  %5380 = vmatpush.msra.mxu0 0.0
  %5381 = vmatpush.msra.mxu0 0.0
  %5382 = vmatpush.msra.mxu0 0.0
  %5383 = vmatpush.msra.mxu0 0.0
  %5384 = vmatpush.msra.mxu0 0.0
  %5385 = vmatpush.msra.mxu0 0.0
  %5386 = vmatpush.msra.mxu0 %v5370
  %5387 = vmatpush.msra.mxu0 %v5363
  %5388 = vmatmul.f32.gmra.mxu0 %v5368
  %v5389 = vpop.f32.mrf.mxu0
  %v5390 = vadd.f32 0.0, %v5389
  %5391 = vdwg.mxu0
  %5392 = vrot.lane.b32.xlu0 %v5319, 126
  %v5393 = vpop.permute.xlu0 %5392
  %5394 = vrot.lane.b32.xlu0 %v5322, 126
  %v5395 = vpop.permute.xlu0 %5394
  %v5396 = vsel %vm85, %v5393, 0
  %v5398 = vsel %vm85, %v5395, 0
  %5400 = vmatpush.xpose.msra.mxu0 0.0
  %5401 = vmatpush.xpose.msra.mxu0 0.0
  %5402 = vmatpush.xpose.msra.mxu0 0.0
  %5403 = vmatpush.xpose.msra.mxu0 0.0
  %5404 = vmatpush.xpose.msra.mxu0 0.0
  %5405 = vmatpush.xpose.msra.mxu0 0.0
  %5406 = vmatpush.xpose.msra.mxu0 0.0
  %5407 = vmatpush.xpose.msra.mxu0 0.0
  %5408 = vmatpush.xpose.msra.mxu0 0.0
  %5409 = vmatpush.xpose.msra.mxu0 0.0
  %5410 = vmatpush.xpose.msra.mxu0 0.0
  %5411 = vmatpush.xpose.msra.mxu0 0.0
  %5412 = vmatpush.xpose.msra.mxu0 0.0
  %5413 = vmatpush.xpose.msra.mxu0 0.0
  %5414 = vmatpush.xpose.msra.mxu0 %v5398
  %5415 = vmatpush.xpose.msra.mxu0 %v5396
  %5416 = vmatmul.f32.gmra.mxu0 %v4135
  %v5417 = vpop.f32.mrf.mxu0
  %v5418 = vadd.f32 0.0, %v5417
  %5419 = vdwg.mxu0
  %v5420 = vmul.f32 %v5418, 0.70710677
  %v5421 = vsel %vm1215, %v5420, -inf
  %5422 = vmax.xlane.f32.xlu0 %v5421
  %v5423 = vpop.xlane.xlu0 %5422
  %v5424 = vsub.f32 %v5420, %v5423
  %v5425 = vmul.f32 %v5424, 1.442695
  %v5426 = vpow.pop %v5425
  %v5427 = vsel %vm1215, %v5426, 0.0
  %5428 = vadd.xlane.f32.xlu0 %v5427
  %v5429 = vpop.xlane.xlu0 %5428
  %v5430 = vrcp.pop %v5429
  %v5431 = vmul.f32 %v5426, %v5430
  %5432 = vrot.lane.b32.xlu0 %v5319, 118
  %v5433 = vpop.permute.xlu0 %5432
  %5434 = vrot.lane.b32.xlu0 %v5322, 118
  %v5435 = vpop.permute.xlu0 %5434
  %v5438 = vsel %vm119, %v5431, 0
  %v5440 = vsel %vm154, %v5435, 0
  %5442 = vmatpush.msra.mxu0 0.0
  %5443 = vmatpush.msra.mxu0 0.0
  %5444 = vmatpush.msra.mxu0 0.0
  %5445 = vmatpush.msra.mxu0 0.0
  %5446 = vmatpush.msra.mxu0 0.0
  %5447 = vmatpush.msra.mxu0 0.0
  %5448 = vmatpush.msra.mxu0 0.0
  %5449 = vmatpush.msra.mxu0 0.0
  %5450 = vmatpush.msra.mxu0 0.0
  %5451 = vmatpush.msra.mxu0 0.0
  %5452 = vmatpush.msra.mxu0 0.0
  %5453 = vmatpush.msra.mxu0 0.0
  %5454 = vmatpush.msra.mxu0 0.0
  %5455 = vmatpush.msra.mxu0 0.0
  %5456 = vmatpush.msra.mxu0 %v5440
  %5457 = vmatpush.msra.mxu0 %v5433
  %5458 = vmatmul.f32.gmra.mxu0 %v5438
  %v5459 = vpop.f32.mrf.mxu0
  %v5460 = vadd.f32 0.0, %v5459
  %5461 = vdwg.mxu0
  %v5463 = vsel %vm85, %v5460, 0
  %5465 = vmatpush.msra.mxu0 0.0
  %5466 = vmatpush.msra.mxu0 0.0
  %5467 = vmatpush.msra.mxu0 0.0
  %5468 = vmatpush.msra.mxu0 0.0
  %5469 = vmatpush.msra.mxu0 0.0
  %5470 = vmatpush.msra.mxu0 0.0
  %5471 = vmatpush.msra.mxu0 0.0
  %5472 = vmatpush.msra.mxu0 0.0
  %5473 = vmatpush.msra.mxu0 0.0
  %5474 = vmatpush.msra.mxu0 0.0
  %5475 = vmatpush.msra.mxu0 0.0
  %5476 = vmatpush.msra.mxu0 0.0
  %5477 = vmatpush.msra.mxu0 0.0
  %5478 = vmatpush.msra.mxu0 0.0
  %5479 = vmatpush.msra.mxu0 0.0
  %5480 = vmatpush.msra.mxu0 %v1336
  %5481 = vmatmul.f32.gmra.mxu0 %v5463
  %v5482 = vpop.f32.mrf.mxu0
  %v5483 = vadd.f32 0.0, %v5482
  %5484 = vdwg.mxu0
  %v5486 = vsel %vm85, %v5390, 0
  %5488 = vmatpush.msra.mxu0 0.0
  %5489 = vmatpush.msra.mxu0 0.0
  %5490 = vmatpush.msra.mxu0 0.0
  %5491 = vmatpush.msra.mxu0 0.0
  %5492 = vmatpush.msra.mxu0 0.0
  %5493 = vmatpush.msra.mxu0 0.0
  %5494 = vmatpush.msra.mxu0 0.0
  %5495 = vmatpush.msra.mxu0 0.0
  %5496 = vmatpush.msra.mxu0 0.0
  %5497 = vmatpush.msra.mxu0 0.0
  %5498 = vmatpush.msra.mxu0 0.0
  %5499 = vmatpush.msra.mxu0 0.0
  %5500 = vmatpush.msra.mxu0 0.0
  %5501 = vmatpush.msra.mxu0 0.0
  %5502 = vmatpush.msra.mxu0 0.0
  %5503 = vmatpush.msra.mxu0 %v1361
  %5504 = vmatmul.f32.gmra.mxu0 %v5486
  %v5505 = vpop.f32.mrf.mxu0
  %v5506 = vadd.f32 %v5483, %v5505
  %5507 = vdwg.mxu0
  %5508 = vrot.lane.b32.xlu0 %v5319, 124
  %v5509 = vpop.permute.xlu0 %5508
  %5510 = vrot.lane.b32.xlu0 %v5322, 124
  %v5511 = vpop.permute.xlu0 %5510
  %v5512 = vsel %vm85, %v5509, 0
  %v5514 = vsel %vm85, %v5511, 0
  %5516 = vmatpush.xpose.msra.mxu0 0.0
  %5517 = vmatpush.xpose.msra.mxu0 0.0
  %5518 = vmatpush.xpose.msra.mxu0 0.0
  %5519 = vmatpush.xpose.msra.mxu0 0.0
  %5520 = vmatpush.xpose.msra.mxu0 0.0
  %5521 = vmatpush.xpose.msra.mxu0 0.0
  %5522 = vmatpush.xpose.msra.mxu0 0.0
  %5523 = vmatpush.xpose.msra.mxu0 0.0
  %5524 = vmatpush.xpose.msra.mxu0 0.0
  %5525 = vmatpush.xpose.msra.mxu0 0.0
  %5526 = vmatpush.xpose.msra.mxu0 0.0
  %5527 = vmatpush.xpose.msra.mxu0 0.0
  %5528 = vmatpush.xpose.msra.mxu0 0.0
  %5529 = vmatpush.xpose.msra.mxu0 0.0
  %5530 = vmatpush.xpose.msra.mxu0 %v5514
  %5531 = vmatpush.xpose.msra.mxu0 %v5512
  %5532 = vmatmul.f32.gmra.mxu0 %v4255
  %v5533 = vpop.f32.mrf.mxu0
  %v5534 = vadd.f32 0.0, %v5533
  %5535 = vdwg.mxu0
  %v5536 = vmul.f32 %v5534, 0.70710677
  %v5537 = vsel %vm1215, %v5536, -inf
  %5538 = vmax.xlane.f32.xlu0 %v5537
  %v5539 = vpop.xlane.xlu0 %5538
  %v5540 = vsub.f32 %v5536, %v5539
  %v5541 = vmul.f32 %v5540, 1.442695
  %v5542 = vpow.pop %v5541
  %v5543 = vsel %vm1215, %v5542, 0.0
  %5544 = vadd.xlane.f32.xlu0 %v5543
  %v5545 = vpop.xlane.xlu0 %5544
  %v5546 = vrcp.pop %v5545
  %v5547 = vmul.f32 %v5542, %v5546
  %5548 = vrot.lane.b32.xlu0 %v5319, 116
  %v5549 = vpop.permute.xlu0 %5548
  %5550 = vrot.lane.b32.xlu0 %v5322, 116
  %v5551 = vpop.permute.xlu0 %5550
  %v5554 = vsel %vm119, %v5547, 0
  %v5556 = vsel %vm154, %v5551, 0
  %5558 = vmatpush.msra.mxu0 0.0
  %5559 = vmatpush.msra.mxu0 0.0
  %5560 = vmatpush.msra.mxu0 0.0
  %5561 = vmatpush.msra.mxu0 0.0
  %5562 = vmatpush.msra.mxu0 0.0
  %5563 = vmatpush.msra.mxu0 0.0
  %5564 = vmatpush.msra.mxu0 0.0
  %5565 = vmatpush.msra.mxu0 0.0
  %5566 = vmatpush.msra.mxu0 0.0
  %5567 = vmatpush.msra.mxu0 0.0
  %5568 = vmatpush.msra.mxu0 0.0
  %5569 = vmatpush.msra.mxu0 0.0
  %5570 = vmatpush.msra.mxu0 0.0
  %5571 = vmatpush.msra.mxu0 0.0
  %5572 = vmatpush.msra.mxu0 %v5556
  %5573 = vmatpush.msra.mxu0 %v5549
  %5574 = vmatmul.f32.gmra.mxu0 %v5554
  %v5575 = vpop.f32.mrf.mxu0
  %v5576 = vadd.f32 0.0, %v5575
  %5577 = vdwg.mxu0
  %v5579 = vsel %vm85, %v5576, 0
  %5581 = vmatpush.msra.mxu0 0.0
  %5582 = vmatpush.msra.mxu0 0.0
  %5583 = vmatpush.msra.mxu0 0.0
  %5584 = vmatpush.msra.mxu0 0.0
  %5585 = vmatpush.msra.mxu0 0.0
  %5586 = vmatpush.msra.mxu0 0.0
  %5587 = vmatpush.msra.mxu0 0.0
  %5588 = vmatpush.msra.mxu0 0.0
  %5589 = vmatpush.msra.mxu0 0.0
  %5590 = vmatpush.msra.mxu0 0.0
  %5591 = vmatpush.msra.mxu0 0.0
  %5592 = vmatpush.msra.mxu0 0.0
  %5593 = vmatpush.msra.mxu0 0.0
  %5594 = vmatpush.msra.mxu0 0.0
  %5595 = vmatpush.msra.mxu0 0.0
  %5596 = vmatpush.msra.mxu0 %v1461
  %5597 = vmatmul.f32.gmra.mxu0 %v5579
  %v5598 = vpop.f32.mrf.mxu0
  %v5599 = vadd.f32 0.0, %v5598
  %5600 = vdwg.mxu0
  %v5601 = vadd.f32 %v5506, %v5599
  %5602 = vrot.lane.b32.xlu0 %v5319, 122
  %v5603 = vpop.permute.xlu0 %5602
  %5604 = vrot.lane.b32.xlu0 %v5322, 122
  %v5605 = vpop.permute.xlu0 %5604
  %v5606 = vsel %vm85, %v5603, 0
  %v5608 = vsel %vm85, %v5605, 0
  %5610 = vmatpush.xpose.msra.mxu0 0.0
  %5611 = vmatpush.xpose.msra.mxu0 0.0
  %5612 = vmatpush.xpose.msra.mxu0 0.0
  %5613 = vmatpush.xpose.msra.mxu0 0.0
  %5614 = vmatpush.xpose.msra.mxu0 0.0
  %5615 = vmatpush.xpose.msra.mxu0 0.0
  %5616 = vmatpush.xpose.msra.mxu0 0.0
  %5617 = vmatpush.xpose.msra.mxu0 0.0
  %5618 = vmatpush.xpose.msra.mxu0 0.0
  %5619 = vmatpush.xpose.msra.mxu0 0.0
  %5620 = vmatpush.xpose.msra.mxu0 0.0
  %5621 = vmatpush.xpose.msra.mxu0 0.0
  %5622 = vmatpush.xpose.msra.mxu0 0.0
  %5623 = vmatpush.xpose.msra.mxu0 0.0
  %5624 = vmatpush.xpose.msra.mxu0 %v5608
  %5625 = vmatpush.xpose.msra.mxu0 %v5606
  %5626 = vmatmul.f32.gmra.mxu0 %v4353
  %v5627 = vpop.f32.mrf.mxu0
  %v5628 = vadd.f32 0.0, %v5627
  %5629 = vdwg.mxu0
  %v5630 = vmul.f32 %v5628, 0.70710677
  %v5631 = vsel %vm1215, %v5630, -inf
  %5632 = vmax.xlane.f32.xlu0 %v5631
  %v5633 = vpop.xlane.xlu0 %5632
  %v5634 = vsub.f32 %v5630, %v5633
  %v5635 = vmul.f32 %v5634, 1.442695
  %v5636 = vpow.pop %v5635
  %v5637 = vsel %vm1215, %v5636, 0.0
  %5638 = vadd.xlane.f32.xlu0 %v5637
  %v5639 = vpop.xlane.xlu0 %5638
  %v5640 = vrcp.pop %v5639
  %v5641 = vmul.f32 %v5636, %v5640
  %5642 = vrot.lane.b32.xlu0 %v5319, 114
  %v5643 = vpop.permute.xlu0 %5642
  %5644 = vrot.lane.b32.xlu0 %v5322, 114
  %v5645 = vpop.permute.xlu0 %5644
  %v5648 = vsel %vm119, %v5641, 0
  %v5650 = vsel %vm154, %v5645, 0
  %5652 = vmatpush.msra.mxu0 0.0
  %5653 = vmatpush.msra.mxu0 0.0
  %5654 = vmatpush.msra.mxu0 0.0
  %5655 = vmatpush.msra.mxu0 0.0
  %5656 = vmatpush.msra.mxu0 0.0
  %5657 = vmatpush.msra.mxu0 0.0
  %5658 = vmatpush.msra.mxu0 0.0
  %5659 = vmatpush.msra.mxu0 0.0
  %5660 = vmatpush.msra.mxu0 0.0
  %5661 = vmatpush.msra.mxu0 0.0
  %5662 = vmatpush.msra.mxu0 0.0
  %5663 = vmatpush.msra.mxu0 0.0
  %5664 = vmatpush.msra.mxu0 0.0
  %5665 = vmatpush.msra.mxu0 0.0
  %5666 = vmatpush.msra.mxu0 %v5650
  %5667 = vmatpush.msra.mxu0 %v5643
  %5668 = vmatmul.f32.gmra.mxu0 %v5648
  %v5669 = vpop.f32.mrf.mxu0
  %v5670 = vadd.f32 0.0, %v5669
  %5671 = vdwg.mxu0
  %v5673 = vsel %vm85, %v5670, 0
  %5675 = vmatpush.msra.mxu0 0.0
  %5676 = vmatpush.msra.mxu0 0.0
  %5677 = vmatpush.msra.mxu0 0.0
  %5678 = vmatpush.msra.mxu0 0.0
  %5679 = vmatpush.msra.mxu0 0.0
  %5680 = vmatpush.msra.mxu0 0.0
  %5681 = vmatpush.msra.mxu0 0.0
  %5682 = vmatpush.msra.mxu0 0.0
  %5683 = vmatpush.msra.mxu0 0.0
  %5684 = vmatpush.msra.mxu0 0.0
  %5685 = vmatpush.msra.mxu0 0.0
  %5686 = vmatpush.msra.mxu0 0.0
  %5687 = vmatpush.msra.mxu0 0.0
  %5688 = vmatpush.msra.mxu0 0.0
  %5689 = vmatpush.msra.mxu0 0.0
  %5690 = vmatpush.msra.mxu0 %v1562
  %5691 = vmatmul.f32.gmra.mxu0 %v5673
  %v5692 = vpop.f32.mrf.mxu0
  %v5693 = vadd.f32 0.0, %v5692
  %5694 = vdwg.mxu0
  %v5695 = vadd.f32 %v5601, %v5693
  %v5696 = vadd.f32 %v5695, %v1585
  %v5697 = vadd.f32 %v4005, %v5696
  %v5698 = vsel %vm1093, %v5697, 0.0
  %5699 = vadd.xlane.f32.xlu0 %v5698
  %v5700 = vpop.xlane.xlu0 %5699
  %v5701 = vmul.f32 %v5700, %v627
  %v5702 = vsub.f32 %v5697, %v5701
  %v5703 = vmul.f32 %v5702, %v5702
  %v5704 = vsel %vm1093, %v5703, 0.0
  %5705 = vadd.xlane.f32.xlu0 %v5704
  %v5706 = vpop.xlane.xlu0 %5705
  %v5707 = vmul.f32 %v5706, %v627
  %v5708 = vadd.f32 %v5707, 1e-05
  %v5709 = vrsqrt.pop %v5708
  %v5710 = vmul.f32 %v5709, %v5708
  %v5711 = vmul.f32 %v5710, %v5709
  %v5712 = vmul.f32 0.5, %v5711
  %v5713 = vsub.f32 1.5, %v5712
  %v5714 = vmul.f32 %v5709, %v5713
  %vm5715 = vweird.f32 %v5708
  %vm5716 = vweird.f32 %v5709
  %vm5717 = vmor %vm5715, %vm5716
  %v5718 = vsel %vm5717, %v5709, %v5714
  %v5719 = vmul.f32 %v5702, %v5718
  %v5720 = vmul.f32 %v5719, %v1611
  %v5721 = vadd.f32 %v5720, %v1614
  %v5723 = vsel %vm49, %v5721, 0
  %5725 = vmatpush.msra.mxu0 0.0
  %5726 = vmatpush.msra.mxu0 0.0
  %5727 = vmatpush.msra.mxu0 0.0
  %5728 = vmatpush.msra.mxu0 0.0
  %5729 = vmatpush.msra.mxu0 0.0
  %5730 = vmatpush.msra.mxu0 0.0
  %5731 = vmatpush.msra.mxu0 0.0
  %5732 = vmatpush.msra.mxu0 0.0
  %5733 = vmatpush.msra.mxu0 0.0
  %5734 = vmatpush.msra.mxu0 0.0
  %5735 = vmatpush.msra.mxu0 0.0
  %5736 = vmatpush.msra.mxu0 0.0
  %5737 = vmatpush.msra.mxu0 0.0
  %5738 = vmatpush.msra.mxu0 0.0
  %5739 = vmatpush.msra.mxu0 0.0
  %5740 = vmatpush.msra.mxu0 %v34
  %5741 = vmatmul.f32.gmra.mxu0 %v5723
  %v5742 = vpop.f32.mrf.mxu0
  %v5743 = vadd.f32 %v40, %v5742
  %5744 = vdwg.mxu0
  %v5745 = vmax.f32 %v5743, 0.0
  %v5747 = vsel %vm705, %v5745, 0
  %5749 = vmatpush.msra.mxu0 0.0
  %5750 = vmatpush.msra.mxu0 0.0
  %5751 = vmatpush.msra.mxu0 0.0
  %5752 = vmatpush.msra.mxu0 0.0
  %5753 = vmatpush.msra.mxu0 0.0
  %5754 = vmatpush.msra.mxu0 0.0
  %5755 = vmatpush.msra.mxu0 0.0
  %5756 = vmatpush.msra.mxu0 0.0
  %5757 = vmatpush.msra.mxu0 0.0
  %5758 = vmatpush.msra.mxu0 0.0
  %5759 = vmatpush.msra.mxu0 0.0
  %5760 = vmatpush.msra.mxu0 0.0
  %5761 = vmatpush.msra.mxu0 0.0
  %5762 = vmatpush.msra.mxu0 0.0
  %5763 = vmatpush.msra.mxu0 %v36
  %5764 = vmatpush.msra.mxu0 %v35
  %5765 = vmatmul.f32.gmra.mxu0 %v5747
  %v5766 = vpop.f32.mrf.mxu0
  %v5767 = vadd.f32 %v1642, %v5766
  %5768 = vdwg.mxu0
  %v5769 = vadd.f32 %v5721, %v5767
  %v5770 = vsel %vm1093, %v5769, 0.0
  %5771 = vadd.xlane.f32.xlu0 %v5770
  %v5772 = vpop.xlane.xlu0 %5771
  %v5773 = vmul.f32 %v5772, %v627
  %v5774 = vsub.f32 %v5769, %v5773
  %v5775 = vmul.f32 %v5774, %v5774
  %v5776 = vsel %vm1093, %v5775, 0.0
  %5777 = vadd.xlane.f32.xlu0 %v5776
  %v5778 = vpop.xlane.xlu0 %5777
  %v5779 = vmul.f32 %v5778, %v627
  %v5780 = vadd.f32 %v5779, 1e-05
  %v5781 = vrsqrt.pop %v5780
  %v5782 = vmul.f32 %v5781, %v5780
  %v5783 = vmul.f32 %v5782, %v5781
  %v5784 = vmul.f32 0.5, %v5783
  %v5785 = vsub.f32 1.5, %v5784
  %v5786 = vmul.f32 %v5781, %v5785
  %vm5787 = vweird.f32 %v5780
  %vm5788 = vweird.f32 %v5781
  %vm5789 = vmor %vm5787, %vm5788
  %v5790 = vsel %vm5789, %v5781, %v5786
  %v5791 = vmul.f32 %v5774, %v5790
  %v5792 = vmul.f32 %v5791, %v1690
  %v5793 = vadd.f32 %v5792, %v1693
  %v5795 = vsel %vm49, %v5793, 0
  %5797 = vmatpush.msra.mxu0 0.0
  %5798 = vmatpush.msra.mxu0 0.0
  %5799 = vmatpush.msra.mxu0 0.0
  %5800 = vmatpush.msra.mxu0 0.0
  %5801 = vmatpush.msra.mxu0 0.0
  %5802 = vmatpush.msra.mxu0 0.0
  %5803 = vmatpush.msra.mxu0 0.0
  %5804 = vmatpush.msra.mxu0 0.0
  %5805 = vmatpush.msra.mxu0 0.0
  %5806 = vmatpush.msra.mxu0 0.0
  %5807 = vmatpush.msra.mxu0 0.0
  %5808 = vmatpush.msra.mxu0 0.0
  %5809 = vmatpush.msra.mxu0 0.0
  %5810 = vmatpush.msra.mxu0 0.0
  %5811 = vmatpush.msra.mxu0 0.0
  %5812 = vmatpush.msra.mxu0 %v37
  %5813 = vmatmul.f32.gmra.mxu0 %v5795
  %v5814 = vpop.f32.mrf.mxu0
  %v5815 = vadd.f32 %v1696, %v5814
  %5816 = vdwg.mxu0
  %v5817 = vsub.f32 0.0, %v5815
  %v5818 = vmul.f32 %v5817, 1.442695
  %v5819 = vpow.pop %v5818
  %v5820 = vadd.f32 %v5819, 1.0
  %v5821 = vrcp.pop %v5820
  %5823 = vrot.lane.b32.xlu0 %v5821, 4
  %v5824 = vpop.permute.xlu0 %5823
  %v5826 = vsel %vm41, %v2976, %v5824
  %5827 = vst.msk [vmem:[%s5] sm:$0x1] %vm1093, %v5826
  // Predicated region
  $region22: #{forward.1} parent=0 // pred_check
    _
  $region23: #{forward.1} parent=0 // pred_check_branch
    %5829 = sbr.rel (0) target = $region25
  $region24: #{forward.1} parent=0 // pred_region
    _
  $region25: #{forward.1} parent=0 // pred_fallthru
    _
  // Predicated region
  $region26: #{forward.1} parent=0 // pred_check
    _
  $region27: #{forward.1} parent=0 // pred_check_branch
    %5831 = sbr.rel (0) target = $region29
  $region28: #{forward.1} parent=0 // pred_region
    _
  $region29: #{forward.1} parent=0 // pred_fallthru
    _

</llo_original>
